<compile_context>
chip_gen: v7x
topology: tpu7x:2x2x1
jax: 0.10.0
libtpu: 0.0.40
codegen_flags: <defaults>
</compile_context>

<pallas_src>
import functools
import jax
import jax.numpy as jnp
from jax.experimental import pallas as pl
from jax.experimental.pallas import tpu as pltpu


VMEM_LIMIT = 32 * 1024 * 1024  # explicit; safe on v5e/v6e (128 MiB) and v7x (64 MiB)

# Matmul tile sizes (fit easily in VMEM on every generation; halve for huge K if needed)
TM, TN, TK = 256, 128, 128


def _round_up(x, m):
    return ((x + m - 1) // m) * m


def _row_tile(h, target=64):
    """Pick a row (sublane) tile: multiple of 8 dividing h, else full h."""
    if h % 8 != 0:
        return h
    t = min(h, target)
    t -= t % 8
    while t > 8 and h % t != 0:
        t -= 8
    return t if (t > 0 and h % t == 0) else h


# ----------------------------------------------------------------------------
# Tiled MXU matmul with fused bias + (pre-)activation
# ----------------------------------------------------------------------------
def _matmul_kernel_factory(act_in):
    def kernel(a_ref, b_ref, bias_ref, o_ref, acc_ref):
        k = pl.program_id(2)

        @pl.when(k == 0)
        def _():
            acc_ref[...] = jnp.zeros_like(acc_ref)

        a = a_ref[...]
        # fused pre-activation of the conv input (elementwise, commutes with im2col)
        if act_in == "lrelu":
            a = jnp.where(a >= 0, a, 0.2 * a)
        elif act_in == "relu":
            a = jnp.maximum(a, 0.0)

        acc_ref[...] += jnp.dot(a, b_ref[...], preferred_element_type=jnp.float32)

        @pl.when(k == pl.num_programs(2) - 1)
        def _():
            o_ref[...] = acc_ref[...] + bias_ref[...]

    return kernel


def matmul_bias(cols, wmat, bias, act_in=None):
    """(M,K) @ (K,N) + bias with fused pre-activation.  bf16 operands, f32 acc."""
    M, K = cols.shape
    N = wmat.shape[1]
    Mp, Kp, Np = _round_up(M, TM), _round_up(K, TK), _round_up(N, TN)

    a = jnp.pad(cols.astype(jnp.bfloat16), ((0, Mp - M), (0, Kp - K)))
    b = jnp.pad(wmat.astype(jnp.bfloat16), ((0, Kp - K), (0, Np - N)))
    bb = jnp.pad(bias.astype(jnp.float32).reshape(1, N), ((0, 0), (0, Np - N)))

    grid = (Mp // TM, Np // TN, Kp // TK)
    out = pl.pallas_call(
        _matmul_kernel_factory(act_in),
        grid=grid,
        in_specs=[
            pl.BlockSpec((TM, TK), lambda i, j, k: (i, k)),
            pl.BlockSpec((TK, TN), lambda i, j, k: (k, j)),
            pl.BlockSpec((1, TN), lambda i, j, k: (0, j)),
        ],
        out_specs=pl.BlockSpec((TM, TN), lambda i, j, k: (i, j)),
        out_shape=jax.ShapeDtypeStruct((Mp, Np), jnp.float32),
        scratch_shapes=[pltpu.VMEM((TM, TN), jnp.float32)],
        compiler_params=pltpu.CompilerParams(
            dimension_semantics=("parallel", "parallel", "arbitrary"),
            vmem_limit_bytes=VMEM_LIMIT),
    )(a, b, bb)
    return out[:M, :N]


# ----------------------------------------------------------------------------
# Convolutions (im2col glue in JAX, matmul in Pallas)
# ----------------------------------------------------------------------------
def im2col(x, kh, kw, stride, pad):
    # TODO(synk): patch extraction stays in XLA glue; fusing it into the Pallas
    #             index_map (slab reads + in-kernel shifted slices) is the next step.
    n, c, h, w = x.shape
    if pad:
        x = jnp.pad(x, ((0, 0), (0, 0), (pad, pad), (pad, pad)))
    ho = (h + 2 * pad - kh) // stride + 1
    wo = (w + 2 * pad - kw) // stride + 1
    patches = []
    for i in range(kh):
        for j in range(kw):
            patches.append(
                x[:, :, i:i + stride * (ho - 1) + 1:stride,
                        j:j + stride * (wo - 1) + 1:stride])
    p = jnp.stack(patches, axis=2)                       # (N, C, kh*kw, Ho, Wo)
    p = p.transpose(0, 3, 4, 1, 2).reshape(n * ho * wo, c * kh * kw)
    return p, ho, wo


def conv2d(x, w, b, stride=1, pad=0, act_in=None):
    # x: (N, Cin, H, W); w: (Cout, Cin, kh, kw)  [PyTorch Conv2d layout]
    n = x.shape[0]
    cout, cin, kh, kw = w.shape
    cols, ho, wo = im2col(x, kh, kw, stride, pad)
    wmat = w.reshape(cout, cin * kh * kw).T
    y = matmul_bias(cols, wmat, b, act_in=act_in)
    return y.reshape(n, ho, wo, cout).transpose(0, 3, 1, 2)


def conv_transpose2d(x, w, b, act_in=None):
    """PyTorch ConvTranspose2d(k=4, stride=2, pad=1) via sub-pixel decomposition.

    out[2m+r, 2n+s] only touches 2x2 sub-kernels of w -> 4 small convs, no zero
    dilation (4x fewer flops/bytes than the dilated formulation).
    w layout: (Cin, Cout, 4, 4).
    """
    n, cin, h, wd = x.shape
    cout = w.shape[1]
    xp = jnp.pad(x, ((0, 0), (0, 0), (1, 1), (1, 1)))
    ridx = ((3, 1), (2, 0))          # phase -> kernel taps for offsets {0,1}
    phases = []
    for r in (0, 1):
        row = []
        for s in (0, 1):
            wk = w[:, :, jnp.array(ridx[r]), :][:, :, :, jnp.array(ridx[s])]
            wk = wk.transpose(1, 0, 2, 3)                      # (Cout, Cin, 2, 2)
            xs = xp[:, :, r:r + h + 1, s:s + wd + 1]           # (N, Cin, h+1, w+1)
            row.append(conv2d(xs, wk, b, stride=1, pad=0, act_in=act_in))
        phases.append(row)
    row0 = jnp.stack([phases[0][0], phases[0][1]], axis=-1).reshape(n, cout, h, 2 * wd)
    row1 = jnp.stack([phases[1][0], phases[1][1]], axis=-1).reshape(n, cout, h, 2 * wd)
    return jnp.stack([row0, row1], axis=-2).reshape(n, cout, 2 * h, 2 * wd)


# ----------------------------------------------------------------------------
# Tiled instance norm (two passes, column-chunked reduction)
# ----------------------------------------------------------------------------
INORM_TR = 8
INORM_TC = 512


def _inorm_stats_kernel(x_ref, mean_ref, rstd_ref, sum_sc, sq_sc, *, count, eps):
    k = pl.program_id(1)

    @pl.when(k == 0)
    def _():
        sum_sc[...] = jnp.zeros_like(sum_sc)
        sq_sc[...] = jnp.zeros_like(sq_sc)

    x = x_ref[...]
    sum_sc[...] += jnp.sum(x, axis=-1, keepdims=True)
    sq_sc[...] += jnp.sum(x * x, axis=-1, keepdims=True)

    @pl.when(k == pl.num_programs(1) - 1)
    def _():
        mean = sum_sc[...] / count
        var = sq_sc[...] / count - mean * mean          # biased, as in PyTorch
        mean_ref[...] = mean
        rstd_ref[...] = jax.lax.rsqrt(jnp.maximum(var, 0.0) + eps)


def _inorm_apply_kernel(x_ref, mean_ref, rstd_ref, o_ref):
    o_ref[...] = (x_ref[...] - mean_ref[...]) * rstd_ref[...]


def instance_norm(x, eps=1e-5):
    n, c, h, w = x.shape
    R, C = n * c, h * w
    x2 = x.reshape(R, C)
    Rp = _round_up(R, INORM_TR)
    TC = min(INORM_TC, _round_up(C, 128))
    Cp = _round_up(C, TC)
    xp = jnp.pad(x2, ((0, Rp - R), (0, Cp - C)))  # zero pad: adds 0 to sum/sumsq
    grid = (Rp // INORM_TR, Cp // TC)

    mean, rstd = pl.pallas_call(
        functools.partial(_inorm_stats_kernel, count=float(C), eps=eps),
        grid=grid,
        in_specs=[pl.BlockSpec((INORM_TR, TC), lambda i, k: (i, k))],
        out_specs=(pl.BlockSpec((INORM_TR, 1), lambda i, k: (i, 0)),
                   pl.BlockSpec((INORM_TR, 1), lambda i, k: (i, 0))),
        out_shape=(jax.ShapeDtypeStruct((Rp, 1), jnp.float32),
                   jax.ShapeDtypeStruct((Rp, 1), jnp.float32)),
        scratch_shapes=[pltpu.VMEM((INORM_TR, 1), jnp.float32),
                        pltpu.VMEM((INORM_TR, 1), jnp.float32)],
        compiler_params=pltpu.CompilerParams(
            dimension_semantics=("parallel", "arbitrary"),
            vmem_limit_bytes=VMEM_LIMIT),
    )(xp)

    y = pl.pallas_call(
        _inorm_apply_kernel,
        grid=grid,
        in_specs=[pl.BlockSpec((INORM_TR, TC), lambda i, k: (i, k)),
                  pl.BlockSpec((INORM_TR, 1), lambda i, k: (i, 0)),
                  pl.BlockSpec((INORM_TR, 1), lambda i, k: (i, 0))],
        out_specs=pl.BlockSpec((INORM_TR, TC), lambda i, k: (i, k)),
        out_shape=jax.ShapeDtypeStruct((Rp, Cp), jnp.float32),
        compiler_params=pltpu.CompilerParams(
            dimension_semantics=("parallel", "parallel"),
            vmem_limit_bytes=VMEM_LIMIT),
    )(xp, mean, rstd)
    return y[:R, :C].reshape(n, c, h, w)


# ----------------------------------------------------------------------------
# Broadcast-aware complex multiply (no materialized broadcasts)
# ----------------------------------------------------------------------------
def _cmul_kernel(ar_ref, ai_ref, br_ref, bi_ref, or_ref, oi_ref):
    ar, ai = ar_ref[...], ai_ref[...]
    br, bi = br_ref[...], bi_ref[...]
    or_ref[...] = ar * br - ai * bi
    oi_ref[...] = ar * bi + ai * br


def bcast_cmul(ar, ai, br, bi):
    """Complex multiply of 4-D fields; dims 0/1 broadcast via index_map replication."""
    n0 = max(ar.shape[0], br.shape[0])
    n1 = max(ar.shape[1], br.shape[1])
    H, W = ar.shape[2], ar.shape[3]
    th = _row_tile(H)
    grid = (n0, n1, H // th)

    def make_idx(shape):
        s0, s1 = shape[0], shape[1]

        def idx(b, j, r):
            return (b if s0 > 1 else 0, j if s1 > 1 else 0, r, 0)
        return idx

    a_spec = pl.BlockSpec((1, 1, th, W), make_idx(ar.shape))
    b_spec = pl.BlockSpec((1, 1, th, W), make_idx(br.shape))
    o_spec = pl.BlockSpec((1, 1, th, W), lambda b, j, r: (b, j, r, 0))
    sds = jax.ShapeDtypeStruct((n0, n1, H, W), jnp.float32)
    outs = pl.pallas_call(
        _cmul_kernel,
        grid=grid,
        in_specs=[a_spec, a_spec, b_spec, b_spec],
        out_specs=(o_spec, o_spec),
        out_shape=(sds, sds),
        compiler_params=pltpu.CompilerParams(
            dimension_semantics=("parallel", "parallel", "parallel"),
            vmem_limit_bytes=VMEM_LIMIT),
    )(ar, ai, br, bi)
    return outs[0], outs[1]


# ----------------------------------------------------------------------------
# Generic tiled elementwise runner over (D, H, W) f32 arrays
# ----------------------------------------------------------------------------
def _ew_call(kernel, inputs, n_out):
    D, H, W = inputs[0].shape
    th = _row_tile(H)
    grid = (D, H // th)
    spec = pl.BlockSpec((1, th, W), lambda d, r: (d, r, 0))
    sds = jax.ShapeDtypeStruct((D, H, W), jnp.float32)
    outs = pl.pallas_call(
        kernel,
        grid=grid,
        in_specs=[spec] * len(inputs),
        out_specs=(spec,) * n_out,
        out_shape=(sds,) * n_out,
        compiler_params=pltpu.CompilerParams(
            dimension_semantics=("parallel", "parallel"),
            vmem_limit_bytes=VMEM_LIMIT),
    )(*inputs)
    if not isinstance(outs, (tuple, list)):
        outs = (outs,)
    return tuple(outs)


def _cabs_kernel(r_ref, i_ref, o_ref):
    r, i = r_ref[...], i_ref[...]
    o_ref[...] = jnp.sqrt(r * r + i * i)


def cabs_pallas(fr, fi):
    shp = fr.shape
    fr3 = fr.reshape(-1, shp[-2], shp[-1])
    fi3 = fi.reshape(-1, shp[-2], shp[-1])
    (a,) = _ew_call(_cabs_kernel, [fr3, fi3], 1)
    return a.reshape(shp)


def _recombine_kernel(tor_ref, toi_ref, tr_ref, ti_ref, or_ref, oi_ref):
    # fused: amp = |cnn_out|, out = amp * field / |field|  (== amp * exp(i*angle(field)))
    tor, toi = tor_ref[...], toi_ref[...]
    tr, ti = tr_ref[...], ti_ref[...]
    amp = jnp.sqrt(tor * tor + toi * toi)
    mag = jnp.sqrt(tr * tr + ti * ti)
    inv = jnp.where(mag > 0, 1.0 / mag, 0.0)
    cr = jnp.where(mag > 0, tr * inv, 1.0)   # angle(0) -> 0 => exp(i*0) = 1 (torch convention)
    ci = ti * inv
    or_ref[...] = amp * cr
    oi_ref[...] = amp * ci


# ----------------------------------------------------------------------------
# U-Net (pix2pix-style, outer_skip) -- see NOTE at top about assumptions
# ----------------------------------------------------------------------------
def init_unet_params(key, input_nc, output_nc, num_downs, nf0, max_channels):
    ch = [min((2 ** l) * nf0, max_channels) for l in range(num_downs)]
    keys = iter(jax.random.split(key, 2 * num_downs))
    down_w, down_b, up_w, up_b = [], [], [], []
    k = 4
    for l in range(num_downs):
        cin = input_nc if l == 0 else ch[l - 1]
        cout = ch[l]
        down_w.append(0.02 * jax.random.normal(next(keys), (cout, cin, k, k), jnp.float32))
        down_b.append(jnp.zeros((cout,), jnp.float32))
    for l in range(num_downs):
        if l == 0:
            cin, cout = 2 * ch[0], output_nc
        elif l == num_downs - 1:
            cin, cout = ch[l], ch[l - 1]
        else:
            cin, cout = 2 * ch[l], ch[l - 1]
        up_w.append(0.02 * jax.random.normal(next(keys), (cin, cout, k, k), jnp.float32))
        up_b.append(jnp.zeros((cout,), jnp.float32))
    # NOTE: no non-array leaves (num_downs derived from static list length).
    return dict(down_w=down_w, down_b=down_b, up_w=up_w, up_b=up_b)


def unet_apply(p, x):
    down_w, down_b = p["down_w"], p["down_b"]
    up_w, up_b = p["up_w"], p["up_b"]
    nd = len(down_w)                           # static (list length)
    skips = []
    h = conv2d(x, down_w[0], down_b[0], stride=2, pad=1)          # outermost down
    for l in range(1, nd):
        skips.append(h)
        c = conv2d(h, down_w[l], down_b[l], stride=2, pad=1, act_in="lrelu")
        if l < nd - 1:
            c = instance_norm(c)
        h = c
    for l in range(nd - 1, 0, -1):
        u = conv_transpose2d(h, up_w[l], up_b[l], act_in="relu")  # ReLU fused on input
        u = instance_norm(u)
        h = jnp.concatenate([skips[l - 1], u], axis=1)
    out = conv_transpose2d(h, up_w[0], up_b[0], act_in="relu")
    # outer_skip=True: residual adds the (real, imag) channels of the input encoding
    out = out + x[:, 2:4]
    return out


# ----------------------------------------------------------------------------
# Field2Input / Output2Field / ASM propagation
# ----------------------------------------------------------------------------
def field2input(fr, fi, latent_amp=None, latent_phase=None, shared_cnn=False):
    # coord='both' -> channels: [abs, angle, real, imag]
    if latent_amp is not None:
        # TODO(synk): cos/sin kept in plain JAX glue (parameter preprocessing)
        mr = latent_amp * jnp.cos(latent_phase)       # (1, 1, h, w)
        mi = latent_amp * jnp.sin(latent_phase)
        fr, fi = bcast_cmul(fr, fi, mr, mi)           # broadcast via index_map, no copies
    if shared_cnn:
        n, c, h, w = fr.shape
        fr = fr.reshape(n * c, 1, h, w)
        fi = fi.reshape(n * c, 1, h, w)
    amp = cabs_pallas(fr, fi)
    ang = jnp.arctan2(fi, fr)                         # TODO(synk): atan2 left in plain JAX
    return jnp.concatenate([amp, ang, fr, fi], axis=1)


def create_gaussian(shape, sigma):
    hh, ww = shape
    y = jnp.arange(hh, dtype=jnp.float32) - (hh - 1) / 2.0
    x = jnp.arange(ww, dtype=jnp.float32) - (ww - 1) / 2.0
    yy, xx = jnp.meshgrid(y, x, indexing="ij")
    return jnp.exp(-(xx ** 2 + yy ** 2) / (2.0 * sigma ** 2))


def make_Heff(dists, wavelength, feature_size, F_aperture, f_amp, f_phase):
    # Centered (fftshifted) ASM transfer function x learned Fourier amp/phase.
    hp, wp = f_amp.shape[-2:]
    dy, dx = feature_size
    ly, lx = dy * hp, dx * wp
    fy = jnp.linspace(-1 / (2 * dy) + 0.5 / (2 * ly),
                      1 / (2 * dy) - 0.5 / (2 * ly), hp, dtype=jnp.float32)
    fx = jnp.linspace(-1 / (2 * dx) + 0.5 / (2 * lx),
                      1 / (2 * dx) - 0.5 / (2 * lx), wp, dtype=jnp.float32)
    FY, FX = jnp.meshgrid(fy, fx, indexing="ij")
    f2 = FX ** 2 + FY ** 2
    arg = jnp.maximum((1.0 / wavelength) ** 2 - f2, 0.0)
    filt = (f2 <= (F_aperture ** 2) * jnp.max(f2)).astype(jnp.float32)
    lr = f_amp[0, 0] * jnp.cos(f_phase[0, 0])
    li = f_amp[0, 0] * jnp.sin(f_phase[0, 0])
    hr_l, hi_l = [], []
    for d in dists:
        phz = 2.0 * jnp.pi * float(d) * jnp.sqrt(arg)
        hr = filt * jnp.cos(phz)
        hi = filt * jnp.sin(phz)
        hr_l.append(hr * lr - hi * li)
        hi_l.append(hr * li + hi * lr)
    return (jnp.stack(hr_l).astype(jnp.float32),
            jnp.stack(hi_l).astype(jnp.float32))


def propagate(ur, ui, Hr, Hi):
    # ur/ui: (N, 1, H, W); Hr/Hi: (D, 2H, 2W).  linear_conv=True (2x pad).
    n, _, h, w = ur.shape
    d = Hr.shape[0]
    hp, wp = 2 * h, 2 * w
    ph, pw = (hp - h) // 2, (wp - w) // 2
    u = (ur + 1j * ui).astype(jnp.complex64)
    u = jnp.pad(u, ((0, 0), (0, 0), (ph, hp - h - ph), (pw, wp - w - pw)))
    # TODO(synk): FFT has no Pallas equivalent; jnp.fft used in plain JAX.
    U = jnp.fft.fftshift(
        jnp.fft.fft2(jnp.fft.ifftshift(u, axes=(-2, -1))), axes=(-2, -1))
    Ur = U.real.astype(jnp.float32)                  # (n, 1, hp, wp)
    Ui = U.imag.astype(jnp.float32)
    Hr4 = Hr.reshape(1, d, hp, wp)
    Hi4 = Hi.reshape(1, d, hp, wp)
    Vr, Vi = bcast_cmul(Ur, Ui, Hr4, Hi4)            # Fourier-plane multiply, no broadcasts
    V = (Vr + 1j * Vi).astype(jnp.complex64)
    v = jnp.fft.fftshift(
        jnp.fft.ifft2(jnp.fft.ifftshift(V, axes=(-2, -1))), axes=(-2, -1))
    v = v[..., ph:ph + h, pw:pw + w]
    return v.real.astype(jnp.float32), v.imag.astype(jnp.float32)


# ----------------------------------------------------------------------------
# CNNpropCNN forward
# ----------------------------------------------------------------------------
def cnnpropcnn_forward(params, field_r, field_i, cfg):
    # --- slm_cnn: Field2Input -> U-Net -> Output2Field ('both' coord) ---
    x = field2input(field_r, field_i,
                    params["slm_latent_amp"], params["slm_latent_phase"])
    y = unet_apply(params["slm_unet"], x)
    slm_r, slm_i = y[:, 0:1], y[:, 1:2]

    # --- prop_slm_wrp: ASM propagation with learned Fourier amp/phase ---
    Hr_w, Hi_w = make_Heff((cfg["prop_dist"],), cfg["wavelength"],
                           cfg["feature_size"], cfg["F_aperture"],
                           params["f_latent_amp"], params["f_latent_phase"])
    wrp_r, wrp_i = propagate(slm_r, slm_i, Hr_w, Hi_w)

    # --- prop_wrp_target: multi-plane propagation (same learned amp/phase) ---
    Hr_t, Hi_t = make_Heff(cfg["prop_dists_from_wrp"], cfg["wavelength"],
                           cfg["feature_size"], cfg["F_aperture"],
                           params["f_latent_amp"], params["f_latent_phase"])
    tgt_r, tgt_i = propagate(wrp_r, wrp_i, Hr_t, Hi_t)      # (n, D, h, w)

    # --- target_cnn (shared over planes) -> amplitude; phase from target field ---
    t_in = field2input(tgt_r, tgt_i, shared_cnn=True)       # (n*D, 4, h, w)
    t_out = unet_apply(params["tgt_unet"], t_in)            # (n*D, 2, h, w)

    planes = t_out.shape[0]
    h, w = t_out.shape[-2:]
    tor, toi = t_out[:, 0], t_out[:, 1]                     # (planes, h, w)
    tr3 = tgt_r.reshape(planes, h, w)
    ti3 = tgt_i.reshape(planes, h, w)
    out_r, out_i = _ew_call(_recombine_kernel, [tor, toi, tr3, ti3], 2)
    return jnp.squeeze(out_r + 1j * out_i)


def init_params(key, cfg):
    h, w = cfg["slm_res"]
    k_slm, k_tgt = jax.random.split(key)
    fh, fw = 2 * h, 2 * w
    g = create_gaussian((fh, fw), sigma=0.0002 / cfg["wavelength"])
    g = jnp.clip(g / jnp.max(g), 0.0, cfg["f_amp_init_th"]) / cfg["f_amp_init_th"]
    return dict(
        slm_latent_amp=jnp.ones((1, 1, h, w), jnp.float32),
        slm_latent_phase=jnp.zeros((1, 1, h, w), jnp.float32),
        f_latent_amp=g.reshape(1, 1, fh, fw).astype(jnp.float32),
        f_latent_phase=jnp.zeros((1, 1, fh, fw), jnp.float32),
        slm_unet=init_unet_params(k_slm, 4, 2, cfg["num_downs"],
                                  cfg["nf0"], cfg["max_channels"]),
        tgt_unet=init_unet_params(k_tgt, 4, 2, cfg["num_downs"],
                                  cfg["nf0"], cfg["max_channels"]),
    )


if __name__ == "__main__":
    cfg = dict(
        slm_res=(16, 16),
        wavelength=520e-9,
        feature_size=(6.4e-6, 6.4e-6),
        prop_dist=10e-3,
        prop_dists_from_wrp=(-1e-3, 1e-3),   # 2 target planes
        F_aperture=1.0,
        num_downs=3, nf0=8, max_channels=16,
        f_amp_init_th=0.36,
    )
    key = jax.random.PRNGKey(0)
    kp, kr, ki = jax.random.split(key, 3)
    params = init_params(kp, cfg)

    n, (h, w) = 1, cfg["slm_res"]
    field_r = jax.random.normal(kr, (n, 1, h, w), jnp.float32)
    field_i = jax.random.normal(ki, (n, 1, h, w), jnp.float32)

    fwd = jax.jit(lambda p, fr, fi: cnnpropcnn_forward(p, fr, fi, cfg))
    out = fwd(params, field_r, field_i)
    out = jax.block_until_ready(out)

    assert out.shape == (len(cfg["prop_dists_from_wrp"]), h, w)
    assert bool(jnp.all(jnp.isfinite(out.real))) and bool(jnp.all(jnp.isfinite(out.imag)))
    print("KERNEL_OK")
</pallas_src>

<mosaic_0001>
module attributes {stable_mosaic.version = 11 : i64} {
  func.func @_cmul_kernel(%arg0: i32, %arg1: i32, %arg2: i32, %arg3: memref<1x1x16x16xf32, #tpu.memory_space<vmem>>, %arg4: memref<1x1x16x16xf32, #tpu.memory_space<vmem>>, %arg5: memref<1x1x16x16xf32, #tpu.memory_space<vmem>>, %arg6: memref<1x1x16x16xf32, #tpu.memory_space<vmem>>, %arg7: memref<1x1x16x16xf32, #tpu.memory_space<vmem>>, %arg8: memref<1x1x16x16xf32, #tpu.memory_space<vmem>>) attributes {dimension_semantics = [#tpu.dimension_semantics<parallel>, #tpu.dimension_semantics<parallel>, #tpu.dimension_semantics<parallel>], iteration_bounds = array<i64: 1, 1, 1>, scalar_prefetch = 0 : i64, scratch_operands = 0 : i64, tpu.core_type = #tpu.core_type<tc>, window_params = [{transform_indices = @transform_0, window_bounds = array<i64: 1, 1, 16, 16>}, {transform_indices = @transform_1, window_bounds = array<i64: 1, 1, 16, 16>}, {transform_indices = @transform_2, window_bounds = array<i64: 1, 1, 16, 16>}, {transform_indices = @transform_3, window_bounds = array<i64: 1, 1, 16, 16>}, {transform_indices = @transform_4, window_bounds = array<i64: 1, 1, 16, 16>}, {transform_indices = @transform_5, window_bounds = array<i64: 1, 1, 16, 16>}]} {
    %c0 = arith.constant 0 : index
    %c0_0 = arith.constant 0 : index
    %c0_1 = arith.constant 0 : index
    %c0_2 = arith.constant 0 : index
    %0 = vector.load %arg3[%c0, %c0_0, %c0_1, %c0_2] : memref<1x1x16x16xf32, #tpu.memory_space<vmem>>, vector<1x1x16x16xf32>
    %c0_3 = arith.constant 0 : index
    %c0_4 = arith.constant 0 : index
    %c0_5 = arith.constant 0 : index
    %c0_6 = arith.constant 0 : index
    %1 = vector.load %arg4[%c0_3, %c0_4, %c0_5, %c0_6] : memref<1x1x16x16xf32, #tpu.memory_space<vmem>>, vector<1x1x16x16xf32>
    %c0_7 = arith.constant 0 : index
    %c0_8 = arith.constant 0 : index
    %c0_9 = arith.constant 0 : index
    %c0_10 = arith.constant 0 : index
    %2 = vector.load %arg5[%c0_7, %c0_8, %c0_9, %c0_10] : memref<1x1x16x16xf32, #tpu.memory_space<vmem>>, vector<1x1x16x16xf32>
    %c0_11 = arith.constant 0 : index
    %c0_12 = arith.constant 0 : index
    %c0_13 = arith.constant 0 : index
    %c0_14 = arith.constant 0 : index
    %3 = vector.load %arg6[%c0_11, %c0_12, %c0_13, %c0_14] : memref<1x1x16x16xf32, #tpu.memory_space<vmem>>, vector<1x1x16x16xf32>
    %4 = arith.mulf %0, %2 : vector<1x1x16x16xf32>
    %5 = arith.mulf %1, %3 : vector<1x1x16x16xf32>
    %6 = arith.subf %4, %5 : vector<1x1x16x16xf32>
    %c0_15 = arith.constant 0 : index
    %c0_16 = arith.constant 0 : index
    %c0_17 = arith.constant 0 : index
    %c0_18 = arith.constant 0 : index
    %7 = vector.load %arg7[%c0_15, %c0_16, %c0_17, %c0_18] : memref<1x1x16x16xf32, #tpu.memory_space<vmem>>, vector<1x1x16x16xf32>
    tpu.vector_store %arg7[%c0_15, %c0_16, %c0_17, %c0_18], %6 {strides = array<i32>} : memref<1x1x16x16xf32, #tpu.memory_space<vmem>>, vector<1x1x16x16xf32>,
    %8 = arith.mulf %0, %3 : vector<1x1x16x16xf32>
    %9 = arith.mulf %1, %2 : vector<1x1x16x16xf32>
    %10 = arith.addf %8, %9 : vector<1x1x16x16xf32>
    %c0_19 = arith.constant 0 : index
    %c0_20 = arith.constant 0 : index
    %c0_21 = arith.constant 0 : index
    %c0_22 = arith.constant 0 : index
    %11 = vector.load %arg8[%c0_19, %c0_20, %c0_21, %c0_22] : memref<1x1x16x16xf32, #tpu.memory_space<vmem>>, vector<1x1x16x16xf32>
    tpu.vector_store %arg8[%c0_19, %c0_20, %c0_21, %c0_22], %10 {strides = array<i32>} : memref<1x1x16x16xf32, #tpu.memory_space<vmem>>, vector<1x1x16x16xf32>,
    return
  }
  func.func @transform_0(%arg0: i32, %arg1: i32, %arg2: i32) -> (i32, i32, i32, i32) {
    %c0_i32 = arith.constant 0 : i32
    %c0_i32_0 = arith.constant 0 : i32
    %c0_i32_1 = arith.constant 0 : i32
    %c0_i32_2 = arith.constant 0 : i32
    return %c0_i32, %c0_i32_0, %arg2, %c0_i32_1 : i32, i32, i32, i32
  }
  func.func @transform_1(%arg0: i32, %arg1: i32, %arg2: i32) -> (i32, i32, i32, i32) {
    %c0_i32 = arith.constant 0 : i32
    %c0_i32_0 = arith.constant 0 : i32
    %c0_i32_1 = arith.constant 0 : i32
    %c0_i32_2 = arith.constant 0 : i32
    return %c0_i32, %c0_i32_0, %arg2, %c0_i32_1 : i32, i32, i32, i32
  }
  func.func @transform_2(%arg0: i32, %arg1: i32, %arg2: i32) -> (i32, i32, i32, i32) {
    %c0_i32 = arith.constant 0 : i32
    %c0_i32_0 = arith.constant 0 : i32
    %c0_i32_1 = arith.constant 0 : i32
    %c0_i32_2 = arith.constant 0 : i32
    return %c0_i32, %c0_i32_0, %arg2, %c0_i32_1 : i32, i32, i32, i32
  }
  func.func @transform_3(%arg0: i32, %arg1: i32, %arg2: i32) -> (i32, i32, i32, i32) {
    %c0_i32 = arith.constant 0 : i32
    %c0_i32_0 = arith.constant 0 : i32
    %c0_i32_1 = arith.constant 0 : i32
    %c0_i32_2 = arith.constant 0 : i32
    return %c0_i32, %c0_i32_0, %arg2, %c0_i32_1 : i32, i32, i32, i32
  }
  func.func @transform_4(%arg0: i32, %arg1: i32, %arg2: i32) -> (i32, i32, i32, i32) {
    %c0_i32 = arith.constant 0 : i32
    %c0_i32_0 = arith.constant 0 : i32
    return %arg0, %arg1, %arg2, %c0_i32 : i32, i32, i32, i32
  }
  func.func @transform_5(%arg0: i32, %arg1: i32, %arg2: i32) -> (i32, i32, i32, i32) {
    %c0_i32 = arith.constant 0 : i32
    %c0_i32_0 = arith.constant 0 : i32
    return %arg0, %arg1, %arg2, %c0_i32 : i32, i32, i32, i32
  }
}

module attributes {stable_mosaic.version = 11 : i64} {
  func.func @_cabs_kernel(%arg0: i32, %arg1: i32, %arg2: memref<1x16x16xf32, #tpu.memory_space<vmem>>, %arg3: memref<1x16x16xf32, #tpu.memory_space<vmem>>, %arg4: memref<1x16x16xf32, #tpu.memory_space<vmem>>) attributes {dimension_semantics = [#tpu.dimension_semantics<parallel>, #tpu.dimension_semantics<parallel>], iteration_bounds = array<i64: 1, 1>, scalar_prefetch = 0 : i64, scratch_operands = 0 : i64, tpu.core_type = #tpu.core_type<tc>, window_params = [{transform_indices = @transform_0, window_bounds = array<i64: 1, 16, 16>}, {transform_indices = @transform_1, window_bounds = array<i64: 1, 16, 16>}, {transform_indices = @transform_2, window_bounds = array<i64: 1, 16, 16>}]} {
    %c0 = arith.constant 0 : index
    %c0_0 = arith.constant 0 : index
    %c0_1 = arith.constant 0 : index
    %0 = vector.load %arg2[%c0, %c0_0, %c0_1] : memref<1x16x16xf32, #tpu.memory_space<vmem>>, vector<1x16x16xf32>
    %c0_2 = arith.constant 0 : index
    %c0_3 = arith.constant 0 : index
    %c0_4 = arith.constant 0 : index
    %1 = vector.load %arg3[%c0_2, %c0_3, %c0_4] : memref<1x16x16xf32, #tpu.memory_space<vmem>>, vector<1x16x16xf32>
    %2 = arith.mulf %0, %0 : vector<1x16x16xf32>
    %3 = arith.mulf %1, %1 : vector<1x16x16xf32>
    %4 = arith.addf %2, %3 : vector<1x16x16xf32>
    %5 = math.sqrt %4 : vector<1x16x16xf32>
    %c0_5 = arith.constant 0 : index
    %c0_6 = arith.constant 0 : index
    %c0_7 = arith.constant 0 : index
    %6 = vector.load %arg4[%c0_5, %c0_6, %c0_7] : memref<1x16x16xf32, #tpu.memory_space<vmem>>, vector<1x16x16xf32>
    tpu.vector_store %arg4[%c0_5, %c0_6, %c0_7], %5 {strides = array<i32>} : memref<1x16x16xf32, #tpu.memory_space<vmem>>, vector<1x16x16xf32>,
    return
  }
  func.func @transform_0(%arg0: i32, %arg1: i32) -> (i32, i32, i32) {
    %c0_i32 = arith.constant 0 : i32
    %c0_i32_0 = arith.constant 0 : i32
    return %arg0, %arg1, %c0_i32 : i32, i32, i32
  }
  func.func @transform_1(%arg0: i32, %arg1: i32) -> (i32, i32, i32) {
    %c0_i32 = arith.constant 0 : i32
    %c0_i32_0 = arith.constant 0 : i32
    return %arg0, %arg1, %c0_i32 : i32, i32, i32
  }
  func.func @transform_2(%arg0: i32, %arg1: i32) -> (i32, i32, i32) {
    %c0_i32 = arith.constant 0 : i32
    %c0_i32_0 = arith.constant 0 : i32
    return %arg0, %arg1, %c0_i32 : i32, i32, i32
  }
}

module attributes {stable_mosaic.version = 11 : i64} {
  func.func @kernel(%arg0: i32, %arg1: i32, %arg2: i32, %arg3: memref<256x128xbf16, #tpu.memory_space<vmem>>, %arg4: memref<128x128xbf16, #tpu.memory_space<vmem>>, %arg5: memref<1x128xf32, #tpu.memory_space<vmem>>, %arg6: memref<256x128xf32, #tpu.memory_space<vmem>>, %arg7: memref<256x128xf32, #tpu.memory_space<vmem>>) attributes {dimension_semantics = [#tpu.dimension_semantics<parallel>, #tpu.dimension_semantics<parallel>, #tpu.dimension_semantics<arbitrary>], iteration_bounds = array<i64: 1, 1, 1>, scalar_prefetch = 0 : i64, scratch_operands = 1 : i64, tpu.core_type = #tpu.core_type<tc>, window_params = [{transform_indices = @transform_0, window_bounds = array<i64: 256, 128>}, {transform_indices = @transform_1, window_bounds = array<i64: 128, 128>}, {transform_indices = @transform_2, window_bounds = array<i64: 1, 128>}, {transform_indices = @transform_3, window_bounds = array<i64: 256, 128>}]} {
    %c0_i32 = arith.constant 0 : i32
    %0 = arith.cmpi eq, %arg2, %c0_i32 : i32
    %1 = arith.extui %0 : i1 to i32
    %c0_i32_0 = arith.constant 0 : i32
    %2 = arith.cmpi ne, %1, %c0_i32_0 : i32
    scf.if %2 {
      %cst_10 = arith.constant 0.000000e+00 : f32
      %12 = vector.broadcast %cst_10 : f32 to vector<256x128xf32>
      %c0_11 = arith.constant 0 : index
      %c0_12 = arith.constant 0 : index
      %13 = vector.load %arg7[%c0_11, %c0_12] : memref<256x128xf32, #tpu.memory_space<vmem>>, vector<256x128xf32>
      tpu.vector_store %arg7[%c0_11, %c0_12], %12 {strides = array<i32>} : memref<256x128xf32, #tpu.memory_space<vmem>>, vector<256x128xf32>,
    } else {
    }
    %c0 = arith.constant 0 : index
    %c0_1 = arith.constant 0 : index
    %3 = vector.load %arg3[%c0, %c0_1] : memref<256x128xbf16, #tpu.memory_space<vmem>>, vector<256x128xbf16>
    %c0_2 = arith.constant 0 : index
    %c0_3 = arith.constant 0 : index
    %4 = vector.load %arg7[%c0_2, %c0_3] : memref<256x128xf32, #tpu.memory_space<vmem>>, vector<256x128xf32>
    %c0_4 = arith.constant 0 : index
    %c0_5 = arith.constant 0 : index
    %5 = vector.load %arg4[%c0_4, %c0_5] : memref<128x128xbf16, #tpu.memory_space<vmem>>, vector<128x128xbf16>
    %cst = arith.constant dense<0.000000e+00> : vector<256x128xf32>
    %6 = tpu.matmul %3, %5, %cst {dimension_numbers = #tpu.dot_dimension_numbers<[1], [0], [0], [1], [0, 0, 1, 1], [], []>} : vector<256x128xbf16>, vector<128x128xbf16>, vector<256x128xf32> -> vector<256x128xf32>
    %7 = arith.addf %4, %6 : vector<256x128xf32>
    %c0_6 = arith.constant 0 : index
    %c0_7 = arith.constant 0 : index
    %8 = vector.load %arg7[%c0_6, %c0_7] : memref<256x128xf32, #tpu.memory_space<vmem>>, vector<256x128xf32>
    tpu.vector_store %arg7[%c0_6, %c0_7], %7 {strides = array<i32>} : memref<256x128xf32, #tpu.memory_space<vmem>>, vector<256x128xf32>,
    %c0_i32_8 = arith.constant 0 : i32
    %9 = arith.cmpi eq, %arg2, %c0_i32_8 : i32
    %10 = arith.extui %9 : i1 to i32
    %c0_i32_9 = arith.constant 0 : i32
    %11 = arith.cmpi ne, %10, %c0_i32_9 : i32
    scf.if %11 {
      %c0_10 = arith.constant 0 : index
      %c0_11 = arith.constant 0 : index
      %12 = vector.load %arg7[%c0_10, %c0_11] : memref<256x128xf32, #tpu.memory_space<vmem>>, vector<256x128xf32>
      %c0_12 = arith.constant 0 : index
      %c0_13 = arith.constant 0 : index
      %13 = vector.load %arg5[%c0_12, %c0_13] : memref<1x128xf32, #tpu.memory_space<vmem>>, vector<1x128xf32>
      %14 = vector.broadcast %13 : vector<1x128xf32> to vector<256x128xf32>
      %15 = arith.addf %12, %14 : vector<256x128xf32>
      %c0_14 = arith.constant 0 : index
      %c0_15 = arith.constant 0 : index
      %16 = vector.load %arg6[%c0_14, %c0_15] : memref<256x128xf32, #tpu.memory_space<vmem>>, vector<256x128xf32>
      tpu.vector_store %arg6[%c0_14, %c0_15], %15 {strides = array<i32>} : memref<256x128xf32, #tpu.memory_space<vmem>>, vector<256x128xf32>,
    } else {
    }
    return
  }
  func.func @transform_0(%arg0: i32, %arg1: i32, %arg2: i32) -> (i32, i32) {
    %c0_i32 = arith.constant 0 : i32
    return %arg0, %arg2 : i32, i32
  }
  func.func @transform_1(%arg0: i32, %arg1: i32, %arg2: i32) -> (i32, i32) {
    %c0_i32 = arith.constant 0 : i32
    return %arg2, %arg1 : i32, i32
  }
  func.func @transform_2(%arg0: i32, %arg1: i32, %arg2: i32) -> (i32, i32) {
    %c0_i32 = arith.constant 0 : i32
    %c0_i32_0 = arith.constant 0 : i32
    return %c0_i32, %arg1 : i32, i32
  }
  func.func @transform_3(%arg0: i32, %arg1: i32, %arg2: i32) -> (i32, i32) {
    %c0_i32 = arith.constant 0 : i32
    return %arg0, %arg1 : i32, i32
  }
}

module attributes {stable_mosaic.version = 11 : i64} {
  func.func @kernel(%arg0: i32, %arg1: i32, %arg2: i32, %arg3: memref<256x128xbf16, #tpu.memory_space<vmem>>, %arg4: memref<128x128xbf16, #tpu.memory_space<vmem>>, %arg5: memref<1x128xf32, #tpu.memory_space<vmem>>, %arg6: memref<256x128xf32, #tpu.memory_space<vmem>>, %arg7: memref<256x128xf32, #tpu.memory_space<vmem>>) attributes {dimension_semantics = [#tpu.dimension_semantics<parallel>, #tpu.dimension_semantics<parallel>, #tpu.dimension_semantics<arbitrary>], iteration_bounds = array<i64: 1, 1, 1>, scalar_prefetch = 0 : i64, scratch_operands = 1 : i64, tpu.core_type = #tpu.core_type<tc>, window_params = [{transform_indices = @transform_0, window_bounds = array<i64: 256, 128>}, {transform_indices = @transform_1, window_bounds = array<i64: 128, 128>}, {transform_indices = @transform_2, window_bounds = array<i64: 1, 128>}, {transform_indices = @transform_3, window_bounds = array<i64: 256, 128>}]} {
    %c0_i32 = arith.constant 0 : i32
    %0 = arith.cmpi eq, %arg2, %c0_i32 : i32
    %1 = arith.extui %0 : i1 to i32
    %c0_i32_0 = arith.constant 0 : i32
    %2 = arith.cmpi ne, %1, %c0_i32_0 : i32
    scf.if %2 {
      %cst_12 = arith.constant 0.000000e+00 : f32
      %17 = vector.broadcast %cst_12 : f32 to vector<256x128xf32>
      %c0_13 = arith.constant 0 : index
      %c0_14 = arith.constant 0 : index
      %18 = vector.load %arg7[%c0_13, %c0_14] : memref<256x128xf32, #tpu.memory_space<vmem>>, vector<256x128xf32>
      tpu.vector_store %arg7[%c0_13, %c0_14], %17 {strides = array<i32>} : memref<256x128xf32, #tpu.memory_space<vmem>>, vector<256x128xf32>,
    } else {
    }
    %c0 = arith.constant 0 : index
    %c0_1 = arith.constant 0 : index
    %3 = vector.load %arg3[%c0, %c0_1] : memref<256x128xbf16, #tpu.memory_space<vmem>>, vector<256x128xbf16>
    %cst = arith.constant 0.000000e+00 : bf16
    %4 = vector.broadcast %cst : bf16 to vector<256x128xbf16>
    %5 = arith.cmpf oge, %3, %4 : vector<256x128xbf16>
    %cst_2 = arith.constant 2.001950e-01 : bf16
    %6 = vector.broadcast %cst_2 : bf16 to vector<256x128xbf16>
    %7 = arith.mulf %6, %3 : vector<256x128xbf16>
    %8 = arith.select %5, %3, %7 : vector<256x128xi1>, vector<256x128xbf16>
    %c0_3 = arith.constant 0 : index
    %c0_4 = arith.constant 0 : index
    %9 = vector.load %arg7[%c0_3, %c0_4] : memref<256x128xf32, #tpu.memory_space<vmem>>, vector<256x128xf32>
    %c0_5 = arith.constant 0 : index
    %c0_6 = arith.constant 0 : index
    %10 = vector.load %arg4[%c0_5, %c0_6] : memref<128x128xbf16, #tpu.memory_space<vmem>>, vector<128x128xbf16>
    %cst_7 = arith.constant dense<0.000000e+00> : vector<256x128xf32>
    %11 = tpu.matmul %8, %10, %cst_7 {dimension_numbers = #tpu.dot_dimension_numbers<[1], [0], [0], [1], [0, 0, 1, 1], [], []>} : vector<256x128xbf16>, vector<128x128xbf16>, vector<256x128xf32> -> vector<256x128xf32>
    %12 = arith.addf %9, %11 : vector<256x128xf32>
    %c0_8 = arith.constant 0 : index
    %c0_9 = arith.constant 0 : index
    %13 = vector.load %arg7[%c0_8, %c0_9] : memref<256x128xf32, #tpu.memory_space<vmem>>, vector<256x128xf32>
    tpu.vector_store %arg7[%c0_8, %c0_9], %12 {strides = array<i32>} : memref<256x128xf32, #tpu.memory_space<vmem>>, vector<256x128xf32>,
    %c0_i32_10 = arith.constant 0 : i32
    %14 = arith.cmpi eq, %arg2, %c0_i32_10 : i32
    %15 = arith.extui %14 : i1 to i32
    %c0_i32_11 = arith.constant 0 : i32
    %16 = arith.cmpi ne, %15, %c0_i32_11 : i32
    scf.if %16 {
      %c0_12 = arith.constant 0 : index
      %c0_13 = arith.constant 0 : index
      %17 = vector.load %arg7[%c0_12, %c0_13] : memref<256x128xf32, #tpu.memory_space<vmem>>, vector<256x128xf32>
      %c0_14 = arith.constant 0 : index
      %c0_15 = arith.constant 0 : index
      %18 = vector.load %arg5[%c0_14, %c0_15] : memref<1x128xf32, #tpu.memory_space<vmem>>, vector<1x128xf32>
      %19 = vector.broadcast %18 : vector<1x128xf32> to vector<256x128xf32>
      %20 = arith.addf %17, %19 : vector<256x128xf32>
      %c0_16 = arith.constant 0 : index
      %c0_17 = arith.constant 0 : index
      %21 = vector.load %arg6[%c0_16, %c0_17] : memref<256x128xf32, #tpu.memory_space<vmem>>, vector<256x128xf32>
      tpu.vector_store %arg6[%c0_16, %c0_17], %20 {strides = array<i32>} : memref<256x128xf32, #tpu.memory_space<vmem>>, vector<256x128xf32>,
    } else {
    }
    return
  }
  func.func @transform_0(%arg0: i32, %arg1: i32, %arg2: i32) -> (i32, i32) {
    %c0_i32 = arith.constant 0 : i32
    return %arg0, %arg2 : i32, i32
  }
  func.func @transform_1(%arg0: i32, %arg1: i32, %arg2: i32) -> (i32, i32) {
    %c0_i32 = arith.constant 0 : i32
    return %arg2, %arg1 : i32, i32
  }
  func.func @transform_2(%arg0: i32, %arg1: i32, %arg2: i32) -> (i32, i32) {
    %c0_i32 = arith.constant 0 : i32
    %c0_i32_0 = arith.constant 0 : i32
    return %c0_i32, %arg1 : i32, i32
  }
  func.func @transform_3(%arg0: i32, %arg1: i32, %arg2: i32) -> (i32, i32) {
    %c0_i32 = arith.constant 0 : i32
    return %arg0, %arg1 : i32, i32
  }
}

module attributes {stable_mosaic.version = 11 : i64} {
  func.func @_inorm_stats_kernel(%arg0: i32, %arg1: i32, %arg2: memref<8x128xf32, #tpu.memory_space<vmem>>, %arg3: memref<8x1xf32, #tpu.memory_space<vmem>>, %arg4: memref<8x1xf32, #tpu.memory_space<vmem>>, %arg5: memref<8x1xf32, #tpu.memory_space<vmem>>, %arg6: memref<8x1xf32, #tpu.memory_space<vmem>>) attributes {dimension_semantics = [#tpu.dimension_semantics<parallel>, #tpu.dimension_semantics<arbitrary>], iteration_bounds = array<i64: 2, 1>, scalar_prefetch = 0 : i64, scratch_operands = 2 : i64, tpu.core_type = #tpu.core_type<tc>, window_params = [{transform_indices = @transform_0, window_bounds = array<i64: 8, 128>}, {transform_indices = @transform_1, window_bounds = array<i64: 8, 1>}, {transform_indices = @transform_2, window_bounds = array<i64: 8, 1>}]} {
    %c0_i32 = arith.constant 0 : i32
    %0 = arith.cmpi eq, %arg1, %c0_i32 : i32
    %1 = arith.extui %0 : i1 to i32
    %c0_i32_0 = arith.constant 0 : i32
    %2 = arith.cmpi ne, %1, %c0_i32_0 : i32
    scf.if %2 {
      %cst_13 = arith.constant 0.000000e+00 : f32
      %18 = vector.broadcast %cst_13 : f32 to vector<8x1xf32>
      %c0_14 = arith.constant 0 : index
      %c0_15 = arith.constant 0 : index
      %19 = vector.load %arg5[%c0_14, %c0_15] : memref<8x1xf32, #tpu.memory_space<vmem>>, vector<8x1xf32>
      tpu.vector_store %arg5[%c0_14, %c0_15], %18 {strides = array<i32>} : memref<8x1xf32, #tpu.memory_space<vmem>>, vector<8x1xf32>,
      %cst_16 = arith.constant 0.000000e+00 : f32
      %20 = vector.broadcast %cst_16 : f32 to vector<8x1xf32>
      %c0_17 = arith.constant 0 : index
      %c0_18 = arith.constant 0 : index
      %21 = vector.load %arg6[%c0_17, %c0_18] : memref<8x1xf32, #tpu.memory_space<vmem>>, vector<8x1xf32>
      tpu.vector_store %arg6[%c0_17, %c0_18], %20 {strides = array<i32>} : memref<8x1xf32, #tpu.memory_space<vmem>>, vector<8x1xf32>,
    } else {
    }
    %c0 = arith.constant 0 : index
    %c0_1 = arith.constant 0 : index
    %3 = vector.load %arg2[%c0, %c0_1] : memref<8x128xf32, #tpu.memory_space<vmem>>, vector<8x128xf32>
    %c0_2 = arith.constant 0 : index
    %c0_3 = arith.constant 0 : index
    %4 = vector.load %arg5[%c0_2, %c0_3] : memref<8x1xf32, #tpu.memory_space<vmem>>, vector<8x1xf32>
    %cst = arith.constant dense<0.000000e+00> : vector<8xf32>
    %5 = vector.multi_reduction <add>, %3, %cst [1] : vector<8x128xf32> to vector<8xf32>
    %6 = vector.shape_cast %5 : vector<8xf32> to vector<8x1xf32>
    %7 = arith.addf %4, %6 : vector<8x1xf32>
    %c0_4 = arith.constant 0 : index
    %c0_5 = arith.constant 0 : index
    %8 = vector.load %arg5[%c0_4, %c0_5] : memref<8x1xf32, #tpu.memory_space<vmem>>, vector<8x1xf32>
    tpu.vector_store %arg5[%c0_4, %c0_5], %7 {strides = array<i32>} : memref<8x1xf32, #tpu.memory_space<vmem>>, vector<8x1xf32>,
    %c0_6 = arith.constant 0 : index
    %c0_7 = arith.constant 0 : index
    %9 = vector.load %arg6[%c0_6, %c0_7] : memref<8x1xf32, #tpu.memory_space<vmem>>, vector<8x1xf32>
    %10 = arith.mulf %3, %3 : vector<8x128xf32>
    %cst_8 = arith.constant dense<0.000000e+00> : vector<8xf32>
    %11 = vector.multi_reduction <add>, %10, %cst_8 [1] : vector<8x128xf32> to vector<8xf32>
    %12 = vector.shape_cast %11 : vector<8xf32> to vector<8x1xf32>
    %13 = arith.addf %9, %12 : vector<8x1xf32>
    %c0_9 = arith.constant 0 : index
    %c0_10 = arith.constant 0 : index
    %14 = vector.load %arg6[%c0_9, %c0_10] : memref<8x1xf32, #tpu.memory_space<vmem>>, vector<8x1xf32>
    tpu.vector_store %arg6[%c0_9, %c0_10], %13 {strides = array<i32>} : memref<8x1xf32, #tpu.memory_space<vmem>>, vector<8x1xf32>,
    %c0_i32_11 = arith.constant 0 : i32
    %15 = arith.cmpi eq, %arg1, %c0_i32_11 : i32
    %16 = arith.extui %15 : i1 to i32
    %c0_i32_12 = arith.constant 0 : i32
    %17 = arith.cmpi ne, %16, %c0_i32_12 : i32
    scf.if %17 {
      %c0_13 = arith.constant 0 : index
      %c0_14 = arith.constant 0 : index
      %18 = vector.load %arg5[%c0_13, %c0_14] : memref<8x1xf32, #tpu.memory_space<vmem>>, vector<8x1xf32>
      %cst_15 = arith.constant 1.600000e+01 : f32
      %19 = vector.broadcast %cst_15 : f32 to vector<8x1xf32>
      %20 = arith.divf %18, %19 : vector<8x1xf32>
      %c0_16 = arith.constant 0 : index
      %c0_17 = arith.constant 0 : index
      %21 = vector.load %arg6[%c0_16, %c0_17] : memref<8x1xf32, #tpu.memory_space<vmem>>, vector<8x1xf32>
      %cst_18 = arith.constant 1.600000e+01 : f32
      %22 = vector.broadcast %cst_18 : f32 to vector<8x1xf32>
      %23 = arith.divf %21, %22 : vector<8x1xf32>
      %24 = arith.mulf %20, %20 : vector<8x1xf32>
      %25 = arith.subf %23, %24 : vector<8x1xf32>
      %c0_19 = arith.constant 0 : index
      %c0_20 = arith.constant 0 : index
      %26 = vector.load %arg3[%c0_19, %c0_20] : memref<8x1xf32, #tpu.memory_space<vmem>>, vector<8x1xf32>
      tpu.vector_store %arg3[%c0_19, %c0_20], %20 {strides = array<i32>} : memref<8x1xf32, #tpu.memory_space<vmem>>, vector<8x1xf32>,
      %cst_21 = arith.constant 0.000000e+00 : f32
      %27 = vector.broadcast %cst_21 : f32 to vector<8x1xf32>
      %28 = arith.maximumf %25, %27 : vector<8x1xf32>
      %cst_22 = arith.constant 9.99999974E-6 : f32
      %29 = vector.broadcast %cst_22 : f32 to vector<8x1xf32>
      %30 = arith.addf %28, %29 : vector<8x1xf32>
      %31 = math.rsqrt %30 : vector<8x1xf32>
      %c0_23 = arith.constant 0 : index
      %c0_24 = arith.constant 0 : index
      %32 = vector.load %arg4[%c0_23, %c0_24] : memref<8x1xf32, #tpu.memory_space<vmem>>, vector<8x1xf32>
      tpu.vector_store %arg4[%c0_23, %c0_24], %31 {strides = array<i32>} : memref<8x1xf32, #tpu.memory_space<vmem>>, vector<8x1xf32>,
    } else {
    }
    return
  }
  func.func @transform_0(%arg0: i32, %arg1: i32) -> (i32, i32) {
    %c0_i32 = arith.constant 0 : i32
    return %arg0, %arg1 : i32, i32
  }
  func.func @transform_1(%arg0: i32, %arg1: i32) -> (i32, i32) {
    %c0_i32 = arith.constant 0 : i32
    %c0_i32_0 = arith.constant 0 : i32
    return %arg0, %c0_i32 : i32, i32
  }
  func.func @transform_2(%arg0: i32, %arg1: i32) -> (i32, i32) {
    %c0_i32 = arith.constant 0 : i32
    %c0_i32_0 = arith.constant 0 : i32
    return %arg0, %c0_i32 : i32, i32
  }
}

module attributes {stable_mosaic.version = 11 : i64} {
  func.func @_inorm_apply_kernel(%arg0: i32, %arg1: i32, %arg2: memref<8x128xf32, #tpu.memory_space<vmem>>, %arg3: memref<8x1xf32, #tpu.memory_space<vmem>>, %arg4: memref<8x1xf32, #tpu.memory_space<vmem>>, %arg5: memref<8x128xf32, #tpu.memory_space<vmem>>) attributes {dimension_semantics = [#tpu.dimension_semantics<parallel>, #tpu.dimension_semantics<parallel>], iteration_bounds = array<i64: 2, 1>, scalar_prefetch = 0 : i64, scratch_operands = 0 : i64, tpu.core_type = #tpu.core_type<tc>, window_params = [{transform_indices = @transform_0, window_bounds = array<i64: 8, 128>}, {transform_indices = @transform_1, window_bounds = array<i64: 8, 1>}, {transform_indices = @transform_2, window_bounds = array<i64: 8, 1>}, {transform_indices = @transform_3, window_bounds = array<i64: 8, 128>}]} {
    %c0 = arith.constant 0 : index
    %c0_0 = arith.constant 0 : index
    %0 = vector.load %arg2[%c0, %c0_0] : memref<8x128xf32, #tpu.memory_space<vmem>>, vector<8x128xf32>
    %c0_1 = arith.constant 0 : index
    %c0_2 = arith.constant 0 : index
    %1 = vector.load %arg3[%c0_1, %c0_2] : memref<8x1xf32, #tpu.memory_space<vmem>>, vector<8x1xf32>
    %2 = vector.broadcast %1 : vector<8x1xf32> to vector<8x128xf32>
    %3 = arith.subf %0, %2 : vector<8x128xf32>
    %c0_3 = arith.constant 0 : index
    %c0_4 = arith.constant 0 : index
    %4 = vector.load %arg4[%c0_3, %c0_4] : memref<8x1xf32, #tpu.memory_space<vmem>>, vector<8x1xf32>
    %5 = vector.broadcast %4 : vector<8x1xf32> to vector<8x128xf32>
    %6 = arith.mulf %3, %5 : vector<8x128xf32>
    %c0_5 = arith.constant 0 : index
    %c0_6 = arith.constant 0 : index
    %7 = vector.load %arg5[%c0_5, %c0_6] : memref<8x128xf32, #tpu.memory_space<vmem>>, vector<8x128xf32>
    tpu.vector_store %arg5[%c0_5, %c0_6], %6 {strides = array<i32>} : memref<8x128xf32, #tpu.memory_space<vmem>>, vector<8x128xf32>,
    return
  }
  func.func @transform_0(%arg0: i32, %arg1: i32) -> (i32, i32) {
    %c0_i32 = arith.constant 0 : i32
    return %arg0, %arg1 : i32, i32
  }
  func.func @transform_1(%arg0: i32, %arg1: i32) -> (i32, i32) {
    %c0_i32 = arith.constant 0 : i32
    %c0_i32_0 = arith.constant 0 : i32
    return %arg0, %c0_i32 : i32, i32
  }
  func.func @transform_2(%arg0: i32, %arg1: i32) -> (i32, i32) {
    %c0_i32 = arith.constant 0 : i32
    %c0_i32_0 = arith.constant 0 : i32
    return %arg0, %c0_i32 : i32, i32
  }
  func.func @transform_3(%arg0: i32, %arg1: i32) -> (i32, i32) {
    %c0_i32 = arith.constant 0 : i32
    return %arg0, %arg1 : i32, i32
  }
}

module attributes {stable_mosaic.version = 11 : i64} {
  func.func @kernel(%arg0: i32, %arg1: i32, %arg2: i32, %arg3: memref<256x128xbf16, #tpu.memory_space<vmem>>, %arg4: memref<128x128xbf16, #tpu.memory_space<vmem>>, %arg5: memref<1x128xf32, #tpu.memory_space<vmem>>, %arg6: memref<256x128xf32, #tpu.memory_space<vmem>>, %arg7: memref<256x128xf32, #tpu.memory_space<vmem>>) attributes {dimension_semantics = [#tpu.dimension_semantics<parallel>, #tpu.dimension_semantics<parallel>, #tpu.dimension_semantics<arbitrary>], iteration_bounds = array<i64: 1, 1, 2>, scalar_prefetch = 0 : i64, scratch_operands = 1 : i64, tpu.core_type = #tpu.core_type<tc>, window_params = [{transform_indices = @transform_0, window_bounds = array<i64: 256, 128>}, {transform_indices = @transform_1, window_bounds = array<i64: 128, 128>}, {transform_indices = @transform_2, window_bounds = array<i64: 1, 128>}, {transform_indices = @transform_3, window_bounds = array<i64: 256, 128>}]} {
    %c0_i32 = arith.constant 0 : i32
    %0 = arith.cmpi eq, %arg2, %c0_i32 : i32
    %1 = arith.extui %0 : i1 to i32
    %c0_i32_0 = arith.constant 0 : i32
    %2 = arith.cmpi ne, %1, %c0_i32_0 : i32
    scf.if %2 {
      %cst_11 = arith.constant 0.000000e+00 : f32
      %17 = vector.broadcast %cst_11 : f32 to vector<256x128xf32>
      %c0_12 = arith.constant 0 : index
      %c0_13 = arith.constant 0 : index
      %18 = vector.load %arg7[%c0_12, %c0_13] : memref<256x128xf32, #tpu.memory_space<vmem>>, vector<256x128xf32>
      tpu.vector_store %arg7[%c0_12, %c0_13], %17 {strides = array<i32>} : memref<256x128xf32, #tpu.memory_space<vmem>>, vector<256x128xf32>,
    } else {
    }
    %c0 = arith.constant 0 : index
    %c0_1 = arith.constant 0 : index
    %3 = vector.load %arg3[%c0, %c0_1] : memref<256x128xbf16, #tpu.memory_space<vmem>>, vector<256x128xbf16>
    %cst = arith.constant 0.000000e+00 : bf16
    %4 = vector.broadcast %cst : bf16 to vector<256x128xbf16>
    %5 = arith.cmpf oge, %3, %4 : vector<256x128xbf16>
    %cst_2 = arith.constant 2.001950e-01 : bf16
    %6 = vector.broadcast %cst_2 : bf16 to vector<256x128xbf16>
    %7 = arith.mulf %6, %3 : vector<256x128xbf16>
    %8 = arith.select %5, %3, %7 : vector<256x128xi1>, vector<256x128xbf16>
    %c0_3 = arith.constant 0 : index
    %c0_4 = arith.constant 0 : index
    %9 = vector.load %arg7[%c0_3, %c0_4] : memref<256x128xf32, #tpu.memory_space<vmem>>, vector<256x128xf32>
    %c0_5 = arith.constant 0 : index
    %c0_6 = arith.constant 0 : index
    %10 = vector.load %arg4[%c0_5, %c0_6] : memref<128x128xbf16, #tpu.memory_space<vmem>>, vector<128x128xbf16>
    %cst_7 = arith.constant dense<0.000000e+00> : vector<256x128xf32>
    %11 = tpu.matmul %8, %10, %cst_7 {dimension_numbers = #tpu.dot_dimension_numbers<[1], [0], [0], [1], [0, 0, 1, 1], [], []>} : vector<256x128xbf16>, vector<128x128xbf16>, vector<256x128xf32> -> vector<256x128xf32>
    %12 = arith.addf %9, %11 : vector<256x128xf32>
    %c0_8 = arith.constant 0 : index
    %c0_9 = arith.constant 0 : index
    %13 = vector.load %arg7[%c0_8, %c0_9] : memref<256x128xf32, #tpu.memory_space<vmem>>, vector<256x128xf32>
    tpu.vector_store %arg7[%c0_8, %c0_9], %12 {strides = array<i32>} : memref<256x128xf32, #tpu.memory_space<vmem>>, vector<256x128xf32>,
    %c1_i32 = arith.constant 1 : i32
    %14 = arith.cmpi eq, %arg2, %c1_i32 : i32
    %15 = arith.extui %14 : i1 to i32
    %c0_i32_10 = arith.constant 0 : i32
    %16 = arith.cmpi ne, %15, %c0_i32_10 : i32
    scf.if %16 {
      %c0_11 = arith.constant 0 : index
      %c0_12 = arith.constant 0 : index
      %17 = vector.load %arg7[%c0_11, %c0_12] : memref<256x128xf32, #tpu.memory_space<vmem>>, vector<256x128xf32>
      %c0_13 = arith.constant 0 : index
      %c0_14 = arith.constant 0 : index
      %18 = vector.load %arg5[%c0_13, %c0_14] : memref<1x128xf32, #tpu.memory_space<vmem>>, vector<1x128xf32>
      %19 = vector.broadcast %18 : vector<1x128xf32> to vector<256x128xf32>
      %20 = arith.addf %17, %19 : vector<256x128xf32>
      %c0_15 = arith.constant 0 : index
      %c0_16 = arith.constant 0 : index
      %21 = vector.load %arg6[%c0_15, %c0_16] : memref<256x128xf32, #tpu.memory_space<vmem>>, vector<256x128xf32>
      tpu.vector_store %arg6[%c0_15, %c0_16], %20 {strides = array<i32>} : memref<256x128xf32, #tpu.memory_space<vmem>>, vector<256x128xf32>,
    } else {
    }
    return
  }
  func.func @transform_0(%arg0: i32, %arg1: i32, %arg2: i32) -> (i32, i32) {
    %c0_i32 = arith.constant 0 : i32
    return %arg0, %arg2 : i32, i32
  }
  func.func @transform_1(%arg0: i32, %arg1: i32, %arg2: i32) -> (i32, i32) {
    %c0_i32 = arith.constant 0 : i32
    return %arg2, %arg1 : i32, i32
  }
  func.func @transform_2(%arg0: i32, %arg1: i32, %arg2: i32) -> (i32, i32) {
    %c0_i32 = arith.constant 0 : i32
    %c0_i32_0 = arith.constant 0 : i32
    return %c0_i32, %arg1 : i32, i32
  }
  func.func @transform_3(%arg0: i32, %arg1: i32, %arg2: i32) -> (i32, i32) {
    %c0_i32 = arith.constant 0 : i32
    return %arg0, %arg1 : i32, i32
  }
}

module attributes {stable_mosaic.version = 11 : i64} {
  func.func @kernel(%arg0: i32, %arg1: i32, %arg2: i32, %arg3: memref<256x128xbf16, #tpu.memory_space<vmem>>, %arg4: memref<128x128xbf16, #tpu.memory_space<vmem>>, %arg5: memref<1x128xf32, #tpu.memory_space<vmem>>, %arg6: memref<256x128xf32, #tpu.memory_space<vmem>>, %arg7: memref<256x128xf32, #tpu.memory_space<vmem>>) attributes {dimension_semantics = [#tpu.dimension_semantics<parallel>, #tpu.dimension_semantics<parallel>, #tpu.dimension_semantics<arbitrary>], iteration_bounds = array<i64: 1, 1, 1>, scalar_prefetch = 0 : i64, scratch_operands = 1 : i64, tpu.core_type = #tpu.core_type<tc>, window_params = [{transform_indices = @transform_0, window_bounds = array<i64: 256, 128>}, {transform_indices = @transform_1, window_bounds = array<i64: 128, 128>}, {transform_indices = @transform_2, window_bounds = array<i64: 1, 128>}, {transform_indices = @transform_3, window_bounds = array<i64: 256, 128>}]} {
    %c0_i32 = arith.constant 0 : i32
    %0 = arith.cmpi eq, %arg2, %c0_i32 : i32
    %1 = arith.extui %0 : i1 to i32
    %c0_i32_0 = arith.constant 0 : i32
    %2 = arith.cmpi ne, %1, %c0_i32_0 : i32
    scf.if %2 {
      %cst_11 = arith.constant 0.000000e+00 : f32
      %14 = vector.broadcast %cst_11 : f32 to vector<256x128xf32>
      %c0_12 = arith.constant 0 : index
      %c0_13 = arith.constant 0 : index
      %15 = vector.load %arg7[%c0_12, %c0_13] : memref<256x128xf32, #tpu.memory_space<vmem>>, vector<256x128xf32>
      tpu.vector_store %arg7[%c0_12, %c0_13], %14 {strides = array<i32>} : memref<256x128xf32, #tpu.memory_space<vmem>>, vector<256x128xf32>,
    } else {
    }
    %c0 = arith.constant 0 : index
    %c0_1 = arith.constant 0 : index
    %3 = vector.load %arg3[%c0, %c0_1] : memref<256x128xbf16, #tpu.memory_space<vmem>>, vector<256x128xbf16>
    %cst = arith.constant 0.000000e+00 : bf16
    %4 = vector.broadcast %cst : bf16 to vector<256x128xbf16>
    %5 = arith.maximumf %3, %4 : vector<256x128xbf16>
    %c0_2 = arith.constant 0 : index
    %c0_3 = arith.constant 0 : index
    %6 = vector.load %arg7[%c0_2, %c0_3] : memref<256x128xf32, #tpu.memory_space<vmem>>, vector<256x128xf32>
    %c0_4 = arith.constant 0 : index
    %c0_5 = arith.constant 0 : index
    %7 = vector.load %arg4[%c0_4, %c0_5] : memref<128x128xbf16, #tpu.memory_space<vmem>>, vector<128x128xbf16>
    %cst_6 = arith.constant dense<0.000000e+00> : vector<256x128xf32>
    %8 = tpu.matmul %5, %7, %cst_6 {dimension_numbers = #tpu.dot_dimension_numbers<[1], [0], [0], [1], [0, 0, 1, 1], [], []>} : vector<256x128xbf16>, vector<128x128xbf16>, vector<256x128xf32> -> vector<256x128xf32>
    %9 = arith.addf %6, %8 : vector<256x128xf32>
    %c0_7 = arith.constant 0 : index
    %c0_8 = arith.constant 0 : index
    %10 = vector.load %arg7[%c0_7, %c0_8] : memref<256x128xf32, #tpu.memory_space<vmem>>, vector<256x128xf32>
    tpu.vector_store %arg7[%c0_7, %c0_8], %9 {strides = array<i32>} : memref<256x128xf32, #tpu.memory_space<vmem>>, vector<256x128xf32>,
    %c0_i32_9 = arith.constant 0 : i32
    %11 = arith.cmpi eq, %arg2, %c0_i32_9 : i32
    %12 = arith.extui %11 : i1 to i32
    %c0_i32_10 = arith.constant 0 : i32
    %13 = arith.cmpi ne, %12, %c0_i32_10 : i32
    scf.if %13 {
      %c0_11 = arith.constant 0 : index
      %c0_12 = arith.constant 0 : index
      %14 = vector.load %arg7[%c0_11, %c0_12] : memref<256x128xf32, #tpu.memory_space<vmem>>, vector<256x128xf32>
      %c0_13 = arith.constant 0 : index
      %c0_14 = arith.constant 0 : index
      %15 = vector.load %arg5[%c0_13, %c0_14] : memref<1x128xf32, #tpu.memory_space<vmem>>, vector<1x128xf32>
      %16 = vector.broadcast %15 : vector<1x128xf32> to vector<256x128xf32>
      %17 = arith.addf %14, %16 : vector<256x128xf32>
      %c0_15 = arith.constant 0 : index
      %c0_16 = arith.constant 0 : index
      %18 = vector.load %arg6[%c0_15, %c0_16] : memref<256x128xf32, #tpu.memory_space<vmem>>, vector<256x128xf32>
      tpu.vector_store %arg6[%c0_15, %c0_16], %17 {strides = array<i32>} : memref<256x128xf32, #tpu.memory_space<vmem>>, vector<256x128xf32>,
    } else {
    }
    return
  }
  func.func @transform_0(%arg0: i32, %arg1: i32, %arg2: i32) -> (i32, i32) {
    %c0_i32 = arith.constant 0 : i32
    return %arg0, %arg2 : i32, i32
  }
  func.func @transform_1(%arg0: i32, %arg1: i32, %arg2: i32) -> (i32, i32) {
    %c0_i32 = arith.constant 0 : i32
    return %arg2, %arg1 : i32, i32
  }
  func.func @transform_2(%arg0: i32, %arg1: i32, %arg2: i32) -> (i32, i32) {
    %c0_i32 = arith.constant 0 : i32
    %c0_i32_0 = arith.constant 0 : i32
    return %c0_i32, %arg1 : i32, i32
  }
  func.func @transform_3(%arg0: i32, %arg1: i32, %arg2: i32) -> (i32, i32) {
    %c0_i32 = arith.constant 0 : i32
    return %arg0, %arg1 : i32, i32
  }
}

module attributes {stable_mosaic.version = 11 : i64} {
  func.func @_inorm_apply_kernel(%arg0: i32, %arg1: i32, %arg2: memref<8x128xf32, #tpu.memory_space<vmem>>, %arg3: memref<8x1xf32, #tpu.memory_space<vmem>>, %arg4: memref<8x1xf32, #tpu.memory_space<vmem>>, %arg5: memref<8x128xf32, #tpu.memory_space<vmem>>) attributes {dimension_semantics = [#tpu.dimension_semantics<parallel>, #tpu.dimension_semantics<parallel>], iteration_bounds = array<i64: 1, 1>, scalar_prefetch = 0 : i64, scratch_operands = 0 : i64, tpu.core_type = #tpu.core_type<tc>, window_params = [{transform_indices = @transform_0, window_bounds = array<i64: 8, 128>}, {transform_indices = @transform_1, window_bounds = array<i64: 8, 1>}, {transform_indices = @transform_2, window_bounds = array<i64: 8, 1>}, {transform_indices = @transform_3, window_bounds = array<i64: 8, 128>}]} {
    %c0 = arith.constant 0 : index
    %c0_0 = arith.constant 0 : index
    %0 = vector.load %arg2[%c0, %c0_0] : memref<8x128xf32, #tpu.memory_space<vmem>>, vector<8x128xf32>
    %c0_1 = arith.constant 0 : index
    %c0_2 = arith.constant 0 : index
    %1 = vector.load %arg3[%c0_1, %c0_2] : memref<8x1xf32, #tpu.memory_space<vmem>>, vector<8x1xf32>
    %2 = vector.broadcast %1 : vector<8x1xf32> to vector<8x128xf32>
    %3 = arith.subf %0, %2 : vector<8x128xf32>
    %c0_3 = arith.constant 0 : index
    %c0_4 = arith.constant 0 : index
    %4 = vector.load %arg4[%c0_3, %c0_4] : memref<8x1xf32, #tpu.memory_space<vmem>>, vector<8x1xf32>
    %5 = vector.broadcast %4 : vector<8x1xf32> to vector<8x128xf32>
    %6 = arith.mulf %3, %5 : vector<8x128xf32>
    %c0_5 = arith.constant 0 : index
    %c0_6 = arith.constant 0 : index
    %7 = vector.load %arg5[%c0_5, %c0_6] : memref<8x128xf32, #tpu.memory_space<vmem>>, vector<8x128xf32>
    tpu.vector_store %arg5[%c0_5, %c0_6], %6 {strides = array<i32>} : memref<8x128xf32, #tpu.memory_space<vmem>>, vector<8x128xf32>,
    return
  }
  func.func @transform_0(%arg0: i32, %arg1: i32) -> (i32, i32) {
    %c0_i32 = arith.constant 0 : i32
    return %arg0, %arg1 : i32, i32
  }
  func.func @transform_1(%arg0: i32, %arg1: i32) -> (i32, i32) {
    %c0_i32 = arith.constant 0 : i32
    %c0_i32_0 = arith.constant 0 : i32
    return %arg0, %c0_i32 : i32, i32
  }
  func.func @transform_2(%arg0: i32, %arg1: i32) -> (i32, i32) {
    %c0_i32 = arith.constant 0 : i32
    %c0_i32_0 = arith.constant 0 : i32
    return %arg0, %c0_i32 : i32, i32
  }
  func.func @transform_3(%arg0: i32, %arg1: i32) -> (i32, i32) {
    %c0_i32 = arith.constant 0 : i32
    return %arg0, %arg1 : i32, i32
  }
}

module attributes {stable_mosaic.version = 11 : i64} {
  func.func @_inorm_stats_kernel(%arg0: i32, %arg1: i32, %arg2: memref<8x128xf32, #tpu.memory_space<vmem>>, %arg3: memref<8x1xf32, #tpu.memory_space<vmem>>, %arg4: memref<8x1xf32, #tpu.memory_space<vmem>>, %arg5: memref<8x1xf32, #tpu.memory_space<vmem>>, %arg6: memref<8x1xf32, #tpu.memory_space<vmem>>) attributes {dimension_semantics = [#tpu.dimension_semantics<parallel>, #tpu.dimension_semantics<arbitrary>], iteration_bounds = array<i64: 1, 1>, scalar_prefetch = 0 : i64, scratch_operands = 2 : i64, tpu.core_type = #tpu.core_type<tc>, window_params = [{transform_indices = @transform_0, window_bounds = array<i64: 8, 128>}, {transform_indices = @transform_1, window_bounds = array<i64: 8, 1>}, {transform_indices = @transform_2, window_bounds = array<i64: 8, 1>}]} {
    %c0_i32 = arith.constant 0 : i32
    %0 = arith.cmpi eq, %arg1, %c0_i32 : i32
    %1 = arith.extui %0 : i1 to i32
    %c0_i32_0 = arith.constant 0 : i32
    %2 = arith.cmpi ne, %1, %c0_i32_0 : i32
    scf.if %2 {
      %cst_13 = arith.constant 0.000000e+00 : f32
      %18 = vector.broadcast %cst_13 : f32 to vector<8x1xf32>
      %c0_14 = arith.constant 0 : index
      %c0_15 = arith.constant 0 : index
      %19 = vector.load %arg5[%c0_14, %c0_15] : memref<8x1xf32, #tpu.memory_space<vmem>>, vector<8x1xf32>
      tpu.vector_store %arg5[%c0_14, %c0_15], %18 {strides = array<i32>} : memref<8x1xf32, #tpu.memory_space<vmem>>, vector<8x1xf32>,
      %cst_16 = arith.constant 0.000000e+00 : f32
      %20 = vector.broadcast %cst_16 : f32 to vector<8x1xf32>
      %c0_17 = arith.constant 0 : index
      %c0_18 = arith.constant 0 : index
      %21 = vector.load %arg6[%c0_17, %c0_18] : memref<8x1xf32, #tpu.memory_space<vmem>>, vector<8x1xf32>
      tpu.vector_store %arg6[%c0_17, %c0_18], %20 {strides = array<i32>} : memref<8x1xf32, #tpu.memory_space<vmem>>, vector<8x1xf32>,
    } else {
    }
    %c0 = arith.constant 0 : index
    %c0_1 = arith.constant 0 : index
    %3 = vector.load %arg2[%c0, %c0_1] : memref<8x128xf32, #tpu.memory_space<vmem>>, vector<8x128xf32>
    %c0_2 = arith.constant 0 : index
    %c0_3 = arith.constant 0 : index
    %4 = vector.load %arg5[%c0_2, %c0_3] : memref<8x1xf32, #tpu.memory_space<vmem>>, vector<8x1xf32>
    %cst = arith.constant dense<0.000000e+00> : vector<8xf32>
    %5 = vector.multi_reduction <add>, %3, %cst [1] : vector<8x128xf32> to vector<8xf32>
    %6 = vector.shape_cast %5 : vector<8xf32> to vector<8x1xf32>
    %7 = arith.addf %4, %6 : vector<8x1xf32>
    %c0_4 = arith.constant 0 : index
    %c0_5 = arith.constant 0 : index
    %8 = vector.load %arg5[%c0_4, %c0_5] : memref<8x1xf32, #tpu.memory_space<vmem>>, vector<8x1xf32>
    tpu.vector_store %arg5[%c0_4, %c0_5], %7 {strides = array<i32>} : memref<8x1xf32, #tpu.memory_space<vmem>>, vector<8x1xf32>,
    %c0_6 = arith.constant 0 : index
    %c0_7 = arith.constant 0 : index
    %9 = vector.load %arg6[%c0_6, %c0_7] : memref<8x1xf32, #tpu.memory_space<vmem>>, vector<8x1xf32>
    %10 = arith.mulf %3, %3 : vector<8x128xf32>
    %cst_8 = arith.constant dense<0.000000e+00> : vector<8xf32>
    %11 = vector.multi_reduction <add>, %10, %cst_8 [1] : vector<8x128xf32> to vector<8xf32>
    %12 = vector.shape_cast %11 : vector<8xf32> to vector<8x1xf32>
    %13 = arith.addf %9, %12 : vector<8x1xf32>
    %c0_9 = arith.constant 0 : index
    %c0_10 = arith.constant 0 : index
    %14 = vector.load %arg6[%c0_9, %c0_10] : memref<8x1xf32, #tpu.memory_space<vmem>>, vector<8x1xf32>
    tpu.vector_store %arg6[%c0_9, %c0_10], %13 {strides = array<i32>} : memref<8x1xf32, #tpu.memory_space<vmem>>, vector<8x1xf32>,
    %c0_i32_11 = arith.constant 0 : i32
    %15 = arith.cmpi eq, %arg1, %c0_i32_11 : i32
    %16 = arith.extui %15 : i1 to i32
    %c0_i32_12 = arith.constant 0 : i32
    %17 = arith.cmpi ne, %16, %c0_i32_12 : i32
    scf.if %17 {
      %c0_13 = arith.constant 0 : index
      %c0_14 = arith.constant 0 : index
      %18 = vector.load %arg5[%c0_13, %c0_14] : memref<8x1xf32, #tpu.memory_space<vmem>>, vector<8x1xf32>
      %cst_15 = arith.constant 6.400000e+01 : f32
      %19 = vector.broadcast %cst_15 : f32 to vector<8x1xf32>
      %20 = arith.divf %18, %19 : vector<8x1xf32>
      %c0_16 = arith.constant 0 : index
      %c0_17 = arith.constant 0 : index
      %21 = vector.load %arg6[%c0_16, %c0_17] : memref<8x1xf32, #tpu.memory_space<vmem>>, vector<8x1xf32>
      %cst_18 = arith.constant 6.400000e+01 : f32
      %22 = vector.broadcast %cst_18 : f32 to vector<8x1xf32>
      %23 = arith.divf %21, %22 : vector<8x1xf32>
      %24 = arith.mulf %20, %20 : vector<8x1xf32>
      %25 = arith.subf %23, %24 : vector<8x1xf32>
      %c0_19 = arith.constant 0 : index
      %c0_20 = arith.constant 0 : index
      %26 = vector.load %arg3[%c0_19, %c0_20] : memref<8x1xf32, #tpu.memory_space<vmem>>, vector<8x1xf32>
      tpu.vector_store %arg3[%c0_19, %c0_20], %20 {strides = array<i32>} : memref<8x1xf32, #tpu.memory_space<vmem>>, vector<8x1xf32>,
      %cst_21 = arith.constant 0.000000e+00 : f32
      %27 = vector.broadcast %cst_21 : f32 to vector<8x1xf32>
      %28 = arith.maximumf %25, %27 : vector<8x1xf32>
      %cst_22 = arith.constant 9.99999974E-6 : f32
      %29 = vector.broadcast %cst_22 : f32 to vector<8x1xf32>
      %30 = arith.addf %28, %29 : vector<8x1xf32>
      %31 = math.rsqrt %30 : vector<8x1xf32>
      %c0_23 = arith.constant 0 : index
      %c0_24 = arith.constant 0 : index
      %32 = vector.load %arg4[%c0_23, %c0_24] : memref<8x1xf32, #tpu.memory_space<vmem>>, vector<8x1xf32>
      tpu.vector_store %arg4[%c0_23, %c0_24], %31 {strides = array<i32>} : memref<8x1xf32, #tpu.memory_space<vmem>>, vector<8x1xf32>,
    } else {
    }
    return
  }
  func.func @transform_0(%arg0: i32, %arg1: i32) -> (i32, i32) {
    %c0_i32 = arith.constant 0 : i32
    return %arg0, %arg1 : i32, i32
  }
  func.func @transform_1(%arg0: i32, %arg1: i32) -> (i32, i32) {
    %c0_i32 = arith.constant 0 : i32
    %c0_i32_0 = arith.constant 0 : i32
    return %arg0, %c0_i32 : i32, i32
  }
  func.func @transform_2(%arg0: i32, %arg1: i32) -> (i32, i32) {
    %c0_i32 = arith.constant 0 : i32
    %c0_i32_0 = arith.constant 0 : i32
    return %arg0, %c0_i32 : i32, i32
  }
}

module attributes {stable_mosaic.version = 11 : i64} {
  func.func @_cmul_kernel(%arg0: i32, %arg1: i32, %arg2: i32, %arg3: memref<1x1x32x32xf32, #tpu.memory_space<vmem>>, %arg4: memref<1x1x32x32xf32, #tpu.memory_space<vmem>>, %arg5: memref<1x1x32x32xf32, #tpu.memory_space<vmem>>, %arg6: memref<1x1x32x32xf32, #tpu.memory_space<vmem>>, %arg7: memref<1x1x32x32xf32, #tpu.memory_space<vmem>>, %arg8: memref<1x1x32x32xf32, #tpu.memory_space<vmem>>) attributes {dimension_semantics = [#tpu.dimension_semantics<parallel>, #tpu.dimension_semantics<parallel>, #tpu.dimension_semantics<parallel>], iteration_bounds = array<i64: 1, 1, 1>, scalar_prefetch = 0 : i64, scratch_operands = 0 : i64, tpu.core_type = #tpu.core_type<tc>, window_params = [{transform_indices = @transform_0, window_bounds = array<i64: 1, 1, 32, 32>}, {transform_indices = @transform_1, window_bounds = array<i64: 1, 1, 32, 32>}, {transform_indices = @transform_2, window_bounds = array<i64: 1, 1, 32, 32>}, {transform_indices = @transform_3, window_bounds = array<i64: 1, 1, 32, 32>}, {transform_indices = @transform_4, window_bounds = array<i64: 1, 1, 32, 32>}, {transform_indices = @transform_5, window_bounds = array<i64: 1, 1, 32, 32>}]} {
    %c0 = arith.constant 0 : index
    %c0_0 = arith.constant 0 : index
    %c0_1 = arith.constant 0 : index
    %c0_2 = arith.constant 0 : index
    %0 = vector.load %arg3[%c0, %c0_0, %c0_1, %c0_2] : memref<1x1x32x32xf32, #tpu.memory_space<vmem>>, vector<1x1x32x32xf32>
    %c0_3 = arith.constant 0 : index
    %c0_4 = arith.constant 0 : index
    %c0_5 = arith.constant 0 : index
    %c0_6 = arith.constant 0 : index
    %1 = vector.load %arg4[%c0_3, %c0_4, %c0_5, %c0_6] : memref<1x1x32x32xf32, #tpu.memory_space<vmem>>, vector<1x1x32x32xf32>
    %c0_7 = arith.constant 0 : index
    %c0_8 = arith.constant 0 : index
    %c0_9 = arith.constant 0 : index
    %c0_10 = arith.constant 0 : index
    %2 = vector.load %arg5[%c0_7, %c0_8, %c0_9, %c0_10] : memref<1x1x32x32xf32, #tpu.memory_space<vmem>>, vector<1x1x32x32xf32>
    %c0_11 = arith.constant 0 : index
    %c0_12 = arith.constant 0 : index
    %c0_13 = arith.constant 0 : index
    %c0_14 = arith.constant 0 : index
    %3 = vector.load %arg6[%c0_11, %c0_12, %c0_13, %c0_14] : memref<1x1x32x32xf32, #tpu.memory_space<vmem>>, vector<1x1x32x32xf32>
    %4 = arith.mulf %0, %2 : vector<1x1x32x32xf32>
    %5 = arith.mulf %1, %3 : vector<1x1x32x32xf32>
    %6 = arith.subf %4, %5 : vector<1x1x32x32xf32>
    %c0_15 = arith.constant 0 : index
    %c0_16 = arith.constant 0 : index
    %c0_17 = arith.constant 0 : index
    %c0_18 = arith.constant 0 : index
    %7 = vector.load %arg7[%c0_15, %c0_16, %c0_17, %c0_18] : memref<1x1x32x32xf32, #tpu.memory_space<vmem>>, vector<1x1x32x32xf32>
    tpu.vector_store %arg7[%c0_15, %c0_16, %c0_17, %c0_18], %6 {strides = array<i32>} : memref<1x1x32x32xf32, #tpu.memory_space<vmem>>, vector<1x1x32x32xf32>,
    %8 = arith.mulf %0, %3 : vector<1x1x32x32xf32>
    %9 = arith.mulf %1, %2 : vector<1x1x32x32xf32>
    %10 = arith.addf %8, %9 : vector<1x1x32x32xf32>
    %c0_19 = arith.constant 0 : index
    %c0_20 = arith.constant 0 : index
    %c0_21 = arith.constant 0 : index
    %c0_22 = arith.constant 0 : index
    %11 = vector.load %arg8[%c0_19, %c0_20, %c0_21, %c0_22] : memref<1x1x32x32xf32, #tpu.memory_space<vmem>>, vector<1x1x32x32xf32>
    tpu.vector_store %arg8[%c0_19, %c0_20, %c0_21, %c0_22], %10 {strides = array<i32>} : memref<1x1x32x32xf32, #tpu.memory_space<vmem>>, vector<1x1x32x32xf32>,
    return
  }
  func.func @transform_0(%arg0: i32, %arg1: i32, %arg2: i32) -> (i32, i32, i32, i32) {
    %c0_i32 = arith.constant 0 : i32
    %c0_i32_0 = arith.constant 0 : i32
    %c0_i32_1 = arith.constant 0 : i32
    %c0_i32_2 = arith.constant 0 : i32
    return %c0_i32, %c0_i32_0, %arg2, %c0_i32_1 : i32, i32, i32, i32
  }
  func.func @transform_1(%arg0: i32, %arg1: i32, %arg2: i32) -> (i32, i32, i32, i32) {
    %c0_i32 = arith.constant 0 : i32
    %c0_i32_0 = arith.constant 0 : i32
    %c0_i32_1 = arith.constant 0 : i32
    %c0_i32_2 = arith.constant 0 : i32
    return %c0_i32, %c0_i32_0, %arg2, %c0_i32_1 : i32, i32, i32, i32
  }
  func.func @transform_2(%arg0: i32, %arg1: i32, %arg2: i32) -> (i32, i32, i32, i32) {
    %c0_i32 = arith.constant 0 : i32
    %c0_i32_0 = arith.constant 0 : i32
    %c0_i32_1 = arith.constant 0 : i32
    %c0_i32_2 = arith.constant 0 : i32
    return %c0_i32, %c0_i32_0, %arg2, %c0_i32_1 : i32, i32, i32, i32
  }
  func.func @transform_3(%arg0: i32, %arg1: i32, %arg2: i32) -> (i32, i32, i32, i32) {
    %c0_i32 = arith.constant 0 : i32
    %c0_i32_0 = arith.constant 0 : i32
    %c0_i32_1 = arith.constant 0 : i32
    %c0_i32_2 = arith.constant 0 : i32
    return %c0_i32, %c0_i32_0, %arg2, %c0_i32_1 : i32, i32, i32, i32
  }
  func.func @transform_4(%arg0: i32, %arg1: i32, %arg2: i32) -> (i32, i32, i32, i32) {
    %c0_i32 = arith.constant 0 : i32
    %c0_i32_0 = arith.constant 0 : i32
    return %arg0, %arg1, %arg2, %c0_i32 : i32, i32, i32, i32
  }
  func.func @transform_5(%arg0: i32, %arg1: i32, %arg2: i32) -> (i32, i32, i32, i32) {
    %c0_i32 = arith.constant 0 : i32
    %c0_i32_0 = arith.constant 0 : i32
    return %arg0, %arg1, %arg2, %c0_i32 : i32, i32, i32, i32
  }
}

module attributes {stable_mosaic.version = 11 : i64} {
  func.func @_cmul_kernel(%arg0: i32, %arg1: i32, %arg2: i32, %arg3: memref<1x1x32x32xf32, #tpu.memory_space<vmem>>, %arg4: memref<1x1x32x32xf32, #tpu.memory_space<vmem>>, %arg5: memref<1x1x32x32xf32, #tpu.memory_space<vmem>>, %arg6: memref<1x1x32x32xf32, #tpu.memory_space<vmem>>, %arg7: memref<1x1x32x32xf32, #tpu.memory_space<vmem>>, %arg8: memref<1x1x32x32xf32, #tpu.memory_space<vmem>>) attributes {dimension_semantics = [#tpu.dimension_semantics<parallel>, #tpu.dimension_semantics<parallel>, #tpu.dimension_semantics<parallel>], iteration_bounds = array<i64: 1, 2, 1>, scalar_prefetch = 0 : i64, scratch_operands = 0 : i64, tpu.core_type = #tpu.core_type<tc>, window_params = [{transform_indices = @transform_0, window_bounds = array<i64: 1, 1, 32, 32>}, {transform_indices = @transform_1, window_bounds = array<i64: 1, 1, 32, 32>}, {transform_indices = @transform_2, window_bounds = array<i64: 1, 1, 32, 32>}, {transform_indices = @transform_3, window_bounds = array<i64: 1, 1, 32, 32>}, {transform_indices = @transform_4, window_bounds = array<i64: 1, 1, 32, 32>}, {transform_indices = @transform_5, window_bounds = array<i64: 1, 1, 32, 32>}]} {
    %c0 = arith.constant 0 : index
    %c0_0 = arith.constant 0 : index
    %c0_1 = arith.constant 0 : index
    %c0_2 = arith.constant 0 : index
    %0 = vector.load %arg3[%c0, %c0_0, %c0_1, %c0_2] : memref<1x1x32x32xf32, #tpu.memory_space<vmem>>, vector<1x1x32x32xf32>
    %c0_3 = arith.constant 0 : index
    %c0_4 = arith.constant 0 : index
    %c0_5 = arith.constant 0 : index
    %c0_6 = arith.constant 0 : index
    %1 = vector.load %arg4[%c0_3, %c0_4, %c0_5, %c0_6] : memref<1x1x32x32xf32, #tpu.memory_space<vmem>>, vector<1x1x32x32xf32>
    %c0_7 = arith.constant 0 : index
    %c0_8 = arith.constant 0 : index
    %c0_9 = arith.constant 0 : index
    %c0_10 = arith.constant 0 : index
    %2 = vector.load %arg5[%c0_7, %c0_8, %c0_9, %c0_10] : memref<1x1x32x32xf32, #tpu.memory_space<vmem>>, vector<1x1x32x32xf32>
    %c0_11 = arith.constant 0 : index
    %c0_12 = arith.constant 0 : index
    %c0_13 = arith.constant 0 : index
    %c0_14 = arith.constant 0 : index
    %3 = vector.load %arg6[%c0_11, %c0_12, %c0_13, %c0_14] : memref<1x1x32x32xf32, #tpu.memory_space<vmem>>, vector<1x1x32x32xf32>
    %4 = arith.mulf %0, %2 : vector<1x1x32x32xf32>
    %5 = arith.mulf %1, %3 : vector<1x1x32x32xf32>
    %6 = arith.subf %4, %5 : vector<1x1x32x32xf32>
    %c0_15 = arith.constant 0 : index
    %c0_16 = arith.constant 0 : index
    %c0_17 = arith.constant 0 : index
    %c0_18 = arith.constant 0 : index
    %7 = vector.load %arg7[%c0_15, %c0_16, %c0_17, %c0_18] : memref<1x1x32x32xf32, #tpu.memory_space<vmem>>, vector<1x1x32x32xf32>
    tpu.vector_store %arg7[%c0_15, %c0_16, %c0_17, %c0_18], %6 {strides = array<i32>} : memref<1x1x32x32xf32, #tpu.memory_space<vmem>>, vector<1x1x32x32xf32>,
    %8 = arith.mulf %0, %3 : vector<1x1x32x32xf32>
    %9 = arith.mulf %1, %2 : vector<1x1x32x32xf32>
    %10 = arith.addf %8, %9 : vector<1x1x32x32xf32>
    %c0_19 = arith.constant 0 : index
    %c0_20 = arith.constant 0 : index
    %c0_21 = arith.constant 0 : index
    %c0_22 = arith.constant 0 : index
    %11 = vector.load %arg8[%c0_19, %c0_20, %c0_21, %c0_22] : memref<1x1x32x32xf32, #tpu.memory_space<vmem>>, vector<1x1x32x32xf32>
    tpu.vector_store %arg8[%c0_19, %c0_20, %c0_21, %c0_22], %10 {strides = array<i32>} : memref<1x1x32x32xf32, #tpu.memory_space<vmem>>, vector<1x1x32x32xf32>,
    return
  }
  func.func @transform_0(%arg0: i32, %arg1: i32, %arg2: i32) -> (i32, i32, i32, i32) {
    %c0_i32 = arith.constant 0 : i32
    %c0_i32_0 = arith.constant 0 : i32
    %c0_i32_1 = arith.constant 0 : i32
    %c0_i32_2 = arith.constant 0 : i32
    return %c0_i32, %c0_i32_0, %arg2, %c0_i32_1 : i32, i32, i32, i32
  }
  func.func @transform_1(%arg0: i32, %arg1: i32, %arg2: i32) -> (i32, i32, i32, i32) {
    %c0_i32 = arith.constant 0 : i32
    %c0_i32_0 = arith.constant 0 : i32
    %c0_i32_1 = arith.constant 0 : i32
    %c0_i32_2 = arith.constant 0 : i32
    return %c0_i32, %c0_i32_0, %arg2, %c0_i32_1 : i32, i32, i32, i32
  }
  func.func @transform_2(%arg0: i32, %arg1: i32, %arg2: i32) -> (i32, i32, i32, i32) {
    %c0_i32 = arith.constant 0 : i32
    %c0_i32_0 = arith.constant 0 : i32
    %c0_i32_1 = arith.constant 0 : i32
    return %c0_i32, %arg1, %arg2, %c0_i32_0 : i32, i32, i32, i32
  }
  func.func @transform_3(%arg0: i32, %arg1: i32, %arg2: i32) -> (i32, i32, i32, i32) {
    %c0_i32 = arith.constant 0 : i32
    %c0_i32_0 = arith.constant 0 : i32
    %c0_i32_1 = arith.constant 0 : i32
    return %c0_i32, %arg1, %arg2, %c0_i32_0 : i32, i32, i32, i32
  }
  func.func @transform_4(%arg0: i32, %arg1: i32, %arg2: i32) -> (i32, i32, i32, i32) {
    %c0_i32 = arith.constant 0 : i32
    %c0_i32_0 = arith.constant 0 : i32
    return %arg0, %arg1, %arg2, %c0_i32 : i32, i32, i32, i32
  }
  func.func @transform_5(%arg0: i32, %arg1: i32, %arg2: i32) -> (i32, i32, i32, i32) {
    %c0_i32 = arith.constant 0 : i32
    %c0_i32_0 = arith.constant 0 : i32
    return %arg0, %arg1, %arg2, %c0_i32 : i32, i32, i32, i32
  }
}

module attributes {stable_mosaic.version = 11 : i64} {
  func.func @_cabs_kernel(%arg0: i32, %arg1: i32, %arg2: memref<1x16x16xf32, #tpu.memory_space<vmem>>, %arg3: memref<1x16x16xf32, #tpu.memory_space<vmem>>, %arg4: memref<1x16x16xf32, #tpu.memory_space<vmem>>) attributes {dimension_semantics = [#tpu.dimension_semantics<parallel>, #tpu.dimension_semantics<parallel>], iteration_bounds = array<i64: 2, 1>, scalar_prefetch = 0 : i64, scratch_operands = 0 : i64, tpu.core_type = #tpu.core_type<tc>, window_params = [{transform_indices = @transform_0, window_bounds = array<i64: 1, 16, 16>}, {transform_indices = @transform_1, window_bounds = array<i64: 1, 16, 16>}, {transform_indices = @transform_2, window_bounds = array<i64: 1, 16, 16>}]} {
    %c0 = arith.constant 0 : index
    %c0_0 = arith.constant 0 : index
    %c0_1 = arith.constant 0 : index
    %0 = vector.load %arg2[%c0, %c0_0, %c0_1] : memref<1x16x16xf32, #tpu.memory_space<vmem>>, vector<1x16x16xf32>
    %c0_2 = arith.constant 0 : index
    %c0_3 = arith.constant 0 : index
    %c0_4 = arith.constant 0 : index
    %1 = vector.load %arg3[%c0_2, %c0_3, %c0_4] : memref<1x16x16xf32, #tpu.memory_space<vmem>>, vector<1x16x16xf32>
    %2 = arith.mulf %0, %0 : vector<1x16x16xf32>
    %3 = arith.mulf %1, %1 : vector<1x16x16xf32>
    %4 = arith.addf %2, %3 : vector<1x16x16xf32>
    %5 = math.sqrt %4 : vector<1x16x16xf32>
    %c0_5 = arith.constant 0 : index
    %c0_6 = arith.constant 0 : index
    %c0_7 = arith.constant 0 : index
    %6 = vector.load %arg4[%c0_5, %c0_6, %c0_7] : memref<1x16x16xf32, #tpu.memory_space<vmem>>, vector<1x16x16xf32>
    tpu.vector_store %arg4[%c0_5, %c0_6, %c0_7], %5 {strides = array<i32>} : memref<1x16x16xf32, #tpu.memory_space<vmem>>, vector<1x16x16xf32>,
    return
  }
  func.func @transform_0(%arg0: i32, %arg1: i32) -> (i32, i32, i32) {
    %c0_i32 = arith.constant 0 : i32
    %c0_i32_0 = arith.constant 0 : i32
    return %arg0, %arg1, %c0_i32 : i32, i32, i32
  }
  func.func @transform_1(%arg0: i32, %arg1: i32) -> (i32, i32, i32) {
    %c0_i32 = arith.constant 0 : i32
    %c0_i32_0 = arith.constant 0 : i32
    return %arg0, %arg1, %c0_i32 : i32, i32, i32
  }
  func.func @transform_2(%arg0: i32, %arg1: i32) -> (i32, i32, i32) {
    %c0_i32 = arith.constant 0 : i32
    %c0_i32_0 = arith.constant 0 : i32
    return %arg0, %arg1, %c0_i32 : i32, i32, i32
  }
}

module attributes {stable_mosaic.version = 11 : i64} {
  func.func @_inorm_stats_kernel(%arg0: i32, %arg1: i32, %arg2: memref<8x128xf32, #tpu.memory_space<vmem>>, %arg3: memref<8x1xf32, #tpu.memory_space<vmem>>, %arg4: memref<8x1xf32, #tpu.memory_space<vmem>>, %arg5: memref<8x1xf32, #tpu.memory_space<vmem>>, %arg6: memref<8x1xf32, #tpu.memory_space<vmem>>) attributes {dimension_semantics = [#tpu.dimension_semantics<parallel>, #tpu.dimension_semantics<arbitrary>], iteration_bounds = array<i64: 4, 1>, scalar_prefetch = 0 : i64, scratch_operands = 2 : i64, tpu.core_type = #tpu.core_type<tc>, window_params = [{transform_indices = @transform_0, window_bounds = array<i64: 8, 128>}, {transform_indices = @transform_1, window_bounds = array<i64: 8, 1>}, {transform_indices = @transform_2, window_bounds = array<i64: 8, 1>}]} {
    %c0_i32 = arith.constant 0 : i32
    %0 = arith.cmpi eq, %arg1, %c0_i32 : i32
    %1 = arith.extui %0 : i1 to i32
    %c0_i32_0 = arith.constant 0 : i32
    %2 = arith.cmpi ne, %1, %c0_i32_0 : i32
    scf.if %2 {
      %cst_13 = arith.constant 0.000000e+00 : f32
      %18 = vector.broadcast %cst_13 : f32 to vector<8x1xf32>
      %c0_14 = arith.constant 0 : index
      %c0_15 = arith.constant 0 : index
      %19 = vector.load %arg5[%c0_14, %c0_15] : memref<8x1xf32, #tpu.memory_space<vmem>>, vector<8x1xf32>
      tpu.vector_store %arg5[%c0_14, %c0_15], %18 {strides = array<i32>} : memref<8x1xf32, #tpu.memory_space<vmem>>, vector<8x1xf32>,
      %cst_16 = arith.constant 0.000000e+00 : f32
      %20 = vector.broadcast %cst_16 : f32 to vector<8x1xf32>
      %c0_17 = arith.constant 0 : index
      %c0_18 = arith.constant 0 : index
      %21 = vector.load %arg6[%c0_17, %c0_18] : memref<8x1xf32, #tpu.memory_space<vmem>>, vector<8x1xf32>
      tpu.vector_store %arg6[%c0_17, %c0_18], %20 {strides = array<i32>} : memref<8x1xf32, #tpu.memory_space<vmem>>, vector<8x1xf32>,
    } else {
    }
    %c0 = arith.constant 0 : index
    %c0_1 = arith.constant 0 : index
    %3 = vector.load %arg2[%c0, %c0_1] : memref<8x128xf32, #tpu.memory_space<vmem>>, vector<8x128xf32>
    %c0_2 = arith.constant 0 : index
    %c0_3 = arith.constant 0 : index
    %4 = vector.load %arg5[%c0_2, %c0_3] : memref<8x1xf32, #tpu.memory_space<vmem>>, vector<8x1xf32>
    %cst = arith.constant dense<0.000000e+00> : vector<8xf32>
    %5 = vector.multi_reduction <add>, %3, %cst [1] : vector<8x128xf32> to vector<8xf32>
    %6 = vector.shape_cast %5 : vector<8xf32> to vector<8x1xf32>
    %7 = arith.addf %4, %6 : vector<8x1xf32>
    %c0_4 = arith.constant 0 : index
    %c0_5 = arith.constant 0 : index
    %8 = vector.load %arg5[%c0_4, %c0_5] : memref<8x1xf32, #tpu.memory_space<vmem>>, vector<8x1xf32>
    tpu.vector_store %arg5[%c0_4, %c0_5], %7 {strides = array<i32>} : memref<8x1xf32, #tpu.memory_space<vmem>>, vector<8x1xf32>,
    %c0_6 = arith.constant 0 : index
    %c0_7 = arith.constant 0 : index
    %9 = vector.load %arg6[%c0_6, %c0_7] : memref<8x1xf32, #tpu.memory_space<vmem>>, vector<8x1xf32>
    %10 = arith.mulf %3, %3 : vector<8x128xf32>
    %cst_8 = arith.constant dense<0.000000e+00> : vector<8xf32>
    %11 = vector.multi_reduction <add>, %10, %cst_8 [1] : vector<8x128xf32> to vector<8xf32>
    %12 = vector.shape_cast %11 : vector<8xf32> to vector<8x1xf32>
    %13 = arith.addf %9, %12 : vector<8x1xf32>
    %c0_9 = arith.constant 0 : index
    %c0_10 = arith.constant 0 : index
    %14 = vector.load %arg6[%c0_9, %c0_10] : memref<8x1xf32, #tpu.memory_space<vmem>>, vector<8x1xf32>
    tpu.vector_store %arg6[%c0_9, %c0_10], %13 {strides = array<i32>} : memref<8x1xf32, #tpu.memory_space<vmem>>, vector<8x1xf32>,
    %c0_i32_11 = arith.constant 0 : i32
    %15 = arith.cmpi eq, %arg1, %c0_i32_11 : i32
    %16 = arith.extui %15 : i1 to i32
    %c0_i32_12 = arith.constant 0 : i32
    %17 = arith.cmpi ne, %16, %c0_i32_12 : i32
    scf.if %17 {
      %c0_13 = arith.constant 0 : index
      %c0_14 = arith.constant 0 : index
      %18 = vector.load %arg5[%c0_13, %c0_14] : memref<8x1xf32, #tpu.memory_space<vmem>>, vector<8x1xf32>
      %cst_15 = arith.constant 1.600000e+01 : f32
      %19 = vector.broadcast %cst_15 : f32 to vector<8x1xf32>
      %20 = arith.divf %18, %19 : vector<8x1xf32>
      %c0_16 = arith.constant 0 : index
      %c0_17 = arith.constant 0 : index
      %21 = vector.load %arg6[%c0_16, %c0_17] : memref<8x1xf32, #tpu.memory_space<vmem>>, vector<8x1xf32>
      %cst_18 = arith.constant 1.600000e+01 : f32
      %22 = vector.broadcast %cst_18 : f32 to vector<8x1xf32>
      %23 = arith.divf %21, %22 : vector<8x1xf32>
      %24 = arith.mulf %20, %20 : vector<8x1xf32>
      %25 = arith.subf %23, %24 : vector<8x1xf32>
      %c0_19 = arith.constant 0 : index
      %c0_20 = arith.constant 0 : index
      %26 = vector.load %arg3[%c0_19, %c0_20] : memref<8x1xf32, #tpu.memory_space<vmem>>, vector<8x1xf32>
      tpu.vector_store %arg3[%c0_19, %c0_20], %20 {strides = array<i32>} : memref<8x1xf32, #tpu.memory_space<vmem>>, vector<8x1xf32>,
      %cst_21 = arith.constant 0.000000e+00 : f32
      %27 = vector.broadcast %cst_21 : f32 to vector<8x1xf32>
      %28 = arith.maximumf %25, %27 : vector<8x1xf32>
      %cst_22 = arith.constant 9.99999974E-6 : f32
      %29 = vector.broadcast %cst_22 : f32 to vector<8x1xf32>
      %30 = arith.addf %28, %29 : vector<8x1xf32>
      %31 = math.rsqrt %30 : vector<8x1xf32>
      %c0_23 = arith.constant 0 : index
      %c0_24 = arith.constant 0 : index
      %32 = vector.load %arg4[%c0_23, %c0_24] : memref<8x1xf32, #tpu.memory_space<vmem>>, vector<8x1xf32>
      tpu.vector_store %arg4[%c0_23, %c0_24], %31 {strides = array<i32>} : memref<8x1xf32, #tpu.memory_space<vmem>>, vector<8x1xf32>,
    } else {
    }
    return
  }
  func.func @transform_0(%arg0: i32, %arg1: i32) -> (i32, i32) {
    %c0_i32 = arith.constant 0 : i32
    return %arg0, %arg1 : i32, i32
  }
  func.func @transform_1(%arg0: i32, %arg1: i32) -> (i32, i32) {
    %c0_i32 = arith.constant 0 : i32
    %c0_i32_0 = arith.constant 0 : i32
    return %arg0, %c0_i32 : i32, i32
  }
  func.func @transform_2(%arg0: i32, %arg1: i32) -> (i32, i32) {
    %c0_i32 = arith.constant 0 : i32
    %c0_i32_0 = arith.constant 0 : i32
    return %arg0, %c0_i32 : i32, i32
  }
}

module attributes {stable_mosaic.version = 11 : i64} {
  func.func @_inorm_apply_kernel(%arg0: i32, %arg1: i32, %arg2: memref<8x128xf32, #tpu.memory_space<vmem>>, %arg3: memref<8x1xf32, #tpu.memory_space<vmem>>, %arg4: memref<8x1xf32, #tpu.memory_space<vmem>>, %arg5: memref<8x128xf32, #tpu.memory_space<vmem>>) attributes {dimension_semantics = [#tpu.dimension_semantics<parallel>, #tpu.dimension_semantics<parallel>], iteration_bounds = array<i64: 4, 1>, scalar_prefetch = 0 : i64, scratch_operands = 0 : i64, tpu.core_type = #tpu.core_type<tc>, window_params = [{transform_indices = @transform_0, window_bounds = array<i64: 8, 128>}, {transform_indices = @transform_1, window_bounds = array<i64: 8, 1>}, {transform_indices = @transform_2, window_bounds = array<i64: 8, 1>}, {transform_indices = @transform_3, window_bounds = array<i64: 8, 128>}]} {
    %c0 = arith.constant 0 : index
    %c0_0 = arith.constant 0 : index
    %0 = vector.load %arg2[%c0, %c0_0] : memref<8x128xf32, #tpu.memory_space<vmem>>, vector<8x128xf32>
    %c0_1 = arith.constant 0 : index
    %c0_2 = arith.constant 0 : index
    %1 = vector.load %arg3[%c0_1, %c0_2] : memref<8x1xf32, #tpu.memory_space<vmem>>, vector<8x1xf32>
    %2 = vector.broadcast %1 : vector<8x1xf32> to vector<8x128xf32>
    %3 = arith.subf %0, %2 : vector<8x128xf32>
    %c0_3 = arith.constant 0 : index
    %c0_4 = arith.constant 0 : index
    %4 = vector.load %arg4[%c0_3, %c0_4] : memref<8x1xf32, #tpu.memory_space<vmem>>, vector<8x1xf32>
    %5 = vector.broadcast %4 : vector<8x1xf32> to vector<8x128xf32>
    %6 = arith.mulf %3, %5 : vector<8x128xf32>
    %c0_5 = arith.constant 0 : index
    %c0_6 = arith.constant 0 : index
    %7 = vector.load %arg5[%c0_5, %c0_6] : memref<8x128xf32, #tpu.memory_space<vmem>>, vector<8x128xf32>
    tpu.vector_store %arg5[%c0_5, %c0_6], %6 {strides = array<i32>} : memref<8x128xf32, #tpu.memory_space<vmem>>, vector<8x128xf32>,
    return
  }
  func.func @transform_0(%arg0: i32, %arg1: i32) -> (i32, i32) {
    %c0_i32 = arith.constant 0 : i32
    return %arg0, %arg1 : i32, i32
  }
  func.func @transform_1(%arg0: i32, %arg1: i32) -> (i32, i32) {
    %c0_i32 = arith.constant 0 : i32
    %c0_i32_0 = arith.constant 0 : i32
    return %arg0, %c0_i32 : i32, i32
  }
  func.func @transform_2(%arg0: i32, %arg1: i32) -> (i32, i32) {
    %c0_i32 = arith.constant 0 : i32
    %c0_i32_0 = arith.constant 0 : i32
    return %arg0, %c0_i32 : i32, i32
  }
  func.func @transform_3(%arg0: i32, %arg1: i32) -> (i32, i32) {
    %c0_i32 = arith.constant 0 : i32
    return %arg0, %arg1 : i32, i32
  }
}

module attributes {stable_mosaic.version = 11 : i64} {
  func.func @_inorm_stats_kernel(%arg0: i32, %arg1: i32, %arg2: memref<8x128xf32, #tpu.memory_space<vmem>>, %arg3: memref<8x1xf32, #tpu.memory_space<vmem>>, %arg4: memref<8x1xf32, #tpu.memory_space<vmem>>, %arg5: memref<8x1xf32, #tpu.memory_space<vmem>>, %arg6: memref<8x1xf32, #tpu.memory_space<vmem>>) attributes {dimension_semantics = [#tpu.dimension_semantics<parallel>, #tpu.dimension_semantics<arbitrary>], iteration_bounds = array<i64: 2, 1>, scalar_prefetch = 0 : i64, scratch_operands = 2 : i64, tpu.core_type = #tpu.core_type<tc>, window_params = [{transform_indices = @transform_0, window_bounds = array<i64: 8, 128>}, {transform_indices = @transform_1, window_bounds = array<i64: 8, 1>}, {transform_indices = @transform_2, window_bounds = array<i64: 8, 1>}]} {
    %c0_i32 = arith.constant 0 : i32
    %0 = arith.cmpi eq, %arg1, %c0_i32 : i32
    %1 = arith.extui %0 : i1 to i32
    %c0_i32_0 = arith.constant 0 : i32
    %2 = arith.cmpi ne, %1, %c0_i32_0 : i32
    scf.if %2 {
      %cst_13 = arith.constant 0.000000e+00 : f32
      %18 = vector.broadcast %cst_13 : f32 to vector<8x1xf32>
      %c0_14 = arith.constant 0 : index
      %c0_15 = arith.constant 0 : index
      %19 = vector.load %arg5[%c0_14, %c0_15] : memref<8x1xf32, #tpu.memory_space<vmem>>, vector<8x1xf32>
      tpu.vector_store %arg5[%c0_14, %c0_15], %18 {strides = array<i32>} : memref<8x1xf32, #tpu.memory_space<vmem>>, vector<8x1xf32>,
      %cst_16 = arith.constant 0.000000e+00 : f32
      %20 = vector.broadcast %cst_16 : f32 to vector<8x1xf32>
      %c0_17 = arith.constant 0 : index
      %c0_18 = arith.constant 0 : index
      %21 = vector.load %arg6[%c0_17, %c0_18] : memref<8x1xf32, #tpu.memory_space<vmem>>, vector<8x1xf32>
      tpu.vector_store %arg6[%c0_17, %c0_18], %20 {strides = array<i32>} : memref<8x1xf32, #tpu.memory_space<vmem>>, vector<8x1xf32>,
    } else {
    }
    %c0 = arith.constant 0 : index
    %c0_1 = arith.constant 0 : index
    %3 = vector.load %arg2[%c0, %c0_1] : memref<8x128xf32, #tpu.memory_space<vmem>>, vector<8x128xf32>
    %c0_2 = arith.constant 0 : index
    %c0_3 = arith.constant 0 : index
    %4 = vector.load %arg5[%c0_2, %c0_3] : memref<8x1xf32, #tpu.memory_space<vmem>>, vector<8x1xf32>
    %cst = arith.constant dense<0.000000e+00> : vector<8xf32>
    %5 = vector.multi_reduction <add>, %3, %cst [1] : vector<8x128xf32> to vector<8xf32>
    %6 = vector.shape_cast %5 : vector<8xf32> to vector<8x1xf32>
    %7 = arith.addf %4, %6 : vector<8x1xf32>
    %c0_4 = arith.constant 0 : index
    %c0_5 = arith.constant 0 : index
    %8 = vector.load %arg5[%c0_4, %c0_5] : memref<8x1xf32, #tpu.memory_space<vmem>>, vector<8x1xf32>
    tpu.vector_store %arg5[%c0_4, %c0_5], %7 {strides = array<i32>} : memref<8x1xf32, #tpu.memory_space<vmem>>, vector<8x1xf32>,
    %c0_6 = arith.constant 0 : index
    %c0_7 = arith.constant 0 : index
    %9 = vector.load %arg6[%c0_6, %c0_7] : memref<8x1xf32, #tpu.memory_space<vmem>>, vector<8x1xf32>
    %10 = arith.mulf %3, %3 : vector<8x128xf32>
    %cst_8 = arith.constant dense<0.000000e+00> : vector<8xf32>
    %11 = vector.multi_reduction <add>, %10, %cst_8 [1] : vector<8x128xf32> to vector<8xf32>
    %12 = vector.shape_cast %11 : vector<8xf32> to vector<8x1xf32>
    %13 = arith.addf %9, %12 : vector<8x1xf32>
    %c0_9 = arith.constant 0 : index
    %c0_10 = arith.constant 0 : index
    %14 = vector.load %arg6[%c0_9, %c0_10] : memref<8x1xf32, #tpu.memory_space<vmem>>, vector<8x1xf32>
    tpu.vector_store %arg6[%c0_9, %c0_10], %13 {strides = array<i32>} : memref<8x1xf32, #tpu.memory_space<vmem>>, vector<8x1xf32>,
    %c0_i32_11 = arith.constant 0 : i32
    %15 = arith.cmpi eq, %arg1, %c0_i32_11 : i32
    %16 = arith.extui %15 : i1 to i32
    %c0_i32_12 = arith.constant 0 : i32
    %17 = arith.cmpi ne, %16, %c0_i32_12 : i32
    scf.if %17 {
      %c0_13 = arith.constant 0 : index
      %c0_14 = arith.constant 0 : index
      %18 = vector.load %arg5[%c0_13, %c0_14] : memref<8x1xf32, #tpu.memory_space<vmem>>, vector<8x1xf32>
      %cst_15 = arith.constant 6.400000e+01 : f32
      %19 = vector.broadcast %cst_15 : f32 to vector<8x1xf32>
      %20 = arith.divf %18, %19 : vector<8x1xf32>
      %c0_16 = arith.constant 0 : index
      %c0_17 = arith.constant 0 : index
      %21 = vector.load %arg6[%c0_16, %c0_17] : memref<8x1xf32, #tpu.memory_space<vmem>>, vector<8x1xf32>
      %cst_18 = arith.constant 6.400000e+01 : f32
      %22 = vector.broadcast %cst_18 : f32 to vector<8x1xf32>
      %23 = arith.divf %21, %22 : vector<8x1xf32>
      %24 = arith.mulf %20, %20 : vector<8x1xf32>
      %25 = arith.subf %23, %24 : vector<8x1xf32>
      %c0_19 = arith.constant 0 : index
      %c0_20 = arith.constant 0 : index
      %26 = vector.load %arg3[%c0_19, %c0_20] : memref<8x1xf32, #tpu.memory_space<vmem>>, vector<8x1xf32>
      tpu.vector_store %arg3[%c0_19, %c0_20], %20 {strides = array<i32>} : memref<8x1xf32, #tpu.memory_space<vmem>>, vector<8x1xf32>,
      %cst_21 = arith.constant 0.000000e+00 : f32
      %27 = vector.broadcast %cst_21 : f32 to vector<8x1xf32>
      %28 = arith.maximumf %25, %27 : vector<8x1xf32>
      %cst_22 = arith.constant 9.99999974E-6 : f32
      %29 = vector.broadcast %cst_22 : f32 to vector<8x1xf32>
      %30 = arith.addf %28, %29 : vector<8x1xf32>
      %31 = math.rsqrt %30 : vector<8x1xf32>
      %c0_23 = arith.constant 0 : index
      %c0_24 = arith.constant 0 : index
      %32 = vector.load %arg4[%c0_23, %c0_24] : memref<8x1xf32, #tpu.memory_space<vmem>>, vector<8x1xf32>
      tpu.vector_store %arg4[%c0_23, %c0_24], %31 {strides = array<i32>} : memref<8x1xf32, #tpu.memory_space<vmem>>, vector<8x1xf32>,
    } else {
    }
    return
  }
  func.func @transform_0(%arg0: i32, %arg1: i32) -> (i32, i32) {
    %c0_i32 = arith.constant 0 : i32
    return %arg0, %arg1 : i32, i32
  }
  func.func @transform_1(%arg0: i32, %arg1: i32) -> (i32, i32) {
    %c0_i32 = arith.constant 0 : i32
    %c0_i32_0 = arith.constant 0 : i32
    return %arg0, %c0_i32 : i32, i32
  }
  func.func @transform_2(%arg0: i32, %arg1: i32) -> (i32, i32) {
    %c0_i32 = arith.constant 0 : i32
    %c0_i32_0 = arith.constant 0 : i32
    return %arg0, %c0_i32 : i32, i32
  }
}

module attributes {stable_mosaic.version = 11 : i64} {
  func.func @_recombine_kernel(%arg0: i32, %arg1: i32, %arg2: memref<1x16x16xf32, #tpu.memory_space<vmem>>, %arg3: memref<1x16x16xf32, #tpu.memory_space<vmem>>, %arg4: memref<1x16x16xf32, #tpu.memory_space<vmem>>, %arg5: memref<1x16x16xf32, #tpu.memory_space<vmem>>, %arg6: memref<1x16x16xf32, #tpu.memory_space<vmem>>, %arg7: memref<1x16x16xf32, #tpu.memory_space<vmem>>) attributes {dimension_semantics = [#tpu.dimension_semantics<parallel>, #tpu.dimension_semantics<parallel>], iteration_bounds = array<i64: 2, 1>, scalar_prefetch = 0 : i64, scratch_operands = 0 : i64, tpu.core_type = #tpu.core_type<tc>, window_params = [{transform_indices = @transform_0, window_bounds = array<i64: 1, 16, 16>}, {transform_indices = @transform_1, window_bounds = array<i64: 1, 16, 16>}, {transform_indices = @transform_2, window_bounds = array<i64: 1, 16, 16>}, {transform_indices = @transform_3, window_bounds = array<i64: 1, 16, 16>}, {transform_indices = @transform_4, window_bounds = array<i64: 1, 16, 16>}, {transform_indices = @transform_5, window_bounds = array<i64: 1, 16, 16>}]} {
    %c0 = arith.constant 0 : index
    %c0_0 = arith.constant 0 : index
    %c0_1 = arith.constant 0 : index
    %0 = vector.load %arg2[%c0, %c0_0, %c0_1] : memref<1x16x16xf32, #tpu.memory_space<vmem>>, vector<1x16x16xf32>
    %c0_2 = arith.constant 0 : index
    %c0_3 = arith.constant 0 : index
    %c0_4 = arith.constant 0 : index
    %1 = vector.load %arg3[%c0_2, %c0_3, %c0_4] : memref<1x16x16xf32, #tpu.memory_space<vmem>>, vector<1x16x16xf32>
    %c0_5 = arith.constant 0 : index
    %c0_6 = arith.constant 0 : index
    %c0_7 = arith.constant 0 : index
    %2 = vector.load %arg4[%c0_5, %c0_6, %c0_7] : memref<1x16x16xf32, #tpu.memory_space<vmem>>, vector<1x16x16xf32>
    %c0_8 = arith.constant 0 : index
    %c0_9 = arith.constant 0 : index
    %c0_10 = arith.constant 0 : index
    %3 = vector.load %arg5[%c0_8, %c0_9, %c0_10] : memref<1x16x16xf32, #tpu.memory_space<vmem>>, vector<1x16x16xf32>
    %4 = arith.mulf %0, %0 : vector<1x16x16xf32>
    %5 = arith.mulf %1, %1 : vector<1x16x16xf32>
    %6 = arith.addf %4, %5 : vector<1x16x16xf32>
    %7 = math.sqrt %6 : vector<1x16x16xf32>
    %8 = arith.mulf %2, %2 : vector<1x16x16xf32>
    %9 = arith.mulf %3, %3 : vector<1x16x16xf32>
    %10 = arith.addf %8, %9 : vector<1x16x16xf32>
    %11 = math.sqrt %10 : vector<1x16x16xf32>
    %cst = arith.constant 0.000000e+00 : f32
    %12 = vector.broadcast %cst : f32 to vector<1x16x16xf32>
    %13 = arith.cmpf ogt, %11, %12 : vector<1x16x16xf32>
    %cst_11 = arith.constant 1.000000e+00 : f32
    %14 = vector.broadcast %cst_11 : f32 to vector<1x16x16xf32>
    %15 = arith.divf %14, %11 : vector<1x16x16xf32>
    %cst_12 = arith.constant 0.000000e+00 : f32
    %16 = vector.broadcast %cst_12 : f32 to vector<1x16x16xf32>
    %17 = arith.select %13, %15, %16 : vector<1x16x16xi1>, vector<1x16x16xf32>
    %cst_13 = arith.constant 0.000000e+00 : f32
    %18 = vector.broadcast %cst_13 : f32 to vector<1x16x16xf32>
    %19 = arith.cmpf ogt, %11, %18 : vector<1x16x16xf32>
    %20 = arith.mulf %2, %17 : vector<1x16x16xf32>
    %cst_14 = arith.constant 1.000000e+00 : f32
    %21 = vector.broadcast %cst_14 : f32 to vector<1x16x16xf32>
    %22 = arith.select %19, %20, %21 : vector<1x16x16xi1>, vector<1x16x16xf32>
    %23 = arith.mulf %3, %17 : vector<1x16x16xf32>
    %24 = arith.mulf %7, %22 : vector<1x16x16xf32>
    %c0_15 = arith.constant 0 : index
    %c0_16 = arith.constant 0 : index
    %c0_17 = arith.constant 0 : index
    %25 = vector.load %arg6[%c0_15, %c0_16, %c0_17] : memref<1x16x16xf32, #tpu.memory_space<vmem>>, vector<1x16x16xf32>
    tpu.vector_store %arg6[%c0_15, %c0_16, %c0_17], %24 {strides = array<i32>} : memref<1x16x16xf32, #tpu.memory_space<vmem>>, vector<1x16x16xf32>,
    %26 = arith.mulf %7, %23 : vector<1x16x16xf32>
    %c0_18 = arith.constant 0 : index
    %c0_19 = arith.constant 0 : index
    %c0_20 = arith.constant 0 : index
    %27 = vector.load %arg7[%c0_18, %c0_19, %c0_20] : memref<1x16x16xf32, #tpu.memory_space<vmem>>, vector<1x16x16xf32>
    tpu.vector_store %arg7[%c0_18, %c0_19, %c0_20], %26 {strides = array<i32>} : memref<1x16x16xf32, #tpu.memory_space<vmem>>, vector<1x16x16xf32>,
    return
  }
  func.func @transform_0(%arg0: i32, %arg1: i32) -> (i32, i32, i32) {
    %c0_i32 = arith.constant 0 : i32
    %c0_i32_0 = arith.constant 0 : i32
    return %arg0, %arg1, %c0_i32 : i32, i32, i32
  }
  func.func @transform_1(%arg0: i32, %arg1: i32) -> (i32, i32, i32) {
    %c0_i32 = arith.constant 0 : i32
    %c0_i32_0 = arith.constant 0 : i32
    return %arg0, %arg1, %c0_i32 : i32, i32, i32
  }
  func.func @transform_2(%arg0: i32, %arg1: i32) -> (i32, i32, i32) {
    %c0_i32 = arith.constant 0 : i32
    %c0_i32_0 = arith.constant 0 : i32
    return %arg0, %arg1, %c0_i32 : i32, i32, i32
  }
  func.func @transform_3(%arg0: i32, %arg1: i32) -> (i32, i32, i32) {
    %c0_i32 = arith.constant 0 : i32
    %c0_i32_0 = arith.constant 0 : i32
    return %arg0, %arg1, %c0_i32 : i32, i32, i32
  }
  func.func @transform_4(%arg0: i32, %arg1: i32) -> (i32, i32, i32) {
    %c0_i32 = arith.constant 0 : i32
    %c0_i32_0 = arith.constant 0 : i32
    return %arg0, %arg1, %c0_i32 : i32, i32, i32
  }
  func.func @transform_5(%arg0: i32, %arg1: i32) -> (i32, i32, i32) {
    %c0_i32 = arith.constant 0 : i32
    %c0_i32_0 = arith.constant 0 : i32
    return %arg0, %arg1, %c0_i32 : i32, i32, i32
  }
}

</mosaic_0001>

<llo_original>
// kernel: atan2.2
$region0: #{atan2.2}
  #allocation0 [shape = 's32[1]{0}', space=sflag, size = 0x4, scoped, tag = 'scoped memory for atan2.2']
  %s0 = inlined_call_operand.vmem [shape: f32[1,1,16,16], index: 0, kind: input, shape index: {}]
  %s1 = inlined_call_operand.vmem [shape: f32[1,1,16,16], index: 1, kind: input, shape index: {}]
  %s2 = inlined_call_operand.vmem [shape: bf16[1,1,16,16], index: 2, kind: output, shape index: {}]
  %v3 = vld [vmem:[%s0] sm:$0xff]
  %v4 = vld [vmem:[%s1] sm:$0xff]
  %v5 = vand.u32 2147483647, %v4
  %v6 = vand.u32 2147483647, %v3
  %v7 = vmin.f32 %v5, %v6
  %v8 = vmax.f32 %v5, %v6
  %v9 = vrcp.pop %v8
  %v10 = vmul.f32 %v7, %v9
  %v11 = vmul.f32 %v10, %v10
  %v12 = vmul.f32 0.002785687, %v11
  %v13 = vadd.f32 %v12, -0.015866
  %v14 = vmul.f32 %v13, %v11
  %v15 = vadd.f32 %v14, 0.04247222
  %v16 = vmul.f32 %v15, %v11
  %v17 = vadd.f32 %v16, -0.074975304
  %v18 = vmul.f32 %v17, %v11
  %v19 = vadd.f32 %v18, 0.1064488
  %v20 = vmul.f32 %v19, %v11
  %v21 = vadd.f32 %v20, -0.14207031
  %v22 = vmul.f32 %v21, %v11
  %v23 = vadd.f32 %v22, 0.19993454
  %v24 = vmul.f32 %v23, %v11
  %v25 = vadd.f32 %v24, -0.33333147
  %v26 = vmul.f32 %v25, %v11
  %v27 = vmul.f32 %v26, %v10
  %v28 = vadd.f32 %v27, %v10
  %vm29 = vcmp.gt.f32.partialorder %v6, %v5
  %v30 = vsub.f32 1.5707964, %v28
  %v31 = vsel %vm29, %v30, %v28
  %vm32 = vcmp.lt.f32.partialorder %v4, 0.0
  %v33 = vsub.f32 3.1415927, %v31
  %v34 = vsel %vm32, %v33, %v31
  %vm35 = vcmp.lt.s32.totalorder %v4, 0
  %v36 = vsel %vm35, 3.1415927, 0.0
  %vm37 = vcmp.eq.f32.partialorder %v3, 0.0
  %v38 = vsel %vm37, %v36, %v34
  %vm39 = vcmp.ne.f32.partialorder %v4, %v4
  %vm40 = vcmp.ne.f32.partialorder %v3, %v3
  %vm41 = vmor %vm39, %vm40
  %v42 = vsel %vm41, nan, %v38
  %vm43 = vcmp.lt.f32.partialorder %v4, 0.0
  %v44 = vsel %vm43, 2.3561945, 0.7853982
  %vm45 = vcmp.eq.s32.totalorder %v5, inf
  %vm46 = vcmp.eq.s32.totalorder %v6, inf
  %vm47 = vmand %vm45, %vm46
  %v48 = vsel %vm47, %v44, %v42
  %v49 = vand.u32 2147483647, %v48
  %v50 = vand.u32 %v3, 2147483648
  %v51 = vor.u32 %v49, %v50
  %v52 = vpack.c.bf16 0.0, %v51
  %53 = vst [vmem:[%s2] sm:$0xf] %v52
  %s54 = scalar_lea.vmem %s0, 8
  %v55 = vld [vmem:[%s54] sm:$0xff]
  %s56 = scalar_lea.vmem %s1, 8
  %v57 = vld [vmem:[%s56] sm:$0xff]
  %v58 = vand.u32 2147483647, %v57
  %v59 = vand.u32 2147483647, %v55
  %v60 = vmin.f32 %v58, %v59
  %v61 = vmax.f32 %v58, %v59
  %v62 = vrcp.pop %v61
  %v63 = vmul.f32 %v60, %v62
  %v64 = vmul.f32 %v63, %v63
  %v65 = vmul.f32 0.002785687, %v64
  %v66 = vadd.f32 %v65, -0.015866
  %v67 = vmul.f32 %v66, %v64
  %v68 = vadd.f32 %v67, 0.04247222
  %v69 = vmul.f32 %v68, %v64
  %v70 = vadd.f32 %v69, -0.074975304
  %v71 = vmul.f32 %v70, %v64
  %v72 = vadd.f32 %v71, 0.1064488
  %v73 = vmul.f32 %v72, %v64
  %v74 = vadd.f32 %v73, -0.14207031
  %v75 = vmul.f32 %v74, %v64
  %v76 = vadd.f32 %v75, 0.19993454
  %v77 = vmul.f32 %v76, %v64
  %v78 = vadd.f32 %v77, -0.33333147
  %v79 = vmul.f32 %v78, %v64
  %v80 = vmul.f32 %v79, %v63
  %v81 = vadd.f32 %v80, %v63
  %vm82 = vcmp.gt.f32.partialorder %v59, %v58
  %v83 = vsub.f32 1.5707964, %v81
  %v84 = vsel %vm82, %v83, %v81
  %vm85 = vcmp.lt.f32.partialorder %v57, 0.0
  %v86 = vsub.f32 3.1415927, %v84
  %v87 = vsel %vm85, %v86, %v84
  %vm88 = vcmp.lt.s32.totalorder %v57, 0
  %v89 = vsel %vm88, 3.1415927, 0.0
  %vm90 = vcmp.eq.f32.partialorder %v55, 0.0
  %v91 = vsel %vm90, %v89, %v87
  %vm92 = vcmp.ne.f32.partialorder %v57, %v57
  %vm93 = vcmp.ne.f32.partialorder %v55, %v55
  %vm94 = vmor %vm92, %vm93
  %v95 = vsel %vm94, nan, %v91
  %vm96 = vcmp.lt.f32.partialorder %v57, 0.0
  %v97 = vsel %vm96, 2.3561945, 0.7853982
  %vm98 = vcmp.eq.s32.totalorder %v58, inf
  %vm99 = vcmp.eq.s32.totalorder %v59, inf
  %vm100 = vmand %vm98, %vm99
  %v101 = vsel %vm100, %v97, %v95
  %v102 = vand.u32 2147483647, %v101
  %v103 = vand.u32 %v55, 2147483648
  %v104 = vor.u32 %v102, %v103
  %s105 = scalar_lea.vmem %s2, 4
  %v106 = vpack.c.bf16 0.0, %v104
  %107 = vst [vmem:[%s105] sm:$0xf] %v106

// kernel: _lambda_.48
$region0: #{_lambda_.48}
  #allocation0 [shape = 'u32[]', space=smem, size = 0x4, offset = 0x4, fixed_abs, tag = 'smem constant byte address 0x4 - core index']
  #allocation1 [shape = 'u32[144,128]{1,0:T(1,128)}', space=vmem, size = 0x12000, scoped, tag = 'internal scratch']
  %s0 = inlined_call_operand.vmem [shape: f32[1,1,16,16], index: 0, kind: input, shape index: {}]
  %s1 = inlined_call_operand.vmem [shape: f32[1,1,16,16], index: 1, kind: input, shape index: {}]
  %s2 = inlined_call_operand.vmem [shape: f32[1,1,16,16], index: 2, kind: input, shape index: {}]
  %s3 = inlined_call_operand.vmem [shape: f32[1,1,16,16], index: 3, kind: input, shape index: {}]
  %s4 = inlined_call_operand.vmem [shape: f32[1,1,16,16], index: 4, kind: output, shape index: {0}]
  %s5 = inlined_call_operand.vmem [shape: f32[1,1,16,16], index: 5, kind: output, shape index: {1}]
  %6 = xla_tuple %s4, %s5
  %s7 = sld [smem:[#allocation0]]
  $region34: #{_lambda_.48} parent=0
    _
  %s9 = ssub.s32 1, %s7
  %s10 = scalar_select 0, %s9, %s7
  // Predicated region
  $region2: #{_lambda_.48} parent=0 // pred_check
    _
  $region3: #{_lambda_.48} parent=0 // pred_check_branch
    %12 = sbr.rel (0) target = $region5
  $region4: #{_lambda_.48} parent=0 // pred_region
    _
  $region5: #{_lambda_.48} parent=0 // pred_fallthru
    _
  // Predicated region
  $region6: #{_lambda_.48} parent=0 // pred_check
    _
  $region7: #{_lambda_.48} parent=0 // pred_check_branch
    %14 = sbr.rel (0) target = $region9
  $region8: #{_lambda_.48} parent=0 // pred_region
    _
  $region9: #{_lambda_.48} parent=0 // pred_fallthru
    _
  // Predicated region
  $region10: #{_lambda_.48} parent=0 // pred_check
    _
  $region11: #{_lambda_.48} parent=0 // pred_check_branch
    %16 = sbr.rel (0) target = $region13
  $region12: #{_lambda_.48} parent=0 // pred_region
    _
  $region13: #{_lambda_.48} parent=0 // pred_fallthru
    _
  // Predicated region
  $region14: #{_lambda_.48} parent=0 // pred_check
    _
  $region15: #{_lambda_.48} parent=0 // pred_check_branch
    %18 = sbr.rel (0) target = $region17
  $region16: #{_lambda_.48} parent=0 // pred_region
    _
  $region17: #{_lambda_.48} parent=0 // pred_fallthru
    _
  %v19 = vld [vmem:[%s0] sm:$0xff]
  %v20 = vld [vmem:[%s0 + $0x8] sm:$0xff]
  %v21 = vld [vmem:[%s1] sm:$0xff]
  %v22 = vld [vmem:[%s1 + $0x8] sm:$0xff]
  %v23 = vld [vmem:[%s2] sm:$0xff]
  %v24 = vld [vmem:[%s2 + $0x8] sm:$0xff]
  %v25 = vld [vmem:[%s3] sm:$0xff]
  %v26 = vld [vmem:[%s3 + $0x8] sm:$0xff]
  %v27 = vmul.f32 %v19, %v23
  %v28 = vmul.f32 %v20, %v24
  %v29 = vmul.f32 %v21, %v25
  %v30 = vmul.f32 %v22, %v26
  %v31 = vsub.f32 %v27, %v29
  %v32 = vsub.f32 %v28, %v30
  %vm33 = vcmask 130048
  %34 = vst.msk [vmem:[%s4] sm:$0xff] %vm33, %v31
  %35 = vst.msk [vmem:[%s4 + $0x8] sm:$0xff] %vm33, %v32
  %v36 = vmul.f32 %v19, %v25
  %v37 = vmul.f32 %v20, %v26
  %v38 = vmul.f32 %v21, %v23
  %v39 = vmul.f32 %v22, %v24
  %v40 = vadd.f32 %v36, %v38
  %v41 = vadd.f32 %v37, %v39
  %42 = vst.msk [vmem:[%s5] sm:$0xff] %vm33, %v40
  %43 = vst.msk [vmem:[%s5 + $0x8] sm:$0xff] %vm33, %v41
  // Predicated region
  $region18: #{_lambda_.48} parent=0 // pred_check
    _
  $region19: #{_lambda_.48} parent=0 // pred_check_branch
    %45 = sbr.rel (0) target = $region21
  $region20: #{_lambda_.48} parent=0 // pred_region
    _
  $region21: #{_lambda_.48} parent=0 // pred_fallthru
    _
  // Predicated region
  $region22: #{_lambda_.48} parent=0 // pred_check
    _
  $region23: #{_lambda_.48} parent=0 // pred_check_branch
    %47 = sbr.rel (0) target = $region25
  $region24: #{_lambda_.48} parent=0 // pred_region
    _
  $region25: #{_lambda_.48} parent=0 // pred_fallthru
    _
  // Predicated region
  $region26: #{_lambda_.48} parent=0 // pred_check
    _
  $region27: #{_lambda_.48} parent=0 // pred_check_branch
    %49 = sbr.rel (0) target = $region29
  $region28: #{_lambda_.48} parent=0 // pred_region
    _
  $region29: #{_lambda_.48} parent=0 // pred_fallthru
    _
  // Predicated region
  $region30: #{_lambda_.48} parent=0 // pred_check
    _
  $region31: #{_lambda_.48} parent=0 // pred_check_branch
    %51 = sbr.rel (0) target = $region33
  $region32: #{_lambda_.48} parent=0 // pred_region
    _
  $region33: #{_lambda_.48} parent=0 // pred_fallthru
    _

// kernel: _lambda_.49
$region0: #{_lambda_.49}
  #allocation0 [shape = 'u32[]', space=smem, size = 0x4, offset = 0x4, fixed_abs, tag = 'smem constant byte address 0x4 - core index']
  #allocation1 [shape = 'u32[144,128]{1,0:T(1,128)}', space=vmem, size = 0x12000, scoped, tag = 'internal scratch']
  %s0 = inlined_call_operand.vmem [shape: f32[1,16,16], index: 0, kind: input, shape index: {}]
  %s1 = inlined_call_operand.vmem [shape: f32[1,16,16], index: 1, kind: input, shape index: {}]
  %s2 = inlined_call_operand.vmem [shape: f32[1,16,16], index: 2, kind: output, shape index: {}]
  %s3 = sld [smem:[#allocation0]]
  $region18: #{_lambda_.49} parent=0
    _
  %s5 = ssub.s32 1, %s3
  %s6 = scalar_select 0, %s5, %s3
  // Predicated region
  $region2: #{_lambda_.49} parent=0 // pred_check
    _
  $region3: #{_lambda_.49} parent=0 // pred_check_branch
    %8 = sbr.rel (0) target = $region5
  $region4: #{_lambda_.49} parent=0 // pred_region
    _
  $region5: #{_lambda_.49} parent=0 // pred_fallthru
    _
  // Predicated region
  $region6: #{_lambda_.49} parent=0 // pred_check
    _
  $region7: #{_lambda_.49} parent=0 // pred_check_branch
    %10 = sbr.rel (0) target = $region9
  $region8: #{_lambda_.49} parent=0 // pred_region
    _
  $region9: #{_lambda_.49} parent=0 // pred_fallthru
    _
  %v11 = vld [vmem:[%s0] sm:$0xff]
  %v12 = vld [vmem:[%s0 + $0x8] sm:$0xff]
  %v13 = vld [vmem:[%s1] sm:$0xff]
  %v14 = vld [vmem:[%s1 + $0x8] sm:$0xff]
  %v15 = vmul.f32 %v11, %v11
  %v16 = vmul.f32 %v12, %v12
  %v17 = vmul.f32 %v13, %v13
  %v18 = vmul.f32 %v14, %v14
  %v19 = vadd.f32 %v15, %v17
  %v20 = vadd.f32 %v16, %v18
  %v21 = vrsqrt.pop %v19
  %v22 = vmul.f32 %v19, %v21
  %vm23 = vcmp.eq.f32.partialorder %v19, inf
  %v24 = vsel %vm23, %v19, %v22
  %vm25 = vcmp.eq.f32.partialorder %v19, 0.0
  %v26 = vand.u32 %v19, 2147483648
  %v27 = vsel %vm25, %v26, %v24
  %v28 = vrsqrt.pop %v20
  %v29 = vmul.f32 %v20, %v28
  %vm30 = vcmp.eq.f32.partialorder %v20, inf
  %v31 = vsel %vm30, %v20, %v29
  %vm32 = vcmp.eq.f32.partialorder %v20, 0.0
  %v33 = vand.u32 %v20, 2147483648
  %v34 = vsel %vm32, %v33, %v31
  %vm35 = vcmask 130048
  %36 = vst.msk [vmem:[%s2] sm:$0xff] %vm35, %v27
  %37 = vst.msk [vmem:[%s2 + $0x8] sm:$0xff] %vm35, %v34
  // Predicated region
  $region10: #{_lambda_.49} parent=0 // pred_check
    _
  $region11: #{_lambda_.49} parent=0 // pred_check_branch
    %39 = sbr.rel (0) target = $region13
  $region12: #{_lambda_.49} parent=0 // pred_region
    _
  $region13: #{_lambda_.49} parent=0 // pred_fallthru
    _
  // Predicated region
  $region14: #{_lambda_.49} parent=0 // pred_check
    _
  $region15: #{_lambda_.49} parent=0 // pred_check_branch
    %41 = sbr.rel (0) target = $region17
  $region16: #{_lambda_.49} parent=0 // pred_region
    _
  $region17: #{_lambda_.49} parent=0 // pred_fallthru
    _

// kernel: _lambda_.50
$region0: #{_lambda_.50}
  #allocation0 [shape = 'u32[]', space=smem, size = 0x4, offset = 0x4, fixed_abs, tag = 'smem constant byte address 0x4 - core index']
  #allocation1 [shape = 'u32[144,128]{1,0:T(1,128)}', space=vmem, size = 0x12000, scoped, tag = 'internal scratch']
  #allocation2 [shape = 'f32[256,128]{1,0:T(8,128)}', space=vmem, size = 0x20000, scoped, tag = 'scratch operand']
  %s0 = inlined_call_operand.vmem [shape: bf16[256,128], index: 0, kind: input, shape index: {}]
  %s1 = inlined_call_operand.vmem [shape: bf16[128,128], index: 1, kind: input, shape index: {}]
  %s2 = inlined_call_operand.vmem [shape: f32[1,128], index: 2, kind: input, shape index: {}]
  %s3 = inlined_call_operand.vmem [shape: f32[256,128], index: 3, kind: output, shape index: {}]
  %s4 = sld [smem:[#allocation0]]
  $region30: #{_lambda_.50} parent=0
    _
  %s6 = ssub.s32 1, %s4
  %s7 = scalar_select 0, %s6, %s4
  // Predicated region
  $region2: #{_lambda_.50} parent=0 // pred_check
    _
  $region3: #{_lambda_.50} parent=0 // pred_check_branch
    %9 = sbr.rel (0) target = $region5
  $region4: #{_lambda_.50} parent=0 // pred_region
    _
  $region5: #{_lambda_.50} parent=0 // pred_fallthru
    _
  // Predicated region
  $region6: #{_lambda_.50} parent=0 // pred_check
    _
  $region7: #{_lambda_.50} parent=0 // pred_check_branch
    %11 = sbr.rel (0) target = $region9
  $region8: #{_lambda_.50} parent=0 // pred_region
    _
  $region9: #{_lambda_.50} parent=0 // pred_fallthru
    _
  // Predicated region
  $region10: #{_lambda_.50} parent=0 // pred_check
    _
  $region11: #{_lambda_.50} parent=0 // pred_check_branch
    %13 = sbr.rel (0) target = $region13
  $region12: #{_lambda_.50} parent=0 // pred_region
    _
  $region13: #{_lambda_.50} parent=0 // pred_fallthru
    _
  %p15 = scmp.eq.s32.totalorder 0, 0
  // Predicated region
  $region14: #{_lambda_.50} parent=0 // pred_check
    %p16 = pneg %p15
  $region15: #{_lambda_.50} parent=0 // pred_check_branch
    %18 = sbr.rel (%p16) target = $region17
  $region16: #{_lambda_.50} parent=0 // pred_region
    %19 = vst [vmem:[#allocation2] sm:$0xff] 0.0
    %20 = vst [vmem:[#allocation2 + $0x8] sm:$0xff] 0.0
    %21 = vst [vmem:[#allocation2 + $0x10] sm:$0xff] 0.0
    %22 = vst [vmem:[#allocation2 + $0x18] sm:$0xff] 0.0
    %23 = vst [vmem:[#allocation2 + $0x20] sm:$0xff] 0.0
    %24 = vst [vmem:[#allocation2 + $0x28] sm:$0xff] 0.0
    %25 = vst [vmem:[#allocation2 + $0x30] sm:$0xff] 0.0
    %26 = vst [vmem:[#allocation2 + $0x38] sm:$0xff] 0.0
    %27 = vst [vmem:[#allocation2 + $0x40] sm:$0xff] 0.0
    %28 = vst [vmem:[#allocation2 + $0x48] sm:$0xff] 0.0
    %29 = vst [vmem:[#allocation2 + $0x50] sm:$0xff] 0.0
    %30 = vst [vmem:[#allocation2 + $0x58] sm:$0xff] 0.0
    %31 = vst [vmem:[#allocation2 + $0x60] sm:$0xff] 0.0
    %32 = vst [vmem:[#allocation2 + $0x68] sm:$0xff] 0.0
    %33 = vst [vmem:[#allocation2 + $0x70] sm:$0xff] 0.0
    %34 = vst [vmem:[#allocation2 + $0x78] sm:$0xff] 0.0
    %35 = vst [vmem:[#allocation2 + $0x80] sm:$0xff] 0.0
    %36 = vst [vmem:[#allocation2 + $0x88] sm:$0xff] 0.0
    %37 = vst [vmem:[#allocation2 + $0x90] sm:$0xff] 0.0
    %38 = vst [vmem:[#allocation2 + $0x98] sm:$0xff] 0.0
    %39 = vst [vmem:[#allocation2 + $0xa0] sm:$0xff] 0.0
    %40 = vst [vmem:[#allocation2 + $0xa8] sm:$0xff] 0.0
    %41 = vst [vmem:[#allocation2 + $0xb0] sm:$0xff] 0.0
    %42 = vst [vmem:[#allocation2 + $0xb8] sm:$0xff] 0.0
    %43 = vst [vmem:[#allocation2 + $0xc0] sm:$0xff] 0.0
    %44 = vst [vmem:[#allocation2 + $0xc8] sm:$0xff] 0.0
    %45 = vst [vmem:[#allocation2 + $0xd0] sm:$0xff] 0.0
    %46 = vst [vmem:[#allocation2 + $0xd8] sm:$0xff] 0.0
    %47 = vst [vmem:[#allocation2 + $0xe0] sm:$0xff] 0.0
    %48 = vst [vmem:[#allocation2 + $0xe8] sm:$0xff] 0.0
    %49 = vst [vmem:[#allocation2 + $0xf0] sm:$0xff] 0.0
    %50 = vst [vmem:[#allocation2 + $0xf8] sm:$0xff] 0.0
  $region17: #{_lambda_.50} parent=0 // pred_fallthru
    _
  %v51 = vld [vmem:[%s0] sm:$0xf]
  %v52 = vld [vmem:[%s0 + $0x4] sm:$0xf]
  %v53 = vld [vmem:[%s0 + $0x8] sm:$0xf]
  %v54 = vld [vmem:[%s0 + $0xc] sm:$0xf]
  %v55 = vld [vmem:[%s0 + $0x10] sm:$0xf]
  %v56 = vld [vmem:[%s0 + $0x14] sm:$0xf]
  %v57 = vld [vmem:[%s0 + $0x18] sm:$0xf]
  %v58 = vld [vmem:[%s0 + $0x1c] sm:$0xf]
  %v59 = vld [vmem:[%s0 + $0x20] sm:$0xf]
  %v60 = vld [vmem:[%s0 + $0x24] sm:$0xf]
  %v61 = vld [vmem:[%s0 + $0x28] sm:$0xf]
  %v62 = vld [vmem:[%s0 + $0x2c] sm:$0xf]
  %v63 = vld [vmem:[%s0 + $0x30] sm:$0xf]
  %v64 = vld [vmem:[%s0 + $0x34] sm:$0xf]
  %v65 = vld [vmem:[%s0 + $0x38] sm:$0xf]
  %v66 = vld [vmem:[%s0 + $0x3c] sm:$0xf]
  %v67 = vld [vmem:[%s0 + $0x40] sm:$0xf]
  %v68 = vld [vmem:[%s0 + $0x44] sm:$0xf]
  %v69 = vld [vmem:[%s0 + $0x48] sm:$0xf]
  %v70 = vld [vmem:[%s0 + $0x4c] sm:$0xf]
  %v71 = vld [vmem:[%s0 + $0x50] sm:$0xf]
  %v72 = vld [vmem:[%s0 + $0x54] sm:$0xf]
  %v73 = vld [vmem:[%s0 + $0x58] sm:$0xf]
  %v74 = vld [vmem:[%s0 + $0x5c] sm:$0xf]
  %v75 = vld [vmem:[%s0 + $0x60] sm:$0xf]
  %v76 = vld [vmem:[%s0 + $0x64] sm:$0xf]
  %v77 = vld [vmem:[%s0 + $0x68] sm:$0xf]
  %v78 = vld [vmem:[%s0 + $0x6c] sm:$0xf]
  %v79 = vld [vmem:[%s0 + $0x70] sm:$0xf]
  %v80 = vld [vmem:[%s0 + $0x74] sm:$0xf]
  %v81 = vld [vmem:[%s0 + $0x78] sm:$0xf]
  %v82 = vld [vmem:[%s0 + $0x7c] sm:$0xf]
  %v83 = vld [vmem:[#allocation2] sm:$0xff]
  %v84 = vld [vmem:[#allocation2 + $0x8] sm:$0xff]
  %v85 = vld [vmem:[#allocation2 + $0x10] sm:$0xff]
  %v86 = vld [vmem:[#allocation2 + $0x18] sm:$0xff]
  %v87 = vld [vmem:[#allocation2 + $0x20] sm:$0xff]
  %v88 = vld [vmem:[#allocation2 + $0x28] sm:$0xff]
  %v89 = vld [vmem:[#allocation2 + $0x30] sm:$0xff]
  %v90 = vld [vmem:[#allocation2 + $0x38] sm:$0xff]
  %v91 = vld [vmem:[#allocation2 + $0x40] sm:$0xff]
  %v92 = vld [vmem:[#allocation2 + $0x48] sm:$0xff]
  %v93 = vld [vmem:[#allocation2 + $0x50] sm:$0xff]
  %v94 = vld [vmem:[#allocation2 + $0x58] sm:$0xff]
  %v95 = vld [vmem:[#allocation2 + $0x60] sm:$0xff]
  %v96 = vld [vmem:[#allocation2 + $0x68] sm:$0xff]
  %v97 = vld [vmem:[#allocation2 + $0x70] sm:$0xff]
  %v98 = vld [vmem:[#allocation2 + $0x78] sm:$0xff]
  %v99 = vld [vmem:[#allocation2 + $0x80] sm:$0xff]
  %v100 = vld [vmem:[#allocation2 + $0x88] sm:$0xff]
  %v101 = vld [vmem:[#allocation2 + $0x90] sm:$0xff]
  %v102 = vld [vmem:[#allocation2 + $0x98] sm:$0xff]
  %v103 = vld [vmem:[#allocation2 + $0xa0] sm:$0xff]
  %v104 = vld [vmem:[#allocation2 + $0xa8] sm:$0xff]
  %v105 = vld [vmem:[#allocation2 + $0xb0] sm:$0xff]
  %v106 = vld [vmem:[#allocation2 + $0xb8] sm:$0xff]
  %v107 = vld [vmem:[#allocation2 + $0xc0] sm:$0xff]
  %v108 = vld [vmem:[#allocation2 + $0xc8] sm:$0xff]
  %v109 = vld [vmem:[#allocation2 + $0xd0] sm:$0xff]
  %v110 = vld [vmem:[#allocation2 + $0xd8] sm:$0xff]
  %v111 = vld [vmem:[#allocation2 + $0xe0] sm:$0xff]
  %v112 = vld [vmem:[#allocation2 + $0xe8] sm:$0xff]
  %v113 = vld [vmem:[#allocation2 + $0xf0] sm:$0xff]
  %v114 = vld [vmem:[#allocation2 + $0xf8] sm:$0xff]
  %v115 = vld [vmem:[%s1] sm:$0xf]
  %v116 = vld [vmem:[%s1 + $0x4] sm:$0xf]
  %v117 = vld [vmem:[%s1 + $0x8] sm:$0xf]
  %v118 = vld [vmem:[%s1 + $0xc] sm:$0xf]
  %v119 = vld [vmem:[%s1 + $0x10] sm:$0xf]
  %v120 = vld [vmem:[%s1 + $0x14] sm:$0xf]
  %v121 = vld [vmem:[%s1 + $0x18] sm:$0xf]
  %v122 = vld [vmem:[%s1 + $0x1c] sm:$0xf]
  %v123 = vld [vmem:[%s1 + $0x20] sm:$0xf]
  %v124 = vld [vmem:[%s1 + $0x24] sm:$0xf]
  %v125 = vld [vmem:[%s1 + $0x28] sm:$0xf]
  %v126 = vld [vmem:[%s1 + $0x2c] sm:$0xf]
  %v127 = vld [vmem:[%s1 + $0x30] sm:$0xf]
  %v128 = vld [vmem:[%s1 + $0x34] sm:$0xf]
  %v129 = vld [vmem:[%s1 + $0x38] sm:$0xf]
  %v130 = vld [vmem:[%s1 + $0x3c] sm:$0xf]
  %v163 = vunpack.c.l.b16 %v51
  %v164 = vunpack.c.l.b16 %v52
  %v165 = vunpack.c.l.b16 %v53
  %v166 = vunpack.c.l.b16 %v54
  %v167 = vunpack.c.l.b16 %v55
  %v168 = vunpack.c.l.b16 %v56
  %v169 = vunpack.c.l.b16 %v57
  %v170 = vunpack.c.l.b16 %v58
  %v171 = vunpack.c.l.b16 %v59
  %v172 = vunpack.c.l.b16 %v60
  %v173 = vunpack.c.l.b16 %v61
  %v174 = vunpack.c.l.b16 %v62
  %v175 = vunpack.c.l.b16 %v63
  %v176 = vunpack.c.l.b16 %v64
  %v177 = vunpack.c.l.b16 %v65
  %v178 = vunpack.c.l.b16 %v66
  %v179 = vunpack.c.l.b16 %v67
  %v180 = vunpack.c.l.b16 %v68
  %v181 = vunpack.c.l.b16 %v69
  %v182 = vunpack.c.l.b16 %v70
  %v183 = vunpack.c.l.b16 %v71
  %v184 = vunpack.c.l.b16 %v72
  %v185 = vunpack.c.l.b16 %v73
  %v186 = vunpack.c.l.b16 %v74
  %v187 = vunpack.c.l.b16 %v75
  %v188 = vunpack.c.l.b16 %v76
  %v189 = vunpack.c.l.b16 %v77
  %v190 = vunpack.c.l.b16 %v78
  %v191 = vunpack.c.l.b16 %v79
  %v192 = vunpack.c.l.b16 %v80
  %v193 = vunpack.c.l.b16 %v81
  %v194 = vunpack.c.l.b16 %v82
  %v195 = vpack.c.b16 %v164, %v163
  %v196 = vpack.c.b16 %v166, %v165
  %v197 = vpack.c.b16 %v168, %v167
  %v198 = vpack.c.b16 %v170, %v169
  %v199 = vpack.c.b16 %v172, %v171
  %v200 = vpack.c.b16 %v174, %v173
  %v201 = vpack.c.b16 %v176, %v175
  %v202 = vpack.c.b16 %v178, %v177
  %v203 = vpack.c.b16 %v180, %v179
  %v204 = vpack.c.b16 %v182, %v181
  %v205 = vpack.c.b16 %v184, %v183
  %v206 = vpack.c.b16 %v186, %v185
  %v207 = vpack.c.b16 %v188, %v187
  %v208 = vpack.c.b16 %v190, %v189
  %v209 = vpack.c.b16 %v192, %v191
  %v210 = vpack.c.b16 %v194, %v193
  %v243 = vunpack.c.l.b16 %v115
  %v244 = vunpack.c.l.b16 %v116
  %v245 = vunpack.c.l.b16 %v117
  %v246 = vunpack.c.l.b16 %v118
  %v247 = vunpack.c.l.b16 %v119
  %v248 = vunpack.c.l.b16 %v120
  %v249 = vunpack.c.l.b16 %v121
  %v250 = vunpack.c.l.b16 %v122
  %v251 = vunpack.c.l.b16 %v123
  %v252 = vunpack.c.l.b16 %v124
  %v253 = vunpack.c.l.b16 %v125
  %v254 = vunpack.c.l.b16 %v126
  %v255 = vunpack.c.l.b16 %v127
  %v256 = vunpack.c.l.b16 %v128
  %v257 = vunpack.c.l.b16 %v129
  %v258 = vunpack.c.l.b16 %v130
  %v259 = vpack.c.b16 %v244, %v243
  %v260 = vpack.c.b16 %v246, %v245
  %v261 = vpack.c.b16 %v248, %v247
  %v262 = vpack.c.b16 %v250, %v249
  %v263 = vpack.c.b16 %v252, %v251
  %v264 = vpack.c.b16 %v254, %v253
  %v265 = vpack.c.b16 %v256, %v255
  %v266 = vpack.c.b16 %v258, %v257
  %275 = vmatprep.subr.bf16.mxu0 0
  %276 = vmatpush1.bf16.msra.mxu0 %v259
  %277 = vmatprep.subr.bf16.mxu0 0
  %278 = vmatpush1.bf16.msra.mxu0 %v260
  %279 = vmatprep.subr.bf16.mxu0 0
  %280 = vmatpush1.bf16.msra.mxu0 %v261
  %281 = vmatprep.subr.bf16.mxu0 0
  %282 = vmatpush1.bf16.msra.mxu0 %v262
  %283 = vmatprep.subr.bf16.mxu0 0
  %284 = vmatpush1.bf16.msra.mxu0 %v263
  %285 = vmatprep.subr.bf16.mxu0 0
  %286 = vmatpush1.bf16.msra.mxu0 %v264
  %287 = vmatprep.subr.bf16.mxu0 0
  %288 = vmatpush1.bf16.msra.mxu0 %v265
  %289 = vmatprep.subr.bf16.mxu0 0
  %290 = vmatpush1.bf16.msra.mxu0 %v266
  %291 = vmatprep.subr.bf16.mxu0 0
  %292 = vmatpush1.bf16.msra.mxu0 0
  %293 = vmatprep.subr.bf16.mxu0 0
  %294 = vmatpush1.bf16.msra.mxu0 0
  %295 = vmatprep.subr.bf16.mxu0 0
  %296 = vmatpush1.bf16.msra.mxu0 0
  %297 = vmatprep.subr.bf16.mxu0 0
  %298 = vmatpush1.bf16.msra.mxu0 0
  %299 = vmatprep.subr.bf16.mxu0 0
  %300 = vmatpush1.bf16.msra.mxu0 0
  %301 = vmatprep.subr.bf16.mxu0 0
  %302 = vmatpush1.bf16.msra.mxu0 0
  %303 = vmatprep.subr.bf16.mxu0 0
  %304 = vmatpush1.bf16.msra.mxu0 0
  %305 = vmatprep.subr.bf16.mxu0 0
  %306 = vmatpush1.bf16.msra.mxu0 0
  %307 = vmatprep.mubr.bf16.mxu0 0
  %308 = vmatmul.mubr.bf16.gmra.mrb[0].mxu0 %v195
  %v309 = vpop.f32.mrb[0].mxu0
  %v310 = vadd.f32 0.0, %v309
  %v311 = vpop.f32.mrb[0].mxu0
  %v312 = vpop.f32.mrb[0].mxu0
  %v313 = vadd.f32 0.0, %v312
  %v314 = vpop.f32.mrb[0].mxu0
  %315 = vmatprep.mubr.bf16.mxu0 0
  %316 = vmatmul.mubr.bf16.gmra.mrb[0].mxu0 %v196
  %v317 = vpop.f32.mrb[0].mxu0
  %v318 = vadd.f32 0.0, %v317
  %v319 = vpop.f32.mrb[0].mxu0
  %v320 = vpop.f32.mrb[0].mxu0
  %v321 = vadd.f32 0.0, %v320
  %v322 = vpop.f32.mrb[0].mxu0
  %323 = vmatprep.mubr.bf16.mxu0 0
  %324 = vmatmul.mubr.bf16.gmra.mrb[0].mxu0 %v197
  %v325 = vpop.f32.mrb[0].mxu0
  %v326 = vadd.f32 0.0, %v325
  %v327 = vpop.f32.mrb[0].mxu0
  %v328 = vpop.f32.mrb[0].mxu0
  %v329 = vadd.f32 0.0, %v328
  %v330 = vpop.f32.mrb[0].mxu0
  %331 = vmatprep.mubr.bf16.mxu0 0
  %332 = vmatmul.mubr.bf16.gmra.mrb[0].mxu0 %v198
  %v333 = vpop.f32.mrb[0].mxu0
  %v334 = vadd.f32 0.0, %v333
  %v335 = vpop.f32.mrb[0].mxu0
  %v336 = vpop.f32.mrb[0].mxu0
  %v337 = vadd.f32 0.0, %v336
  %v338 = vpop.f32.mrb[0].mxu0
  %339 = vmatprep.mubr.bf16.mxu0 0
  %340 = vmatmul.mubr.bf16.gmra.mrb[0].mxu0 %v199
  %v341 = vpop.f32.mrb[0].mxu0
  %v342 = vadd.f32 0.0, %v341
  %v343 = vpop.f32.mrb[0].mxu0
  %v344 = vpop.f32.mrb[0].mxu0
  %v345 = vadd.f32 0.0, %v344
  %v346 = vpop.f32.mrb[0].mxu0
  %347 = vmatprep.mubr.bf16.mxu0 0
  %348 = vmatmul.mubr.bf16.gmra.mrb[0].mxu0 %v200
  %v349 = vpop.f32.mrb[0].mxu0
  %v350 = vadd.f32 0.0, %v349
  %v351 = vpop.f32.mrb[0].mxu0
  %v352 = vpop.f32.mrb[0].mxu0
  %v353 = vadd.f32 0.0, %v352
  %v354 = vpop.f32.mrb[0].mxu0
  %355 = vmatprep.mubr.bf16.mxu0 0
  %356 = vmatmul.mubr.bf16.gmra.mrb[0].mxu0 %v201
  %v357 = vpop.f32.mrb[0].mxu0
  %v358 = vadd.f32 0.0, %v357
  %v359 = vpop.f32.mrb[0].mxu0
  %v360 = vpop.f32.mrb[0].mxu0
  %v361 = vadd.f32 0.0, %v360
  %v362 = vpop.f32.mrb[0].mxu0
  %363 = vmatprep.mubr.bf16.mxu0 0
  %364 = vmatmul.mubr.bf16.gmra.mrb[0].mxu0 %v202
  %v365 = vpop.f32.mrb[0].mxu0
  %v366 = vadd.f32 0.0, %v365
  %v367 = vpop.f32.mrb[0].mxu0
  %v368 = vpop.f32.mrb[0].mxu0
  %v369 = vadd.f32 0.0, %v368
  %v370 = vpop.f32.mrb[0].mxu0
  %371 = vmatprep.mubr.bf16.mxu0 0
  %372 = vmatmul.mubr.bf16.gmra.mrb[0].mxu0 %v203
  %v373 = vpop.f32.mrb[0].mxu0
  %v374 = vadd.f32 0.0, %v373
  %v375 = vpop.f32.mrb[0].mxu0
  %v376 = vpop.f32.mrb[0].mxu0
  %v377 = vadd.f32 0.0, %v376
  %v378 = vpop.f32.mrb[0].mxu0
  %379 = vmatprep.mubr.bf16.mxu0 0
  %380 = vmatmul.mubr.bf16.gmra.mrb[0].mxu0 %v204
  %v381 = vpop.f32.mrb[0].mxu0
  %v382 = vadd.f32 0.0, %v381
  %v383 = vpop.f32.mrb[0].mxu0
  %v384 = vpop.f32.mrb[0].mxu0
  %v385 = vadd.f32 0.0, %v384
  %v386 = vpop.f32.mrb[0].mxu0
  %387 = vmatprep.mubr.bf16.mxu0 0
  %388 = vmatmul.mubr.bf16.gmra.mrb[0].mxu0 %v205
  %v389 = vpop.f32.mrb[0].mxu0
  %v390 = vadd.f32 0.0, %v389
  %v391 = vpop.f32.mrb[0].mxu0
  %v392 = vpop.f32.mrb[0].mxu0
  %v393 = vadd.f32 0.0, %v392
  %v394 = vpop.f32.mrb[0].mxu0
  %395 = vmatprep.mubr.bf16.mxu0 0
  %396 = vmatmul.mubr.bf16.gmra.mrb[0].mxu0 %v206
  %v397 = vpop.f32.mrb[0].mxu0
  %v398 = vadd.f32 0.0, %v397
  %v399 = vpop.f32.mrb[0].mxu0
  %v400 = vpop.f32.mrb[0].mxu0
  %v401 = vadd.f32 0.0, %v400
  %v402 = vpop.f32.mrb[0].mxu0
  %403 = vmatprep.mubr.bf16.mxu0 0
  %404 = vmatmul.mubr.bf16.gmra.mrb[0].mxu0 %v207
  %v405 = vpop.f32.mrb[0].mxu0
  %v406 = vadd.f32 0.0, %v405
  %v407 = vpop.f32.mrb[0].mxu0
  %v408 = vpop.f32.mrb[0].mxu0
  %v409 = vadd.f32 0.0, %v408
  %v410 = vpop.f32.mrb[0].mxu0
  %411 = vmatprep.mubr.bf16.mxu0 0
  %412 = vmatmul.mubr.bf16.gmra.mrb[0].mxu0 %v208
  %v413 = vpop.f32.mrb[0].mxu0
  %v414 = vadd.f32 0.0, %v413
  %v415 = vpop.f32.mrb[0].mxu0
  %v416 = vpop.f32.mrb[0].mxu0
  %v417 = vadd.f32 0.0, %v416
  %v418 = vpop.f32.mrb[0].mxu0
  %419 = vmatprep.mubr.bf16.mxu0 0
  %420 = vmatmul.mubr.bf16.gmra.mrb[0].mxu0 %v209
  %v421 = vpop.f32.mrb[0].mxu0
  %v422 = vadd.f32 0.0, %v421
  %v423 = vpop.f32.mrb[0].mxu0
  %v424 = vpop.f32.mrb[0].mxu0
  %v425 = vadd.f32 0.0, %v424
  %v426 = vpop.f32.mrb[0].mxu0
  %427 = vmatprep.mubr.bf16.mxu0 0
  %428 = vmatmul.mubr.bf16.gmra.mrb[0].mxu0 %v210
  %v429 = vpop.f32.mrb[0].mxu0
  %v430 = vadd.f32 0.0, %v429
  %v431 = vpop.f32.mrb[0].mxu0
  %v432 = vpop.f32.mrb[0].mxu0
  %v433 = vadd.f32 0.0, %v432
  %v434 = vpop.f32.mrb[0].mxu0
  %435 = vdwg.mxu0
  %v436 = vadd.f32 %v83, %v310
  %v437 = vadd.f32 %v84, %v313
  %v438 = vadd.f32 %v85, %v318
  %v439 = vadd.f32 %v86, %v321
  %v440 = vadd.f32 %v87, %v326
  %v441 = vadd.f32 %v88, %v329
  %v442 = vadd.f32 %v89, %v334
  %v443 = vadd.f32 %v90, %v337
  %v444 = vadd.f32 %v91, %v342
  %v445 = vadd.f32 %v92, %v345
  %v446 = vadd.f32 %v93, %v350
  %v447 = vadd.f32 %v94, %v353
  %v448 = vadd.f32 %v95, %v358
  %v449 = vadd.f32 %v96, %v361
  %v450 = vadd.f32 %v97, %v366
  %v451 = vadd.f32 %v98, %v369
  %v452 = vadd.f32 %v99, %v374
  %v453 = vadd.f32 %v100, %v377
  %v454 = vadd.f32 %v101, %v382
  %v455 = vadd.f32 %v102, %v385
  %v456 = vadd.f32 %v103, %v390
  %v457 = vadd.f32 %v104, %v393
  %v458 = vadd.f32 %v105, %v398
  %v459 = vadd.f32 %v106, %v401
  %v460 = vadd.f32 %v107, %v406
  %v461 = vadd.f32 %v108, %v409
  %v462 = vadd.f32 %v109, %v414
  %v463 = vadd.f32 %v110, %v417
  %v464 = vadd.f32 %v111, %v422
  %v465 = vadd.f32 %v112, %v425
  %v466 = vadd.f32 %v113, %v430
  %v467 = vadd.f32 %v114, %v433
  %468 = vst [vmem:[#allocation2] sm:$0xff] %v436
  %469 = vst [vmem:[#allocation2 + $0x8] sm:$0xff] %v437
  %470 = vst [vmem:[#allocation2 + $0x10] sm:$0xff] %v438
  %471 = vst [vmem:[#allocation2 + $0x18] sm:$0xff] %v439
  %472 = vst [vmem:[#allocation2 + $0x20] sm:$0xff] %v440
  %473 = vst [vmem:[#allocation2 + $0x28] sm:$0xff] %v441
  %474 = vst [vmem:[#allocation2 + $0x30] sm:$0xff] %v442
  %475 = vst [vmem:[#allocation2 + $0x38] sm:$0xff] %v443
  %476 = vst [vmem:[#allocation2 + $0x40] sm:$0xff] %v444
  %477 = vst [vmem:[#allocation2 + $0x48] sm:$0xff] %v445
  %478 = vst [vmem:[#allocation2 + $0x50] sm:$0xff] %v446
  %479 = vst [vmem:[#allocation2 + $0x58] sm:$0xff] %v447
  %480 = vst [vmem:[#allocation2 + $0x60] sm:$0xff] %v448
  %481 = vst [vmem:[#allocation2 + $0x68] sm:$0xff] %v449
  %482 = vst [vmem:[#allocation2 + $0x70] sm:$0xff] %v450
  %483 = vst [vmem:[#allocation2 + $0x78] sm:$0xff] %v451
  %484 = vst [vmem:[#allocation2 + $0x80] sm:$0xff] %v452
  %485 = vst [vmem:[#allocation2 + $0x88] sm:$0xff] %v453
  %486 = vst [vmem:[#allocation2 + $0x90] sm:$0xff] %v454
  %487 = vst [vmem:[#allocation2 + $0x98] sm:$0xff] %v455
  %488 = vst [vmem:[#allocation2 + $0xa0] sm:$0xff] %v456
  %489 = vst [vmem:[#allocation2 + $0xa8] sm:$0xff] %v457
  %490 = vst [vmem:[#allocation2 + $0xb0] sm:$0xff] %v458
  %491 = vst [vmem:[#allocation2 + $0xb8] sm:$0xff] %v459
  %492 = vst [vmem:[#allocation2 + $0xc0] sm:$0xff] %v460
  %493 = vst [vmem:[#allocation2 + $0xc8] sm:$0xff] %v461
  %494 = vst [vmem:[#allocation2 + $0xd0] sm:$0xff] %v462
  %495 = vst [vmem:[#allocation2 + $0xd8] sm:$0xff] %v463
  %496 = vst [vmem:[#allocation2 + $0xe0] sm:$0xff] %v464
  %497 = vst [vmem:[#allocation2 + $0xe8] sm:$0xff] %v465
  %498 = vst [vmem:[#allocation2 + $0xf0] sm:$0xff] %v466
  %499 = vst [vmem:[#allocation2 + $0xf8] sm:$0xff] %v467
  // Predicated region
  $region18: #{_lambda_.50} parent=0 // pred_check
    %p500 = pneg %p15
  $region19: #{_lambda_.50} parent=0 // pred_check_branch
    %502 = sbr.rel (%p500) target = $region21
  $region20: #{_lambda_.50} parent=0 // pred_region
    %v503 = vld [vmem:[#allocation2] sm:$0xff]
    %v504 = vld [vmem:[#allocation2 + $0x8] sm:$0xff]
    %v505 = vld [vmem:[#allocation2 + $0x10] sm:$0xff]
    %v506 = vld [vmem:[#allocation2 + $0x18] sm:$0xff]
    %v507 = vld [vmem:[#allocation2 + $0x20] sm:$0xff]
    %v508 = vld [vmem:[#allocation2 + $0x28] sm:$0xff]
    %v509 = vld [vmem:[#allocation2 + $0x30] sm:$0xff]
    %v510 = vld [vmem:[#allocation2 + $0x38] sm:$0xff]
    %v511 = vld [vmem:[#allocation2 + $0x40] sm:$0xff]
    %v512 = vld [vmem:[#allocation2 + $0x48] sm:$0xff]
    %v513 = vld [vmem:[#allocation2 + $0x50] sm:$0xff]
    %v514 = vld [vmem:[#allocation2 + $0x58] sm:$0xff]
    %v515 = vld [vmem:[#allocation2 + $0x60] sm:$0xff]
    %v516 = vld [vmem:[#allocation2 + $0x68] sm:$0xff]
    %v517 = vld [vmem:[#allocation2 + $0x70] sm:$0xff]
    %v518 = vld [vmem:[#allocation2 + $0x78] sm:$0xff]
    %v519 = vld [vmem:[#allocation2 + $0x80] sm:$0xff]
    %v520 = vld [vmem:[#allocation2 + $0x88] sm:$0xff]
    %v521 = vld [vmem:[#allocation2 + $0x90] sm:$0xff]
    %v522 = vld [vmem:[#allocation2 + $0x98] sm:$0xff]
    %v523 = vld [vmem:[#allocation2 + $0xa0] sm:$0xff]
    %v524 = vld [vmem:[#allocation2 + $0xa8] sm:$0xff]
    %v525 = vld [vmem:[#allocation2 + $0xb0] sm:$0xff]
    %v526 = vld [vmem:[#allocation2 + $0xb8] sm:$0xff]
    %v527 = vld [vmem:[#allocation2 + $0xc0] sm:$0xff]
    %v528 = vld [vmem:[#allocation2 + $0xc8] sm:$0xff]
    %v529 = vld [vmem:[#allocation2 + $0xd0] sm:$0xff]
    %v530 = vld [vmem:[#allocation2 + $0xd8] sm:$0xff]
    %v531 = vld [vmem:[#allocation2 + $0xe0] sm:$0xff]
    %v532 = vld [vmem:[#allocation2 + $0xe8] sm:$0xff]
    %v533 = vld [vmem:[#allocation2 + $0xf0] sm:$0xff]
    %v534 = vld [vmem:[#allocation2 + $0xf8] sm:$0xff]
    %v535 = vld [vmem:[%s2] sm:$0x1]
    %v537 = vlaneseq
    %v538 = vshrl.u32 %v537, 7
    %v539 = vsub.s32 0, %v538
    %v540 = vrot.slane %v535, %v539
    %v542 = vadd.f32 %v503, %v540
    %v543 = vadd.f32 %v504, %v540
    %v544 = vadd.f32 %v505, %v540
    %v545 = vadd.f32 %v506, %v540
    %v546 = vadd.f32 %v507, %v540
    %v547 = vadd.f32 %v508, %v540
    %v548 = vadd.f32 %v509, %v540
    %v549 = vadd.f32 %v510, %v540
    %v550 = vadd.f32 %v511, %v540
    %v551 = vadd.f32 %v512, %v540
    %v552 = vadd.f32 %v513, %v540
    %v553 = vadd.f32 %v514, %v540
    %v554 = vadd.f32 %v515, %v540
    %v555 = vadd.f32 %v516, %v540
    %v556 = vadd.f32 %v517, %v540
    %v557 = vadd.f32 %v518, %v540
    %v558 = vadd.f32 %v519, %v540
    %v559 = vadd.f32 %v520, %v540
    %v560 = vadd.f32 %v521, %v540
    %v561 = vadd.f32 %v522, %v540
    %v562 = vadd.f32 %v523, %v540
    %v563 = vadd.f32 %v524, %v540
    %v564 = vadd.f32 %v525, %v540
    %v565 = vadd.f32 %v526, %v540
    %v566 = vadd.f32 %v527, %v540
    %v567 = vadd.f32 %v528, %v540
    %v568 = vadd.f32 %v529, %v540
    %v569 = vadd.f32 %v530, %v540
    %v570 = vadd.f32 %v531, %v540
    %v571 = vadd.f32 %v532, %v540
    %v572 = vadd.f32 %v533, %v540
    %v573 = vadd.f32 %v534, %v540
    %574 = vst [vmem:[%s3] sm:$0xff] %v542
    %575 = vst [vmem:[%s3 + $0x8] sm:$0xff] %v543
    %576 = vst [vmem:[%s3 + $0x10] sm:$0xff] %v544
    %577 = vst [vmem:[%s3 + $0x18] sm:$0xff] %v545
    %578 = vst [vmem:[%s3 + $0x20] sm:$0xff] %v546
    %579 = vst [vmem:[%s3 + $0x28] sm:$0xff] %v547
    %580 = vst [vmem:[%s3 + $0x30] sm:$0xff] %v548
    %581 = vst [vmem:[%s3 + $0x38] sm:$0xff] %v549
    %582 = vst [vmem:[%s3 + $0x40] sm:$0xff] %v550
    %583 = vst [vmem:[%s3 + $0x48] sm:$0xff] %v551
    %584 = vst [vmem:[%s3 + $0x50] sm:$0xff] %v552
    %585 = vst [vmem:[%s3 + $0x58] sm:$0xff] %v553
    %586 = vst [vmem:[%s3 + $0x60] sm:$0xff] %v554
    %587 = vst [vmem:[%s3 + $0x68] sm:$0xff] %v555
    %588 = vst [vmem:[%s3 + $0x70] sm:$0xff] %v556
    %589 = vst [vmem:[%s3 + $0x78] sm:$0xff] %v557
    %590 = vst [vmem:[%s3 + $0x80] sm:$0xff] %v558
    %591 = vst [vmem:[%s3 + $0x88] sm:$0xff] %v559
    %592 = vst [vmem:[%s3 + $0x90] sm:$0xff] %v560
    %593 = vst [vmem:[%s3 + $0x98] sm:$0xff] %v561
    %594 = vst [vmem:[%s3 + $0xa0] sm:$0xff] %v562
    %595 = vst [vmem:[%s3 + $0xa8] sm:$0xff] %v563
    %596 = vst [vmem:[%s3 + $0xb0] sm:$0xff] %v564
    %597 = vst [vmem:[%s3 + $0xb8] sm:$0xff] %v565
    %598 = vst [vmem:[%s3 + $0xc0] sm:$0xff] %v566
    %599 = vst [vmem:[%s3 + $0xc8] sm:$0xff] %v567
    %600 = vst [vmem:[%s3 + $0xd0] sm:$0xff] %v568
    %601 = vst [vmem:[%s3 + $0xd8] sm:$0xff] %v569
    %602 = vst [vmem:[%s3 + $0xe0] sm:$0xff] %v570
    %603 = vst [vmem:[%s3 + $0xe8] sm:$0xff] %v571
    %604 = vst [vmem:[%s3 + $0xf0] sm:$0xff] %v572
    %605 = vst [vmem:[%s3 + $0xf8] sm:$0xff] %v573
  $region21: #{_lambda_.50} parent=0 // pred_fallthru
    _
  // Predicated region
  $region22: #{_lambda_.50} parent=0 // pred_check
    _
  $region23: #{_lambda_.50} parent=0 // pred_check_branch
    %607 = sbr.rel (0) target = $region25
  $region24: #{_lambda_.50} parent=0 // pred_region
    _
  $region25: #{_lambda_.50} parent=0 // pred_fallthru
    _
  // Predicated region
  $region26: #{_lambda_.50} parent=0 // pred_check
    _
  $region27: #{_lambda_.50} parent=0 // pred_check_branch
    %609 = sbr.rel (0) target = $region29
  $region28: #{_lambda_.50} parent=0 // pred_region
    _
  $region29: #{_lambda_.50} parent=0 // pred_fallthru
    _

// kernel: _lambda_.52
$region0: #{_lambda_.52}
  #allocation0 [shape = 'u32[]', space=smem, size = 0x4, offset = 0x4, fixed_abs, tag = 'smem constant byte address 0x4 - core index']
  #allocation1 [shape = 'u32[144,128]{1,0:T(1,128)}', space=vmem, size = 0x12000, scoped, tag = 'internal scratch']
  #allocation2 [shape = 'f32[8,1]{1,0:T(8,128)}', space=vmem, size = 0x1000, scoped, tag = 'scratch operand']
  #allocation3 [shape = 'f32[8,1]{1,0:T(8,128)}', space=vmem, size = 0x1000, scoped, tag = 'scratch operand']
  %s0 = inlined_call_operand.vmem [shape: f32[16,128], index: 0, kind: input, shape index: {}]
  %s1 = inlined_call_operand.vmem [shape: f32[16,1], index: 1, kind: output, shape index: {0}]
  %s2 = inlined_call_operand.vmem [shape: f32[16,1], index: 2, kind: output, shape index: {1}]
  %3 = xla_tuple %s1, %s2
  %s4 = sld [smem:[#allocation0]]
  $region53: #{_lambda_.52} parent=0
    _
  %s6 = ssub.s32 1, %s4
  %s7 = scalar_select 0, %s6, %s4
  loop: start=0, step=1, limit=4
  $region2: #{_lambda_.52} parent=0 // loop_pre_header
    _
  $region3: #{_lambda_.52} parent=0 // loop_header
    %s9 = sphi 0, %s13
    %p10 = scmp.ge.s32.totalorder %s9, 4
    %s16 = sphi 0, %s28
    %s17 = sphi 0, %s24
    %s18 = sphi 0, %s16
    %s19 = sphi 0, %s17
    %s20 = sphi 0, %s18
    %s21 = sphi 0, %s19
    %s33 = sphi 0, %s35
    %s36 = sphi 0, %s33
    %s37 = sphi 0, %s36
    %s53 = sphi 0, %s37
    %s59 = sphi 0, %s61
    %s62 = sphi 0, %s59
    %s63 = sphi 0, %s62
    %s79 = sphi 0, %s63
    %s85 = sphi 0, %s87
    %s88 = sphi 0, %s85
    %s89 = sphi 0, %s88
    %s105 = sphi 0, %s89
  $region4: #{_lambda_.52} parent=0 // loop_header_branch
    %12 = sbr.rel (%p10) target = $region8
  $region5: #{_lambda_.52} parent=0 // loop_body
    %s14 = ssub.s32 %s9, 1
    %s15 = ssub.s32 %s9, 2
    %s22 = sadd.s32 1, %s17
    %p23 = scmp.ge.s32.totalorder %s22, 1
    %s24 = scalar_select %p23, 0, %s22
    %s25 = sadd.s32 1, %s16
    %s26 = scalar_select %p23, %s25, %s16
    %p27 = scmp.ge.s32.totalorder %s26, 2
    %s28 = scalar_select %p27, 0, %s26
    %s29 = ssub.s32 %s16, %s28
    %s30 = ssub.s32 %s17, %s24
    %s31 = sor.u32 %s29, %s30
    %p32 = scmp.eq.s32.totalorder %s31, 0
    %s34 = sadd.s32 %s33, 1
    %s35 = scalar_select %p32, %s33, %s34
    %p38 = pneg %p32
    %p39 = scmp.eq.s32.totalorder %s9, 1
    %p40 = por %p38, %p39
    %p41 = scmp.ne.s32.totalorder %s33, %s36
    %p42 = scmp.eq.s32.totalorder %s9, 0
    %p43 = por %p41, %p42
    %p44 = scmp.ne.s32.totalorder %s33, %s36
    %p45 = scmp.eq.s32.totalorder %s14, 1
    %p46 = por %p44, %p45
    %p47 = scmp.ne.s32.totalorder %s36, %s37
    %p48 = scmp.eq.s32.totalorder %s14, 0
    %p49 = por %p47, %p48
    %p50 = scmp.ne.s32.totalorder %s36, %s37
    %p51 = scmp.eq.s32.totalorder %s15, 1
    %p52 = por %p50, %p51
    %p54 = scmp.ne.s32.totalorder %s37, %s53
    %p55 = scmp.eq.s32.totalorder %s15, 0
    %p56 = por %p54, %p55
    %s57 = ssub.s32 %s16, %s28
    %p58 = scmp.eq.s32.totalorder %s57, 0
    %s60 = sadd.s32 %s59, 1
    %s61 = scalar_select %p58, %s59, %s60
    %p64 = pneg %p58
    %p65 = scmp.eq.s32.totalorder %s9, 1
    %p66 = por %p64, %p65
    %p67 = scmp.ne.s32.totalorder %s59, %s62
    %p68 = scmp.eq.s32.totalorder %s9, 0
    %p69 = por %p67, %p68
    %p70 = scmp.ne.s32.totalorder %s59, %s62
    %p71 = scmp.eq.s32.totalorder %s14, 1
    %p72 = por %p70, %p71
    %p73 = scmp.ne.s32.totalorder %s62, %s63
    %p74 = scmp.eq.s32.totalorder %s14, 0
    %p75 = por %p73, %p74
    %p76 = scmp.ne.s32.totalorder %s62, %s63
    %p77 = scmp.eq.s32.totalorder %s15, 1
    %p78 = por %p76, %p77
    %p80 = scmp.ne.s32.totalorder %s63, %s79
    %p81 = scmp.eq.s32.totalorder %s15, 0
    %p82 = por %p80, %p81
    %s83 = ssub.s32 %s16, %s28
    %p84 = scmp.eq.s32.totalorder %s83, 0
    %s86 = sadd.s32 %s85, 1
    %s87 = scalar_select %p84, %s85, %s86
    %p90 = pneg %p84
    %p91 = scmp.eq.s32.totalorder %s9, 1
    %p92 = por %p90, %p91
    %p93 = scmp.ne.s32.totalorder %s85, %s88
    %p94 = scmp.eq.s32.totalorder %s9, 0
    %p95 = por %p93, %p94
    %p96 = scmp.ne.s32.totalorder %s85, %s88
    %p97 = scmp.eq.s32.totalorder %s14, 1
    %p98 = por %p96, %p97
    %p99 = scmp.ne.s32.totalorder %s88, %s89
    %p100 = scmp.eq.s32.totalorder %s14, 0
    %p101 = por %p99, %p100
    %p102 = scmp.ne.s32.totalorder %s88, %s89
    %p103 = scmp.eq.s32.totalorder %s15, 1
    %p104 = por %p102, %p103
    %p106 = scmp.ne.s32.totalorder %s89, %s105
    %p107 = scmp.eq.s32.totalorder %s15, 0
    %p108 = por %p106, %p107
    %p109 = scmp.le.s32.totalorder 1, %s9
    %p110 = scmp.lt.s32.totalorder %s9, 3
    %p111 = pnand %p109, %p110
    %p112 = pneg %p111
    // Predicated region
    $region9: #{_lambda_.52} parent=5 // pred_check
      _
    $region10: #{_lambda_.52} parent=5 // pred_check_branch
      %114 = sbr.rel (%p111) target = $region12
    $region11: #{_lambda_.52} parent=5 // pred_region
      %s115 = ssub.s32 %s9, 1
    $region12: #{_lambda_.52} parent=5 // pred_fallthru
      _
    %p116 = scmp.lt.s32.totalorder %s9, 2
    // Predicated region
    $region13: #{_lambda_.52} parent=5 // pred_check
      %p117 = pneg %p116
    $region14: #{_lambda_.52} parent=5 // pred_check_branch
      %119 = sbr.rel (%p117) target = $region16
    $region15: #{_lambda_.52} parent=5 // pred_region
      // Predicated region
      $region17: #{_lambda_.52} parent=15 // pred_check
        %p120 = pneg %p43
      $region18: #{_lambda_.52} parent=15 // pred_check_branch
        %122 = sbr.rel (%p120) target = $region20
      $region19: #{_lambda_.52} parent=15 // pred_region
        %p123 = scmp.lt.s32.totalorder %s16, 1
        %s124 = scalar_select %p123, %s16, 1
        %p125 = scmp.lt.s32.totalorder %s17, 0
        %s126 = scalar_select %p125, %s17, 0
        %s127 = sadd.s32 %s126, %s124
        %s128 = smul.addr %s127, 8
        %s129 = scalar_lea.vmem %s0, %s128
      $region20: #{_lambda_.52} parent=15 // pred_fallthru
        _
    $region16: #{_lambda_.52} parent=5 // pred_fallthru
      _
    %p130 = scmp.le.s32.totalorder 1, %s9
    %p131 = scmp.lt.s32.totalorder %s9, 3
    %p132 = pnand %p130, %p131
    %p133 = pneg %p132
    // Predicated region
    $region21: #{_lambda_.52} parent=5 // pred_check
      _
    $region22: #{_lambda_.52} parent=5 // pred_check_branch
      %135 = sbr.rel (%p132) target = $region24
    $region23: #{_lambda_.52} parent=5 // pred_region
      %s136 = ssub.s32 %s9, 1
      %p137 = scmp.lt.s32.totalorder %s18, 1
      %s138 = scalar_select %p137, %s18, 1
      %p139 = scmp.lt.s32.totalorder %s19, 0
      %s140 = scalar_select %p139, %s19, 0
      %s141 = sadd.s32 %s140, %s138
      %s142 = smul.addr %s141, 8
      %s143 = scalar_lea.vmem %s0, %s142
      %p144 = pneg %p49
      %p145 = pneg %p46
      %p146 = pneg %p75
      %p147 = pneg %p72
      %p148 = scmp.lt.s32.totalorder %s18, 1
      %s149 = scalar_select %p148, %s18, 1
      %s150 = smul.addr %s149, 8
      %s151 = scalar_lea.vmem %s1, %s150
      %p152 = pneg %p101
      %p153 = pneg %p98
      %p154 = scmp.lt.s32.totalorder %s18, 1
      %s155 = scalar_select %p154, %s18, 1
      %s156 = smul.addr %s155, 8
      %s157 = scalar_lea.vmem %s2, %s156
      %p158 = scmp.lt.s32.totalorder %s18, 1
      %s159 = scalar_select %p158, %s18, 1
      %p160 = scmp.lt.s32.totalorder %s19, 0
      %s161 = scalar_select %p160, %s19, 0
      %s162 = sadd.s32 %s161, %s159
      %s163 = smul.addr %s162, 8
      %s164 = scalar_lea.vmem %s0, %s163
      %p165 = scmp.lt.s32.totalorder %s18, 1
      %s166 = scalar_select %p165, %s18, 1
      %s167 = smul.addr %s166, 8
      %s168 = scalar_lea.vmem %s1, %s167
      %p169 = scmp.lt.s32.totalorder %s18, 1
      %s170 = scalar_select %p169, %s18, 1
      %s171 = smul.addr %s170, 8
      %s172 = scalar_lea.vmem %s2, %s171
      %p173 = scmp.eq.s32.totalorder %s19, 0
      // Predicated region
      $region25: #{_lambda_.52} parent=23 // pred_check
        %p174 = pneg %p173
      $region26: #{_lambda_.52} parent=23 // pred_check_branch
        %176 = sbr.rel (%p174) target = $region28
      $region27: #{_lambda_.52} parent=23 // pred_region
        %vm177 = vcmask 7168
        %178 = vst.msk [vmem:[#allocation2] sm:$0xff] %vm177, 0.0
        %179 = vst.msk [vmem:[#allocation3] sm:$0xff] %vm177, 0.0
      $region28: #{_lambda_.52} parent=23 // pred_fallthru
        _
      %v180 = vld [vmem:[%s164] sm:$0xff]
      %v181 = vld [vmem:[#allocation2] sm:$0xff]
      %182 = vadd.xlane.f32.xlu0 %v180
      %v183 = vpop.xlane.xlu0 %182
      %v184 = vadd.f32 %v181, %v183
      %vm185 = vcmask 7168
      %186 = vst.msk [vmem:[#allocation2] sm:$0xff] %vm185, %v184
      %v187 = vld [vmem:[#allocation3] sm:$0xff]
      %v188 = vmul.f32 %v180, %v180
      %189 = vadd.xlane.f32.xlu0 %v188
      %v190 = vpop.xlane.xlu0 %189
      %v191 = vadd.f32 %v187, %v190
      %192 = vst.msk [vmem:[#allocation3] sm:$0xff] %vm185, %v191
      // Predicated region
      $region29: #{_lambda_.52} parent=23 // pred_check
        %p193 = pneg %p173
      $region30: #{_lambda_.52} parent=23 // pred_check_branch
        %195 = sbr.rel (%p193) target = $region32
      $region31: #{_lambda_.52} parent=23 // pred_region
        %v196 = vld [vmem:[#allocation2] sm:$0xff]
        %v197 = vrcp.pop 16.0
        %v198 = vmul.f32 %v196, %v197
        %v199 = vld [vmem:[#allocation3] sm:$0xff]
        %v200 = vmul.f32 %v199, %v197
        %v201 = vmul.f32 %v198, %v198
        %v202 = vsub.f32 %v200, %v201
        %203 = vst.msk [vmem:[%s168] sm:$0xff] %vm185, %v198
        %v204 = vmax.f32 %v202, 0.0
        %v205 = vadd.f32 %v204, 1e-05
        %v206 = vrsqrt.pop %v205
        %207 = vst.msk [vmem:[%s172] sm:$0xff] %vm185, %v206
      $region32: #{_lambda_.52} parent=23 // pred_fallthru
        _
      %p208 = scmp.lt.s32.totalorder %s18, 1
      %s209 = scalar_select %p208, %s18, 1
      %s210 = smul.addr %s209, 8
      %s211 = scalar_lea.vmem %s1, %s210
      %p212 = scmp.lt.s32.totalorder %s18, 1
      %s213 = scalar_select %p212, %s18, 1
      %s214 = smul.addr %s213, 8
      %s215 = scalar_lea.vmem %s2, %s214
      // Predicated region
      $region33: #{_lambda_.52} parent=23 // pred_check
        %p216 = pneg %p72
      $region34: #{_lambda_.52} parent=23 // pred_check_branch
        %218 = sbr.rel (%p216) target = $region36
      $region35: #{_lambda_.52} parent=23 // pred_region
        _
      $region36: #{_lambda_.52} parent=23 // pred_fallthru
        _
      // Predicated region
      $region37: #{_lambda_.52} parent=23 // pred_check
        %p219 = pneg %p98
      $region38: #{_lambda_.52} parent=23 // pred_check_branch
        %221 = sbr.rel (%p219) target = $region40
      $region39: #{_lambda_.52} parent=23 // pred_region
        _
      $region40: #{_lambda_.52} parent=23 // pred_fallthru
        _
    $region24: #{_lambda_.52} parent=5 // pred_fallthru
      _
    %p222 = scmp.le.s32.totalorder 2, %s9
    // Predicated region
    $region41: #{_lambda_.52} parent=5 // pred_check
      %p223 = pneg %p222
    $region42: #{_lambda_.52} parent=5 // pred_check_branch
      %225 = sbr.rel (%p223) target = $region44
    $region43: #{_lambda_.52} parent=5 // pred_region
      %s226 = ssub.s32 %s9, 2
      // Predicated region
      $region45: #{_lambda_.52} parent=43 // pred_check
        %p227 = pneg %p78
      $region46: #{_lambda_.52} parent=43 // pred_check_branch
        %229 = sbr.rel (%p227) target = $region48
      $region47: #{_lambda_.52} parent=43 // pred_region
        %p230 = scmp.lt.s32.totalorder %s20, 1
        %s231 = scalar_select %p230, %s20, 1
        %s232 = smul.addr %s231, 8
        %s233 = scalar_lea.vmem %s1, %s232
      $region48: #{_lambda_.52} parent=43 // pred_fallthru
        _
      // Predicated region
      $region49: #{_lambda_.52} parent=43 // pred_check
        %p234 = pneg %p104
      $region50: #{_lambda_.52} parent=43 // pred_check_branch
        %236 = sbr.rel (%p234) target = $region52
      $region51: #{_lambda_.52} parent=43 // pred_region
        %p237 = scmp.lt.s32.totalorder %s20, 1
        %s238 = scalar_select %p237, %s20, 1
        %s239 = smul.addr %s238, 8
        %s240 = scalar_lea.vmem %s2, %s239
      $region52: #{_lambda_.52} parent=43 // pred_fallthru
        _
    $region44: #{_lambda_.52} parent=5 // pred_fallthru
      _
  $region6: #{_lambda_.52} parent=0 // loop_footer
    %s13 = sadd.s32 1, %s9
  $region7: #{_lambda_.52} parent=0 // loop_footer_branch
    %8 = sbr.rel target = $region3
  $region8: #{_lambda_.52} parent=0 // loop_exit
    _

// kernel: _lambda_.53
$region0: #{_lambda_.53}
  #allocation0 [shape = 'u32[]', space=smem, size = 0x4, offset = 0x4, fixed_abs, tag = 'smem constant byte address 0x4 - core index']
  #allocation1 [shape = 'u32[144,128]{1,0:T(1,128)}', space=vmem, size = 0x12000, scoped, tag = 'internal scratch']
  %s0 = inlined_call_operand.vmem [shape: f32[16,128], index: 0, kind: input, shape index: {}]
  %s1 = inlined_call_operand.vmem [shape: f32[16,1], index: 1, kind: input, shape index: {}]
  %s2 = inlined_call_operand.vmem [shape: f32[16,1], index: 2, kind: input, shape index: {}]
  %s3 = inlined_call_operand.vmem [shape: f32[16,128], index: 3, kind: output, shape index: {}]
  %s4 = sld [smem:[#allocation0]]
  $region45: #{_lambda_.53} parent=0
    _
  %s6 = ssub.s32 1, %s4
  %s7 = scalar_select 0, %s6, %s4
  loop: start=0, step=1, limit=4
  $region2: #{_lambda_.53} parent=0 // loop_pre_header
    _
  $region3: #{_lambda_.53} parent=0 // loop_header
    %s9 = sphi 0, %s13
    %p10 = scmp.ge.s32.totalorder %s9, 4
    %s16 = sphi 0, %s28
    %s17 = sphi 0, %s24
    %s18 = sphi 0, %s16
    %s19 = sphi 0, %s17
    %s20 = sphi 0, %s18
    %s21 = sphi 0, %s19
    %s33 = sphi 0, %s35
    %s36 = sphi 0, %s33
    %s37 = sphi 0, %s36
    %s53 = sphi 0, %s37
    %s59 = sphi 0, %s61
    %s62 = sphi 0, %s59
    %s63 = sphi 0, %s62
    %s79 = sphi 0, %s63
    %s85 = sphi 0, %s87
    %s88 = sphi 0, %s85
    %s89 = sphi 0, %s88
    %s105 = sphi 0, %s89
    %s113 = sphi 0, %s115
    %s116 = sphi 0, %s113
    %s117 = sphi 0, %s116
    %s133 = sphi 0, %s117
  $region4: #{_lambda_.53} parent=0 // loop_header_branch
    %12 = sbr.rel (%p10) target = $region8
  $region5: #{_lambda_.53} parent=0 // loop_body
    %s14 = ssub.s32 %s9, 1
    %s15 = ssub.s32 %s9, 2
    %s22 = sadd.s32 1, %s17
    %p23 = scmp.ge.s32.totalorder %s22, 1
    %s24 = scalar_select %p23, 0, %s22
    %s25 = sadd.s32 1, %s16
    %s26 = scalar_select %p23, %s25, %s16
    %p27 = scmp.ge.s32.totalorder %s26, 2
    %s28 = scalar_select %p27, 0, %s26
    %s29 = ssub.s32 %s16, %s28
    %s30 = ssub.s32 %s17, %s24
    %s31 = sor.u32 %s29, %s30
    %p32 = scmp.eq.s32.totalorder %s31, 0
    %s34 = sadd.s32 %s33, 1
    %s35 = scalar_select %p32, %s33, %s34
    %p38 = pneg %p32
    %p39 = scmp.eq.s32.totalorder %s9, 1
    %p40 = por %p38, %p39
    %p41 = scmp.ne.s32.totalorder %s33, %s36
    %p42 = scmp.eq.s32.totalorder %s9, 0
    %p43 = por %p41, %p42
    %p44 = scmp.ne.s32.totalorder %s33, %s36
    %p45 = scmp.eq.s32.totalorder %s14, 1
    %p46 = por %p44, %p45
    %p47 = scmp.ne.s32.totalorder %s36, %s37
    %p48 = scmp.eq.s32.totalorder %s14, 0
    %p49 = por %p47, %p48
    %p50 = scmp.ne.s32.totalorder %s36, %s37
    %p51 = scmp.eq.s32.totalorder %s15, 1
    %p52 = por %p50, %p51
    %p54 = scmp.ne.s32.totalorder %s37, %s53
    %p55 = scmp.eq.s32.totalorder %s15, 0
    %p56 = por %p54, %p55
    %s57 = ssub.s32 %s16, %s28
    %p58 = scmp.eq.s32.totalorder %s57, 0
    %s60 = sadd.s32 %s59, 1
    %s61 = scalar_select %p58, %s59, %s60
    %p64 = pneg %p58
    %p65 = scmp.eq.s32.totalorder %s9, 1
    %p66 = por %p64, %p65
    %p67 = scmp.ne.s32.totalorder %s59, %s62
    %p68 = scmp.eq.s32.totalorder %s9, 0
    %p69 = por %p67, %p68
    %p70 = scmp.ne.s32.totalorder %s59, %s62
    %p71 = scmp.eq.s32.totalorder %s14, 1
    %p72 = por %p70, %p71
    %p73 = scmp.ne.s32.totalorder %s62, %s63
    %p74 = scmp.eq.s32.totalorder %s14, 0
    %p75 = por %p73, %p74
    %p76 = scmp.ne.s32.totalorder %s62, %s63
    %p77 = scmp.eq.s32.totalorder %s15, 1
    %p78 = por %p76, %p77
    %p80 = scmp.ne.s32.totalorder %s63, %s79
    %p81 = scmp.eq.s32.totalorder %s15, 0
    %p82 = por %p80, %p81
    %s83 = ssub.s32 %s16, %s28
    %p84 = scmp.eq.s32.totalorder %s83, 0
    %s86 = sadd.s32 %s85, 1
    %s87 = scalar_select %p84, %s85, %s86
    %p90 = pneg %p84
    %p91 = scmp.eq.s32.totalorder %s9, 1
    %p92 = por %p90, %p91
    %p93 = scmp.ne.s32.totalorder %s85, %s88
    %p94 = scmp.eq.s32.totalorder %s9, 0
    %p95 = por %p93, %p94
    %p96 = scmp.ne.s32.totalorder %s85, %s88
    %p97 = scmp.eq.s32.totalorder %s14, 1
    %p98 = por %p96, %p97
    %p99 = scmp.ne.s32.totalorder %s88, %s89
    %p100 = scmp.eq.s32.totalorder %s14, 0
    %p101 = por %p99, %p100
    %p102 = scmp.ne.s32.totalorder %s88, %s89
    %p103 = scmp.eq.s32.totalorder %s15, 1
    %p104 = por %p102, %p103
    %p106 = scmp.ne.s32.totalorder %s89, %s105
    %p107 = scmp.eq.s32.totalorder %s15, 0
    %p108 = por %p106, %p107
    %s109 = ssub.s32 %s16, %s28
    %s110 = ssub.s32 %s17, %s24
    %s111 = sor.u32 %s109, %s110
    %p112 = scmp.eq.s32.totalorder %s111, 0
    %s114 = sadd.s32 %s113, 1
    %s115 = scalar_select %p112, %s113, %s114
    %p118 = pneg %p112
    %p119 = scmp.eq.s32.totalorder %s9, 1
    %p120 = por %p118, %p119
    %p121 = scmp.ne.s32.totalorder %s113, %s116
    %p122 = scmp.eq.s32.totalorder %s9, 0
    %p123 = por %p121, %p122
    %p124 = scmp.ne.s32.totalorder %s113, %s116
    %p125 = scmp.eq.s32.totalorder %s14, 1
    %p126 = por %p124, %p125
    %p127 = scmp.ne.s32.totalorder %s116, %s117
    %p128 = scmp.eq.s32.totalorder %s14, 0
    %p129 = por %p127, %p128
    %p130 = scmp.ne.s32.totalorder %s116, %s117
    %p131 = scmp.eq.s32.totalorder %s15, 1
    %p132 = por %p130, %p131
    %p134 = scmp.ne.s32.totalorder %s117, %s133
    %p135 = scmp.eq.s32.totalorder %s15, 0
    %p136 = por %p134, %p135
    %p137 = scmp.le.s32.totalorder 1, %s9
    %p138 = scmp.lt.s32.totalorder %s9, 3
    %p139 = pnand %p137, %p138
    %p140 = pneg %p139
    // Predicated region
    $region9: #{_lambda_.53} parent=5 // pred_check
      _
    $region10: #{_lambda_.53} parent=5 // pred_check_branch
      %142 = sbr.rel (%p139) target = $region12
    $region11: #{_lambda_.53} parent=5 // pred_region
      %s143 = ssub.s32 %s9, 1
    $region12: #{_lambda_.53} parent=5 // pred_fallthru
      _
    %p144 = scmp.lt.s32.totalorder %s9, 2
    // Predicated region
    $region13: #{_lambda_.53} parent=5 // pred_check
      %p145 = pneg %p144
    $region14: #{_lambda_.53} parent=5 // pred_check_branch
      %147 = sbr.rel (%p145) target = $region16
    $region15: #{_lambda_.53} parent=5 // pred_region
      // Predicated region
      $region17: #{_lambda_.53} parent=15 // pred_check
        %p148 = pneg %p43
      $region18: #{_lambda_.53} parent=15 // pred_check_branch
        %150 = sbr.rel (%p148) target = $region20
      $region19: #{_lambda_.53} parent=15 // pred_region
        %p151 = scmp.lt.s32.totalorder %s16, 1
        %s152 = scalar_select %p151, %s16, 1
        %p153 = scmp.lt.s32.totalorder %s17, 0
        %s154 = scalar_select %p153, %s17, 0
        %s155 = sadd.s32 %s154, %s152
        %s156 = smul.addr %s155, 8
        %s157 = scalar_lea.vmem %s0, %s156
      $region20: #{_lambda_.53} parent=15 // pred_fallthru
        _
      // Predicated region
      $region21: #{_lambda_.53} parent=15 // pred_check
        %p158 = pneg %p69
      $region22: #{_lambda_.53} parent=15 // pred_check_branch
        %160 = sbr.rel (%p158) target = $region24
      $region23: #{_lambda_.53} parent=15 // pred_region
        %p161 = scmp.lt.s32.totalorder %s16, 1
        %s162 = scalar_select %p161, %s16, 1
        %s163 = smul.addr %s162, 8
        %s164 = scalar_lea.vmem %s1, %s163
      $region24: #{_lambda_.53} parent=15 // pred_fallthru
        _
      // Predicated region
      $region25: #{_lambda_.53} parent=15 // pred_check
        %p165 = pneg %p95
      $region26: #{_lambda_.53} parent=15 // pred_check_branch
        %167 = sbr.rel (%p165) target = $region28
      $region27: #{_lambda_.53} parent=15 // pred_region
        %p168 = scmp.lt.s32.totalorder %s16, 1
        %s169 = scalar_select %p168, %s16, 1
        %s170 = smul.addr %s169, 8
        %s171 = scalar_lea.vmem %s2, %s170
      $region28: #{_lambda_.53} parent=15 // pred_fallthru
        _
    $region16: #{_lambda_.53} parent=5 // pred_fallthru
      _
    %p172 = scmp.le.s32.totalorder 1, %s9
    %p173 = scmp.lt.s32.totalorder %s9, 3
    %p174 = pnand %p172, %p173
    %p175 = pneg %p174
    // Predicated region
    $region29: #{_lambda_.53} parent=5 // pred_check
      _
    $region30: #{_lambda_.53} parent=5 // pred_check_branch
      %177 = sbr.rel (%p174) target = $region32
    $region31: #{_lambda_.53} parent=5 // pred_region
      %s178 = ssub.s32 %s9, 1
      %p179 = scmp.lt.s32.totalorder %s18, 1
      %s180 = scalar_select %p179, %s18, 1
      %p181 = scmp.lt.s32.totalorder %s19, 0
      %s182 = scalar_select %p181, %s19, 0
      %s183 = sadd.s32 %s182, %s180
      %s184 = smul.addr %s183, 8
      %s185 = scalar_lea.vmem %s0, %s184
      %p186 = pneg %p49
      %p187 = pneg %p46
      %p188 = scmp.lt.s32.totalorder %s18, 1
      %s189 = scalar_select %p188, %s18, 1
      %s190 = smul.addr %s189, 8
      %s191 = scalar_lea.vmem %s1, %s190
      %p192 = pneg %p75
      %p193 = pneg %p72
      %p194 = scmp.lt.s32.totalorder %s18, 1
      %s195 = scalar_select %p194, %s18, 1
      %s196 = smul.addr %s195, 8
      %s197 = scalar_lea.vmem %s2, %s196
      %p198 = pneg %p101
      %p199 = pneg %p98
      %p200 = pneg %p129
      %p201 = pneg %p126
      %p202 = scmp.lt.s32.totalorder %s18, 1
      %s203 = scalar_select %p202, %s18, 1
      %p204 = scmp.lt.s32.totalorder %s19, 0
      %s205 = scalar_select %p204, %s19, 0
      %s206 = sadd.s32 %s205, %s203
      %s207 = smul.addr %s206, 8
      %s208 = scalar_lea.vmem %s3, %s207
      %p209 = scmp.lt.s32.totalorder %s18, 1
      %s210 = scalar_select %p209, %s18, 1
      %p211 = scmp.lt.s32.totalorder %s19, 0
      %s212 = scalar_select %p211, %s19, 0
      %s213 = sadd.s32 %s212, %s210
      %s214 = smul.addr %s213, 8
      %s215 = scalar_lea.vmem %s0, %s214
      %p216 = scmp.lt.s32.totalorder %s18, 1
      %s217 = scalar_select %p216, %s18, 1
      %s218 = smul.addr %s217, 8
      %s219 = scalar_lea.vmem %s1, %s218
      %p220 = scmp.lt.s32.totalorder %s18, 1
      %s221 = scalar_select %p220, %s18, 1
      %s222 = smul.addr %s221, 8
      %s223 = scalar_lea.vmem %s2, %s222
      %p224 = scmp.lt.s32.totalorder %s18, 1
      %s225 = scalar_select %p224, %s18, 1
      %p226 = scmp.lt.s32.totalorder %s19, 0
      %s227 = scalar_select %p226, %s19, 0
      %s228 = sadd.s32 %s227, %s225
      %s229 = smul.addr %s228, 8
      %s230 = scalar_lea.vmem %s3, %s229
      %v231 = vld [vmem:[%s215] sm:$0xff]
      %v232 = vld [vmem:[%s219] sm:$0xff]
      %234 = vset.pattern.permute.xlu0 0
      %235 = vperm.xlu0 %234, %v232
      %v236 = vpop.permute.xlu0 %235
      %v238 = vsub.f32 %v231, %v236
      %v239 = vld [vmem:[%s223] sm:$0xff]
      %241 = vset.pattern.permute.xlu0 0
      %242 = vperm.xlu0 %241, %v239
      %v243 = vpop.permute.xlu0 %242
      %v245 = vmul.f32 %v238, %v243
      %246 = vst [vmem:[%s230] sm:$0xff] %v245
      %p247 = scmp.lt.s32.totalorder %s18, 1
      %s248 = scalar_select %p247, %s18, 1
      %p249 = scmp.lt.s32.totalorder %s19, 0
      %s250 = scalar_select %p249, %s19, 0
      %s251 = sadd.s32 %s250, %s248
      %s252 = smul.addr %s251, 8
      %s253 = scalar_lea.vmem %s3, %s252
      // Predicated region
      $region33: #{_lambda_.53} parent=31 // pred_check
        %p254 = pneg %p126
      $region34: #{_lambda_.53} parent=31 // pred_check_branch
        %256 = sbr.rel (%p254) target = $region36
      $region35: #{_lambda_.53} parent=31 // pred_region
        _
      $region36: #{_lambda_.53} parent=31 // pred_fallthru
        _
    $region32: #{_lambda_.53} parent=5 // pred_fallthru
      _
    %p257 = scmp.le.s32.totalorder 2, %s9
    // Predicated region
    $region37: #{_lambda_.53} parent=5 // pred_check
      %p258 = pneg %p257
    $region38: #{_lambda_.53} parent=5 // pred_check_branch
      %260 = sbr.rel (%p258) target = $region40
    $region39: #{_lambda_.53} parent=5 // pred_region
      %s261 = ssub.s32 %s9, 2
      // Predicated region
      $region41: #{_lambda_.53} parent=39 // pred_check
        %p262 = pneg %p132
      $region42: #{_lambda_.53} parent=39 // pred_check_branch
        %264 = sbr.rel (%p262) target = $region44
      $region43: #{_lambda_.53} parent=39 // pred_region
        %p265 = scmp.lt.s32.totalorder %s20, 1
        %s266 = scalar_select %p265, %s20, 1
        %p267 = scmp.lt.s32.totalorder %s21, 0
        %s268 = scalar_select %p267, %s21, 0
        %s269 = sadd.s32 %s268, %s266
        %s270 = smul.addr %s269, 8
        %s271 = scalar_lea.vmem %s3, %s270
      $region44: #{_lambda_.53} parent=39 // pred_fallthru
        _
    $region40: #{_lambda_.53} parent=5 // pred_fallthru
      _
  $region6: #{_lambda_.53} parent=0 // loop_footer
    %s13 = sadd.s32 1, %s9
  $region7: #{_lambda_.53} parent=0 // loop_footer_branch
    %8 = sbr.rel target = $region3
  $region8: #{_lambda_.53} parent=0 // loop_exit
    _

// kernel: _lambda_.51
$region0: #{_lambda_.51}
  #allocation0 [shape = 'u32[]', space=smem, size = 0x4, offset = 0x4, fixed_abs, tag = 'smem constant byte address 0x4 - core index']
  #allocation1 [shape = 'u32[144,128]{1,0:T(1,128)}', space=vmem, size = 0x12000, scoped, tag = 'internal scratch']
  #allocation2 [shape = 'f32[256,128]{1,0:T(8,128)}', space=vmem, size = 0x20000, scoped, tag = 'scratch operand']
  %s0 = inlined_call_operand.vmem [shape: bf16[256,128], index: 0, kind: input, shape index: {}]
  %s1 = inlined_call_operand.vmem [shape: bf16[128,128], index: 1, kind: input, shape index: {}]
  %s2 = inlined_call_operand.vmem [shape: f32[1,128], index: 2, kind: input, shape index: {}]
  %s3 = inlined_call_operand.vmem [shape: f32[256,128], index: 3, kind: output, shape index: {}]
  %s4 = sld [smem:[#allocation0]]
  $region30: #{_lambda_.51} parent=0
    _
  %s6 = ssub.s32 1, %s4
  %s7 = scalar_select 0, %s6, %s4
  // Predicated region
  $region2: #{_lambda_.51} parent=0 // pred_check
    _
  $region3: #{_lambda_.51} parent=0 // pred_check_branch
    %9 = sbr.rel (0) target = $region5
  $region4: #{_lambda_.51} parent=0 // pred_region
    _
  $region5: #{_lambda_.51} parent=0 // pred_fallthru
    _
  // Predicated region
  $region6: #{_lambda_.51} parent=0 // pred_check
    _
  $region7: #{_lambda_.51} parent=0 // pred_check_branch
    %11 = sbr.rel (0) target = $region9
  $region8: #{_lambda_.51} parent=0 // pred_region
    _
  $region9: #{_lambda_.51} parent=0 // pred_fallthru
    _
  // Predicated region
  $region10: #{_lambda_.51} parent=0 // pred_check
    _
  $region11: #{_lambda_.51} parent=0 // pred_check_branch
    %13 = sbr.rel (0) target = $region13
  $region12: #{_lambda_.51} parent=0 // pred_region
    _
  $region13: #{_lambda_.51} parent=0 // pred_fallthru
    _
  %p16 = scmp.eq.s32.totalorder 0, 0
  // Predicated region
  $region14: #{_lambda_.51} parent=0 // pred_check
    %p17 = pneg %p16
  $region15: #{_lambda_.51} parent=0 // pred_check_branch
    %19 = sbr.rel (%p17) target = $region17
  $region16: #{_lambda_.51} parent=0 // pred_region
    %20 = vst [vmem:[#allocation2] sm:$0xff] 0.0
    %21 = vst [vmem:[#allocation2 + $0x8] sm:$0xff] 0.0
    %22 = vst [vmem:[#allocation2 + $0x10] sm:$0xff] 0.0
    %23 = vst [vmem:[#allocation2 + $0x18] sm:$0xff] 0.0
    %24 = vst [vmem:[#allocation2 + $0x20] sm:$0xff] 0.0
    %25 = vst [vmem:[#allocation2 + $0x28] sm:$0xff] 0.0
    %26 = vst [vmem:[#allocation2 + $0x30] sm:$0xff] 0.0
    %27 = vst [vmem:[#allocation2 + $0x38] sm:$0xff] 0.0
    %28 = vst [vmem:[#allocation2 + $0x40] sm:$0xff] 0.0
    %29 = vst [vmem:[#allocation2 + $0x48] sm:$0xff] 0.0
    %30 = vst [vmem:[#allocation2 + $0x50] sm:$0xff] 0.0
    %31 = vst [vmem:[#allocation2 + $0x58] sm:$0xff] 0.0
    %32 = vst [vmem:[#allocation2 + $0x60] sm:$0xff] 0.0
    %33 = vst [vmem:[#allocation2 + $0x68] sm:$0xff] 0.0
    %34 = vst [vmem:[#allocation2 + $0x70] sm:$0xff] 0.0
    %35 = vst [vmem:[#allocation2 + $0x78] sm:$0xff] 0.0
    %36 = vst [vmem:[#allocation2 + $0x80] sm:$0xff] 0.0
    %37 = vst [vmem:[#allocation2 + $0x88] sm:$0xff] 0.0
    %38 = vst [vmem:[#allocation2 + $0x90] sm:$0xff] 0.0
    %39 = vst [vmem:[#allocation2 + $0x98] sm:$0xff] 0.0
    %40 = vst [vmem:[#allocation2 + $0xa0] sm:$0xff] 0.0
    %41 = vst [vmem:[#allocation2 + $0xa8] sm:$0xff] 0.0
    %42 = vst [vmem:[#allocation2 + $0xb0] sm:$0xff] 0.0
    %43 = vst [vmem:[#allocation2 + $0xb8] sm:$0xff] 0.0
    %44 = vst [vmem:[#allocation2 + $0xc0] sm:$0xff] 0.0
    %45 = vst [vmem:[#allocation2 + $0xc8] sm:$0xff] 0.0
    %46 = vst [vmem:[#allocation2 + $0xd0] sm:$0xff] 0.0
    %47 = vst [vmem:[#allocation2 + $0xd8] sm:$0xff] 0.0
    %48 = vst [vmem:[#allocation2 + $0xe0] sm:$0xff] 0.0
    %49 = vst [vmem:[#allocation2 + $0xe8] sm:$0xff] 0.0
    %50 = vst [vmem:[#allocation2 + $0xf0] sm:$0xff] 0.0
    %51 = vst [vmem:[#allocation2 + $0xf8] sm:$0xff] 0.0
  $region17: #{_lambda_.51} parent=0 // pred_fallthru
    _
  %v52 = vld [vmem:[%s0] sm:$0xf]
  %v53 = vld [vmem:[%s0 + $0x4] sm:$0xf]
  %v54 = vld [vmem:[%s0 + $0x8] sm:$0xf]
  %v55 = vld [vmem:[%s0 + $0xc] sm:$0xf]
  %v56 = vld [vmem:[%s0 + $0x10] sm:$0xf]
  %v57 = vld [vmem:[%s0 + $0x14] sm:$0xf]
  %v58 = vld [vmem:[%s0 + $0x18] sm:$0xf]
  %v59 = vld [vmem:[%s0 + $0x1c] sm:$0xf]
  %v60 = vld [vmem:[%s0 + $0x20] sm:$0xf]
  %v61 = vld [vmem:[%s0 + $0x24] sm:$0xf]
  %v62 = vld [vmem:[%s0 + $0x28] sm:$0xf]
  %v63 = vld [vmem:[%s0 + $0x2c] sm:$0xf]
  %v64 = vld [vmem:[%s0 + $0x30] sm:$0xf]
  %v65 = vld [vmem:[%s0 + $0x34] sm:$0xf]
  %v66 = vld [vmem:[%s0 + $0x38] sm:$0xf]
  %v67 = vld [vmem:[%s0 + $0x3c] sm:$0xf]
  %v68 = vld [vmem:[%s0 + $0x40] sm:$0xf]
  %v69 = vld [vmem:[%s0 + $0x44] sm:$0xf]
  %v70 = vld [vmem:[%s0 + $0x48] sm:$0xf]
  %v71 = vld [vmem:[%s0 + $0x4c] sm:$0xf]
  %v72 = vld [vmem:[%s0 + $0x50] sm:$0xf]
  %v73 = vld [vmem:[%s0 + $0x54] sm:$0xf]
  %v74 = vld [vmem:[%s0 + $0x58] sm:$0xf]
  %v75 = vld [vmem:[%s0 + $0x5c] sm:$0xf]
  %v76 = vld [vmem:[%s0 + $0x60] sm:$0xf]
  %v77 = vld [vmem:[%s0 + $0x64] sm:$0xf]
  %v78 = vld [vmem:[%s0 + $0x68] sm:$0xf]
  %v79 = vld [vmem:[%s0 + $0x6c] sm:$0xf]
  %v80 = vld [vmem:[%s0 + $0x70] sm:$0xf]
  %v81 = vld [vmem:[%s0 + $0x74] sm:$0xf]
  %v82 = vld [vmem:[%s0 + $0x78] sm:$0xf]
  %v83 = vld [vmem:[%s0 + $0x7c] sm:$0xf]
  %vm84 = vcmp.ge.bf16.partialorder %v52, 0
  %vm85 = vcmp.ge.bf16.partialorder %v53, 0
  %vm86 = vcmp.ge.bf16.partialorder %v54, 0
  %vm87 = vcmp.ge.bf16.partialorder %v55, 0
  %vm88 = vcmp.ge.bf16.partialorder %v56, 0
  %vm89 = vcmp.ge.bf16.partialorder %v57, 0
  %vm90 = vcmp.ge.bf16.partialorder %v58, 0
  %vm91 = vcmp.ge.bf16.partialorder %v59, 0
  %vm92 = vcmp.ge.bf16.partialorder %v60, 0
  %vm93 = vcmp.ge.bf16.partialorder %v61, 0
  %vm94 = vcmp.ge.bf16.partialorder %v62, 0
  %vm95 = vcmp.ge.bf16.partialorder %v63, 0
  %vm96 = vcmp.ge.bf16.partialorder %v64, 0
  %vm97 = vcmp.ge.bf16.partialorder %v65, 0
  %vm98 = vcmp.ge.bf16.partialorder %v66, 0
  %vm99 = vcmp.ge.bf16.partialorder %v67, 0
  %vm100 = vcmp.ge.bf16.partialorder %v68, 0
  %vm101 = vcmp.ge.bf16.partialorder %v69, 0
  %vm102 = vcmp.ge.bf16.partialorder %v70, 0
  %vm103 = vcmp.ge.bf16.partialorder %v71, 0
  %vm104 = vcmp.ge.bf16.partialorder %v72, 0
  %vm105 = vcmp.ge.bf16.partialorder %v73, 0
  %vm106 = vcmp.ge.bf16.partialorder %v74, 0
  %vm107 = vcmp.ge.bf16.partialorder %v75, 0
  %vm108 = vcmp.ge.bf16.partialorder %v76, 0
  %vm109 = vcmp.ge.bf16.partialorder %v77, 0
  %vm110 = vcmp.ge.bf16.partialorder %v78, 0
  %vm111 = vcmp.ge.bf16.partialorder %v79, 0
  %vm112 = vcmp.ge.bf16.partialorder %v80, 0
  %vm113 = vcmp.ge.bf16.partialorder %v81, 0
  %vm114 = vcmp.ge.bf16.partialorder %v82, 0
  %vm115 = vcmp.ge.bf16.partialorder %v83, 0
  %v116 = vmul.bf16 %v52, 1045249613
  %v117 = vmul.bf16 %v53, 1045249613
  %v118 = vmul.bf16 %v54, 1045249613
  %v119 = vmul.bf16 %v55, 1045249613
  %v120 = vmul.bf16 %v56, 1045249613
  %v121 = vmul.bf16 %v57, 1045249613
  %v122 = vmul.bf16 %v58, 1045249613
  %v123 = vmul.bf16 %v59, 1045249613
  %v124 = vmul.bf16 %v60, 1045249613
  %v125 = vmul.bf16 %v61, 1045249613
  %v126 = vmul.bf16 %v62, 1045249613
  %v127 = vmul.bf16 %v63, 1045249613
  %v128 = vmul.bf16 %v64, 1045249613
  %v129 = vmul.bf16 %v65, 1045249613
  %v130 = vmul.bf16 %v66, 1045249613
  %v131 = vmul.bf16 %v67, 1045249613
  %v132 = vmul.bf16 %v68, 1045249613
  %v133 = vmul.bf16 %v69, 1045249613
  %v134 = vmul.bf16 %v70, 1045249613
  %v135 = vmul.bf16 %v71, 1045249613
  %v136 = vmul.bf16 %v72, 1045249613
  %v137 = vmul.bf16 %v73, 1045249613
  %v138 = vmul.bf16 %v74, 1045249613
  %v139 = vmul.bf16 %v75, 1045249613
  %v140 = vmul.bf16 %v76, 1045249613
  %v141 = vmul.bf16 %v77, 1045249613
  %v142 = vmul.bf16 %v78, 1045249613
  %v143 = vmul.bf16 %v79, 1045249613
  %v144 = vmul.bf16 %v80, 1045249613
  %v145 = vmul.bf16 %v81, 1045249613
  %v146 = vmul.bf16 %v82, 1045249613
  %v147 = vmul.bf16 %v83, 1045249613
  %v148 = vsel %vm84, %v52, %v116
  %v149 = vsel %vm85, %v53, %v117
  %v150 = vsel %vm86, %v54, %v118
  %v151 = vsel %vm87, %v55, %v119
  %v152 = vsel %vm88, %v56, %v120
  %v153 = vsel %vm89, %v57, %v121
  %v154 = vsel %vm90, %v58, %v122
  %v155 = vsel %vm91, %v59, %v123
  %v156 = vsel %vm92, %v60, %v124
  %v157 = vsel %vm93, %v61, %v125
  %v158 = vsel %vm94, %v62, %v126
  %v159 = vsel %vm95, %v63, %v127
  %v160 = vsel %vm96, %v64, %v128
  %v161 = vsel %vm97, %v65, %v129
  %v162 = vsel %vm98, %v66, %v130
  %v163 = vsel %vm99, %v67, %v131
  %v164 = vsel %vm100, %v68, %v132
  %v165 = vsel %vm101, %v69, %v133
  %v166 = vsel %vm102, %v70, %v134
  %v167 = vsel %vm103, %v71, %v135
  %v168 = vsel %vm104, %v72, %v136
  %v169 = vsel %vm105, %v73, %v137
  %v170 = vsel %vm106, %v74, %v138
  %v171 = vsel %vm107, %v75, %v139
  %v172 = vsel %vm108, %v76, %v140
  %v173 = vsel %vm109, %v77, %v141
  %v174 = vsel %vm110, %v78, %v142
  %v175 = vsel %vm111, %v79, %v143
  %v176 = vsel %vm112, %v80, %v144
  %v177 = vsel %vm113, %v81, %v145
  %v178 = vsel %vm114, %v82, %v146
  %v179 = vsel %vm115, %v83, %v147
  %v180 = vld [vmem:[#allocation2] sm:$0xff]
  %v181 = vld [vmem:[#allocation2 + $0x8] sm:$0xff]
  %v182 = vld [vmem:[#allocation2 + $0x10] sm:$0xff]
  %v183 = vld [vmem:[#allocation2 + $0x18] sm:$0xff]
  %v184 = vld [vmem:[#allocation2 + $0x20] sm:$0xff]
  %v185 = vld [vmem:[#allocation2 + $0x28] sm:$0xff]
  %v186 = vld [vmem:[#allocation2 + $0x30] sm:$0xff]
  %v187 = vld [vmem:[#allocation2 + $0x38] sm:$0xff]
  %v188 = vld [vmem:[#allocation2 + $0x40] sm:$0xff]
  %v189 = vld [vmem:[#allocation2 + $0x48] sm:$0xff]
  %v190 = vld [vmem:[#allocation2 + $0x50] sm:$0xff]
  %v191 = vld [vmem:[#allocation2 + $0x58] sm:$0xff]
  %v192 = vld [vmem:[#allocation2 + $0x60] sm:$0xff]
  %v193 = vld [vmem:[#allocation2 + $0x68] sm:$0xff]
  %v194 = vld [vmem:[#allocation2 + $0x70] sm:$0xff]
  %v195 = vld [vmem:[#allocation2 + $0x78] sm:$0xff]
  %v196 = vld [vmem:[#allocation2 + $0x80] sm:$0xff]
  %v197 = vld [vmem:[#allocation2 + $0x88] sm:$0xff]
  %v198 = vld [vmem:[#allocation2 + $0x90] sm:$0xff]
  %v199 = vld [vmem:[#allocation2 + $0x98] sm:$0xff]
  %v200 = vld [vmem:[#allocation2 + $0xa0] sm:$0xff]
  %v201 = vld [vmem:[#allocation2 + $0xa8] sm:$0xff]
  %v202 = vld [vmem:[#allocation2 + $0xb0] sm:$0xff]
  %v203 = vld [vmem:[#allocation2 + $0xb8] sm:$0xff]
  %v204 = vld [vmem:[#allocation2 + $0xc0] sm:$0xff]
  %v205 = vld [vmem:[#allocation2 + $0xc8] sm:$0xff]
  %v206 = vld [vmem:[#allocation2 + $0xd0] sm:$0xff]
  %v207 = vld [vmem:[#allocation2 + $0xd8] sm:$0xff]
  %v208 = vld [vmem:[#allocation2 + $0xe0] sm:$0xff]
  %v209 = vld [vmem:[#allocation2 + $0xe8] sm:$0xff]
  %v210 = vld [vmem:[#allocation2 + $0xf0] sm:$0xff]
  %v211 = vld [vmem:[#allocation2 + $0xf8] sm:$0xff]
  %v212 = vld [vmem:[%s1] sm:$0xf]
  %v213 = vld [vmem:[%s1 + $0x4] sm:$0xf]
  %v214 = vld [vmem:[%s1 + $0x8] sm:$0xf]
  %v215 = vld [vmem:[%s1 + $0xc] sm:$0xf]
  %v216 = vld [vmem:[%s1 + $0x10] sm:$0xf]
  %v217 = vld [vmem:[%s1 + $0x14] sm:$0xf]
  %v218 = vld [vmem:[%s1 + $0x18] sm:$0xf]
  %v219 = vld [vmem:[%s1 + $0x1c] sm:$0xf]
  %v220 = vld [vmem:[%s1 + $0x20] sm:$0xf]
  %v221 = vld [vmem:[%s1 + $0x24] sm:$0xf]
  %v222 = vld [vmem:[%s1 + $0x28] sm:$0xf]
  %v223 = vld [vmem:[%s1 + $0x2c] sm:$0xf]
  %v224 = vld [vmem:[%s1 + $0x30] sm:$0xf]
  %v225 = vld [vmem:[%s1 + $0x34] sm:$0xf]
  %v226 = vld [vmem:[%s1 + $0x38] sm:$0xf]
  %v227 = vld [vmem:[%s1 + $0x3c] sm:$0xf]
  %v260 = vunpack.c.l.b16 %v148
  %v261 = vunpack.c.l.b16 %v149
  %v262 = vunpack.c.l.b16 %v150
  %v263 = vunpack.c.l.b16 %v151
  %v264 = vunpack.c.l.b16 %v152
  %v265 = vunpack.c.l.b16 %v153
  %v266 = vunpack.c.l.b16 %v154
  %v267 = vunpack.c.l.b16 %v155
  %v268 = vunpack.c.l.b16 %v156
  %v269 = vunpack.c.l.b16 %v157
  %v270 = vunpack.c.l.b16 %v158
  %v271 = vunpack.c.l.b16 %v159
  %v272 = vunpack.c.l.b16 %v160
  %v273 = vunpack.c.l.b16 %v161
  %v274 = vunpack.c.l.b16 %v162
  %v275 = vunpack.c.l.b16 %v163
  %v276 = vunpack.c.l.b16 %v164
  %v277 = vunpack.c.l.b16 %v165
  %v278 = vunpack.c.l.b16 %v166
  %v279 = vunpack.c.l.b16 %v167
  %v280 = vunpack.c.l.b16 %v168
  %v281 = vunpack.c.l.b16 %v169
  %v282 = vunpack.c.l.b16 %v170
  %v283 = vunpack.c.l.b16 %v171
  %v284 = vunpack.c.l.b16 %v172
  %v285 = vunpack.c.l.b16 %v173
  %v286 = vunpack.c.l.b16 %v174
  %v287 = vunpack.c.l.b16 %v175
  %v288 = vunpack.c.l.b16 %v176
  %v289 = vunpack.c.l.b16 %v177
  %v290 = vunpack.c.l.b16 %v178
  %v291 = vunpack.c.l.b16 %v179
  %v292 = vpack.c.b16 %v261, %v260
  %v293 = vpack.c.b16 %v263, %v262
  %v294 = vpack.c.b16 %v265, %v264
  %v295 = vpack.c.b16 %v267, %v266
  %v296 = vpack.c.b16 %v269, %v268
  %v297 = vpack.c.b16 %v271, %v270
  %v298 = vpack.c.b16 %v273, %v272
  %v299 = vpack.c.b16 %v275, %v274
  %v300 = vpack.c.b16 %v277, %v276
  %v301 = vpack.c.b16 %v279, %v278
  %v302 = vpack.c.b16 %v281, %v280
  %v303 = vpack.c.b16 %v283, %v282
  %v304 = vpack.c.b16 %v285, %v284
  %v305 = vpack.c.b16 %v287, %v286
  %v306 = vpack.c.b16 %v289, %v288
  %v307 = vpack.c.b16 %v291, %v290
  %v340 = vunpack.c.l.b16 %v212
  %v341 = vunpack.c.l.b16 %v213
  %v342 = vunpack.c.l.b16 %v214
  %v343 = vunpack.c.l.b16 %v215
  %v344 = vunpack.c.l.b16 %v216
  %v345 = vunpack.c.l.b16 %v217
  %v346 = vunpack.c.l.b16 %v218
  %v347 = vunpack.c.l.b16 %v219
  %v348 = vunpack.c.l.b16 %v220
  %v349 = vunpack.c.l.b16 %v221
  %v350 = vunpack.c.l.b16 %v222
  %v351 = vunpack.c.l.b16 %v223
  %v352 = vunpack.c.l.b16 %v224
  %v353 = vunpack.c.l.b16 %v225
  %v354 = vunpack.c.l.b16 %v226
  %v355 = vunpack.c.l.b16 %v227
  %v356 = vpack.c.b16 %v341, %v340
  %v357 = vpack.c.b16 %v343, %v342
  %v358 = vpack.c.b16 %v345, %v344
  %v359 = vpack.c.b16 %v347, %v346
  %v360 = vpack.c.b16 %v349, %v348
  %v361 = vpack.c.b16 %v351, %v350
  %v362 = vpack.c.b16 %v353, %v352
  %v363 = vpack.c.b16 %v355, %v354
  %372 = vmatprep.subr.bf16.mxu0 0
  %373 = vmatpush1.bf16.msra.mxu0 %v356
  %374 = vmatprep.subr.bf16.mxu0 0
  %375 = vmatpush1.bf16.msra.mxu0 %v357
  %376 = vmatprep.subr.bf16.mxu0 0
  %377 = vmatpush1.bf16.msra.mxu0 %v358
  %378 = vmatprep.subr.bf16.mxu0 0
  %379 = vmatpush1.bf16.msra.mxu0 %v359
  %380 = vmatprep.subr.bf16.mxu0 0
  %381 = vmatpush1.bf16.msra.mxu0 %v360
  %382 = vmatprep.subr.bf16.mxu0 0
  %383 = vmatpush1.bf16.msra.mxu0 %v361
  %384 = vmatprep.subr.bf16.mxu0 0
  %385 = vmatpush1.bf16.msra.mxu0 %v362
  %386 = vmatprep.subr.bf16.mxu0 0
  %387 = vmatpush1.bf16.msra.mxu0 %v363
  %388 = vmatprep.subr.bf16.mxu0 0
  %389 = vmatpush1.bf16.msra.mxu0 0
  %390 = vmatprep.subr.bf16.mxu0 0
  %391 = vmatpush1.bf16.msra.mxu0 0
  %392 = vmatprep.subr.bf16.mxu0 0
  %393 = vmatpush1.bf16.msra.mxu0 0
  %394 = vmatprep.subr.bf16.mxu0 0
  %395 = vmatpush1.bf16.msra.mxu0 0
  %396 = vmatprep.subr.bf16.mxu0 0
  %397 = vmatpush1.bf16.msra.mxu0 0
  %398 = vmatprep.subr.bf16.mxu0 0
  %399 = vmatpush1.bf16.msra.mxu0 0
  %400 = vmatprep.subr.bf16.mxu0 0
  %401 = vmatpush1.bf16.msra.mxu0 0
  %402 = vmatprep.subr.bf16.mxu0 0
  %403 = vmatpush1.bf16.msra.mxu0 0
  %404 = vmatprep.mubr.bf16.mxu0 0
  %405 = vmatmul.mubr.bf16.gmra.mrb[0].mxu0 %v292
  %v406 = vpop.f32.mrb[0].mxu0
  %v407 = vadd.f32 0.0, %v406
  %v408 = vpop.f32.mrb[0].mxu0
  %v409 = vpop.f32.mrb[0].mxu0
  %v410 = vadd.f32 0.0, %v409
  %v411 = vpop.f32.mrb[0].mxu0
  %412 = vmatprep.mubr.bf16.mxu0 0
  %413 = vmatmul.mubr.bf16.gmra.mrb[0].mxu0 %v293
  %v414 = vpop.f32.mrb[0].mxu0
  %v415 = vadd.f32 0.0, %v414
  %v416 = vpop.f32.mrb[0].mxu0
  %v417 = vpop.f32.mrb[0].mxu0
  %v418 = vadd.f32 0.0, %v417
  %v419 = vpop.f32.mrb[0].mxu0
  %420 = vmatprep.mubr.bf16.mxu0 0
  %421 = vmatmul.mubr.bf16.gmra.mrb[0].mxu0 %v294
  %v422 = vpop.f32.mrb[0].mxu0
  %v423 = vadd.f32 0.0, %v422
  %v424 = vpop.f32.mrb[0].mxu0
  %v425 = vpop.f32.mrb[0].mxu0
  %v426 = vadd.f32 0.0, %v425
  %v427 = vpop.f32.mrb[0].mxu0
  %428 = vmatprep.mubr.bf16.mxu0 0
  %429 = vmatmul.mubr.bf16.gmra.mrb[0].mxu0 %v295
  %v430 = vpop.f32.mrb[0].mxu0
  %v431 = vadd.f32 0.0, %v430
  %v432 = vpop.f32.mrb[0].mxu0
  %v433 = vpop.f32.mrb[0].mxu0
  %v434 = vadd.f32 0.0, %v433
  %v435 = vpop.f32.mrb[0].mxu0
  %436 = vmatprep.mubr.bf16.mxu0 0
  %437 = vmatmul.mubr.bf16.gmra.mrb[0].mxu0 %v296
  %v438 = vpop.f32.mrb[0].mxu0
  %v439 = vadd.f32 0.0, %v438
  %v440 = vpop.f32.mrb[0].mxu0
  %v441 = vpop.f32.mrb[0].mxu0
  %v442 = vadd.f32 0.0, %v441
  %v443 = vpop.f32.mrb[0].mxu0
  %444 = vmatprep.mubr.bf16.mxu0 0
  %445 = vmatmul.mubr.bf16.gmra.mrb[0].mxu0 %v297
  %v446 = vpop.f32.mrb[0].mxu0
  %v447 = vadd.f32 0.0, %v446
  %v448 = vpop.f32.mrb[0].mxu0
  %v449 = vpop.f32.mrb[0].mxu0
  %v450 = vadd.f32 0.0, %v449
  %v451 = vpop.f32.mrb[0].mxu0
  %452 = vmatprep.mubr.bf16.mxu0 0
  %453 = vmatmul.mubr.bf16.gmra.mrb[0].mxu0 %v298
  %v454 = vpop.f32.mrb[0].mxu0
  %v455 = vadd.f32 0.0, %v454
  %v456 = vpop.f32.mrb[0].mxu0
  %v457 = vpop.f32.mrb[0].mxu0
  %v458 = vadd.f32 0.0, %v457
  %v459 = vpop.f32.mrb[0].mxu0
  %460 = vmatprep.mubr.bf16.mxu0 0
  %461 = vmatmul.mubr.bf16.gmra.mrb[0].mxu0 %v299
  %v462 = vpop.f32.mrb[0].mxu0
  %v463 = vadd.f32 0.0, %v462
  %v464 = vpop.f32.mrb[0].mxu0
  %v465 = vpop.f32.mrb[0].mxu0
  %v466 = vadd.f32 0.0, %v465
  %v467 = vpop.f32.mrb[0].mxu0
  %468 = vmatprep.mubr.bf16.mxu0 0
  %469 = vmatmul.mubr.bf16.gmra.mrb[0].mxu0 %v300
  %v470 = vpop.f32.mrb[0].mxu0
  %v471 = vadd.f32 0.0, %v470
  %v472 = vpop.f32.mrb[0].mxu0
  %v473 = vpop.f32.mrb[0].mxu0
  %v474 = vadd.f32 0.0, %v473
  %v475 = vpop.f32.mrb[0].mxu0
  %476 = vmatprep.mubr.bf16.mxu0 0
  %477 = vmatmul.mubr.bf16.gmra.mrb[0].mxu0 %v301
  %v478 = vpop.f32.mrb[0].mxu0
  %v479 = vadd.f32 0.0, %v478
  %v480 = vpop.f32.mrb[0].mxu0
  %v481 = vpop.f32.mrb[0].mxu0
  %v482 = vadd.f32 0.0, %v481
  %v483 = vpop.f32.mrb[0].mxu0
  %484 = vmatprep.mubr.bf16.mxu0 0
  %485 = vmatmul.mubr.bf16.gmra.mrb[0].mxu0 %v302
  %v486 = vpop.f32.mrb[0].mxu0
  %v487 = vadd.f32 0.0, %v486
  %v488 = vpop.f32.mrb[0].mxu0
  %v489 = vpop.f32.mrb[0].mxu0
  %v490 = vadd.f32 0.0, %v489
  %v491 = vpop.f32.mrb[0].mxu0
  %492 = vmatprep.mubr.bf16.mxu0 0
  %493 = vmatmul.mubr.bf16.gmra.mrb[0].mxu0 %v303
  %v494 = vpop.f32.mrb[0].mxu0
  %v495 = vadd.f32 0.0, %v494
  %v496 = vpop.f32.mrb[0].mxu0
  %v497 = vpop.f32.mrb[0].mxu0
  %v498 = vadd.f32 0.0, %v497
  %v499 = vpop.f32.mrb[0].mxu0
  %500 = vmatprep.mubr.bf16.mxu0 0
  %501 = vmatmul.mubr.bf16.gmra.mrb[0].mxu0 %v304
  %v502 = vpop.f32.mrb[0].mxu0
  %v503 = vadd.f32 0.0, %v502
  %v504 = vpop.f32.mrb[0].mxu0
  %v505 = vpop.f32.mrb[0].mxu0
  %v506 = vadd.f32 0.0, %v505
  %v507 = vpop.f32.mrb[0].mxu0
  %508 = vmatprep.mubr.bf16.mxu0 0
  %509 = vmatmul.mubr.bf16.gmra.mrb[0].mxu0 %v305
  %v510 = vpop.f32.mrb[0].mxu0
  %v511 = vadd.f32 0.0, %v510
  %v512 = vpop.f32.mrb[0].mxu0
  %v513 = vpop.f32.mrb[0].mxu0
  %v514 = vadd.f32 0.0, %v513
  %v515 = vpop.f32.mrb[0].mxu0
  %516 = vmatprep.mubr.bf16.mxu0 0
  %517 = vmatmul.mubr.bf16.gmra.mrb[0].mxu0 %v306
  %v518 = vpop.f32.mrb[0].mxu0
  %v519 = vadd.f32 0.0, %v518
  %v520 = vpop.f32.mrb[0].mxu0
  %v521 = vpop.f32.mrb[0].mxu0
  %v522 = vadd.f32 0.0, %v521
  %v523 = vpop.f32.mrb[0].mxu0
  %524 = vmatprep.mubr.bf16.mxu0 0
  %525 = vmatmul.mubr.bf16.gmra.mrb[0].mxu0 %v307
  %v526 = vpop.f32.mrb[0].mxu0
  %v527 = vadd.f32 0.0, %v526
  %v528 = vpop.f32.mrb[0].mxu0
  %v529 = vpop.f32.mrb[0].mxu0
  %v530 = vadd.f32 0.0, %v529
  %v531 = vpop.f32.mrb[0].mxu0
  %532 = vdwg.mxu0
  %v533 = vadd.f32 %v180, %v407
  %v534 = vadd.f32 %v181, %v410
  %v535 = vadd.f32 %v182, %v415
  %v536 = vadd.f32 %v183, %v418
  %v537 = vadd.f32 %v184, %v423
  %v538 = vadd.f32 %v185, %v426
  %v539 = vadd.f32 %v186, %v431
  %v540 = vadd.f32 %v187, %v434
  %v541 = vadd.f32 %v188, %v439
  %v542 = vadd.f32 %v189, %v442
  %v543 = vadd.f32 %v190, %v447
  %v544 = vadd.f32 %v191, %v450
  %v545 = vadd.f32 %v192, %v455
  %v546 = vadd.f32 %v193, %v458
  %v547 = vadd.f32 %v194, %v463
  %v548 = vadd.f32 %v195, %v466
  %v549 = vadd.f32 %v196, %v471
  %v550 = vadd.f32 %v197, %v474
  %v551 = vadd.f32 %v198, %v479
  %v552 = vadd.f32 %v199, %v482
  %v553 = vadd.f32 %v200, %v487
  %v554 = vadd.f32 %v201, %v490
  %v555 = vadd.f32 %v202, %v495
  %v556 = vadd.f32 %v203, %v498
  %v557 = vadd.f32 %v204, %v503
  %v558 = vadd.f32 %v205, %v506
  %v559 = vadd.f32 %v206, %v511
  %v560 = vadd.f32 %v207, %v514
  %v561 = vadd.f32 %v208, %v519
  %v562 = vadd.f32 %v209, %v522
  %v563 = vadd.f32 %v210, %v527
  %v564 = vadd.f32 %v211, %v530
  %565 = vst [vmem:[#allocation2] sm:$0xff] %v533
  %566 = vst [vmem:[#allocation2 + $0x8] sm:$0xff] %v534
  %567 = vst [vmem:[#allocation2 + $0x10] sm:$0xff] %v535
  %568 = vst [vmem:[#allocation2 + $0x18] sm:$0xff] %v536
  %569 = vst [vmem:[#allocation2 + $0x20] sm:$0xff] %v537
  %570 = vst [vmem:[#allocation2 + $0x28] sm:$0xff] %v538
  %571 = vst [vmem:[#allocation2 + $0x30] sm:$0xff] %v539
  %572 = vst [vmem:[#allocation2 + $0x38] sm:$0xff] %v540
  %573 = vst [vmem:[#allocation2 + $0x40] sm:$0xff] %v541
  %574 = vst [vmem:[#allocation2 + $0x48] sm:$0xff] %v542
  %575 = vst [vmem:[#allocation2 + $0x50] sm:$0xff] %v543
  %576 = vst [vmem:[#allocation2 + $0x58] sm:$0xff] %v544
  %577 = vst [vmem:[#allocation2 + $0x60] sm:$0xff] %v545
  %578 = vst [vmem:[#allocation2 + $0x68] sm:$0xff] %v546
  %579 = vst [vmem:[#allocation2 + $0x70] sm:$0xff] %v547
  %580 = vst [vmem:[#allocation2 + $0x78] sm:$0xff] %v548
  %581 = vst [vmem:[#allocation2 + $0x80] sm:$0xff] %v549
  %582 = vst [vmem:[#allocation2 + $0x88] sm:$0xff] %v550
  %583 = vst [vmem:[#allocation2 + $0x90] sm:$0xff] %v551
  %584 = vst [vmem:[#allocation2 + $0x98] sm:$0xff] %v552
  %585 = vst [vmem:[#allocation2 + $0xa0] sm:$0xff] %v553
  %586 = vst [vmem:[#allocation2 + $0xa8] sm:$0xff] %v554
  %587 = vst [vmem:[#allocation2 + $0xb0] sm:$0xff] %v555
  %588 = vst [vmem:[#allocation2 + $0xb8] sm:$0xff] %v556
  %589 = vst [vmem:[#allocation2 + $0xc0] sm:$0xff] %v557
  %590 = vst [vmem:[#allocation2 + $0xc8] sm:$0xff] %v558
  %591 = vst [vmem:[#allocation2 + $0xd0] sm:$0xff] %v559
  %592 = vst [vmem:[#allocation2 + $0xd8] sm:$0xff] %v560
  %593 = vst [vmem:[#allocation2 + $0xe0] sm:$0xff] %v561
  %594 = vst [vmem:[#allocation2 + $0xe8] sm:$0xff] %v562
  %595 = vst [vmem:[#allocation2 + $0xf0] sm:$0xff] %v563
  %596 = vst [vmem:[#allocation2 + $0xf8] sm:$0xff] %v564
  // Predicated region
  $region18: #{_lambda_.51} parent=0 // pred_check
    %p597 = pneg %p16
  $region19: #{_lambda_.51} parent=0 // pred_check_branch
    %599 = sbr.rel (%p597) target = $region21
  $region20: #{_lambda_.51} parent=0 // pred_region
    %v600 = vld [vmem:[#allocation2] sm:$0xff]
    %v601 = vld [vmem:[#allocation2 + $0x8] sm:$0xff]
    %v602 = vld [vmem:[#allocation2 + $0x10] sm:$0xff]
    %v603 = vld [vmem:[#allocation2 + $0x18] sm:$0xff]
    %v604 = vld [vmem:[#allocation2 + $0x20] sm:$0xff]
    %v605 = vld [vmem:[#allocation2 + $0x28] sm:$0xff]
    %v606 = vld [vmem:[#allocation2 + $0x30] sm:$0xff]
    %v607 = vld [vmem:[#allocation2 + $0x38] sm:$0xff]
    %v608 = vld [vmem:[#allocation2 + $0x40] sm:$0xff]
    %v609 = vld [vmem:[#allocation2 + $0x48] sm:$0xff]
    %v610 = vld [vmem:[#allocation2 + $0x50] sm:$0xff]
    %v611 = vld [vmem:[#allocation2 + $0x58] sm:$0xff]
    %v612 = vld [vmem:[#allocation2 + $0x60] sm:$0xff]
    %v613 = vld [vmem:[#allocation2 + $0x68] sm:$0xff]
    %v614 = vld [vmem:[#allocation2 + $0x70] sm:$0xff]
    %v615 = vld [vmem:[#allocation2 + $0x78] sm:$0xff]
    %v616 = vld [vmem:[#allocation2 + $0x80] sm:$0xff]
    %v617 = vld [vmem:[#allocation2 + $0x88] sm:$0xff]
    %v618 = vld [vmem:[#allocation2 + $0x90] sm:$0xff]
    %v619 = vld [vmem:[#allocation2 + $0x98] sm:$0xff]
    %v620 = vld [vmem:[#allocation2 + $0xa0] sm:$0xff]
    %v621 = vld [vmem:[#allocation2 + $0xa8] sm:$0xff]
    %v622 = vld [vmem:[#allocation2 + $0xb0] sm:$0xff]
    %v623 = vld [vmem:[#allocation2 + $0xb8] sm:$0xff]
    %v624 = vld [vmem:[#allocation2 + $0xc0] sm:$0xff]
    %v625 = vld [vmem:[#allocation2 + $0xc8] sm:$0xff]
    %v626 = vld [vmem:[#allocation2 + $0xd0] sm:$0xff]
    %v627 = vld [vmem:[#allocation2 + $0xd8] sm:$0xff]
    %v628 = vld [vmem:[#allocation2 + $0xe0] sm:$0xff]
    %v629 = vld [vmem:[#allocation2 + $0xe8] sm:$0xff]
    %v630 = vld [vmem:[#allocation2 + $0xf0] sm:$0xff]
    %v631 = vld [vmem:[#allocation2 + $0xf8] sm:$0xff]
    %v632 = vld [vmem:[%s2] sm:$0x1]
    %v634 = vlaneseq
    %v635 = vshrl.u32 %v634, 7
    %v636 = vsub.s32 0, %v635
    %v637 = vrot.slane %v632, %v636
    %v639 = vadd.f32 %v600, %v637
    %v640 = vadd.f32 %v601, %v637
    %v641 = vadd.f32 %v602, %v637
    %v642 = vadd.f32 %v603, %v637
    %v643 = vadd.f32 %v604, %v637
    %v644 = vadd.f32 %v605, %v637
    %v645 = vadd.f32 %v606, %v637
    %v646 = vadd.f32 %v607, %v637
    %v647 = vadd.f32 %v608, %v637
    %v648 = vadd.f32 %v609, %v637
    %v649 = vadd.f32 %v610, %v637
    %v650 = vadd.f32 %v611, %v637
    %v651 = vadd.f32 %v612, %v637
    %v652 = vadd.f32 %v613, %v637
    %v653 = vadd.f32 %v614, %v637
    %v654 = vadd.f32 %v615, %v637
    %v655 = vadd.f32 %v616, %v637
    %v656 = vadd.f32 %v617, %v637
    %v657 = vadd.f32 %v618, %v637
    %v658 = vadd.f32 %v619, %v637
    %v659 = vadd.f32 %v620, %v637
    %v660 = vadd.f32 %v621, %v637
    %v661 = vadd.f32 %v622, %v637
    %v662 = vadd.f32 %v623, %v637
    %v663 = vadd.f32 %v624, %v637
    %v664 = vadd.f32 %v625, %v637
    %v665 = vadd.f32 %v626, %v637
    %v666 = vadd.f32 %v627, %v637
    %v667 = vadd.f32 %v628, %v637
    %v668 = vadd.f32 %v629, %v637
    %v669 = vadd.f32 %v630, %v637
    %v670 = vadd.f32 %v631, %v637
    %671 = vst [vmem:[%s3] sm:$0xff] %v639
    %672 = vst [vmem:[%s3 + $0x8] sm:$0xff] %v640
    %673 = vst [vmem:[%s3 + $0x10] sm:$0xff] %v641
    %674 = vst [vmem:[%s3 + $0x18] sm:$0xff] %v642
    %675 = vst [vmem:[%s3 + $0x20] sm:$0xff] %v643
    %676 = vst [vmem:[%s3 + $0x28] sm:$0xff] %v644
    %677 = vst [vmem:[%s3 + $0x30] sm:$0xff] %v645
    %678 = vst [vmem:[%s3 + $0x38] sm:$0xff] %v646
    %679 = vst [vmem:[%s3 + $0x40] sm:$0xff] %v647
    %680 = vst [vmem:[%s3 + $0x48] sm:$0xff] %v648
    %681 = vst [vmem:[%s3 + $0x50] sm:$0xff] %v649
    %682 = vst [vmem:[%s3 + $0x58] sm:$0xff] %v650
    %683 = vst [vmem:[%s3 + $0x60] sm:$0xff] %v651
    %684 = vst [vmem:[%s3 + $0x68] sm:$0xff] %v652
    %685 = vst [vmem:[%s3 + $0x70] sm:$0xff] %v653
    %686 = vst [vmem:[%s3 + $0x78] sm:$0xff] %v654
    %687 = vst [vmem:[%s3 + $0x80] sm:$0xff] %v655
    %688 = vst [vmem:[%s3 + $0x88] sm:$0xff] %v656
    %689 = vst [vmem:[%s3 + $0x90] sm:$0xff] %v657
    %690 = vst [vmem:[%s3 + $0x98] sm:$0xff] %v658
    %691 = vst [vmem:[%s3 + $0xa0] sm:$0xff] %v659
    %692 = vst [vmem:[%s3 + $0xa8] sm:$0xff] %v660
    %693 = vst [vmem:[%s3 + $0xb0] sm:$0xff] %v661
    %694 = vst [vmem:[%s3 + $0xb8] sm:$0xff] %v662
    %695 = vst [vmem:[%s3 + $0xc0] sm:$0xff] %v663
    %696 = vst [vmem:[%s3 + $0xc8] sm:$0xff] %v664
    %697 = vst [vmem:[%s3 + $0xd0] sm:$0xff] %v665
    %698 = vst [vmem:[%s3 + $0xd8] sm:$0xff] %v666
    %699 = vst [vmem:[%s3 + $0xe0] sm:$0xff] %v667
    %700 = vst [vmem:[%s3 + $0xe8] sm:$0xff] %v668
    %701 = vst [vmem:[%s3 + $0xf0] sm:$0xff] %v669
    %702 = vst [vmem:[%s3 + $0xf8] sm:$0xff] %v670
  $region21: #{_lambda_.51} parent=0 // pred_fallthru
    _
  // Predicated region
  $region22: #{_lambda_.51} parent=0 // pred_check
    _
  $region23: #{_lambda_.51} parent=0 // pred_check_branch
    %704 = sbr.rel (0) target = $region25
  $region24: #{_lambda_.51} parent=0 // pred_region
    _
  $region25: #{_lambda_.51} parent=0 // pred_fallthru
    _
  // Predicated region
  $region26: #{_lambda_.51} parent=0 // pred_check
    _
  $region27: #{_lambda_.51} parent=0 // pred_check_branch
    %706 = sbr.rel (0) target = $region29
  $region28: #{_lambda_.51} parent=0 // pred_region
    _
  $region29: #{_lambda_.51} parent=0 // pred_fallthru
    _

// kernel: _lambda_.54
$region0: #{_lambda_.54}
  #allocation0 [shape = 'u32[]', space=smem, size = 0x4, offset = 0x4, fixed_abs, tag = 'smem constant byte address 0x4 - core index']
  #allocation1 [shape = 'u32[144,128]{1,0:T(1,128)}', space=vmem, size = 0x12000, scoped, tag = 'internal scratch']
  #allocation2 [shape = 'f32[256,128]{1,0:T(8,128)}', space=vmem, size = 0x20000, scoped, tag = 'scratch operand']
  %s0 = inlined_call_operand.vmem [shape: bf16[256,256], index: 0, kind: input, shape index: {}]
  %s1 = inlined_call_operand.vmem [shape: bf16[256,128], index: 1, kind: input, shape index: {}]
  %s2 = inlined_call_operand.vmem [shape: f32[1,128], index: 2, kind: input, shape index: {}]
  %s3 = inlined_call_operand.vmem [shape: f32[256,128], index: 3, kind: output, shape index: {}]
  %s4 = sld [smem:[#allocation0]]
  $region94: #{_lambda_.54} parent=0
    _
  %s6 = ssub.s32 1, %s4
  %s7 = scalar_select 0, %s6, %s4
  $region1: #{_lambda_.54} parent=0
    #allocation3 [shape = 'u8[131072]{0}', space=vmem, size = 0x20000, scoped, tag = 'input window, operand 0']
    loop: start=0, step=1, limit=4
    $region2: #{_lambda_.54} parent=1 // loop_pre_header
      _
    $region3: #{_lambda_.54} parent=1 // loop_header
      %s9 = sphi 0, %s13
      %p10 = scmp.ge.s32.totalorder %s9, 4
      %s16 = sphi 0, %s35
      %s17 = sphi 0, %s31
      %s18 = sphi 0, %s27
      %s19 = sphi 0, %s16
      %s20 = sphi 0, %s17
      %s21 = sphi 0, %s18
      %s22 = sphi 0, %s19
      %s23 = sphi 0, %s20
      %s24 = sphi 0, %s21
      %s40 = sphi 0, %s42
      %s43 = sphi 0, %s40
      %s44 = sphi 0, %s43
      %s60 = sphi 0, %s44
      %s68 = sphi 0, %s70
      %s71 = sphi 0, %s68
      %s72 = sphi 0, %s71
      %s88 = sphi 0, %s72
      %s94 = sphi 0, %s96
      %s97 = sphi 0, %s94
      %s98 = sphi 0, %s97
      %s114 = sphi 0, %s98
      %s122 = sphi 0, %s124
      %s125 = sphi 0, %s122
      %s126 = sphi 0, %s125
      %s142 = sphi 0, %s126
    $region4: #{_lambda_.54} parent=1 // loop_header_branch
      %12 = sbr.rel (%p10) target = $region8
    $region5: #{_lambda_.54} parent=1 // loop_body
      %s14 = ssub.s32 %s9, 1
      %s15 = ssub.s32 %s9, 2
      %s25 = sadd.s32 1, %s18
      %p26 = scmp.ge.s32.totalorder %s25, 2
      %s27 = scalar_select %p26, 0, %s25
      %s28 = sadd.s32 1, %s17
      %s29 = scalar_select %p26, %s28, %s17
      %p30 = scmp.ge.s32.totalorder %s29, 1
      %s31 = scalar_select %p30, 0, %s29
      %s32 = sadd.s32 1, %s16
      %s33 = scalar_select %p30, %s32, %s16
      %p34 = scmp.ge.s32.totalorder %s33, 1
      %s35 = scalar_select %p34, 0, %s33
      %s36 = ssub.s32 %s16, %s35
      %s37 = ssub.s32 %s18, %s27
      %s38 = sor.u32 %s36, %s37
      %p39 = scmp.eq.s32.totalorder %s38, 0
      %s41 = sadd.s32 %s40, 1
      %s42 = scalar_select %p39, %s40, %s41
      %p45 = pneg %p39
      %p46 = scmp.eq.s32.totalorder %s9, 1
      %p47 = por %p45, %p46
      %p48 = scmp.ne.s32.totalorder %s40, %s43
      %p49 = scmp.eq.s32.totalorder %s9, 0
      %p50 = por %p48, %p49
      %p51 = scmp.ne.s32.totalorder %s40, %s43
      %p52 = scmp.eq.s32.totalorder %s14, 1
      %p53 = por %p51, %p52
      %p54 = scmp.ne.s32.totalorder %s43, %s44
      %p55 = scmp.eq.s32.totalorder %s14, 0
      %p56 = por %p54, %p55
      %p57 = scmp.ne.s32.totalorder %s43, %s44
      %p58 = scmp.eq.s32.totalorder %s15, 1
      %p59 = por %p57, %p58
      %p61 = scmp.ne.s32.totalorder %s44, %s60
      %p62 = scmp.eq.s32.totalorder %s15, 0
      %p63 = por %p61, %p62
      %s64 = ssub.s32 %s18, %s27
      %s65 = ssub.s32 %s17, %s31
      %s66 = sor.u32 %s64, %s65
      %p67 = scmp.eq.s32.totalorder %s66, 0
      %s69 = sadd.s32 %s68, 1
      %s70 = scalar_select %p67, %s68, %s69
      %p73 = pneg %p67
      %p74 = scmp.eq.s32.totalorder %s9, 1
      %p75 = por %p73, %p74
      %p76 = scmp.ne.s32.totalorder %s68, %s71
      %p77 = scmp.eq.s32.totalorder %s9, 0
      %p78 = por %p76, %p77
      %p79 = scmp.ne.s32.totalorder %s68, %s71
      %p80 = scmp.eq.s32.totalorder %s14, 1
      %p81 = por %p79, %p80
      %p82 = scmp.ne.s32.totalorder %s71, %s72
      %p83 = scmp.eq.s32.totalorder %s14, 0
      %p84 = por %p82, %p83
      %p85 = scmp.ne.s32.totalorder %s71, %s72
      %p86 = scmp.eq.s32.totalorder %s15, 1
      %p87 = por %p85, %p86
      %p89 = scmp.ne.s32.totalorder %s72, %s88
      %p90 = scmp.eq.s32.totalorder %s15, 0
      %p91 = por %p89, %p90
      %s92 = ssub.s32 %s17, %s31
      %p93 = scmp.eq.s32.totalorder %s92, 0
      %s95 = sadd.s32 %s94, 1
      %s96 = scalar_select %p93, %s94, %s95
      %p99 = pneg %p93
      %p100 = scmp.eq.s32.totalorder %s9, 1
      %p101 = por %p99, %p100
      %p102 = scmp.ne.s32.totalorder %s94, %s97
      %p103 = scmp.eq.s32.totalorder %s9, 0
      %p104 = por %p102, %p103
      %p105 = scmp.ne.s32.totalorder %s94, %s97
      %p106 = scmp.eq.s32.totalorder %s14, 1
      %p107 = por %p105, %p106
      %p108 = scmp.ne.s32.totalorder %s97, %s98
      %p109 = scmp.eq.s32.totalorder %s14, 0
      %p110 = por %p108, %p109
      %p111 = scmp.ne.s32.totalorder %s97, %s98
      %p112 = scmp.eq.s32.totalorder %s15, 1
      %p113 = por %p111, %p112
      %p115 = scmp.ne.s32.totalorder %s98, %s114
      %p116 = scmp.eq.s32.totalorder %s15, 0
      %p117 = por %p115, %p116
      %s118 = ssub.s32 %s16, %s35
      %s119 = ssub.s32 %s17, %s31
      %s120 = sor.u32 %s118, %s119
      %p121 = scmp.eq.s32.totalorder %s120, 0
      %s123 = sadd.s32 %s122, 1
      %s124 = scalar_select %p121, %s122, %s123
      %p127 = pneg %p121
      %p128 = scmp.eq.s32.totalorder %s9, 1
      %p129 = por %p127, %p128
      %p130 = scmp.ne.s32.totalorder %s122, %s125
      %p131 = scmp.eq.s32.totalorder %s9, 0
      %p132 = por %p130, %p131
      %p133 = scmp.ne.s32.totalorder %s122, %s125
      %p134 = scmp.eq.s32.totalorder %s14, 1
      %p135 = por %p133, %p134
      %p136 = scmp.ne.s32.totalorder %s125, %s126
      %p137 = scmp.eq.s32.totalorder %s14, 0
      %p138 = por %p136, %p137
      %p139 = scmp.ne.s32.totalorder %s125, %s126
      %p140 = scmp.eq.s32.totalorder %s15, 1
      %p141 = por %p139, %p140
      %p143 = scmp.ne.s32.totalorder %s126, %s142
      %p144 = scmp.eq.s32.totalorder %s15, 0
      %p145 = por %p143, %p144
      %p146 = scmp.le.s32.totalorder 1, %s9
      %p147 = scmp.lt.s32.totalorder %s9, 3
      %p148 = pnand %p146, %p147
      %p149 = pneg %p148
      // Predicated region
      $region9: #{_lambda_.54} parent=5 // pred_check
        _
      $region10: #{_lambda_.54} parent=5 // pred_check_branch
        %151 = sbr.rel (%p148) target = $region12
      $region11: #{_lambda_.54} parent=5 // pred_region
        %s152 = ssub.s32 %s9, 1
        // Predicated region
        $region13: #{_lambda_.54} parent=11 // pred_check
          %p153 = pneg %p110
        $region14: #{_lambda_.54} parent=11 // pred_check_branch
          %155 = sbr.rel (%p153) target = $region16
        $region15: #{_lambda_.54} parent=11 // pred_region
          %p156 = scmp.lt.s32.totalorder %s20, 0
          %s157 = scalar_select %p156, %s20, 0
          %s158 = scalar_lea.vmem %s2, %s157
        $region16: #{_lambda_.54} parent=11 // pred_fallthru
          _
      $region12: #{_lambda_.54} parent=5 // pred_fallthru
        _
      %p159 = scmp.lt.s32.totalorder %s9, 2
      // Predicated region
      $region17: #{_lambda_.54} parent=5 // pred_check
        %p160 = pneg %p159
      $region18: #{_lambda_.54} parent=5 // pred_check_branch
        %162 = sbr.rel (%p160) target = $region20
      $region19: #{_lambda_.54} parent=5 // pred_region
        // Predicated region
        $region21: #{_lambda_.54} parent=19 // pred_check
          %p163 = pneg %p50
        $region22: #{_lambda_.54} parent=19 // pred_check_branch
          %165 = sbr.rel (%p163) target = $region24
        $region23: #{_lambda_.54} parent=19 // pred_region
          %s166 = sand.u32 %s40, 1
          %s167 = sand.u32 %s40, 1
          %s168 = smul.addr %s167, 128
          %s169 = scalar_lea.vmem [#allocation3], %s168
          %s170 = smul.u32 32, %s16
          %s171 = smul.addr %s170, 2
          %s172 = sadd.s32 %s18, %s171
          %s173 = smul.addr %s172, 4
          %s174 = scalar_lea.vmem %s0, %s173
          // Predicated region
          $region25: #{_lambda_.54} parent=23 // pred_check
            _
          $region26: #{_lambda_.54} parent=23 // pred_check_branch
            %176 = sbr.rel (0) target = $region28
          $region27: #{_lambda_.54} parent=23 // pred_region
            // Predicated region
            $region29: #{_lambda_.54} parent=27 // pred_check
              _
            $region30: #{_lambda_.54} parent=27 // pred_check_branch
              %178 = sbr.rel target = $region32
            $region31: #{_lambda_.54} parent=27 // pred_region
              // Predicated region
              $region44: #{_lambda_.54} parent=31 // pred_check
                _
              $region45: #{_lambda_.54} parent=31 // pred_check_branch
                %255 = sbr.rel (0) target = $region47
              $region46: #{_lambda_.54} parent=31 // pred_region
                loop: start=0, step=1, limit=1
                $region48: #{_lambda_.54} parent=46 // loop_pre_header
                  _
                $region49: #{_lambda_.54} parent=46 // loop_header
                  %s257 = sphi 0, %s261
                  %p258 = scmp.ge.s32.totalorder %s257, 1
                  %s262 = sphi %s174, %s174
                  %s263 = sphi %s169, %s169
                $region50: #{_lambda_.54} parent=46 // loop_header_branch
                  %260 = sbr.rel (%p258) target = $region54
                $region51: #{_lambda_.54} parent=46 // loop_body
                  _
                $region52: #{_lambda_.54} parent=46 // loop_footer
                  %s261 = sadd.s32 1, %s257
                $region53: #{_lambda_.54} parent=46 // loop_footer_branch
                  %256 = sbr.rel target = $region49
                $region54: #{_lambda_.54} parent=46 // loop_exit
                  _
                loop: start=0, step=1, limit=1
                $region55: #{_lambda_.54} parent=46 // loop_pre_header
                  _
                $region56: #{_lambda_.54} parent=46 // loop_header
                  %s266 = sphi 0, %s270
                  %p267 = scmp.ge.s32.totalorder %s266, 1
                  %s271 = sphi %s174, %s174
                  %s272 = sphi %s169, %s169
                $region57: #{_lambda_.54} parent=46 // loop_header_branch
                  %269 = sbr.rel (%p267) target = $region61
                $region58: #{_lambda_.54} parent=46 // loop_body
                  %v273 = vld [vmem:[%s271] sm:$0xf]
                  %274 = vst [vmem:[%s272] sm:$0xf] %v273
                  %v275 = vld [vmem:[%s271 + $0x8] sm:$0xf]
                  %276 = vst [vmem:[%s272 + $0x4] sm:$0xf] %v275
                  %v277 = vld [vmem:[%s271 + $0x10] sm:$0xf]
                  %278 = vst [vmem:[%s272 + $0x8] sm:$0xf] %v277
                  %v279 = vld [vmem:[%s271 + $0x18] sm:$0xf]
                  %280 = vst [vmem:[%s272 + $0xc] sm:$0xf] %v279
                  %v281 = vld [vmem:[%s271 + $0x20] sm:$0xf]
                  %282 = vst [vmem:[%s272 + $0x10] sm:$0xf] %v281
                  %v283 = vld [vmem:[%s271 + $0x28] sm:$0xf]
                  %284 = vst [vmem:[%s272 + $0x14] sm:$0xf] %v283
                  %v285 = vld [vmem:[%s271 + $0x30] sm:$0xf]
                  %286 = vst [vmem:[%s272 + $0x18] sm:$0xf] %v285
                  %v287 = vld [vmem:[%s271 + $0x38] sm:$0xf]
                  %288 = vst [vmem:[%s272 + $0x1c] sm:$0xf] %v287
                  %v289 = vld [vmem:[%s271 + $0x40] sm:$0xf]
                  %290 = vst [vmem:[%s272 + $0x20] sm:$0xf] %v289
                  %v291 = vld [vmem:[%s271 + $0x48] sm:$0xf]
                  %292 = vst [vmem:[%s272 + $0x24] sm:$0xf] %v291
                  %v293 = vld [vmem:[%s271 + $0x50] sm:$0xf]
                  %294 = vst [vmem:[%s272 + $0x28] sm:$0xf] %v293
                  %v295 = vld [vmem:[%s271 + $0x58] sm:$0xf]
                  %296 = vst [vmem:[%s272 + $0x2c] sm:$0xf] %v295
                  %v297 = vld [vmem:[%s271 + $0x60] sm:$0xf]
                  %298 = vst [vmem:[%s272 + $0x30] sm:$0xf] %v297
                  %v299 = vld [vmem:[%s271 + $0x68] sm:$0xf]
                  %300 = vst [vmem:[%s272 + $0x34] sm:$0xf] %v299
                  %v301 = vld [vmem:[%s271 + $0x70] sm:$0xf]
                  %302 = vst [vmem:[%s272 + $0x38] sm:$0xf] %v301
                  %v303 = vld [vmem:[%s271 + $0x78] sm:$0xf]
                  %304 = vst [vmem:[%s272 + $0x3c] sm:$0xf] %v303
                  %v305 = vld [vmem:[%s271 + $0x80] sm:$0xf]
                  %306 = vst [vmem:[%s272 + $0x40] sm:$0xf] %v305
                  %v307 = vld [vmem:[%s271 + $0x88] sm:$0xf]
                  %308 = vst [vmem:[%s272 + $0x44] sm:$0xf] %v307
                  %v309 = vld [vmem:[%s271 + $0x90] sm:$0xf]
                  %310 = vst [vmem:[%s272 + $0x48] sm:$0xf] %v309
                  %v311 = vld [vmem:[%s271 + $0x98] sm:$0xf]
                  %312 = vst [vmem:[%s272 + $0x4c] sm:$0xf] %v311
                  %v313 = vld [vmem:[%s271 + $0xa0] sm:$0xf]
                  %314 = vst [vmem:[%s272 + $0x50] sm:$0xf] %v313
                  %v315 = vld [vmem:[%s271 + $0xa8] sm:$0xf]
                  %316 = vst [vmem:[%s272 + $0x54] sm:$0xf] %v315
                  %v317 = vld [vmem:[%s271 + $0xb0] sm:$0xf]
                  %318 = vst [vmem:[%s272 + $0x58] sm:$0xf] %v317
                  %v319 = vld [vmem:[%s271 + $0xb8] sm:$0xf]
                  %320 = vst [vmem:[%s272 + $0x5c] sm:$0xf] %v319
                  %v321 = vld [vmem:[%s271 + $0xc0] sm:$0xf]
                  %322 = vst [vmem:[%s272 + $0x60] sm:$0xf] %v321
                  %v323 = vld [vmem:[%s271 + $0xc8] sm:$0xf]
                  %324 = vst [vmem:[%s272 + $0x64] sm:$0xf] %v323
                  %v325 = vld [vmem:[%s271 + $0xd0] sm:$0xf]
                  %326 = vst [vmem:[%s272 + $0x68] sm:$0xf] %v325
                  %v327 = vld [vmem:[%s271 + $0xd8] sm:$0xf]
                  %328 = vst [vmem:[%s272 + $0x6c] sm:$0xf] %v327
                  %v329 = vld [vmem:[%s271 + $0xe0] sm:$0xf]
                  %330 = vst [vmem:[%s272 + $0x70] sm:$0xf] %v329
                  %v331 = vld [vmem:[%s271 + $0xe8] sm:$0xf]
                  %332 = vst [vmem:[%s272 + $0x74] sm:$0xf] %v331
                  %v333 = vld [vmem:[%s271 + $0xf0] sm:$0xf]
                  %334 = vst [vmem:[%s272 + $0x78] sm:$0xf] %v333
                  %v335 = vld [vmem:[%s271 + $0xf8] sm:$0xf]
                  %336 = vst [vmem:[%s272 + $0x7c] sm:$0xf] %v335
                $region59: #{_lambda_.54} parent=46 // loop_footer
                  %s270 = sadd.s32 1, %s266
                $region60: #{_lambda_.54} parent=46 // loop_footer_branch
                  %265 = sbr.rel target = $region56
                $region61: #{_lambda_.54} parent=46 // loop_exit
                  _
              $region47: #{_lambda_.54} parent=31 // pred_fallthru
                _
            $region32: #{_lambda_.54} parent=27 // pred_fallthru
              _
            // Predicated region
            $region33: #{_lambda_.54} parent=27 // pred_check
              _
            $region34: #{_lambda_.54} parent=27 // pred_check_branch
              %180 = sbr.rel (0) target = $region36
            $region35: #{_lambda_.54} parent=27 // pred_region
              loop: start=0, step=1, limit=1
              $region37: #{_lambda_.54} parent=35 // loop_pre_header
                _
              $region38: #{_lambda_.54} parent=35 // loop_header
                %s183 = sphi 0, %s187
                %p184 = scmp.ge.s32.totalorder %s183, 1
                %s188 = sphi %s174, %s174
                %s189 = sphi %s169, %s169
              $region39: #{_lambda_.54} parent=35 // loop_header_branch
                %186 = sbr.rel (%p184) target = $region43
              $region40: #{_lambda_.54} parent=35 // loop_body
                %v190 = vld [vmem:[%s188] sm:$0xf]
                %191 = vst [vmem:[%s189] sm:$0xf] %v190
                %v192 = vld [vmem:[%s188 + $0x8] sm:$0xf]
                %193 = vst [vmem:[%s189 + $0x4] sm:$0xf] %v192
                %v194 = vld [vmem:[%s188 + $0x10] sm:$0xf]
                %195 = vst [vmem:[%s189 + $0x8] sm:$0xf] %v194
                %v196 = vld [vmem:[%s188 + $0x18] sm:$0xf]
                %197 = vst [vmem:[%s189 + $0xc] sm:$0xf] %v196
                %v198 = vld [vmem:[%s188 + $0x20] sm:$0xf]
                %199 = vst [vmem:[%s189 + $0x10] sm:$0xf] %v198
                %v200 = vld [vmem:[%s188 + $0x28] sm:$0xf]
                %201 = vst [vmem:[%s189 + $0x14] sm:$0xf] %v200
                %v202 = vld [vmem:[%s188 + $0x30] sm:$0xf]
                %203 = vst [vmem:[%s189 + $0x18] sm:$0xf] %v202
                %v204 = vld [vmem:[%s188 + $0x38] sm:$0xf]
                %205 = vst [vmem:[%s189 + $0x1c] sm:$0xf] %v204
                %v206 = vld [vmem:[%s188 + $0x40] sm:$0xf]
                %207 = vst [vmem:[%s189 + $0x20] sm:$0xf] %v206
                %v208 = vld [vmem:[%s188 + $0x48] sm:$0xf]
                %209 = vst [vmem:[%s189 + $0x24] sm:$0xf] %v208
                %v210 = vld [vmem:[%s188 + $0x50] sm:$0xf]
                %211 = vst [vmem:[%s189 + $0x28] sm:$0xf] %v210
                %v212 = vld [vmem:[%s188 + $0x58] sm:$0xf]
                %213 = vst [vmem:[%s189 + $0x2c] sm:$0xf] %v212
                %v214 = vld [vmem:[%s188 + $0x60] sm:$0xf]
                %215 = vst [vmem:[%s189 + $0x30] sm:$0xf] %v214
                %v216 = vld [vmem:[%s188 + $0x68] sm:$0xf]
                %217 = vst [vmem:[%s189 + $0x34] sm:$0xf] %v216
                %v218 = vld [vmem:[%s188 + $0x70] sm:$0xf]
                %219 = vst [vmem:[%s189 + $0x38] sm:$0xf] %v218
                %v220 = vld [vmem:[%s188 + $0x78] sm:$0xf]
                %221 = vst [vmem:[%s189 + $0x3c] sm:$0xf] %v220
                %v222 = vld [vmem:[%s188 + $0x80] sm:$0xf]
                %223 = vst [vmem:[%s189 + $0x40] sm:$0xf] %v222
                %v224 = vld [vmem:[%s188 + $0x88] sm:$0xf]
                %225 = vst [vmem:[%s189 + $0x44] sm:$0xf] %v224
                %v226 = vld [vmem:[%s188 + $0x90] sm:$0xf]
                %227 = vst [vmem:[%s189 + $0x48] sm:$0xf] %v226
                %v228 = vld [vmem:[%s188 + $0x98] sm:$0xf]
                %229 = vst [vmem:[%s189 + $0x4c] sm:$0xf] %v228
                %v230 = vld [vmem:[%s188 + $0xa0] sm:$0xf]
                %231 = vst [vmem:[%s189 + $0x50] sm:$0xf] %v230
                %v232 = vld [vmem:[%s188 + $0xa8] sm:$0xf]
                %233 = vst [vmem:[%s189 + $0x54] sm:$0xf] %v232
                %v234 = vld [vmem:[%s188 + $0xb0] sm:$0xf]
                %235 = vst [vmem:[%s189 + $0x58] sm:$0xf] %v234
                %v236 = vld [vmem:[%s188 + $0xb8] sm:$0xf]
                %237 = vst [vmem:[%s189 + $0x5c] sm:$0xf] %v236
                %v238 = vld [vmem:[%s188 + $0xc0] sm:$0xf]
                %239 = vst [vmem:[%s189 + $0x60] sm:$0xf] %v238
                %v240 = vld [vmem:[%s188 + $0xc8] sm:$0xf]
                %241 = vst [vmem:[%s189 + $0x64] sm:$0xf] %v240
                %v242 = vld [vmem:[%s188 + $0xd0] sm:$0xf]
                %243 = vst [vmem:[%s189 + $0x68] sm:$0xf] %v242
                %v244 = vld [vmem:[%s188 + $0xd8] sm:$0xf]
                %245 = vst [vmem:[%s189 + $0x6c] sm:$0xf] %v244
                %v246 = vld [vmem:[%s188 + $0xe0] sm:$0xf]
                %247 = vst [vmem:[%s189 + $0x70] sm:$0xf] %v246
                %v248 = vld [vmem:[%s188 + $0xe8] sm:$0xf]
                %249 = vst [vmem:[%s189 + $0x74] sm:$0xf] %v248
                %v250 = vld [vmem:[%s188 + $0xf0] sm:$0xf]
                %251 = vst [vmem:[%s189 + $0x78] sm:$0xf] %v250
                %v252 = vld [vmem:[%s188 + $0xf8] sm:$0xf]
                %253 = vst [vmem:[%s189 + $0x7c] sm:$0xf] %v252
              $region41: #{_lambda_.54} parent=35 // loop_footer
                %s187 = sadd.s32 1, %s183
              $region42: #{_lambda_.54} parent=35 // loop_footer_branch
                %182 = sbr.rel target = $region38
              $region43: #{_lambda_.54} parent=35 // loop_exit
                _
            $region36: #{_lambda_.54} parent=27 // pred_fallthru
              _
          $region28: #{_lambda_.54} parent=23 // pred_fallthru
            _
          %337 = vnop
        $region24: #{_lambda_.54} parent=19 // pred_fallthru
          _
        // Predicated region
        $region62: #{_lambda_.54} parent=19 // pred_check
          %p338 = pneg %p78
        $region63: #{_lambda_.54} parent=19 // pred_check_branch
          %340 = sbr.rel (%p338) target = $region65
        $region64: #{_lambda_.54} parent=19 // pred_region
          %s341 = smul.u32 16, %s18
          %p342 = scmp.lt.s32.totalorder %s341, 31
          %s343 = scalar_select %p342, %s341, 31
          %p344 = scmp.lt.s32.totalorder %s17, 0
          %s345 = scalar_select %p344, %s17, 0
          %s346 = sadd.s32 %s345, %s343
          %s347 = smul.addr %s346, 4
          %s348 = scalar_lea.vmem %s1, %s347
          %s349 = smul.u32 16, %s18
        $region65: #{_lambda_.54} parent=19 // pred_fallthru
          _
      $region20: #{_lambda_.54} parent=5 // pred_fallthru
        _
      %p350 = scmp.le.s32.totalorder 1, %s9
      %p351 = scmp.lt.s32.totalorder %s9, 3
      %p352 = pnand %p350, %p351
      %p353 = pneg %p352
      // Predicated region
      $region66: #{_lambda_.54} parent=5 // pred_check
        _
      $region67: #{_lambda_.54} parent=5 // pred_check_branch
        %355 = sbr.rel (%p352) target = $region69
      $region68: #{_lambda_.54} parent=5 // pred_region
        %s356 = ssub.s32 %s9, 1
        %s357 = sand.u32 %s43, 1
        %s358 = sand.u32 %s43, 1
        %s359 = smul.addr %s358, 128
        %s360 = scalar_lea.vmem [#allocation3], %s359
        // Predicated region
        $region70: #{_lambda_.54} parent=68 // pred_check
          %p361 = pneg %p56
        $region71: #{_lambda_.54} parent=68 // pred_check_branch
          %363 = sbr.rel (%p361) target = $region73
        $region72: #{_lambda_.54} parent=68 // pred_region
          _
        $region73: #{_lambda_.54} parent=68 // pred_fallthru
          _
        %s364 = sand.u32 %s43, 1
        %s365 = sand.u32 %s43, 1
        %s366 = smul.addr %s365, 128
        %s367 = scalar_lea.vmem [#allocation3], %s366
        %p368 = pneg %p56
        %p369 = pneg %p53
        %s370 = smul.u32 16, %s21
        %p371 = scmp.lt.s32.totalorder %s370, 31
        %s372 = scalar_select %p371, %s370, 31
        %p373 = scmp.lt.s32.totalorder %s20, 0
        %s374 = scalar_select %p373, %s20, 0
        %s375 = sadd.s32 %s374, %s372
        %s376 = smul.addr %s375, 4
        %s377 = scalar_lea.vmem %s1, %s376
        %p378 = pneg %p84
        %p379 = pneg %p81
        %p380 = scmp.lt.s32.totalorder %s20, 0
        %s381 = scalar_select %p380, %s20, 0
        %s382 = scalar_lea.vmem %s2, %s381
        %p383 = pneg %p110
        %p384 = pneg %p107
        %p385 = pneg %p138
        %p386 = pneg %p135
        %s387 = smul.u32 32, %s19
        %p388 = scmp.lt.s32.totalorder %s387, 31
        %s389 = scalar_select %p388, %s387, 31
        %p390 = scmp.lt.s32.totalorder %s20, 0
        %s391 = scalar_select %p390, %s20, 0
        %s392 = sadd.s32 %s391, %s389
        %s393 = smul.addr %s392, 8
        %s394 = scalar_lea.vmem %s3, %s393
        %s395 = smul.u32 32, %s19
        %s396 = smul.u32 16, %s21
        %p397 = scmp.lt.s32.totalorder %s396, 31
        %s398 = scalar_select %p397, %s396, 31
        %p399 = scmp.lt.s32.totalorder %s20, 0
        %s400 = scalar_select %p399, %s20, 0
        %s401 = sadd.s32 %s400, %s398
        %s402 = smul.addr %s401, 4
        %s403 = scalar_lea.vmem %s1, %s402
        %s404 = smul.u32 16, %s21
        %p405 = scmp.lt.s32.totalorder %s20, 0
        %s406 = scalar_select %p405, %s20, 0
        %s407 = scalar_lea.vmem %s2, %s406
        %s408 = smul.u32 32, %s19
        %p409 = scmp.lt.s32.totalorder %s408, 31
        %s410 = scalar_select %p409, %s408, 31
        %p411 = scmp.lt.s32.totalorder %s20, 0
        %s412 = scalar_select %p411, %s20, 0
        %s413 = sadd.s32 %s412, %s410
        %s414 = smul.addr %s413, 8
        %s415 = scalar_lea.vmem %s3, %s414
        %s416 = smul.u32 32, %s19
        %p419 = scmp.eq.s32.totalorder %s21, 0
        // Predicated region
        $region74: #{_lambda_.54} parent=68 // pred_check
          %p420 = pneg %p419
        $region75: #{_lambda_.54} parent=68 // pred_check_branch
          %422 = sbr.rel (%p420) target = $region77
        $region76: #{_lambda_.54} parent=68 // pred_region
          %423 = vst [vmem:[#allocation2] sm:$0xff] 0.0
          %424 = vst [vmem:[#allocation2 + $0x8] sm:$0xff] 0.0
          %425 = vst [vmem:[#allocation2 + $0x10] sm:$0xff] 0.0
          %426 = vst [vmem:[#allocation2 + $0x18] sm:$0xff] 0.0
          %427 = vst [vmem:[#allocation2 + $0x20] sm:$0xff] 0.0
          %428 = vst [vmem:[#allocation2 + $0x28] sm:$0xff] 0.0
          %429 = vst [vmem:[#allocation2 + $0x30] sm:$0xff] 0.0
          %430 = vst [vmem:[#allocation2 + $0x38] sm:$0xff] 0.0
          %431 = vst [vmem:[#allocation2 + $0x40] sm:$0xff] 0.0
          %432 = vst [vmem:[#allocation2 + $0x48] sm:$0xff] 0.0
          %433 = vst [vmem:[#allocation2 + $0x50] sm:$0xff] 0.0
          %434 = vst [vmem:[#allocation2 + $0x58] sm:$0xff] 0.0
          %435 = vst [vmem:[#allocation2 + $0x60] sm:$0xff] 0.0
          %436 = vst [vmem:[#allocation2 + $0x68] sm:$0xff] 0.0
          %437 = vst [vmem:[#allocation2 + $0x70] sm:$0xff] 0.0
          %438 = vst [vmem:[#allocation2 + $0x78] sm:$0xff] 0.0
          %439 = vst [vmem:[#allocation2 + $0x80] sm:$0xff] 0.0
          %440 = vst [vmem:[#allocation2 + $0x88] sm:$0xff] 0.0
          %441 = vst [vmem:[#allocation2 + $0x90] sm:$0xff] 0.0
          %442 = vst [vmem:[#allocation2 + $0x98] sm:$0xff] 0.0
          %443 = vst [vmem:[#allocation2 + $0xa0] sm:$0xff] 0.0
          %444 = vst [vmem:[#allocation2 + $0xa8] sm:$0xff] 0.0
          %445 = vst [vmem:[#allocation2 + $0xb0] sm:$0xff] 0.0
          %446 = vst [vmem:[#allocation2 + $0xb8] sm:$0xff] 0.0
          %447 = vst [vmem:[#allocation2 + $0xc0] sm:$0xff] 0.0
          %448 = vst [vmem:[#allocation2 + $0xc8] sm:$0xff] 0.0
          %449 = vst [vmem:[#allocation2 + $0xd0] sm:$0xff] 0.0
          %450 = vst [vmem:[#allocation2 + $0xd8] sm:$0xff] 0.0
          %451 = vst [vmem:[#allocation2 + $0xe0] sm:$0xff] 0.0
          %452 = vst [vmem:[#allocation2 + $0xe8] sm:$0xff] 0.0
          %453 = vst [vmem:[#allocation2 + $0xf0] sm:$0xff] 0.0
          %454 = vst [vmem:[#allocation2 + $0xf8] sm:$0xff] 0.0
        $region77: #{_lambda_.54} parent=68 // pred_fallthru
          _
        %v455 = vld [vmem:[%s360] sm:$0xf]
        %v456 = vld [vmem:[%s360 + $0x4] sm:$0xf]
        %v457 = vld [vmem:[%s360 + $0x8] sm:$0xf]
        %v458 = vld [vmem:[%s360 + $0xc] sm:$0xf]
        %v459 = vld [vmem:[%s360 + $0x10] sm:$0xf]
        %v460 = vld [vmem:[%s360 + $0x14] sm:$0xf]
        %v461 = vld [vmem:[%s360 + $0x18] sm:$0xf]
        %v462 = vld [vmem:[%s360 + $0x1c] sm:$0xf]
        %v463 = vld [vmem:[%s360 + $0x20] sm:$0xf]
        %v464 = vld [vmem:[%s360 + $0x24] sm:$0xf]
        %v465 = vld [vmem:[%s360 + $0x28] sm:$0xf]
        %v466 = vld [vmem:[%s360 + $0x2c] sm:$0xf]
        %v467 = vld [vmem:[%s360 + $0x30] sm:$0xf]
        %v468 = vld [vmem:[%s360 + $0x34] sm:$0xf]
        %v469 = vld [vmem:[%s360 + $0x38] sm:$0xf]
        %v470 = vld [vmem:[%s360 + $0x3c] sm:$0xf]
        %v471 = vld [vmem:[%s360 + $0x40] sm:$0xf]
        %v472 = vld [vmem:[%s360 + $0x44] sm:$0xf]
        %v473 = vld [vmem:[%s360 + $0x48] sm:$0xf]
        %v474 = vld [vmem:[%s360 + $0x4c] sm:$0xf]
        %v475 = vld [vmem:[%s360 + $0x50] sm:$0xf]
        %v476 = vld [vmem:[%s360 + $0x54] sm:$0xf]
        %v477 = vld [vmem:[%s360 + $0x58] sm:$0xf]
        %v478 = vld [vmem:[%s360 + $0x5c] sm:$0xf]
        %v479 = vld [vmem:[%s360 + $0x60] sm:$0xf]
        %v480 = vld [vmem:[%s360 + $0x64] sm:$0xf]
        %v481 = vld [vmem:[%s360 + $0x68] sm:$0xf]
        %v482 = vld [vmem:[%s360 + $0x6c] sm:$0xf]
        %v483 = vld [vmem:[%s360 + $0x70] sm:$0xf]
        %v484 = vld [vmem:[%s360 + $0x74] sm:$0xf]
        %v485 = vld [vmem:[%s360 + $0x78] sm:$0xf]
        %v486 = vld [vmem:[%s360 + $0x7c] sm:$0xf]
        %vm487 = vcmp.ge.bf16.partialorder %v455, 0
        %vm488 = vcmp.ge.bf16.partialorder %v456, 0
        %vm489 = vcmp.ge.bf16.partialorder %v457, 0
        %vm490 = vcmp.ge.bf16.partialorder %v458, 0
        %vm491 = vcmp.ge.bf16.partialorder %v459, 0
        %vm492 = vcmp.ge.bf16.partialorder %v460, 0
        %vm493 = vcmp.ge.bf16.partialorder %v461, 0
        %vm494 = vcmp.ge.bf16.partialorder %v462, 0
        %vm495 = vcmp.ge.bf16.partialorder %v463, 0
        %vm496 = vcmp.ge.bf16.partialorder %v464, 0
        %vm497 = vcmp.ge.bf16.partialorder %v465, 0
        %vm498 = vcmp.ge.bf16.partialorder %v466, 0
        %vm499 = vcmp.ge.bf16.partialorder %v467, 0
        %vm500 = vcmp.ge.bf16.partialorder %v468, 0
        %vm501 = vcmp.ge.bf16.partialorder %v469, 0
        %vm502 = vcmp.ge.bf16.partialorder %v470, 0
        %vm503 = vcmp.ge.bf16.partialorder %v471, 0
        %vm504 = vcmp.ge.bf16.partialorder %v472, 0
        %vm505 = vcmp.ge.bf16.partialorder %v473, 0
        %vm506 = vcmp.ge.bf16.partialorder %v474, 0
        %vm507 = vcmp.ge.bf16.partialorder %v475, 0
        %vm508 = vcmp.ge.bf16.partialorder %v476, 0
        %vm509 = vcmp.ge.bf16.partialorder %v477, 0
        %vm510 = vcmp.ge.bf16.partialorder %v478, 0
        %vm511 = vcmp.ge.bf16.partialorder %v479, 0
        %vm512 = vcmp.ge.bf16.partialorder %v480, 0
        %vm513 = vcmp.ge.bf16.partialorder %v481, 0
        %vm514 = vcmp.ge.bf16.partialorder %v482, 0
        %vm515 = vcmp.ge.bf16.partialorder %v483, 0
        %vm516 = vcmp.ge.bf16.partialorder %v484, 0
        %vm517 = vcmp.ge.bf16.partialorder %v485, 0
        %vm518 = vcmp.ge.bf16.partialorder %v486, 0
        %v519 = vmul.bf16 %v455, 1045249613
        %v520 = vmul.bf16 %v456, 1045249613
        %v521 = vmul.bf16 %v457, 1045249613
        %v522 = vmul.bf16 %v458, 1045249613
        %v523 = vmul.bf16 %v459, 1045249613
        %v524 = vmul.bf16 %v460, 1045249613
        %v525 = vmul.bf16 %v461, 1045249613
        %v526 = vmul.bf16 %v462, 1045249613
        %v527 = vmul.bf16 %v463, 1045249613
        %v528 = vmul.bf16 %v464, 1045249613
        %v529 = vmul.bf16 %v465, 1045249613
        %v530 = vmul.bf16 %v466, 1045249613
        %v531 = vmul.bf16 %v467, 1045249613
        %v532 = vmul.bf16 %v468, 1045249613
        %v533 = vmul.bf16 %v469, 1045249613
        %v534 = vmul.bf16 %v470, 1045249613
        %v535 = vmul.bf16 %v471, 1045249613
        %v536 = vmul.bf16 %v472, 1045249613
        %v537 = vmul.bf16 %v473, 1045249613
        %v538 = vmul.bf16 %v474, 1045249613
        %v539 = vmul.bf16 %v475, 1045249613
        %v540 = vmul.bf16 %v476, 1045249613
        %v541 = vmul.bf16 %v477, 1045249613
        %v542 = vmul.bf16 %v478, 1045249613
        %v543 = vmul.bf16 %v479, 1045249613
        %v544 = vmul.bf16 %v480, 1045249613
        %v545 = vmul.bf16 %v481, 1045249613
        %v546 = vmul.bf16 %v482, 1045249613
        %v547 = vmul.bf16 %v483, 1045249613
        %v548 = vmul.bf16 %v484, 1045249613
        %v549 = vmul.bf16 %v485, 1045249613
        %v550 = vmul.bf16 %v486, 1045249613
        %v551 = vsel %vm487, %v455, %v519
        %v552 = vsel %vm488, %v456, %v520
        %v553 = vsel %vm489, %v457, %v521
        %v554 = vsel %vm490, %v458, %v522
        %v555 = vsel %vm491, %v459, %v523
        %v556 = vsel %vm492, %v460, %v524
        %v557 = vsel %vm493, %v461, %v525
        %v558 = vsel %vm494, %v462, %v526
        %v559 = vsel %vm495, %v463, %v527
        %v560 = vsel %vm496, %v464, %v528
        %v561 = vsel %vm497, %v465, %v529
        %v562 = vsel %vm498, %v466, %v530
        %v563 = vsel %vm499, %v467, %v531
        %v564 = vsel %vm500, %v468, %v532
        %v565 = vsel %vm501, %v469, %v533
        %v566 = vsel %vm502, %v470, %v534
        %v567 = vsel %vm503, %v471, %v535
        %v568 = vsel %vm504, %v472, %v536
        %v569 = vsel %vm505, %v473, %v537
        %v570 = vsel %vm506, %v474, %v538
        %v571 = vsel %vm507, %v475, %v539
        %v572 = vsel %vm508, %v476, %v540
        %v573 = vsel %vm509, %v477, %v541
        %v574 = vsel %vm510, %v478, %v542
        %v575 = vsel %vm511, %v479, %v543
        %v576 = vsel %vm512, %v480, %v544
        %v577 = vsel %vm513, %v481, %v545
        %v578 = vsel %vm514, %v482, %v546
        %v579 = vsel %vm515, %v483, %v547
        %v580 = vsel %vm516, %v484, %v548
        %v581 = vsel %vm517, %v485, %v549
        %v582 = vsel %vm518, %v486, %v550
        %v583 = vld [vmem:[#allocation2] sm:$0xff]
        %v584 = vld [vmem:[#allocation2 + $0x8] sm:$0xff]
        %v585 = vld [vmem:[#allocation2 + $0x10] sm:$0xff]
        %v586 = vld [vmem:[#allocation2 + $0x18] sm:$0xff]
        %v587 = vld [vmem:[#allocation2 + $0x20] sm:$0xff]
        %v588 = vld [vmem:[#allocation2 + $0x28] sm:$0xff]
        %v589 = vld [vmem:[#allocation2 + $0x30] sm:$0xff]
        %v590 = vld [vmem:[#allocation2 + $0x38] sm:$0xff]
        %v591 = vld [vmem:[#allocation2 + $0x40] sm:$0xff]
        %v592 = vld [vmem:[#allocation2 + $0x48] sm:$0xff]
        %v593 = vld [vmem:[#allocation2 + $0x50] sm:$0xff]
        %v594 = vld [vmem:[#allocation2 + $0x58] sm:$0xff]
        %v595 = vld [vmem:[#allocation2 + $0x60] sm:$0xff]
        %v596 = vld [vmem:[#allocation2 + $0x68] sm:$0xff]
        %v597 = vld [vmem:[#allocation2 + $0x70] sm:$0xff]
        %v598 = vld [vmem:[#allocation2 + $0x78] sm:$0xff]
        %v599 = vld [vmem:[#allocation2 + $0x80] sm:$0xff]
        %v600 = vld [vmem:[#allocation2 + $0x88] sm:$0xff]
        %v601 = vld [vmem:[#allocation2 + $0x90] sm:$0xff]
        %v602 = vld [vmem:[#allocation2 + $0x98] sm:$0xff]
        %v603 = vld [vmem:[#allocation2 + $0xa0] sm:$0xff]
        %v604 = vld [vmem:[#allocation2 + $0xa8] sm:$0xff]
        %v605 = vld [vmem:[#allocation2 + $0xb0] sm:$0xff]
        %v606 = vld [vmem:[#allocation2 + $0xb8] sm:$0xff]
        %v607 = vld [vmem:[#allocation2 + $0xc0] sm:$0xff]
        %v608 = vld [vmem:[#allocation2 + $0xc8] sm:$0xff]
        %v609 = vld [vmem:[#allocation2 + $0xd0] sm:$0xff]
        %v610 = vld [vmem:[#allocation2 + $0xd8] sm:$0xff]
        %v611 = vld [vmem:[#allocation2 + $0xe0] sm:$0xff]
        %v612 = vld [vmem:[#allocation2 + $0xe8] sm:$0xff]
        %v613 = vld [vmem:[#allocation2 + $0xf0] sm:$0xff]
        %v614 = vld [vmem:[#allocation2 + $0xf8] sm:$0xff]
        %v615 = vld [vmem:[%s403] sm:$0xf]
        %v616 = vld [vmem:[%s403 + $0x4] sm:$0xf]
        %v617 = vld [vmem:[%s403 + $0x8] sm:$0xf]
        %v618 = vld [vmem:[%s403 + $0xc] sm:$0xf]
        %v619 = vld [vmem:[%s403 + $0x10] sm:$0xf]
        %v620 = vld [vmem:[%s403 + $0x14] sm:$0xf]
        %v621 = vld [vmem:[%s403 + $0x18] sm:$0xf]
        %v622 = vld [vmem:[%s403 + $0x1c] sm:$0xf]
        %v623 = vld [vmem:[%s403 + $0x20] sm:$0xf]
        %v624 = vld [vmem:[%s403 + $0x24] sm:$0xf]
        %v625 = vld [vmem:[%s403 + $0x28] sm:$0xf]
        %v626 = vld [vmem:[%s403 + $0x2c] sm:$0xf]
        %v627 = vld [vmem:[%s403 + $0x30] sm:$0xf]
        %v628 = vld [vmem:[%s403 + $0x34] sm:$0xf]
        %v629 = vld [vmem:[%s403 + $0x38] sm:$0xf]
        %v630 = vld [vmem:[%s403 + $0x3c] sm:$0xf]
        %v663 = vunpack.c.l.b16 %v551
        %v664 = vunpack.c.l.b16 %v552
        %v665 = vunpack.c.l.b16 %v553
        %v666 = vunpack.c.l.b16 %v554
        %v667 = vunpack.c.l.b16 %v555
        %v668 = vunpack.c.l.b16 %v556
        %v669 = vunpack.c.l.b16 %v557
        %v670 = vunpack.c.l.b16 %v558
        %v671 = vunpack.c.l.b16 %v559
        %v672 = vunpack.c.l.b16 %v560
        %v673 = vunpack.c.l.b16 %v561
        %v674 = vunpack.c.l.b16 %v562
        %v675 = vunpack.c.l.b16 %v563
        %v676 = vunpack.c.l.b16 %v564
        %v677 = vunpack.c.l.b16 %v565
        %v678 = vunpack.c.l.b16 %v566
        %v679 = vunpack.c.l.b16 %v567
        %v680 = vunpack.c.l.b16 %v568
        %v681 = vunpack.c.l.b16 %v569
        %v682 = vunpack.c.l.b16 %v570
        %v683 = vunpack.c.l.b16 %v571
        %v684 = vunpack.c.l.b16 %v572
        %v685 = vunpack.c.l.b16 %v573
        %v686 = vunpack.c.l.b16 %v574
        %v687 = vunpack.c.l.b16 %v575
        %v688 = vunpack.c.l.b16 %v576
        %v689 = vunpack.c.l.b16 %v577
        %v690 = vunpack.c.l.b16 %v578
        %v691 = vunpack.c.l.b16 %v579
        %v692 = vunpack.c.l.b16 %v580
        %v693 = vunpack.c.l.b16 %v581
        %v694 = vunpack.c.l.b16 %v582
        %v695 = vpack.c.b16 %v664, %v663
        %v696 = vpack.c.b16 %v666, %v665
        %v697 = vpack.c.b16 %v668, %v667
        %v698 = vpack.c.b16 %v670, %v669
        %v699 = vpack.c.b16 %v672, %v671
        %v700 = vpack.c.b16 %v674, %v673
        %v701 = vpack.c.b16 %v676, %v675
        %v702 = vpack.c.b16 %v678, %v677
        %v703 = vpack.c.b16 %v680, %v679
        %v704 = vpack.c.b16 %v682, %v681
        %v705 = vpack.c.b16 %v684, %v683
        %v706 = vpack.c.b16 %v686, %v685
        %v707 = vpack.c.b16 %v688, %v687
        %v708 = vpack.c.b16 %v690, %v689
        %v709 = vpack.c.b16 %v692, %v691
        %v710 = vpack.c.b16 %v694, %v693
        %v743 = vunpack.c.l.b16 %v615
        %v744 = vunpack.c.l.b16 %v616
        %v745 = vunpack.c.l.b16 %v617
        %v746 = vunpack.c.l.b16 %v618
        %v747 = vunpack.c.l.b16 %v619
        %v748 = vunpack.c.l.b16 %v620
        %v749 = vunpack.c.l.b16 %v621
        %v750 = vunpack.c.l.b16 %v622
        %v751 = vunpack.c.l.b16 %v623
        %v752 = vunpack.c.l.b16 %v624
        %v753 = vunpack.c.l.b16 %v625
        %v754 = vunpack.c.l.b16 %v626
        %v755 = vunpack.c.l.b16 %v627
        %v756 = vunpack.c.l.b16 %v628
        %v757 = vunpack.c.l.b16 %v629
        %v758 = vunpack.c.l.b16 %v630
        %v759 = vpack.c.b16 %v744, %v743
        %v760 = vpack.c.b16 %v746, %v745
        %v761 = vpack.c.b16 %v748, %v747
        %v762 = vpack.c.b16 %v750, %v749
        %v763 = vpack.c.b16 %v752, %v751
        %v764 = vpack.c.b16 %v754, %v753
        %v765 = vpack.c.b16 %v756, %v755
        %v766 = vpack.c.b16 %v758, %v757
        %775 = vmatprep.subr.bf16.mxu0 0
        %776 = vmatpush1.bf16.msra.mxu0 %v759
        %777 = vmatprep.subr.bf16.mxu0 0
        %778 = vmatpush1.bf16.msra.mxu0 %v760
        %779 = vmatprep.subr.bf16.mxu0 0
        %780 = vmatpush1.bf16.msra.mxu0 %v761
        %781 = vmatprep.subr.bf16.mxu0 0
        %782 = vmatpush1.bf16.msra.mxu0 %v762
        %783 = vmatprep.subr.bf16.mxu0 0
        %784 = vmatpush1.bf16.msra.mxu0 %v763
        %785 = vmatprep.subr.bf16.mxu0 0
        %786 = vmatpush1.bf16.msra.mxu0 %v764
        %787 = vmatprep.subr.bf16.mxu0 0
        %788 = vmatpush1.bf16.msra.mxu0 %v765
        %789 = vmatprep.subr.bf16.mxu0 0
        %790 = vmatpush1.bf16.msra.mxu0 %v766
        %791 = vmatprep.subr.bf16.mxu0 0
        %792 = vmatpush1.bf16.msra.mxu0 0
        %793 = vmatprep.subr.bf16.mxu0 0
        %794 = vmatpush1.bf16.msra.mxu0 0
        %795 = vmatprep.subr.bf16.mxu0 0
        %796 = vmatpush1.bf16.msra.mxu0 0
        %797 = vmatprep.subr.bf16.mxu0 0
        %798 = vmatpush1.bf16.msra.mxu0 0
        %799 = vmatprep.subr.bf16.mxu0 0
        %800 = vmatpush1.bf16.msra.mxu0 0
        %801 = vmatprep.subr.bf16.mxu0 0
        %802 = vmatpush1.bf16.msra.mxu0 0
        %803 = vmatprep.subr.bf16.mxu0 0
        %804 = vmatpush1.bf16.msra.mxu0 0
        %805 = vmatprep.subr.bf16.mxu0 0
        %806 = vmatpush1.bf16.msra.mxu0 0
        %807 = vmatprep.mubr.bf16.mxu0 0
        %808 = vmatmul.mubr.bf16.gmra.mrb[0].mxu0 %v695
        %v809 = vpop.f32.mrb[0].mxu0
        %v810 = vadd.f32 0.0, %v809
        %v811 = vpop.f32.mrb[0].mxu0
        %v812 = vpop.f32.mrb[0].mxu0
        %v813 = vadd.f32 0.0, %v812
        %v814 = vpop.f32.mrb[0].mxu0
        %815 = vmatprep.mubr.bf16.mxu0 0
        %816 = vmatmul.mubr.bf16.gmra.mrb[0].mxu0 %v696
        %v817 = vpop.f32.mrb[0].mxu0
        %v818 = vadd.f32 0.0, %v817
        %v819 = vpop.f32.mrb[0].mxu0
        %v820 = vpop.f32.mrb[0].mxu0
        %v821 = vadd.f32 0.0, %v820
        %v822 = vpop.f32.mrb[0].mxu0
        %823 = vmatprep.mubr.bf16.mxu0 0
        %824 = vmatmul.mubr.bf16.gmra.mrb[0].mxu0 %v697
        %v825 = vpop.f32.mrb[0].mxu0
        %v826 = vadd.f32 0.0, %v825
        %v827 = vpop.f32.mrb[0].mxu0
        %v828 = vpop.f32.mrb[0].mxu0
        %v829 = vadd.f32 0.0, %v828
        %v830 = vpop.f32.mrb[0].mxu0
        %831 = vmatprep.mubr.bf16.mxu0 0
        %832 = vmatmul.mubr.bf16.gmra.mrb[0].mxu0 %v698
        %v833 = vpop.f32.mrb[0].mxu0
        %v834 = vadd.f32 0.0, %v833
        %v835 = vpop.f32.mrb[0].mxu0
        %v836 = vpop.f32.mrb[0].mxu0
        %v837 = vadd.f32 0.0, %v836
        %v838 = vpop.f32.mrb[0].mxu0
        %839 = vmatprep.mubr.bf16.mxu0 0
        %840 = vmatmul.mubr.bf16.gmra.mrb[0].mxu0 %v699
        %v841 = vpop.f32.mrb[0].mxu0
        %v842 = vadd.f32 0.0, %v841
        %v843 = vpop.f32.mrb[0].mxu0
        %v844 = vpop.f32.mrb[0].mxu0
        %v845 = vadd.f32 0.0, %v844
        %v846 = vpop.f32.mrb[0].mxu0
        %847 = vmatprep.mubr.bf16.mxu0 0
        %848 = vmatmul.mubr.bf16.gmra.mrb[0].mxu0 %v700
        %v849 = vpop.f32.mrb[0].mxu0
        %v850 = vadd.f32 0.0, %v849
        %v851 = vpop.f32.mrb[0].mxu0
        %v852 = vpop.f32.mrb[0].mxu0
        %v853 = vadd.f32 0.0, %v852
        %v854 = vpop.f32.mrb[0].mxu0
        %855 = vmatprep.mubr.bf16.mxu0 0
        %856 = vmatmul.mubr.bf16.gmra.mrb[0].mxu0 %v701
        %v857 = vpop.f32.mrb[0].mxu0
        %v858 = vadd.f32 0.0, %v857
        %v859 = vpop.f32.mrb[0].mxu0
        %v860 = vpop.f32.mrb[0].mxu0
        %v861 = vadd.f32 0.0, %v860
        %v862 = vpop.f32.mrb[0].mxu0
        %863 = vmatprep.mubr.bf16.mxu0 0
        %864 = vmatmul.mubr.bf16.gmra.mrb[0].mxu0 %v702
        %v865 = vpop.f32.mrb[0].mxu0
        %v866 = vadd.f32 0.0, %v865
        %v867 = vpop.f32.mrb[0].mxu0
        %v868 = vpop.f32.mrb[0].mxu0
        %v869 = vadd.f32 0.0, %v868
        %v870 = vpop.f32.mrb[0].mxu0
        %871 = vmatprep.mubr.bf16.mxu0 0
        %872 = vmatmul.mubr.bf16.gmra.mrb[0].mxu0 %v703
        %v873 = vpop.f32.mrb[0].mxu0
        %v874 = vadd.f32 0.0, %v873
        %v875 = vpop.f32.mrb[0].mxu0
        %v876 = vpop.f32.mrb[0].mxu0
        %v877 = vadd.f32 0.0, %v876
        %v878 = vpop.f32.mrb[0].mxu0
        %879 = vmatprep.mubr.bf16.mxu0 0
        %880 = vmatmul.mubr.bf16.gmra.mrb[0].mxu0 %v704
        %v881 = vpop.f32.mrb[0].mxu0
        %v882 = vadd.f32 0.0, %v881
        %v883 = vpop.f32.mrb[0].mxu0
        %v884 = vpop.f32.mrb[0].mxu0
        %v885 = vadd.f32 0.0, %v884
        %v886 = vpop.f32.mrb[0].mxu0
        %887 = vmatprep.mubr.bf16.mxu0 0
        %888 = vmatmul.mubr.bf16.gmra.mrb[0].mxu0 %v705
        %v889 = vpop.f32.mrb[0].mxu0
        %v890 = vadd.f32 0.0, %v889
        %v891 = vpop.f32.mrb[0].mxu0
        %v892 = vpop.f32.mrb[0].mxu0
        %v893 = vadd.f32 0.0, %v892
        %v894 = vpop.f32.mrb[0].mxu0
        %895 = vmatprep.mubr.bf16.mxu0 0
        %896 = vmatmul.mubr.bf16.gmra.mrb[0].mxu0 %v706
        %v897 = vpop.f32.mrb[0].mxu0
        %v898 = vadd.f32 0.0, %v897
        %v899 = vpop.f32.mrb[0].mxu0
        %v900 = vpop.f32.mrb[0].mxu0
        %v901 = vadd.f32 0.0, %v900
        %v902 = vpop.f32.mrb[0].mxu0
        %903 = vmatprep.mubr.bf16.mxu0 0
        %904 = vmatmul.mubr.bf16.gmra.mrb[0].mxu0 %v707
        %v905 = vpop.f32.mrb[0].mxu0
        %v906 = vadd.f32 0.0, %v905
        %v907 = vpop.f32.mrb[0].mxu0
        %v908 = vpop.f32.mrb[0].mxu0
        %v909 = vadd.f32 0.0, %v908
        %v910 = vpop.f32.mrb[0].mxu0
        %911 = vmatprep.mubr.bf16.mxu0 0
        %912 = vmatmul.mubr.bf16.gmra.mrb[0].mxu0 %v708
        %v913 = vpop.f32.mrb[0].mxu0
        %v914 = vadd.f32 0.0, %v913
        %v915 = vpop.f32.mrb[0].mxu0
        %v916 = vpop.f32.mrb[0].mxu0
        %v917 = vadd.f32 0.0, %v916
        %v918 = vpop.f32.mrb[0].mxu0
        %919 = vmatprep.mubr.bf16.mxu0 0
        %920 = vmatmul.mubr.bf16.gmra.mrb[0].mxu0 %v709
        %v921 = vpop.f32.mrb[0].mxu0
        %v922 = vadd.f32 0.0, %v921
        %v923 = vpop.f32.mrb[0].mxu0
        %v924 = vpop.f32.mrb[0].mxu0
        %v925 = vadd.f32 0.0, %v924
        %v926 = vpop.f32.mrb[0].mxu0
        %927 = vmatprep.mubr.bf16.mxu0 0
        %928 = vmatmul.mubr.bf16.gmra.mrb[0].mxu0 %v710
        %v929 = vpop.f32.mrb[0].mxu0
        %v930 = vadd.f32 0.0, %v929
        %v931 = vpop.f32.mrb[0].mxu0
        %v932 = vpop.f32.mrb[0].mxu0
        %v933 = vadd.f32 0.0, %v932
        %v934 = vpop.f32.mrb[0].mxu0
        %935 = vdwg.mxu0
        %v936 = vadd.f32 %v583, %v810
        %v937 = vadd.f32 %v584, %v813
        %v938 = vadd.f32 %v585, %v818
        %v939 = vadd.f32 %v586, %v821
        %v940 = vadd.f32 %v587, %v826
        %v941 = vadd.f32 %v588, %v829
        %v942 = vadd.f32 %v589, %v834
        %v943 = vadd.f32 %v590, %v837
        %v944 = vadd.f32 %v591, %v842
        %v945 = vadd.f32 %v592, %v845
        %v946 = vadd.f32 %v593, %v850
        %v947 = vadd.f32 %v594, %v853
        %v948 = vadd.f32 %v595, %v858
        %v949 = vadd.f32 %v596, %v861
        %v950 = vadd.f32 %v597, %v866
        %v951 = vadd.f32 %v598, %v869
        %v952 = vadd.f32 %v599, %v874
        %v953 = vadd.f32 %v600, %v877
        %v954 = vadd.f32 %v601, %v882
        %v955 = vadd.f32 %v602, %v885
        %v956 = vadd.f32 %v603, %v890
        %v957 = vadd.f32 %v604, %v893
        %v958 = vadd.f32 %v605, %v898
        %v959 = vadd.f32 %v606, %v901
        %v960 = vadd.f32 %v607, %v906
        %v961 = vadd.f32 %v608, %v909
        %v962 = vadd.f32 %v609, %v914
        %v963 = vadd.f32 %v610, %v917
        %v964 = vadd.f32 %v611, %v922
        %v965 = vadd.f32 %v612, %v925
        %v966 = vadd.f32 %v613, %v930
        %v967 = vadd.f32 %v614, %v933
        %968 = vst [vmem:[#allocation2] sm:$0xff] %v936
        %969 = vst [vmem:[#allocation2 + $0x8] sm:$0xff] %v937
        %970 = vst [vmem:[#allocation2 + $0x10] sm:$0xff] %v938
        %971 = vst [vmem:[#allocation2 + $0x18] sm:$0xff] %v939
        %972 = vst [vmem:[#allocation2 + $0x20] sm:$0xff] %v940
        %973 = vst [vmem:[#allocation2 + $0x28] sm:$0xff] %v941
        %974 = vst [vmem:[#allocation2 + $0x30] sm:$0xff] %v942
        %975 = vst [vmem:[#allocation2 + $0x38] sm:$0xff] %v943
        %976 = vst [vmem:[#allocation2 + $0x40] sm:$0xff] %v944
        %977 = vst [vmem:[#allocation2 + $0x48] sm:$0xff] %v945
        %978 = vst [vmem:[#allocation2 + $0x50] sm:$0xff] %v946
        %979 = vst [vmem:[#allocation2 + $0x58] sm:$0xff] %v947
        %980 = vst [vmem:[#allocation2 + $0x60] sm:$0xff] %v948
        %981 = vst [vmem:[#allocation2 + $0x68] sm:$0xff] %v949
        %982 = vst [vmem:[#allocation2 + $0x70] sm:$0xff] %v950
        %983 = vst [vmem:[#allocation2 + $0x78] sm:$0xff] %v951
        %984 = vst [vmem:[#allocation2 + $0x80] sm:$0xff] %v952
        %985 = vst [vmem:[#allocation2 + $0x88] sm:$0xff] %v953
        %986 = vst [vmem:[#allocation2 + $0x90] sm:$0xff] %v954
        %987 = vst [vmem:[#allocation2 + $0x98] sm:$0xff] %v955
        %988 = vst [vmem:[#allocation2 + $0xa0] sm:$0xff] %v956
        %989 = vst [vmem:[#allocation2 + $0xa8] sm:$0xff] %v957
        %990 = vst [vmem:[#allocation2 + $0xb0] sm:$0xff] %v958
        %991 = vst [vmem:[#allocation2 + $0xb8] sm:$0xff] %v959
        %992 = vst [vmem:[#allocation2 + $0xc0] sm:$0xff] %v960
        %993 = vst [vmem:[#allocation2 + $0xc8] sm:$0xff] %v961
        %994 = vst [vmem:[#allocation2 + $0xd0] sm:$0xff] %v962
        %995 = vst [vmem:[#allocation2 + $0xd8] sm:$0xff] %v963
        %996 = vst [vmem:[#allocation2 + $0xe0] sm:$0xff] %v964
        %997 = vst [vmem:[#allocation2 + $0xe8] sm:$0xff] %v965
        %998 = vst [vmem:[#allocation2 + $0xf0] sm:$0xff] %v966
        %999 = vst [vmem:[#allocation2 + $0xf8] sm:$0xff] %v967
        %p1000 = scmp.eq.s32.totalorder %s21, 1
        // Predicated region
        $region78: #{_lambda_.54} parent=68 // pred_check
          %p1001 = pneg %p1000
        $region79: #{_lambda_.54} parent=68 // pred_check_branch
          %1003 = sbr.rel (%p1001) target = $region81
        $region80: #{_lambda_.54} parent=68 // pred_region
          %v1004 = vld [vmem:[#allocation2] sm:$0xff]
          %v1005 = vld [vmem:[#allocation2 + $0x8] sm:$0xff]
          %v1006 = vld [vmem:[#allocation2 + $0x10] sm:$0xff]
          %v1007 = vld [vmem:[#allocation2 + $0x18] sm:$0xff]
          %v1008 = vld [vmem:[#allocation2 + $0x20] sm:$0xff]
          %v1009 = vld [vmem:[#allocation2 + $0x28] sm:$0xff]
          %v1010 = vld [vmem:[#allocation2 + $0x30] sm:$0xff]
          %v1011 = vld [vmem:[#allocation2 + $0x38] sm:$0xff]
          %v1012 = vld [vmem:[#allocation2 + $0x40] sm:$0xff]
          %v1013 = vld [vmem:[#allocation2 + $0x48] sm:$0xff]
          %v1014 = vld [vmem:[#allocation2 + $0x50] sm:$0xff]
          %v1015 = vld [vmem:[#allocation2 + $0x58] sm:$0xff]
          %v1016 = vld [vmem:[#allocation2 + $0x60] sm:$0xff]
          %v1017 = vld [vmem:[#allocation2 + $0x68] sm:$0xff]
          %v1018 = vld [vmem:[#allocation2 + $0x70] sm:$0xff]
          %v1019 = vld [vmem:[#allocation2 + $0x78] sm:$0xff]
          %v1020 = vld [vmem:[#allocation2 + $0x80] sm:$0xff]
          %v1021 = vld [vmem:[#allocation2 + $0x88] sm:$0xff]
          %v1022 = vld [vmem:[#allocation2 + $0x90] sm:$0xff]
          %v1023 = vld [vmem:[#allocation2 + $0x98] sm:$0xff]
          %v1024 = vld [vmem:[#allocation2 + $0xa0] sm:$0xff]
          %v1025 = vld [vmem:[#allocation2 + $0xa8] sm:$0xff]
          %v1026 = vld [vmem:[#allocation2 + $0xb0] sm:$0xff]
          %v1027 = vld [vmem:[#allocation2 + $0xb8] sm:$0xff]
          %v1028 = vld [vmem:[#allocation2 + $0xc0] sm:$0xff]
          %v1029 = vld [vmem:[#allocation2 + $0xc8] sm:$0xff]
          %v1030 = vld [vmem:[#allocation2 + $0xd0] sm:$0xff]
          %v1031 = vld [vmem:[#allocation2 + $0xd8] sm:$0xff]
          %v1032 = vld [vmem:[#allocation2 + $0xe0] sm:$0xff]
          %v1033 = vld [vmem:[#allocation2 + $0xe8] sm:$0xff]
          %v1034 = vld [vmem:[#allocation2 + $0xf0] sm:$0xff]
          %v1035 = vld [vmem:[#allocation2 + $0xf8] sm:$0xff]
          %v1036 = vld [vmem:[%s407] sm:$0x1]
          %v1038 = vlaneseq
          %v1039 = vshrl.u32 %v1038, 7
          %v1040 = vsub.s32 0, %v1039
          %v1041 = vrot.slane %v1036, %v1040
          %v1043 = vadd.f32 %v1004, %v1041
          %v1044 = vadd.f32 %v1005, %v1041
          %v1045 = vadd.f32 %v1006, %v1041
          %v1046 = vadd.f32 %v1007, %v1041
          %v1047 = vadd.f32 %v1008, %v1041
          %v1048 = vadd.f32 %v1009, %v1041
          %v1049 = vadd.f32 %v1010, %v1041
          %v1050 = vadd.f32 %v1011, %v1041
          %v1051 = vadd.f32 %v1012, %v1041
          %v1052 = vadd.f32 %v1013, %v1041
          %v1053 = vadd.f32 %v1014, %v1041
          %v1054 = vadd.f32 %v1015, %v1041
          %v1055 = vadd.f32 %v1016, %v1041
          %v1056 = vadd.f32 %v1017, %v1041
          %v1057 = vadd.f32 %v1018, %v1041
          %v1058 = vadd.f32 %v1019, %v1041
          %v1059 = vadd.f32 %v1020, %v1041
          %v1060 = vadd.f32 %v1021, %v1041
          %v1061 = vadd.f32 %v1022, %v1041
          %v1062 = vadd.f32 %v1023, %v1041
          %v1063 = vadd.f32 %v1024, %v1041
          %v1064 = vadd.f32 %v1025, %v1041
          %v1065 = vadd.f32 %v1026, %v1041
          %v1066 = vadd.f32 %v1027, %v1041
          %v1067 = vadd.f32 %v1028, %v1041
          %v1068 = vadd.f32 %v1029, %v1041
          %v1069 = vadd.f32 %v1030, %v1041
          %v1070 = vadd.f32 %v1031, %v1041
          %v1071 = vadd.f32 %v1032, %v1041
          %v1072 = vadd.f32 %v1033, %v1041
          %v1073 = vadd.f32 %v1034, %v1041
          %v1074 = vadd.f32 %v1035, %v1041
          %1075 = vst [vmem:[%s415] sm:$0xff] %v1043
          %1076 = vst [vmem:[%s415 + $0x8] sm:$0xff] %v1044
          %1077 = vst [vmem:[%s415 + $0x10] sm:$0xff] %v1045
          %1078 = vst [vmem:[%s415 + $0x18] sm:$0xff] %v1046
          %1079 = vst [vmem:[%s415 + $0x20] sm:$0xff] %v1047
          %1080 = vst [vmem:[%s415 + $0x28] sm:$0xff] %v1048
          %1081 = vst [vmem:[%s415 + $0x30] sm:$0xff] %v1049
          %1082 = vst [vmem:[%s415 + $0x38] sm:$0xff] %v1050
          %1083 = vst [vmem:[%s415 + $0x40] sm:$0xff] %v1051
          %1084 = vst [vmem:[%s415 + $0x48] sm:$0xff] %v1052
          %1085 = vst [vmem:[%s415 + $0x50] sm:$0xff] %v1053
          %1086 = vst [vmem:[%s415 + $0x58] sm:$0xff] %v1054
          %1087 = vst [vmem:[%s415 + $0x60] sm:$0xff] %v1055
          %1088 = vst [vmem:[%s415 + $0x68] sm:$0xff] %v1056
          %1089 = vst [vmem:[%s415 + $0x70] sm:$0xff] %v1057
          %1090 = vst [vmem:[%s415 + $0x78] sm:$0xff] %v1058
          %1091 = vst [vmem:[%s415 + $0x80] sm:$0xff] %v1059
          %1092 = vst [vmem:[%s415 + $0x88] sm:$0xff] %v1060
          %1093 = vst [vmem:[%s415 + $0x90] sm:$0xff] %v1061
          %1094 = vst [vmem:[%s415 + $0x98] sm:$0xff] %v1062
          %1095 = vst [vmem:[%s415 + $0xa0] sm:$0xff] %v1063
          %1096 = vst [vmem:[%s415 + $0xa8] sm:$0xff] %v1064
          %1097 = vst [vmem:[%s415 + $0xb0] sm:$0xff] %v1065
          %1098 = vst [vmem:[%s415 + $0xb8] sm:$0xff] %v1066
          %1099 = vst [vmem:[%s415 + $0xc0] sm:$0xff] %v1067
          %1100 = vst [vmem:[%s415 + $0xc8] sm:$0xff] %v1068
          %1101 = vst [vmem:[%s415 + $0xd0] sm:$0xff] %v1069
          %1102 = vst [vmem:[%s415 + $0xd8] sm:$0xff] %v1070
          %1103 = vst [vmem:[%s415 + $0xe0] sm:$0xff] %v1071
          %1104 = vst [vmem:[%s415 + $0xe8] sm:$0xff] %v1072
          %1105 = vst [vmem:[%s415 + $0xf0] sm:$0xff] %v1073
          %1106 = vst [vmem:[%s415 + $0xf8] sm:$0xff] %v1074
        $region81: #{_lambda_.54} parent=68 // pred_fallthru
          _
        %s1107 = smul.u32 32, %s19
        %p1108 = scmp.lt.s32.totalorder %s1107, 31
        %s1109 = scalar_select %p1108, %s1107, 31
        %p1110 = scmp.lt.s32.totalorder %s20, 0
        %s1111 = scalar_select %p1110, %s20, 0
        %s1112 = sadd.s32 %s1111, %s1109
        %s1113 = smul.addr %s1112, 8
        %s1114 = scalar_lea.vmem %s3, %s1113
        // Predicated region
        $region82: #{_lambda_.54} parent=68 // pred_check
          %p1115 = pneg %p135
        $region83: #{_lambda_.54} parent=68 // pred_check_branch
          %1117 = sbr.rel (%p1115) target = $region85
        $region84: #{_lambda_.54} parent=68 // pred_region
          %s1118 = smul.u32 32, %s19
        $region85: #{_lambda_.54} parent=68 // pred_fallthru
          _
        // Predicated region
        $region86: #{_lambda_.54} parent=68 // pred_check
          %p1119 = pneg %p135
        $region87: #{_lambda_.54} parent=68 // pred_check_branch
          %1121 = sbr.rel (%p1119) target = $region89
        $region88: #{_lambda_.54} parent=68 // pred_region
          %s1122 = smul.u32 32, %s19
          %p1123 = scmp.lt.s32.totalorder %s1122, 31
          %s1124 = scalar_select %p1123, %s1122, 31
          %p1125 = scmp.lt.s32.totalorder %s20, 0
          %s1126 = scalar_select %p1125, %s20, 0
          %s1127 = sadd.s32 %s1126, %s1124
          %s1128 = smul.addr %s1127, 8
          %s1129 = scalar_lea.vmem %s3, %s1128
        $region89: #{_lambda_.54} parent=68 // pred_fallthru
          _
      $region69: #{_lambda_.54} parent=5 // pred_fallthru
        _
      %p1130 = scmp.le.s32.totalorder 2, %s9
      // Predicated region
      $region90: #{_lambda_.54} parent=5 // pred_check
        %p1131 = pneg %p1130
      $region91: #{_lambda_.54} parent=5 // pred_check_branch
        %1133 = sbr.rel (%p1131) target = $region93
      $region92: #{_lambda_.54} parent=5 // pred_region
        %s1134 = ssub.s32 %s9, 2
      $region93: #{_lambda_.54} parent=5 // pred_fallthru
        _
    $region6: #{_lambda_.54} parent=1 // loop_footer
      %s13 = sadd.s32 1, %s9
    $region7: #{_lambda_.54} parent=1 // loop_footer_branch
      %8 = sbr.rel target = $region3
    $region8: #{_lambda_.54} parent=1 // loop_exit
      _

// kernel: _lambda_.58
$region0: #{_lambda_.58}
  #allocation0 [shape = 'u32[]', space=smem, size = 0x4, offset = 0x4, fixed_abs, tag = 'smem constant byte address 0x4 - core index']
  #allocation1 [shape = 'u32[144,128]{1,0:T(1,128)}', space=vmem, size = 0x12000, scoped, tag = 'internal scratch']
  #allocation2 [shape = 'f32[256,128]{1,0:T(8,128)}', space=vmem, size = 0x20000, scoped, tag = 'scratch operand']
  %s0 = inlined_call_operand.vmem [shape: bf16[256,128], index: 0, kind: input, shape index: {}]
  %s1 = inlined_call_operand.vmem [shape: bf16[128,128], index: 1, kind: input, shape index: {}]
  %s2 = inlined_call_operand.vmem [shape: f32[1,128], index: 2, kind: input, shape index: {}]
  %s3 = inlined_call_operand.vmem [shape: f32[256,128], index: 3, kind: output, shape index: {}]
  %s4 = sld [smem:[#allocation0]]
  $region30: #{_lambda_.58} parent=0
    _
  %s6 = ssub.s32 1, %s4
  %s7 = scalar_select 0, %s6, %s4
  // Predicated region
  $region2: #{_lambda_.58} parent=0 // pred_check
    _
  $region3: #{_lambda_.58} parent=0 // pred_check_branch
    %9 = sbr.rel (0) target = $region5
  $region4: #{_lambda_.58} parent=0 // pred_region
    _
  $region5: #{_lambda_.58} parent=0 // pred_fallthru
    _
  // Predicated region
  $region6: #{_lambda_.58} parent=0 // pred_check
    _
  $region7: #{_lambda_.58} parent=0 // pred_check_branch
    %11 = sbr.rel (0) target = $region9
  $region8: #{_lambda_.58} parent=0 // pred_region
    _
  $region9: #{_lambda_.58} parent=0 // pred_fallthru
    _
  // Predicated region
  $region10: #{_lambda_.58} parent=0 // pred_check
    _
  $region11: #{_lambda_.58} parent=0 // pred_check_branch
    %13 = sbr.rel (0) target = $region13
  $region12: #{_lambda_.58} parent=0 // pred_region
    _
  $region13: #{_lambda_.58} parent=0 // pred_fallthru
    _
  %p15 = scmp.eq.s32.totalorder 0, 0
  // Predicated region
  $region14: #{_lambda_.58} parent=0 // pred_check
    %p16 = pneg %p15
  $region15: #{_lambda_.58} parent=0 // pred_check_branch
    %18 = sbr.rel (%p16) target = $region17
  $region16: #{_lambda_.58} parent=0 // pred_region
    %19 = vst [vmem:[#allocation2] sm:$0xff] 0.0
    %20 = vst [vmem:[#allocation2 + $0x8] sm:$0xff] 0.0
    %21 = vst [vmem:[#allocation2 + $0x10] sm:$0xff] 0.0
    %22 = vst [vmem:[#allocation2 + $0x18] sm:$0xff] 0.0
    %23 = vst [vmem:[#allocation2 + $0x20] sm:$0xff] 0.0
    %24 = vst [vmem:[#allocation2 + $0x28] sm:$0xff] 0.0
    %25 = vst [vmem:[#allocation2 + $0x30] sm:$0xff] 0.0
    %26 = vst [vmem:[#allocation2 + $0x38] sm:$0xff] 0.0
    %27 = vst [vmem:[#allocation2 + $0x40] sm:$0xff] 0.0
    %28 = vst [vmem:[#allocation2 + $0x48] sm:$0xff] 0.0
    %29 = vst [vmem:[#allocation2 + $0x50] sm:$0xff] 0.0
    %30 = vst [vmem:[#allocation2 + $0x58] sm:$0xff] 0.0
    %31 = vst [vmem:[#allocation2 + $0x60] sm:$0xff] 0.0
    %32 = vst [vmem:[#allocation2 + $0x68] sm:$0xff] 0.0
    %33 = vst [vmem:[#allocation2 + $0x70] sm:$0xff] 0.0
    %34 = vst [vmem:[#allocation2 + $0x78] sm:$0xff] 0.0
    %35 = vst [vmem:[#allocation2 + $0x80] sm:$0xff] 0.0
    %36 = vst [vmem:[#allocation2 + $0x88] sm:$0xff] 0.0
    %37 = vst [vmem:[#allocation2 + $0x90] sm:$0xff] 0.0
    %38 = vst [vmem:[#allocation2 + $0x98] sm:$0xff] 0.0
    %39 = vst [vmem:[#allocation2 + $0xa0] sm:$0xff] 0.0
    %40 = vst [vmem:[#allocation2 + $0xa8] sm:$0xff] 0.0
    %41 = vst [vmem:[#allocation2 + $0xb0] sm:$0xff] 0.0
    %42 = vst [vmem:[#allocation2 + $0xb8] sm:$0xff] 0.0
    %43 = vst [vmem:[#allocation2 + $0xc0] sm:$0xff] 0.0
    %44 = vst [vmem:[#allocation2 + $0xc8] sm:$0xff] 0.0
    %45 = vst [vmem:[#allocation2 + $0xd0] sm:$0xff] 0.0
    %46 = vst [vmem:[#allocation2 + $0xd8] sm:$0xff] 0.0
    %47 = vst [vmem:[#allocation2 + $0xe0] sm:$0xff] 0.0
    %48 = vst [vmem:[#allocation2 + $0xe8] sm:$0xff] 0.0
    %49 = vst [vmem:[#allocation2 + $0xf0] sm:$0xff] 0.0
    %50 = vst [vmem:[#allocation2 + $0xf8] sm:$0xff] 0.0
  $region17: #{_lambda_.58} parent=0 // pred_fallthru
    _
  %v51 = vld [vmem:[%s0] sm:$0xf]
  %v52 = vld [vmem:[%s0 + $0x4] sm:$0xf]
  %v53 = vld [vmem:[%s0 + $0x8] sm:$0xf]
  %v54 = vld [vmem:[%s0 + $0xc] sm:$0xf]
  %v55 = vld [vmem:[%s0 + $0x10] sm:$0xf]
  %v56 = vld [vmem:[%s0 + $0x14] sm:$0xf]
  %v57 = vld [vmem:[%s0 + $0x18] sm:$0xf]
  %v58 = vld [vmem:[%s0 + $0x1c] sm:$0xf]
  %v59 = vld [vmem:[%s0 + $0x20] sm:$0xf]
  %v60 = vld [vmem:[%s0 + $0x24] sm:$0xf]
  %v61 = vld [vmem:[%s0 + $0x28] sm:$0xf]
  %v62 = vld [vmem:[%s0 + $0x2c] sm:$0xf]
  %v63 = vld [vmem:[%s0 + $0x30] sm:$0xf]
  %v64 = vld [vmem:[%s0 + $0x34] sm:$0xf]
  %v65 = vld [vmem:[%s0 + $0x38] sm:$0xf]
  %v66 = vld [vmem:[%s0 + $0x3c] sm:$0xf]
  %v67 = vld [vmem:[%s0 + $0x40] sm:$0xf]
  %v68 = vld [vmem:[%s0 + $0x44] sm:$0xf]
  %v69 = vld [vmem:[%s0 + $0x48] sm:$0xf]
  %v70 = vld [vmem:[%s0 + $0x4c] sm:$0xf]
  %v71 = vld [vmem:[%s0 + $0x50] sm:$0xf]
  %v72 = vld [vmem:[%s0 + $0x54] sm:$0xf]
  %v73 = vld [vmem:[%s0 + $0x58] sm:$0xf]
  %v74 = vld [vmem:[%s0 + $0x5c] sm:$0xf]
  %v75 = vld [vmem:[%s0 + $0x60] sm:$0xf]
  %v76 = vld [vmem:[%s0 + $0x64] sm:$0xf]
  %v77 = vld [vmem:[%s0 + $0x68] sm:$0xf]
  %v78 = vld [vmem:[%s0 + $0x6c] sm:$0xf]
  %v79 = vld [vmem:[%s0 + $0x70] sm:$0xf]
  %v80 = vld [vmem:[%s0 + $0x74] sm:$0xf]
  %v81 = vld [vmem:[%s0 + $0x78] sm:$0xf]
  %v82 = vld [vmem:[%s0 + $0x7c] sm:$0xf]
  %v83 = vmax.bf16 %v51, 0
  %v84 = vmax.bf16 %v52, 0
  %v85 = vmax.bf16 %v53, 0
  %v86 = vmax.bf16 %v54, 0
  %v87 = vmax.bf16 %v55, 0
  %v88 = vmax.bf16 %v56, 0
  %v89 = vmax.bf16 %v57, 0
  %v90 = vmax.bf16 %v58, 0
  %v91 = vmax.bf16 %v59, 0
  %v92 = vmax.bf16 %v60, 0
  %v93 = vmax.bf16 %v61, 0
  %v94 = vmax.bf16 %v62, 0
  %v95 = vmax.bf16 %v63, 0
  %v96 = vmax.bf16 %v64, 0
  %v97 = vmax.bf16 %v65, 0
  %v98 = vmax.bf16 %v66, 0
  %v99 = vmax.bf16 %v67, 0
  %v100 = vmax.bf16 %v68, 0
  %v101 = vmax.bf16 %v69, 0
  %v102 = vmax.bf16 %v70, 0
  %v103 = vmax.bf16 %v71, 0
  %v104 = vmax.bf16 %v72, 0
  %v105 = vmax.bf16 %v73, 0
  %v106 = vmax.bf16 %v74, 0
  %v107 = vmax.bf16 %v75, 0
  %v108 = vmax.bf16 %v76, 0
  %v109 = vmax.bf16 %v77, 0
  %v110 = vmax.bf16 %v78, 0
  %v111 = vmax.bf16 %v79, 0
  %v112 = vmax.bf16 %v80, 0
  %v113 = vmax.bf16 %v81, 0
  %v114 = vmax.bf16 %v82, 0
  %v115 = vld [vmem:[#allocation2] sm:$0xff]
  %v116 = vld [vmem:[#allocation2 + $0x8] sm:$0xff]
  %v117 = vld [vmem:[#allocation2 + $0x10] sm:$0xff]
  %v118 = vld [vmem:[#allocation2 + $0x18] sm:$0xff]
  %v119 = vld [vmem:[#allocation2 + $0x20] sm:$0xff]
  %v120 = vld [vmem:[#allocation2 + $0x28] sm:$0xff]
  %v121 = vld [vmem:[#allocation2 + $0x30] sm:$0xff]
  %v122 = vld [vmem:[#allocation2 + $0x38] sm:$0xff]
  %v123 = vld [vmem:[#allocation2 + $0x40] sm:$0xff]
  %v124 = vld [vmem:[#allocation2 + $0x48] sm:$0xff]
  %v125 = vld [vmem:[#allocation2 + $0x50] sm:$0xff]
  %v126 = vld [vmem:[#allocation2 + $0x58] sm:$0xff]
  %v127 = vld [vmem:[#allocation2 + $0x60] sm:$0xff]
  %v128 = vld [vmem:[#allocation2 + $0x68] sm:$0xff]
  %v129 = vld [vmem:[#allocation2 + $0x70] sm:$0xff]
  %v130 = vld [vmem:[#allocation2 + $0x78] sm:$0xff]
  %v131 = vld [vmem:[#allocation2 + $0x80] sm:$0xff]
  %v132 = vld [vmem:[#allocation2 + $0x88] sm:$0xff]
  %v133 = vld [vmem:[#allocation2 + $0x90] sm:$0xff]
  %v134 = vld [vmem:[#allocation2 + $0x98] sm:$0xff]
  %v135 = vld [vmem:[#allocation2 + $0xa0] sm:$0xff]
  %v136 = vld [vmem:[#allocation2 + $0xa8] sm:$0xff]
  %v137 = vld [vmem:[#allocation2 + $0xb0] sm:$0xff]
  %v138 = vld [vmem:[#allocation2 + $0xb8] sm:$0xff]
  %v139 = vld [vmem:[#allocation2 + $0xc0] sm:$0xff]
  %v140 = vld [vmem:[#allocation2 + $0xc8] sm:$0xff]
  %v141 = vld [vmem:[#allocation2 + $0xd0] sm:$0xff]
  %v142 = vld [vmem:[#allocation2 + $0xd8] sm:$0xff]
  %v143 = vld [vmem:[#allocation2 + $0xe0] sm:$0xff]
  %v144 = vld [vmem:[#allocation2 + $0xe8] sm:$0xff]
  %v145 = vld [vmem:[#allocation2 + $0xf0] sm:$0xff]
  %v146 = vld [vmem:[#allocation2 + $0xf8] sm:$0xff]
  %v147 = vld [vmem:[%s1] sm:$0xf]
  %v148 = vld [vmem:[%s1 + $0x4] sm:$0xf]
  %v149 = vld [vmem:[%s1 + $0x8] sm:$0xf]
  %v150 = vld [vmem:[%s1 + $0xc] sm:$0xf]
  %v151 = vld [vmem:[%s1 + $0x10] sm:$0xf]
  %v152 = vld [vmem:[%s1 + $0x14] sm:$0xf]
  %v153 = vld [vmem:[%s1 + $0x18] sm:$0xf]
  %v154 = vld [vmem:[%s1 + $0x1c] sm:$0xf]
  %v155 = vld [vmem:[%s1 + $0x20] sm:$0xf]
  %v156 = vld [vmem:[%s1 + $0x24] sm:$0xf]
  %v157 = vld [vmem:[%s1 + $0x28] sm:$0xf]
  %v158 = vld [vmem:[%s1 + $0x2c] sm:$0xf]
  %v159 = vld [vmem:[%s1 + $0x30] sm:$0xf]
  %v160 = vld [vmem:[%s1 + $0x34] sm:$0xf]
  %v161 = vld [vmem:[%s1 + $0x38] sm:$0xf]
  %v162 = vld [vmem:[%s1 + $0x3c] sm:$0xf]
  %v195 = vunpack.c.l.b16 %v83
  %v196 = vunpack.c.l.b16 %v84
  %v197 = vunpack.c.l.b16 %v85
  %v198 = vunpack.c.l.b16 %v86
  %v199 = vunpack.c.l.b16 %v87
  %v200 = vunpack.c.l.b16 %v88
  %v201 = vunpack.c.l.b16 %v89
  %v202 = vunpack.c.l.b16 %v90
  %v203 = vunpack.c.l.b16 %v91
  %v204 = vunpack.c.l.b16 %v92
  %v205 = vunpack.c.l.b16 %v93
  %v206 = vunpack.c.l.b16 %v94
  %v207 = vunpack.c.l.b16 %v95
  %v208 = vunpack.c.l.b16 %v96
  %v209 = vunpack.c.l.b16 %v97
  %v210 = vunpack.c.l.b16 %v98
  %v211 = vunpack.c.l.b16 %v99
  %v212 = vunpack.c.l.b16 %v100
  %v213 = vunpack.c.l.b16 %v101
  %v214 = vunpack.c.l.b16 %v102
  %v215 = vunpack.c.l.b16 %v103
  %v216 = vunpack.c.l.b16 %v104
  %v217 = vunpack.c.l.b16 %v105
  %v218 = vunpack.c.l.b16 %v106
  %v219 = vunpack.c.l.b16 %v107
  %v220 = vunpack.c.l.b16 %v108
  %v221 = vunpack.c.l.b16 %v109
  %v222 = vunpack.c.l.b16 %v110
  %v223 = vunpack.c.l.b16 %v111
  %v224 = vunpack.c.l.b16 %v112
  %v225 = vunpack.c.l.b16 %v113
  %v226 = vunpack.c.l.b16 %v114
  %v227 = vpack.c.b16 %v196, %v195
  %v228 = vpack.c.b16 %v198, %v197
  %v229 = vpack.c.b16 %v200, %v199
  %v230 = vpack.c.b16 %v202, %v201
  %v231 = vpack.c.b16 %v204, %v203
  %v232 = vpack.c.b16 %v206, %v205
  %v233 = vpack.c.b16 %v208, %v207
  %v234 = vpack.c.b16 %v210, %v209
  %v235 = vpack.c.b16 %v212, %v211
  %v236 = vpack.c.b16 %v214, %v213
  %v237 = vpack.c.b16 %v216, %v215
  %v238 = vpack.c.b16 %v218, %v217
  %v239 = vpack.c.b16 %v220, %v219
  %v240 = vpack.c.b16 %v222, %v221
  %v241 = vpack.c.b16 %v224, %v223
  %v242 = vpack.c.b16 %v226, %v225
  %v275 = vunpack.c.l.b16 %v147
  %v276 = vunpack.c.l.b16 %v148
  %v277 = vunpack.c.l.b16 %v149
  %v278 = vunpack.c.l.b16 %v150
  %v279 = vunpack.c.l.b16 %v151
  %v280 = vunpack.c.l.b16 %v152
  %v281 = vunpack.c.l.b16 %v153
  %v282 = vunpack.c.l.b16 %v154
  %v283 = vunpack.c.l.b16 %v155
  %v284 = vunpack.c.l.b16 %v156
  %v285 = vunpack.c.l.b16 %v157
  %v286 = vunpack.c.l.b16 %v158
  %v287 = vunpack.c.l.b16 %v159
  %v288 = vunpack.c.l.b16 %v160
  %v289 = vunpack.c.l.b16 %v161
  %v290 = vunpack.c.l.b16 %v162
  %v291 = vpack.c.b16 %v276, %v275
  %v292 = vpack.c.b16 %v278, %v277
  %v293 = vpack.c.b16 %v280, %v279
  %v294 = vpack.c.b16 %v282, %v281
  %v295 = vpack.c.b16 %v284, %v283
  %v296 = vpack.c.b16 %v286, %v285
  %v297 = vpack.c.b16 %v288, %v287
  %v298 = vpack.c.b16 %v290, %v289
  %307 = vmatprep.subr.bf16.mxu0 0
  %308 = vmatpush1.bf16.msra.mxu0 %v291
  %309 = vmatprep.subr.bf16.mxu0 0
  %310 = vmatpush1.bf16.msra.mxu0 %v292
  %311 = vmatprep.subr.bf16.mxu0 0
  %312 = vmatpush1.bf16.msra.mxu0 %v293
  %313 = vmatprep.subr.bf16.mxu0 0
  %314 = vmatpush1.bf16.msra.mxu0 %v294
  %315 = vmatprep.subr.bf16.mxu0 0
  %316 = vmatpush1.bf16.msra.mxu0 %v295
  %317 = vmatprep.subr.bf16.mxu0 0
  %318 = vmatpush1.bf16.msra.mxu0 %v296
  %319 = vmatprep.subr.bf16.mxu0 0
  %320 = vmatpush1.bf16.msra.mxu0 %v297
  %321 = vmatprep.subr.bf16.mxu0 0
  %322 = vmatpush1.bf16.msra.mxu0 %v298
  %323 = vmatprep.subr.bf16.mxu0 0
  %324 = vmatpush1.bf16.msra.mxu0 0
  %325 = vmatprep.subr.bf16.mxu0 0
  %326 = vmatpush1.bf16.msra.mxu0 0
  %327 = vmatprep.subr.bf16.mxu0 0
  %328 = vmatpush1.bf16.msra.mxu0 0
  %329 = vmatprep.subr.bf16.mxu0 0
  %330 = vmatpush1.bf16.msra.mxu0 0
  %331 = vmatprep.subr.bf16.mxu0 0
  %332 = vmatpush1.bf16.msra.mxu0 0
  %333 = vmatprep.subr.bf16.mxu0 0
  %334 = vmatpush1.bf16.msra.mxu0 0
  %335 = vmatprep.subr.bf16.mxu0 0
  %336 = vmatpush1.bf16.msra.mxu0 0
  %337 = vmatprep.subr.bf16.mxu0 0
  %338 = vmatpush1.bf16.msra.mxu0 0
  %339 = vmatprep.mubr.bf16.mxu0 0
  %340 = vmatmul.mubr.bf16.gmra.mrb[0].mxu0 %v227
  %v341 = vpop.f32.mrb[0].mxu0
  %v342 = vadd.f32 0.0, %v341
  %v343 = vpop.f32.mrb[0].mxu0
  %v344 = vpop.f32.mrb[0].mxu0
  %v345 = vadd.f32 0.0, %v344
  %v346 = vpop.f32.mrb[0].mxu0
  %347 = vmatprep.mubr.bf16.mxu0 0
  %348 = vmatmul.mubr.bf16.gmra.mrb[0].mxu0 %v228
  %v349 = vpop.f32.mrb[0].mxu0
  %v350 = vadd.f32 0.0, %v349
  %v351 = vpop.f32.mrb[0].mxu0
  %v352 = vpop.f32.mrb[0].mxu0
  %v353 = vadd.f32 0.0, %v352
  %v354 = vpop.f32.mrb[0].mxu0
  %355 = vmatprep.mubr.bf16.mxu0 0
  %356 = vmatmul.mubr.bf16.gmra.mrb[0].mxu0 %v229
  %v357 = vpop.f32.mrb[0].mxu0
  %v358 = vadd.f32 0.0, %v357
  %v359 = vpop.f32.mrb[0].mxu0
  %v360 = vpop.f32.mrb[0].mxu0
  %v361 = vadd.f32 0.0, %v360
  %v362 = vpop.f32.mrb[0].mxu0
  %363 = vmatprep.mubr.bf16.mxu0 0
  %364 = vmatmul.mubr.bf16.gmra.mrb[0].mxu0 %v230
  %v365 = vpop.f32.mrb[0].mxu0
  %v366 = vadd.f32 0.0, %v365
  %v367 = vpop.f32.mrb[0].mxu0
  %v368 = vpop.f32.mrb[0].mxu0
  %v369 = vadd.f32 0.0, %v368
  %v370 = vpop.f32.mrb[0].mxu0
  %371 = vmatprep.mubr.bf16.mxu0 0
  %372 = vmatmul.mubr.bf16.gmra.mrb[0].mxu0 %v231
  %v373 = vpop.f32.mrb[0].mxu0
  %v374 = vadd.f32 0.0, %v373
  %v375 = vpop.f32.mrb[0].mxu0
  %v376 = vpop.f32.mrb[0].mxu0
  %v377 = vadd.f32 0.0, %v376
  %v378 = vpop.f32.mrb[0].mxu0
  %379 = vmatprep.mubr.bf16.mxu0 0
  %380 = vmatmul.mubr.bf16.gmra.mrb[0].mxu0 %v232
  %v381 = vpop.f32.mrb[0].mxu0
  %v382 = vadd.f32 0.0, %v381
  %v383 = vpop.f32.mrb[0].mxu0
  %v384 = vpop.f32.mrb[0].mxu0
  %v385 = vadd.f32 0.0, %v384
  %v386 = vpop.f32.mrb[0].mxu0
  %387 = vmatprep.mubr.bf16.mxu0 0
  %388 = vmatmul.mubr.bf16.gmra.mrb[0].mxu0 %v233
  %v389 = vpop.f32.mrb[0].mxu0
  %v390 = vadd.f32 0.0, %v389
  %v391 = vpop.f32.mrb[0].mxu0
  %v392 = vpop.f32.mrb[0].mxu0
  %v393 = vadd.f32 0.0, %v392
  %v394 = vpop.f32.mrb[0].mxu0
  %395 = vmatprep.mubr.bf16.mxu0 0
  %396 = vmatmul.mubr.bf16.gmra.mrb[0].mxu0 %v234
  %v397 = vpop.f32.mrb[0].mxu0
  %v398 = vadd.f32 0.0, %v397
  %v399 = vpop.f32.mrb[0].mxu0
  %v400 = vpop.f32.mrb[0].mxu0
  %v401 = vadd.f32 0.0, %v400
  %v402 = vpop.f32.mrb[0].mxu0
  %403 = vmatprep.mubr.bf16.mxu0 0
  %404 = vmatmul.mubr.bf16.gmra.mrb[0].mxu0 %v235
  %v405 = vpop.f32.mrb[0].mxu0
  %v406 = vadd.f32 0.0, %v405
  %v407 = vpop.f32.mrb[0].mxu0
  %v408 = vpop.f32.mrb[0].mxu0
  %v409 = vadd.f32 0.0, %v408
  %v410 = vpop.f32.mrb[0].mxu0
  %411 = vmatprep.mubr.bf16.mxu0 0
  %412 = vmatmul.mubr.bf16.gmra.mrb[0].mxu0 %v236
  %v413 = vpop.f32.mrb[0].mxu0
  %v414 = vadd.f32 0.0, %v413
  %v415 = vpop.f32.mrb[0].mxu0
  %v416 = vpop.f32.mrb[0].mxu0
  %v417 = vadd.f32 0.0, %v416
  %v418 = vpop.f32.mrb[0].mxu0
  %419 = vmatprep.mubr.bf16.mxu0 0
  %420 = vmatmul.mubr.bf16.gmra.mrb[0].mxu0 %v237
  %v421 = vpop.f32.mrb[0].mxu0
  %v422 = vadd.f32 0.0, %v421
  %v423 = vpop.f32.mrb[0].mxu0
  %v424 = vpop.f32.mrb[0].mxu0
  %v425 = vadd.f32 0.0, %v424
  %v426 = vpop.f32.mrb[0].mxu0
  %427 = vmatprep.mubr.bf16.mxu0 0
  %428 = vmatmul.mubr.bf16.gmra.mrb[0].mxu0 %v238
  %v429 = vpop.f32.mrb[0].mxu0
  %v430 = vadd.f32 0.0, %v429
  %v431 = vpop.f32.mrb[0].mxu0
  %v432 = vpop.f32.mrb[0].mxu0
  %v433 = vadd.f32 0.0, %v432
  %v434 = vpop.f32.mrb[0].mxu0
  %435 = vmatprep.mubr.bf16.mxu0 0
  %436 = vmatmul.mubr.bf16.gmra.mrb[0].mxu0 %v239
  %v437 = vpop.f32.mrb[0].mxu0
  %v438 = vadd.f32 0.0, %v437
  %v439 = vpop.f32.mrb[0].mxu0
  %v440 = vpop.f32.mrb[0].mxu0
  %v441 = vadd.f32 0.0, %v440
  %v442 = vpop.f32.mrb[0].mxu0
  %443 = vmatprep.mubr.bf16.mxu0 0
  %444 = vmatmul.mubr.bf16.gmra.mrb[0].mxu0 %v240
  %v445 = vpop.f32.mrb[0].mxu0
  %v446 = vadd.f32 0.0, %v445
  %v447 = vpop.f32.mrb[0].mxu0
  %v448 = vpop.f32.mrb[0].mxu0
  %v449 = vadd.f32 0.0, %v448
  %v450 = vpop.f32.mrb[0].mxu0
  %451 = vmatprep.mubr.bf16.mxu0 0
  %452 = vmatmul.mubr.bf16.gmra.mrb[0].mxu0 %v241
  %v453 = vpop.f32.mrb[0].mxu0
  %v454 = vadd.f32 0.0, %v453
  %v455 = vpop.f32.mrb[0].mxu0
  %v456 = vpop.f32.mrb[0].mxu0
  %v457 = vadd.f32 0.0, %v456
  %v458 = vpop.f32.mrb[0].mxu0
  %459 = vmatprep.mubr.bf16.mxu0 0
  %460 = vmatmul.mubr.bf16.gmra.mrb[0].mxu0 %v242
  %v461 = vpop.f32.mrb[0].mxu0
  %v462 = vadd.f32 0.0, %v461
  %v463 = vpop.f32.mrb[0].mxu0
  %v464 = vpop.f32.mrb[0].mxu0
  %v465 = vadd.f32 0.0, %v464
  %v466 = vpop.f32.mrb[0].mxu0
  %467 = vdwg.mxu0
  %v468 = vadd.f32 %v115, %v342
  %v469 = vadd.f32 %v116, %v345
  %v470 = vadd.f32 %v117, %v350
  %v471 = vadd.f32 %v118, %v353
  %v472 = vadd.f32 %v119, %v358
  %v473 = vadd.f32 %v120, %v361
  %v474 = vadd.f32 %v121, %v366
  %v475 = vadd.f32 %v122, %v369
  %v476 = vadd.f32 %v123, %v374
  %v477 = vadd.f32 %v124, %v377
  %v478 = vadd.f32 %v125, %v382
  %v479 = vadd.f32 %v126, %v385
  %v480 = vadd.f32 %v127, %v390
  %v481 = vadd.f32 %v128, %v393
  %v482 = vadd.f32 %v129, %v398
  %v483 = vadd.f32 %v130, %v401
  %v484 = vadd.f32 %v131, %v406
  %v485 = vadd.f32 %v132, %v409
  %v486 = vadd.f32 %v133, %v414
  %v487 = vadd.f32 %v134, %v417
  %v488 = vadd.f32 %v135, %v422
  %v489 = vadd.f32 %v136, %v425
  %v490 = vadd.f32 %v137, %v430
  %v491 = vadd.f32 %v138, %v433
  %v492 = vadd.f32 %v139, %v438
  %v493 = vadd.f32 %v140, %v441
  %v494 = vadd.f32 %v141, %v446
  %v495 = vadd.f32 %v142, %v449
  %v496 = vadd.f32 %v143, %v454
  %v497 = vadd.f32 %v144, %v457
  %v498 = vadd.f32 %v145, %v462
  %v499 = vadd.f32 %v146, %v465
  %500 = vst [vmem:[#allocation2] sm:$0xff] %v468
  %501 = vst [vmem:[#allocation2 + $0x8] sm:$0xff] %v469
  %502 = vst [vmem:[#allocation2 + $0x10] sm:$0xff] %v470
  %503 = vst [vmem:[#allocation2 + $0x18] sm:$0xff] %v471
  %504 = vst [vmem:[#allocation2 + $0x20] sm:$0xff] %v472
  %505 = vst [vmem:[#allocation2 + $0x28] sm:$0xff] %v473
  %506 = vst [vmem:[#allocation2 + $0x30] sm:$0xff] %v474
  %507 = vst [vmem:[#allocation2 + $0x38] sm:$0xff] %v475
  %508 = vst [vmem:[#allocation2 + $0x40] sm:$0xff] %v476
  %509 = vst [vmem:[#allocation2 + $0x48] sm:$0xff] %v477
  %510 = vst [vmem:[#allocation2 + $0x50] sm:$0xff] %v478
  %511 = vst [vmem:[#allocation2 + $0x58] sm:$0xff] %v479
  %512 = vst [vmem:[#allocation2 + $0x60] sm:$0xff] %v480
  %513 = vst [vmem:[#allocation2 + $0x68] sm:$0xff] %v481
  %514 = vst [vmem:[#allocation2 + $0x70] sm:$0xff] %v482
  %515 = vst [vmem:[#allocation2 + $0x78] sm:$0xff] %v483
  %516 = vst [vmem:[#allocation2 + $0x80] sm:$0xff] %v484
  %517 = vst [vmem:[#allocation2 + $0x88] sm:$0xff] %v485
  %518 = vst [vmem:[#allocation2 + $0x90] sm:$0xff] %v486
  %519 = vst [vmem:[#allocation2 + $0x98] sm:$0xff] %v487
  %520 = vst [vmem:[#allocation2 + $0xa0] sm:$0xff] %v488
  %521 = vst [vmem:[#allocation2 + $0xa8] sm:$0xff] %v489
  %522 = vst [vmem:[#allocation2 + $0xb0] sm:$0xff] %v490
  %523 = vst [vmem:[#allocation2 + $0xb8] sm:$0xff] %v491
  %524 = vst [vmem:[#allocation2 + $0xc0] sm:$0xff] %v492
  %525 = vst [vmem:[#allocation2 + $0xc8] sm:$0xff] %v493
  %526 = vst [vmem:[#allocation2 + $0xd0] sm:$0xff] %v494
  %527 = vst [vmem:[#allocation2 + $0xd8] sm:$0xff] %v495
  %528 = vst [vmem:[#allocation2 + $0xe0] sm:$0xff] %v496
  %529 = vst [vmem:[#allocation2 + $0xe8] sm:$0xff] %v497
  %530 = vst [vmem:[#allocation2 + $0xf0] sm:$0xff] %v498
  %531 = vst [vmem:[#allocation2 + $0xf8] sm:$0xff] %v499
  // Predicated region
  $region18: #{_lambda_.58} parent=0 // pred_check
    %p532 = pneg %p15
  $region19: #{_lambda_.58} parent=0 // pred_check_branch
    %534 = sbr.rel (%p532) target = $region21
  $region20: #{_lambda_.58} parent=0 // pred_region
    %v535 = vld [vmem:[#allocation2] sm:$0xff]
    %v536 = vld [vmem:[#allocation2 + $0x8] sm:$0xff]
    %v537 = vld [vmem:[#allocation2 + $0x10] sm:$0xff]
    %v538 = vld [vmem:[#allocation2 + $0x18] sm:$0xff]
    %v539 = vld [vmem:[#allocation2 + $0x20] sm:$0xff]
    %v540 = vld [vmem:[#allocation2 + $0x28] sm:$0xff]
    %v541 = vld [vmem:[#allocation2 + $0x30] sm:$0xff]
    %v542 = vld [vmem:[#allocation2 + $0x38] sm:$0xff]
    %v543 = vld [vmem:[#allocation2 + $0x40] sm:$0xff]
    %v544 = vld [vmem:[#allocation2 + $0x48] sm:$0xff]
    %v545 = vld [vmem:[#allocation2 + $0x50] sm:$0xff]
    %v546 = vld [vmem:[#allocation2 + $0x58] sm:$0xff]
    %v547 = vld [vmem:[#allocation2 + $0x60] sm:$0xff]
    %v548 = vld [vmem:[#allocation2 + $0x68] sm:$0xff]
    %v549 = vld [vmem:[#allocation2 + $0x70] sm:$0xff]
    %v550 = vld [vmem:[#allocation2 + $0x78] sm:$0xff]
    %v551 = vld [vmem:[#allocation2 + $0x80] sm:$0xff]
    %v552 = vld [vmem:[#allocation2 + $0x88] sm:$0xff]
    %v553 = vld [vmem:[#allocation2 + $0x90] sm:$0xff]
    %v554 = vld [vmem:[#allocation2 + $0x98] sm:$0xff]
    %v555 = vld [vmem:[#allocation2 + $0xa0] sm:$0xff]
    %v556 = vld [vmem:[#allocation2 + $0xa8] sm:$0xff]
    %v557 = vld [vmem:[#allocation2 + $0xb0] sm:$0xff]
    %v558 = vld [vmem:[#allocation2 + $0xb8] sm:$0xff]
    %v559 = vld [vmem:[#allocation2 + $0xc0] sm:$0xff]
    %v560 = vld [vmem:[#allocation2 + $0xc8] sm:$0xff]
    %v561 = vld [vmem:[#allocation2 + $0xd0] sm:$0xff]
    %v562 = vld [vmem:[#allocation2 + $0xd8] sm:$0xff]
    %v563 = vld [vmem:[#allocation2 + $0xe0] sm:$0xff]
    %v564 = vld [vmem:[#allocation2 + $0xe8] sm:$0xff]
    %v565 = vld [vmem:[#allocation2 + $0xf0] sm:$0xff]
    %v566 = vld [vmem:[#allocation2 + $0xf8] sm:$0xff]
    %v567 = vld [vmem:[%s2] sm:$0x1]
    %v569 = vlaneseq
    %v570 = vshrl.u32 %v569, 7
    %v571 = vsub.s32 0, %v570
    %v572 = vrot.slane %v567, %v571
    %v574 = vadd.f32 %v535, %v572
    %v575 = vadd.f32 %v536, %v572
    %v576 = vadd.f32 %v537, %v572
    %v577 = vadd.f32 %v538, %v572
    %v578 = vadd.f32 %v539, %v572
    %v579 = vadd.f32 %v540, %v572
    %v580 = vadd.f32 %v541, %v572
    %v581 = vadd.f32 %v542, %v572
    %v582 = vadd.f32 %v543, %v572
    %v583 = vadd.f32 %v544, %v572
    %v584 = vadd.f32 %v545, %v572
    %v585 = vadd.f32 %v546, %v572
    %v586 = vadd.f32 %v547, %v572
    %v587 = vadd.f32 %v548, %v572
    %v588 = vadd.f32 %v549, %v572
    %v589 = vadd.f32 %v550, %v572
    %v590 = vadd.f32 %v551, %v572
    %v591 = vadd.f32 %v552, %v572
    %v592 = vadd.f32 %v553, %v572
    %v593 = vadd.f32 %v554, %v572
    %v594 = vadd.f32 %v555, %v572
    %v595 = vadd.f32 %v556, %v572
    %v596 = vadd.f32 %v557, %v572
    %v597 = vadd.f32 %v558, %v572
    %v598 = vadd.f32 %v559, %v572
    %v599 = vadd.f32 %v560, %v572
    %v600 = vadd.f32 %v561, %v572
    %v601 = vadd.f32 %v562, %v572
    %v602 = vadd.f32 %v563, %v572
    %v603 = vadd.f32 %v564, %v572
    %v604 = vadd.f32 %v565, %v572
    %v605 = vadd.f32 %v566, %v572
    %606 = vst [vmem:[%s3] sm:$0xff] %v574
    %607 = vst [vmem:[%s3 + $0x8] sm:$0xff] %v575
    %608 = vst [vmem:[%s3 + $0x10] sm:$0xff] %v576
    %609 = vst [vmem:[%s3 + $0x18] sm:$0xff] %v577
    %610 = vst [vmem:[%s3 + $0x20] sm:$0xff] %v578
    %611 = vst [vmem:[%s3 + $0x28] sm:$0xff] %v579
    %612 = vst [vmem:[%s3 + $0x30] sm:$0xff] %v580
    %613 = vst [vmem:[%s3 + $0x38] sm:$0xff] %v581
    %614 = vst [vmem:[%s3 + $0x40] sm:$0xff] %v582
    %615 = vst [vmem:[%s3 + $0x48] sm:$0xff] %v583
    %616 = vst [vmem:[%s3 + $0x50] sm:$0xff] %v584
    %617 = vst [vmem:[%s3 + $0x58] sm:$0xff] %v585
    %618 = vst [vmem:[%s3 + $0x60] sm:$0xff] %v586
    %619 = vst [vmem:[%s3 + $0x68] sm:$0xff] %v587
    %620 = vst [vmem:[%s3 + $0x70] sm:$0xff] %v588
    %621 = vst [vmem:[%s3 + $0x78] sm:$0xff] %v589
    %622 = vst [vmem:[%s3 + $0x80] sm:$0xff] %v590
    %623 = vst [vmem:[%s3 + $0x88] sm:$0xff] %v591
    %624 = vst [vmem:[%s3 + $0x90] sm:$0xff] %v592
    %625 = vst [vmem:[%s3 + $0x98] sm:$0xff] %v593
    %626 = vst [vmem:[%s3 + $0xa0] sm:$0xff] %v594
    %627 = vst [vmem:[%s3 + $0xa8] sm:$0xff] %v595
    %628 = vst [vmem:[%s3 + $0xb0] sm:$0xff] %v596
    %629 = vst [vmem:[%s3 + $0xb8] sm:$0xff] %v597
    %630 = vst [vmem:[%s3 + $0xc0] sm:$0xff] %v598
    %631 = vst [vmem:[%s3 + $0xc8] sm:$0xff] %v599
    %632 = vst [vmem:[%s3 + $0xd0] sm:$0xff] %v600
    %633 = vst [vmem:[%s3 + $0xd8] sm:$0xff] %v601
    %634 = vst [vmem:[%s3 + $0xe0] sm:$0xff] %v602
    %635 = vst [vmem:[%s3 + $0xe8] sm:$0xff] %v603
    %636 = vst [vmem:[%s3 + $0xf0] sm:$0xff] %v604
    %637 = vst [vmem:[%s3 + $0xf8] sm:$0xff] %v605
  $region21: #{_lambda_.58} parent=0 // pred_fallthru
    _
  // Predicated region
  $region22: #{_lambda_.58} parent=0 // pred_check
    _
  $region23: #{_lambda_.58} parent=0 // pred_check_branch
    %639 = sbr.rel (0) target = $region25
  $region24: #{_lambda_.58} parent=0 // pred_region
    _
  $region25: #{_lambda_.58} parent=0 // pred_fallthru
    _
  // Predicated region
  $region26: #{_lambda_.58} parent=0 // pred_check
    _
  $region27: #{_lambda_.58} parent=0 // pred_check_branch
    %641 = sbr.rel (0) target = $region29
  $region28: #{_lambda_.58} parent=0 // pred_region
    _
  $region29: #{_lambda_.58} parent=0 // pred_fallthru
    _

// kernel: _lambda_.66
$region0: #{_lambda_.66}
  #allocation0 [shape = 'u32[]', space=smem, size = 0x4, offset = 0x4, fixed_abs, tag = 'smem constant byte address 0x4 - core index']
  #allocation1 [shape = 'u32[144,128]{1,0:T(1,128)}', space=vmem, size = 0x12000, scoped, tag = 'internal scratch']
  %s0 = inlined_call_operand.vmem [shape: f32[8,128], index: 0, kind: input, shape index: {}]
  %s1 = inlined_call_operand.vmem [shape: f32[8,1], index: 1, kind: input, shape index: {}]
  %s2 = inlined_call_operand.vmem [shape: f32[8,1], index: 2, kind: input, shape index: {}]
  %s3 = inlined_call_operand.vmem [shape: f32[8,128], index: 3, kind: output, shape index: {}]
  %s4 = sld [smem:[#allocation0]]
  $region22: #{_lambda_.66} parent=0
    _
  %s6 = ssub.s32 1, %s4
  %s7 = scalar_select 0, %s6, %s4
  // Predicated region
  $region2: #{_lambda_.66} parent=0 // pred_check
    _
  $region3: #{_lambda_.66} parent=0 // pred_check_branch
    %9 = sbr.rel (0) target = $region5
  $region4: #{_lambda_.66} parent=0 // pred_region
    _
  $region5: #{_lambda_.66} parent=0 // pred_fallthru
    _
  // Predicated region
  $region6: #{_lambda_.66} parent=0 // pred_check
    _
  $region7: #{_lambda_.66} parent=0 // pred_check_branch
    %11 = sbr.rel (0) target = $region9
  $region8: #{_lambda_.66} parent=0 // pred_region
    _
  $region9: #{_lambda_.66} parent=0 // pred_fallthru
    _
  // Predicated region
  $region10: #{_lambda_.66} parent=0 // pred_check
    _
  $region11: #{_lambda_.66} parent=0 // pred_check_branch
    %13 = sbr.rel (0) target = $region13
  $region12: #{_lambda_.66} parent=0 // pred_region
    _
  $region13: #{_lambda_.66} parent=0 // pred_fallthru
    _
  %v14 = vld [vmem:[%s0] sm:$0xff]
  %v15 = vld [vmem:[%s1] sm:$0xff]
  %17 = vset.pattern.permute.xlu0 0
  %18 = vperm.xlu0 %17, %v15
  %v19 = vpop.permute.xlu0 %18
  %v21 = vsub.f32 %v14, %v19
  %v22 = vld [vmem:[%s2] sm:$0xff]
  %24 = vset.pattern.permute.xlu0 0
  %25 = vperm.xlu0 %24, %v22
  %v26 = vpop.permute.xlu0 %25
  %v28 = vmul.f32 %v21, %v26
  %29 = vst [vmem:[%s3] sm:$0xff] %v28
  // Predicated region
  $region14: #{_lambda_.66} parent=0 // pred_check
    _
  $region15: #{_lambda_.66} parent=0 // pred_check_branch
    %31 = sbr.rel (0) target = $region17
  $region16: #{_lambda_.66} parent=0 // pred_region
    _
  $region17: #{_lambda_.66} parent=0 // pred_fallthru
    _
  // Predicated region
  $region18: #{_lambda_.66} parent=0 // pred_check
    _
  $region19: #{_lambda_.66} parent=0 // pred_check_branch
    %33 = sbr.rel (0) target = $region21
  $region20: #{_lambda_.66} parent=0 // pred_region
    _
  $region21: #{_lambda_.66} parent=0 // pred_fallthru
    _

// kernel: _lambda_.65
$region0: #{_lambda_.65}
  #allocation0 [shape = 'u32[]', space=smem, size = 0x4, offset = 0x4, fixed_abs, tag = 'smem constant byte address 0x4 - core index']
  #allocation1 [shape = 'u32[144,128]{1,0:T(1,128)}', space=vmem, size = 0x12000, scoped, tag = 'internal scratch']
  #allocation2 [shape = 'f32[8,1]{1,0:T(8,128)}', space=vmem, size = 0x1000, scoped, tag = 'scratch operand']
  #allocation3 [shape = 'f32[8,1]{1,0:T(8,128)}', space=vmem, size = 0x1000, scoped, tag = 'scratch operand']
  %s0 = inlined_call_operand.vmem [shape: f32[8,128], index: 0, kind: input, shape index: {}]
  %s1 = inlined_call_operand.vmem [shape: f32[8,1], index: 1, kind: output, shape index: {0}]
  %s2 = inlined_call_operand.vmem [shape: f32[8,1], index: 2, kind: output, shape index: {1}]
  %3 = xla_tuple %s1, %s2
  %s4 = sld [smem:[#allocation0]]
  $region30: #{_lambda_.65} parent=0
    _
  %s6 = ssub.s32 1, %s4
  %s7 = scalar_select 0, %s6, %s4
  // Predicated region
  $region2: #{_lambda_.65} parent=0 // pred_check
    _
  $region3: #{_lambda_.65} parent=0 // pred_check_branch
    %9 = sbr.rel (0) target = $region5
  $region4: #{_lambda_.65} parent=0 // pred_region
    _
  $region5: #{_lambda_.65} parent=0 // pred_fallthru
    _
  %p10 = scmp.eq.s32.totalorder 0, 0
  // Predicated region
  $region6: #{_lambda_.65} parent=0 // pred_check
    %p11 = pneg %p10
  $region7: #{_lambda_.65} parent=0 // pred_check_branch
    %13 = sbr.rel (%p11) target = $region9
  $region8: #{_lambda_.65} parent=0 // pred_region
    %vm14 = vcmask 7168
    %15 = vst.msk [vmem:[#allocation2] sm:$0xff] %vm14, 0.0
    %16 = vst.msk [vmem:[#allocation3] sm:$0xff] %vm14, 0.0
  $region9: #{_lambda_.65} parent=0 // pred_fallthru
    _
  %v17 = vld [vmem:[%s0] sm:$0xff]
  %v18 = vld [vmem:[#allocation2] sm:$0xff]
  %19 = vadd.xlane.f32.xlu0 %v17
  %v20 = vpop.xlane.xlu0 %19
  %v21 = vadd.f32 %v18, %v20
  %vm22 = vcmask 7168
  %23 = vst.msk [vmem:[#allocation2] sm:$0xff] %vm22, %v21
  %v24 = vld [vmem:[#allocation3] sm:$0xff]
  %v25 = vmul.f32 %v17, %v17
  %26 = vadd.xlane.f32.xlu0 %v25
  %v27 = vpop.xlane.xlu0 %26
  %v28 = vadd.f32 %v24, %v27
  %29 = vst.msk [vmem:[#allocation3] sm:$0xff] %vm22, %v28
  // Predicated region
  $region10: #{_lambda_.65} parent=0 // pred_check
    %p30 = pneg %p10
  $region11: #{_lambda_.65} parent=0 // pred_check_branch
    %32 = sbr.rel (%p30) target = $region13
  $region12: #{_lambda_.65} parent=0 // pred_region
    %v33 = vld [vmem:[#allocation2] sm:$0xff]
    %v34 = vrcp.pop 64.0
    %v35 = vmul.f32 %v33, %v34
    %v36 = vld [vmem:[#allocation3] sm:$0xff]
    %v37 = vmul.f32 %v36, %v34
    %v38 = vmul.f32 %v35, %v35
    %v39 = vsub.f32 %v37, %v38
    %40 = vst.msk [vmem:[%s1] sm:$0xff] %vm22, %v35
    %v41 = vmax.f32 %v39, 0.0
    %v42 = vadd.f32 %v41, 1e-05
    %v43 = vrsqrt.pop %v42
    %44 = vst.msk [vmem:[%s2] sm:$0xff] %vm22, %v43
  $region13: #{_lambda_.65} parent=0 // pred_fallthru
    _
  // Predicated region
  $region14: #{_lambda_.65} parent=0 // pred_check
    _
  $region15: #{_lambda_.65} parent=0 // pred_check_branch
    %46 = sbr.rel (0) target = $region17
  $region16: #{_lambda_.65} parent=0 // pred_region
    _
  $region17: #{_lambda_.65} parent=0 // pred_fallthru
    _
  // Predicated region
  $region18: #{_lambda_.65} parent=0 // pred_check
    _
  $region19: #{_lambda_.65} parent=0 // pred_check_branch
    %48 = sbr.rel (0) target = $region21
  $region20: #{_lambda_.65} parent=0 // pred_region
    _
  $region21: #{_lambda_.65} parent=0 // pred_fallthru
    _
  // Predicated region
  $region22: #{_lambda_.65} parent=0 // pred_check
    _
  $region23: #{_lambda_.65} parent=0 // pred_check_branch
    %50 = sbr.rel (0) target = $region25
  $region24: #{_lambda_.65} parent=0 // pred_region
    _
  $region25: #{_lambda_.65} parent=0 // pred_fallthru
    _
  // Predicated region
  $region26: #{_lambda_.65} parent=0 // pred_check
    _
  $region27: #{_lambda_.65} parent=0 // pred_check_branch
    %52 = sbr.rel (0) target = $region29
  $region28: #{_lambda_.65} parent=0 // pred_region
    _
  $region29: #{_lambda_.65} parent=0 // pred_fallthru
    _

// kernel: _lambda_.71
$region0: #{_lambda_.71}
  #allocation0 [shape = 'u32[]', space=smem, size = 0x4, offset = 0x4, fixed_abs, tag = 'smem constant byte address 0x4 - core index']
  #allocation1 [shape = 'u32[144,128]{1,0:T(1,128)}', space=vmem, size = 0x12000, scoped, tag = 'internal scratch']
  %s0 = inlined_call_operand.vmem [shape: f32[1,1,32,32], index: 0, kind: input, shape index: {}]
  %s1 = inlined_call_operand.vmem [shape: f32[1,1,32,32], index: 1, kind: input, shape index: {}]
  %s2 = inlined_call_operand.vmem [shape: f32[1,1,32,32], index: 2, kind: input, shape index: {}]
  %s3 = inlined_call_operand.vmem [shape: f32[1,1,32,32], index: 3, kind: input, shape index: {}]
  %s4 = inlined_call_operand.vmem [shape: f32[1,1,32,32], index: 4, kind: output, shape index: {0}]
  %s5 = inlined_call_operand.vmem [shape: f32[1,1,32,32], index: 5, kind: output, shape index: {1}]
  %6 = xla_tuple %s4, %s5
  %s7 = sld [smem:[#allocation0]]
  $region34: #{_lambda_.71} parent=0
    _
  %s9 = ssub.s32 1, %s7
  %s10 = scalar_select 0, %s9, %s7
  // Predicated region
  $region2: #{_lambda_.71} parent=0 // pred_check
    _
  $region3: #{_lambda_.71} parent=0 // pred_check_branch
    %12 = sbr.rel (0) target = $region5
  $region4: #{_lambda_.71} parent=0 // pred_region
    _
  $region5: #{_lambda_.71} parent=0 // pred_fallthru
    _
  // Predicated region
  $region6: #{_lambda_.71} parent=0 // pred_check
    _
  $region7: #{_lambda_.71} parent=0 // pred_check_branch
    %14 = sbr.rel (0) target = $region9
  $region8: #{_lambda_.71} parent=0 // pred_region
    _
  $region9: #{_lambda_.71} parent=0 // pred_fallthru
    _
  // Predicated region
  $region10: #{_lambda_.71} parent=0 // pred_check
    _
  $region11: #{_lambda_.71} parent=0 // pred_check_branch
    %16 = sbr.rel (0) target = $region13
  $region12: #{_lambda_.71} parent=0 // pred_region
    _
  $region13: #{_lambda_.71} parent=0 // pred_fallthru
    _
  // Predicated region
  $region14: #{_lambda_.71} parent=0 // pred_check
    _
  $region15: #{_lambda_.71} parent=0 // pred_check_branch
    %18 = sbr.rel (0) target = $region17
  $region16: #{_lambda_.71} parent=0 // pred_region
    _
  $region17: #{_lambda_.71} parent=0 // pred_fallthru
    _
  %v19 = vld [vmem:[%s0] sm:$0xff]
  %v20 = vld [vmem:[%s0 + $0x8] sm:$0xff]
  %v21 = vld [vmem:[%s0 + $0x10] sm:$0xff]
  %v22 = vld [vmem:[%s0 + $0x18] sm:$0xff]
  %v23 = vld [vmem:[%s1] sm:$0xff]
  %v24 = vld [vmem:[%s1 + $0x8] sm:$0xff]
  %v25 = vld [vmem:[%s1 + $0x10] sm:$0xff]
  %v26 = vld [vmem:[%s1 + $0x18] sm:$0xff]
  %v27 = vld [vmem:[%s2] sm:$0xff]
  %v28 = vld [vmem:[%s2 + $0x8] sm:$0xff]
  %v29 = vld [vmem:[%s2 + $0x10] sm:$0xff]
  %v30 = vld [vmem:[%s2 + $0x18] sm:$0xff]
  %v31 = vld [vmem:[%s3] sm:$0xff]
  %v32 = vld [vmem:[%s3 + $0x8] sm:$0xff]
  %v33 = vld [vmem:[%s3 + $0x10] sm:$0xff]
  %v34 = vld [vmem:[%s3 + $0x18] sm:$0xff]
  %v35 = vmul.f32 %v19, %v27
  %v36 = vmul.f32 %v20, %v28
  %v37 = vmul.f32 %v21, %v29
  %v38 = vmul.f32 %v22, %v30
  %v39 = vmul.f32 %v23, %v31
  %v40 = vmul.f32 %v24, %v32
  %v41 = vmul.f32 %v25, %v33
  %v42 = vmul.f32 %v26, %v34
  %v43 = vsub.f32 %v35, %v39
  %v44 = vsub.f32 %v36, %v40
  %v45 = vsub.f32 %v37, %v41
  %v46 = vsub.f32 %v38, %v42
  %vm47 = vcmask 261120
  %48 = vst.msk [vmem:[%s4] sm:$0xff] %vm47, %v43
  %49 = vst.msk [vmem:[%s4 + $0x8] sm:$0xff] %vm47, %v44
  %50 = vst.msk [vmem:[%s4 + $0x10] sm:$0xff] %vm47, %v45
  %51 = vst.msk [vmem:[%s4 + $0x18] sm:$0xff] %vm47, %v46
  %v52 = vmul.f32 %v19, %v31
  %v53 = vmul.f32 %v20, %v32
  %v54 = vmul.f32 %v21, %v33
  %v55 = vmul.f32 %v22, %v34
  %v56 = vmul.f32 %v23, %v27
  %v57 = vmul.f32 %v24, %v28
  %v58 = vmul.f32 %v25, %v29
  %v59 = vmul.f32 %v26, %v30
  %v60 = vadd.f32 %v52, %v56
  %v61 = vadd.f32 %v53, %v57
  %v62 = vadd.f32 %v54, %v58
  %v63 = vadd.f32 %v55, %v59
  %64 = vst.msk [vmem:[%s5] sm:$0xff] %vm47, %v60
  %65 = vst.msk [vmem:[%s5 + $0x8] sm:$0xff] %vm47, %v61
  %66 = vst.msk [vmem:[%s5 + $0x10] sm:$0xff] %vm47, %v62
  %67 = vst.msk [vmem:[%s5 + $0x18] sm:$0xff] %vm47, %v63
  // Predicated region
  $region18: #{_lambda_.71} parent=0 // pred_check
    _
  $region19: #{_lambda_.71} parent=0 // pred_check_branch
    %69 = sbr.rel (0) target = $region21
  $region20: #{_lambda_.71} parent=0 // pred_region
    _
  $region21: #{_lambda_.71} parent=0 // pred_fallthru
    _
  // Predicated region
  $region22: #{_lambda_.71} parent=0 // pred_check
    _
  $region23: #{_lambda_.71} parent=0 // pred_check_branch
    %71 = sbr.rel (0) target = $region25
  $region24: #{_lambda_.71} parent=0 // pred_region
    _
  $region25: #{_lambda_.71} parent=0 // pred_fallthru
    _
  // Predicated region
  $region26: #{_lambda_.71} parent=0 // pred_check
    _
  $region27: #{_lambda_.71} parent=0 // pred_check_branch
    %73 = sbr.rel (0) target = $region29
  $region28: #{_lambda_.71} parent=0 // pred_region
    _
  $region29: #{_lambda_.71} parent=0 // pred_fallthru
    _
  // Predicated region
  $region30: #{_lambda_.71} parent=0 // pred_check
    _
  $region31: #{_lambda_.71} parent=0 // pred_check_branch
    %75 = sbr.rel (0) target = $region33
  $region32: #{_lambda_.71} parent=0 // pred_region
    _
  $region33: #{_lambda_.71} parent=0 // pred_fallthru
    _

// kernel: _lambda_.72
$region0: #{_lambda_.72}
  #allocation0 [shape = 'u32[]', space=smem, size = 0x4, offset = 0x4, fixed_abs, tag = 'smem constant byte address 0x4 - core index']
  #allocation1 [shape = 'u32[144,128]{1,0:T(1,128)}', space=vmem, size = 0x12000, scoped, tag = 'internal scratch']
  %s0 = inlined_call_operand.vmem [shape: f32[1,1,32,32], index: 0, kind: input, shape index: {}]
  %s1 = inlined_call_operand.vmem [shape: f32[1,1,32,32], index: 1, kind: input, shape index: {}]
  %s2 = inlined_call_operand.vmem [shape: f32[1,2,32,32], index: 2, kind: input, shape index: {}]
  %s3 = inlined_call_operand.vmem [shape: f32[1,2,32,32], index: 3, kind: input, shape index: {}]
  %s4 = inlined_call_operand.vmem [shape: f32[1,2,32,32], index: 4, kind: output, shape index: {0}]
  %s5 = inlined_call_operand.vmem [shape: f32[1,2,32,32], index: 5, kind: output, shape index: {1}]
  %6 = xla_tuple %s4, %s5
  %s7 = sld [smem:[#allocation0]]
  $region57: #{_lambda_.72} parent=0
    _
  %s9 = ssub.s32 1, %s7
  %s10 = scalar_select 0, %s9, %s7
  loop: start=0, step=1, limit=4
  $region2: #{_lambda_.72} parent=0 // loop_pre_header
    _
  $region3: #{_lambda_.72} parent=0 // loop_header
    %s12 = sphi 0, %s16
    %p13 = scmp.ge.s32.totalorder %s12, 4
    %s19 = sphi 0, %s38
    %s20 = sphi 0, %s34
    %s21 = sphi 0, %s30
    %s22 = sphi 0, %s19
    %s23 = sphi 0, %s20
    %s24 = sphi 0, %s21
    %s25 = sphi 0, %s22
    %s26 = sphi 0, %s23
    %s27 = sphi 0, %s24
    %s41 = sphi 0, %s43
    %s44 = sphi 0, %s41
    %s45 = sphi 0, %s44
    %s61 = sphi 0, %s45
    %s67 = sphi 0, %s69
    %s70 = sphi 0, %s67
    %s71 = sphi 0, %s70
    %s87 = sphi 0, %s71
    %s95 = sphi 0, %s97
    %s98 = sphi 0, %s95
    %s99 = sphi 0, %s98
    %s115 = sphi 0, %s99
    %s123 = sphi 0, %s125
    %s126 = sphi 0, %s123
    %s127 = sphi 0, %s126
    %s143 = sphi 0, %s127
    %s153 = sphi 0, %s155
    %s156 = sphi 0, %s153
    %s157 = sphi 0, %s156
    %s173 = sphi 0, %s157
    %s183 = sphi 0, %s185
    %s186 = sphi 0, %s183
    %s187 = sphi 0, %s186
    %s203 = sphi 0, %s187
  $region4: #{_lambda_.72} parent=0 // loop_header_branch
    %15 = sbr.rel (%p13) target = $region8
  $region5: #{_lambda_.72} parent=0 // loop_body
    %s17 = ssub.s32 %s12, 1
    %s18 = ssub.s32 %s12, 2
    %s28 = sadd.s32 1, %s21
    %p29 = scmp.ge.s32.totalorder %s28, 1
    %s30 = scalar_select %p29, 0, %s28
    %s31 = sadd.s32 1, %s20
    %s32 = scalar_select %p29, %s31, %s20
    %p33 = scmp.ge.s32.totalorder %s32, 2
    %s34 = scalar_select %p33, 0, %s32
    %s35 = sadd.s32 1, %s19
    %s36 = scalar_select %p33, %s35, %s19
    %p37 = scmp.ge.s32.totalorder %s36, 1
    %s38 = scalar_select %p37, 0, %s36
    %s39 = ssub.s32 %s21, %s30
    %p40 = scmp.eq.s32.totalorder %s39, 0
    %s42 = sadd.s32 %s41, 1
    %s43 = scalar_select %p40, %s41, %s42
    %p46 = pneg %p40
    %p47 = scmp.eq.s32.totalorder %s12, 1
    %p48 = por %p46, %p47
    %p49 = scmp.ne.s32.totalorder %s41, %s44
    %p50 = scmp.eq.s32.totalorder %s12, 0
    %p51 = por %p49, %p50
    %p52 = scmp.ne.s32.totalorder %s41, %s44
    %p53 = scmp.eq.s32.totalorder %s17, 1
    %p54 = por %p52, %p53
    %p55 = scmp.ne.s32.totalorder %s44, %s45
    %p56 = scmp.eq.s32.totalorder %s17, 0
    %p57 = por %p55, %p56
    %p58 = scmp.ne.s32.totalorder %s44, %s45
    %p59 = scmp.eq.s32.totalorder %s18, 1
    %p60 = por %p58, %p59
    %p62 = scmp.ne.s32.totalorder %s45, %s61
    %p63 = scmp.eq.s32.totalorder %s18, 0
    %p64 = por %p62, %p63
    %s65 = ssub.s32 %s21, %s30
    %p66 = scmp.eq.s32.totalorder %s65, 0
    %s68 = sadd.s32 %s67, 1
    %s69 = scalar_select %p66, %s67, %s68
    %p72 = pneg %p66
    %p73 = scmp.eq.s32.totalorder %s12, 1
    %p74 = por %p72, %p73
    %p75 = scmp.ne.s32.totalorder %s67, %s70
    %p76 = scmp.eq.s32.totalorder %s12, 0
    %p77 = por %p75, %p76
    %p78 = scmp.ne.s32.totalorder %s67, %s70
    %p79 = scmp.eq.s32.totalorder %s17, 1
    %p80 = por %p78, %p79
    %p81 = scmp.ne.s32.totalorder %s70, %s71
    %p82 = scmp.eq.s32.totalorder %s17, 0
    %p83 = por %p81, %p82
    %p84 = scmp.ne.s32.totalorder %s70, %s71
    %p85 = scmp.eq.s32.totalorder %s18, 1
    %p86 = por %p84, %p85
    %p88 = scmp.ne.s32.totalorder %s71, %s87
    %p89 = scmp.eq.s32.totalorder %s18, 0
    %p90 = por %p88, %p89
    %s91 = ssub.s32 %s20, %s34
    %s92 = ssub.s32 %s21, %s30
    %s93 = sor.u32 %s91, %s92
    %p94 = scmp.eq.s32.totalorder %s93, 0
    %s96 = sadd.s32 %s95, 1
    %s97 = scalar_select %p94, %s95, %s96
    %p100 = pneg %p94
    %p101 = scmp.eq.s32.totalorder %s12, 1
    %p102 = por %p100, %p101
    %p103 = scmp.ne.s32.totalorder %s95, %s98
    %p104 = scmp.eq.s32.totalorder %s12, 0
    %p105 = por %p103, %p104
    %p106 = scmp.ne.s32.totalorder %s95, %s98
    %p107 = scmp.eq.s32.totalorder %s17, 1
    %p108 = por %p106, %p107
    %p109 = scmp.ne.s32.totalorder %s98, %s99
    %p110 = scmp.eq.s32.totalorder %s17, 0
    %p111 = por %p109, %p110
    %p112 = scmp.ne.s32.totalorder %s98, %s99
    %p113 = scmp.eq.s32.totalorder %s18, 1
    %p114 = por %p112, %p113
    %p116 = scmp.ne.s32.totalorder %s99, %s115
    %p117 = scmp.eq.s32.totalorder %s18, 0
    %p118 = por %p116, %p117
    %s119 = ssub.s32 %s20, %s34
    %s120 = ssub.s32 %s21, %s30
    %s121 = sor.u32 %s119, %s120
    %p122 = scmp.eq.s32.totalorder %s121, 0
    %s124 = sadd.s32 %s123, 1
    %s125 = scalar_select %p122, %s123, %s124
    %p128 = pneg %p122
    %p129 = scmp.eq.s32.totalorder %s12, 1
    %p130 = por %p128, %p129
    %p131 = scmp.ne.s32.totalorder %s123, %s126
    %p132 = scmp.eq.s32.totalorder %s12, 0
    %p133 = por %p131, %p132
    %p134 = scmp.ne.s32.totalorder %s123, %s126
    %p135 = scmp.eq.s32.totalorder %s17, 1
    %p136 = por %p134, %p135
    %p137 = scmp.ne.s32.totalorder %s126, %s127
    %p138 = scmp.eq.s32.totalorder %s17, 0
    %p139 = por %p137, %p138
    %p140 = scmp.ne.s32.totalorder %s126, %s127
    %p141 = scmp.eq.s32.totalorder %s18, 1
    %p142 = por %p140, %p141
    %p144 = scmp.ne.s32.totalorder %s127, %s143
    %p145 = scmp.eq.s32.totalorder %s18, 0
    %p146 = por %p144, %p145
    %s147 = ssub.s32 %s19, %s38
    %s148 = ssub.s32 %s20, %s34
    %s149 = sor.u32 %s147, %s148
    %s150 = ssub.s32 %s21, %s30
    %s151 = sor.u32 %s149, %s150
    %p152 = scmp.eq.s32.totalorder %s151, 0
    %s154 = sadd.s32 %s153, 1
    %s155 = scalar_select %p152, %s153, %s154
    %p158 = pneg %p152
    %p159 = scmp.eq.s32.totalorder %s12, 1
    %p160 = por %p158, %p159
    %p161 = scmp.ne.s32.totalorder %s153, %s156
    %p162 = scmp.eq.s32.totalorder %s12, 0
    %p163 = por %p161, %p162
    %p164 = scmp.ne.s32.totalorder %s153, %s156
    %p165 = scmp.eq.s32.totalorder %s17, 1
    %p166 = por %p164, %p165
    %p167 = scmp.ne.s32.totalorder %s156, %s157
    %p168 = scmp.eq.s32.totalorder %s17, 0
    %p169 = por %p167, %p168
    %p170 = scmp.ne.s32.totalorder %s156, %s157
    %p171 = scmp.eq.s32.totalorder %s18, 1
    %p172 = por %p170, %p171
    %p174 = scmp.ne.s32.totalorder %s157, %s173
    %p175 = scmp.eq.s32.totalorder %s18, 0
    %p176 = por %p174, %p175
    %s177 = ssub.s32 %s19, %s38
    %s178 = ssub.s32 %s20, %s34
    %s179 = sor.u32 %s177, %s178
    %s180 = ssub.s32 %s21, %s30
    %s181 = sor.u32 %s179, %s180
    %p182 = scmp.eq.s32.totalorder %s181, 0
    %s184 = sadd.s32 %s183, 1
    %s185 = scalar_select %p182, %s183, %s184
    %p188 = pneg %p182
    %p189 = scmp.eq.s32.totalorder %s12, 1
    %p190 = por %p188, %p189
    %p191 = scmp.ne.s32.totalorder %s183, %s186
    %p192 = scmp.eq.s32.totalorder %s12, 0
    %p193 = por %p191, %p192
    %p194 = scmp.ne.s32.totalorder %s183, %s186
    %p195 = scmp.eq.s32.totalorder %s17, 1
    %p196 = por %p194, %p195
    %p197 = scmp.ne.s32.totalorder %s186, %s187
    %p198 = scmp.eq.s32.totalorder %s17, 0
    %p199 = por %p197, %p198
    %p200 = scmp.ne.s32.totalorder %s186, %s187
    %p201 = scmp.eq.s32.totalorder %s18, 1
    %p202 = por %p200, %p201
    %p204 = scmp.ne.s32.totalorder %s187, %s203
    %p205 = scmp.eq.s32.totalorder %s18, 0
    %p206 = por %p204, %p205
    %p207 = scmp.le.s32.totalorder 1, %s12
    %p208 = scmp.lt.s32.totalorder %s12, 3
    %p209 = pnand %p207, %p208
    %p210 = pneg %p209
    // Predicated region
    $region9: #{_lambda_.72} parent=5 // pred_check
      _
    $region10: #{_lambda_.72} parent=5 // pred_check_branch
      %212 = sbr.rel (%p209) target = $region12
    $region11: #{_lambda_.72} parent=5 // pred_region
      %s213 = ssub.s32 %s12, 1
      // Predicated region
      $region13: #{_lambda_.72} parent=11 // pred_check
        %p214 = pneg %p57
      $region14: #{_lambda_.72} parent=11 // pred_check_branch
        %216 = sbr.rel (%p214) target = $region16
      $region15: #{_lambda_.72} parent=11 // pred_region
        %s217 = smul.u32 4, %s24
        %p218 = scmp.lt.s32.totalorder %s217, 3
        %s219 = scalar_select %p218, %s217, 3
        %s220 = smul.addr %s219, 8
        %s221 = scalar_lea.vmem %s0, %s220
        %s222 = smul.u32 4, %s24
      $region16: #{_lambda_.72} parent=11 // pred_fallthru
        _
      // Predicated region
      $region17: #{_lambda_.72} parent=11 // pred_check
        %p223 = pneg %p83
      $region18: #{_lambda_.72} parent=11 // pred_check_branch
        %225 = sbr.rel (%p223) target = $region20
      $region19: #{_lambda_.72} parent=11 // pred_region
        %s226 = smul.u32 4, %s24
        %p227 = scmp.lt.s32.totalorder %s226, 3
        %s228 = scalar_select %p227, %s226, 3
        %s229 = smul.addr %s228, 8
        %s230 = scalar_lea.vmem %s1, %s229
        %s231 = smul.u32 4, %s24
      $region20: #{_lambda_.72} parent=11 // pred_fallthru
        _
    $region12: #{_lambda_.72} parent=5 // pred_fallthru
      _
    %p232 = scmp.lt.s32.totalorder %s12, 2
    // Predicated region
    $region21: #{_lambda_.72} parent=5 // pred_check
      %p233 = pneg %p232
    $region22: #{_lambda_.72} parent=5 // pred_check_branch
      %235 = sbr.rel (%p233) target = $region24
    $region23: #{_lambda_.72} parent=5 // pred_region
      // Predicated region
      $region25: #{_lambda_.72} parent=23 // pred_check
        %p236 = pneg %p105
      $region26: #{_lambda_.72} parent=23 // pred_check_branch
        %238 = sbr.rel (%p236) target = $region28
      $region27: #{_lambda_.72} parent=23 // pred_region
        %s239 = smul.u32 4, %s21
        %p240 = scmp.lt.s32.totalorder %s20, 1
        %s241 = scalar_select %p240, %s20, 1
        %p242 = scmp.lt.s32.totalorder %s239, 3
        %s243 = scalar_select %p242, %s239, 3
        %s244 = smul.addr %s241, 4
        %s245 = sadd.s32 %s243, %s244
        %s246 = smul.addr %s245, 8
        %s247 = scalar_lea.vmem %s2, %s246
        %s248 = smul.u32 4, %s21
      $region28: #{_lambda_.72} parent=23 // pred_fallthru
        _
      // Predicated region
      $region29: #{_lambda_.72} parent=23 // pred_check
        %p249 = pneg %p133
      $region30: #{_lambda_.72} parent=23 // pred_check_branch
        %251 = sbr.rel (%p249) target = $region32
      $region31: #{_lambda_.72} parent=23 // pred_region
        %s252 = smul.u32 4, %s21
        %p253 = scmp.lt.s32.totalorder %s20, 1
        %s254 = scalar_select %p253, %s20, 1
        %p255 = scmp.lt.s32.totalorder %s252, 3
        %s256 = scalar_select %p255, %s252, 3
        %s257 = smul.addr %s254, 4
        %s258 = sadd.s32 %s256, %s257
        %s259 = smul.addr %s258, 8
        %s260 = scalar_lea.vmem %s3, %s259
        %s261 = smul.u32 4, %s21
      $region32: #{_lambda_.72} parent=23 // pred_fallthru
        _
    $region24: #{_lambda_.72} parent=5 // pred_fallthru
      _
    %p262 = scmp.le.s32.totalorder 1, %s12
    %p263 = scmp.lt.s32.totalorder %s12, 3
    %p264 = pnand %p262, %p263
    %p265 = pneg %p264
    // Predicated region
    $region33: #{_lambda_.72} parent=5 // pred_check
      _
    $region34: #{_lambda_.72} parent=5 // pred_check_branch
      %267 = sbr.rel (%p264) target = $region36
    $region35: #{_lambda_.72} parent=5 // pred_region
      %s268 = ssub.s32 %s12, 1
      %s269 = smul.u32 4, %s24
      %p270 = scmp.lt.s32.totalorder %s269, 3
      %s271 = scalar_select %p270, %s269, 3
      %s272 = smul.addr %s271, 8
      %s273 = scalar_lea.vmem %s0, %s272
      %p274 = pneg %p57
      %p275 = pneg %p54
      %s276 = smul.u32 4, %s24
      %p277 = scmp.lt.s32.totalorder %s276, 3
      %s278 = scalar_select %p277, %s276, 3
      %s279 = smul.addr %s278, 8
      %s280 = scalar_lea.vmem %s1, %s279
      %p281 = pneg %p83
      %p282 = pneg %p80
      %s283 = smul.u32 4, %s24
      %p284 = scmp.lt.s32.totalorder %s23, 1
      %s285 = scalar_select %p284, %s23, 1
      %p286 = scmp.lt.s32.totalorder %s283, 3
      %s287 = scalar_select %p286, %s283, 3
      %s288 = smul.addr %s285, 4
      %s289 = sadd.s32 %s287, %s288
      %s290 = smul.addr %s289, 8
      %s291 = scalar_lea.vmem %s2, %s290
      %p292 = pneg %p111
      %p293 = pneg %p108
      %s294 = smul.u32 4, %s24
      %p295 = scmp.lt.s32.totalorder %s23, 1
      %s296 = scalar_select %p295, %s23, 1
      %p297 = scmp.lt.s32.totalorder %s294, 3
      %s298 = scalar_select %p297, %s294, 3
      %s299 = smul.addr %s296, 4
      %s300 = sadd.s32 %s298, %s299
      %s301 = smul.addr %s300, 8
      %s302 = scalar_lea.vmem %s3, %s301
      %p303 = pneg %p139
      %p304 = pneg %p136
      %p305 = pneg %p169
      %p306 = pneg %p166
      %s307 = smul.u32 4, %s24
      %p308 = scmp.lt.s32.totalorder %s22, 0
      %s309 = scalar_select %p308, %s22, 0
      %p310 = scmp.lt.s32.totalorder %s23, 1
      %s311 = scalar_select %p310, %s23, 1
      %p312 = scmp.lt.s32.totalorder %s307, 3
      %s313 = scalar_select %p312, %s307, 3
      %s314 = smul.addr %s311, 4
      %s315 = sadd.s32 %s313, %s314
      %s316 = smul.addr %s309, 8
      %s317 = sadd.s32 %s315, %s316
      %s318 = smul.addr %s317, 8
      %s319 = scalar_lea.vmem %s4, %s318
      %p320 = pneg %p199
      %p321 = pneg %p196
      %s322 = smul.u32 4, %s24
      %p323 = scmp.lt.s32.totalorder %s22, 0
      %s324 = scalar_select %p323, %s22, 0
      %p325 = scmp.lt.s32.totalorder %s23, 1
      %s326 = scalar_select %p325, %s23, 1
      %p327 = scmp.lt.s32.totalorder %s322, 3
      %s328 = scalar_select %p327, %s322, 3
      %s329 = smul.addr %s326, 4
      %s330 = sadd.s32 %s328, %s329
      %s331 = smul.addr %s324, 8
      %s332 = sadd.s32 %s330, %s331
      %s333 = smul.addr %s332, 8
      %s334 = scalar_lea.vmem %s5, %s333
      %s335 = smul.u32 4, %s24
      %p336 = scmp.lt.s32.totalorder %s335, 3
      %s337 = scalar_select %p336, %s335, 3
      %s338 = smul.addr %s337, 8
      %s339 = scalar_lea.vmem %s0, %s338
      %s340 = smul.u32 4, %s24
      %s341 = smul.u32 4, %s24
      %p342 = scmp.lt.s32.totalorder %s341, 3
      %s343 = scalar_select %p342, %s341, 3
      %s344 = smul.addr %s343, 8
      %s345 = scalar_lea.vmem %s1, %s344
      %s346 = smul.u32 4, %s24
      %s347 = smul.u32 4, %s24
      %p348 = scmp.lt.s32.totalorder %s23, 1
      %s349 = scalar_select %p348, %s23, 1
      %p350 = scmp.lt.s32.totalorder %s347, 3
      %s351 = scalar_select %p350, %s347, 3
      %s352 = smul.addr %s349, 4
      %s353 = sadd.s32 %s351, %s352
      %s354 = smul.addr %s353, 8
      %s355 = scalar_lea.vmem %s2, %s354
      %s356 = smul.u32 4, %s24
      %s357 = smul.u32 4, %s24
      %p358 = scmp.lt.s32.totalorder %s23, 1
      %s359 = scalar_select %p358, %s23, 1
      %p360 = scmp.lt.s32.totalorder %s357, 3
      %s361 = scalar_select %p360, %s357, 3
      %s362 = smul.addr %s359, 4
      %s363 = sadd.s32 %s361, %s362
      %s364 = smul.addr %s363, 8
      %s365 = scalar_lea.vmem %s3, %s364
      %s366 = smul.u32 4, %s24
      %s367 = smul.u32 4, %s24
      %p368 = scmp.lt.s32.totalorder %s22, 0
      %s369 = scalar_select %p368, %s22, 0
      %p370 = scmp.lt.s32.totalorder %s23, 1
      %s371 = scalar_select %p370, %s23, 1
      %p372 = scmp.lt.s32.totalorder %s367, 3
      %s373 = scalar_select %p372, %s367, 3
      %s374 = smul.addr %s371, 4
      %s375 = sadd.s32 %s373, %s374
      %s376 = smul.addr %s369, 8
      %s377 = sadd.s32 %s375, %s376
      %s378 = smul.addr %s377, 8
      %s379 = scalar_lea.vmem %s4, %s378
      %s380 = smul.u32 4, %s24
      %s381 = smul.u32 4, %s24
      %p382 = scmp.lt.s32.totalorder %s22, 0
      %s383 = scalar_select %p382, %s22, 0
      %p384 = scmp.lt.s32.totalorder %s23, 1
      %s385 = scalar_select %p384, %s23, 1
      %p386 = scmp.lt.s32.totalorder %s381, 3
      %s387 = scalar_select %p386, %s381, 3
      %s388 = smul.addr %s385, 4
      %s389 = sadd.s32 %s387, %s388
      %s390 = smul.addr %s383, 8
      %s391 = sadd.s32 %s389, %s390
      %s392 = smul.addr %s391, 8
      %s393 = scalar_lea.vmem %s5, %s392
      %s394 = smul.u32 4, %s24
      %v395 = vld [vmem:[%s339] sm:$0xff]
      %v396 = vld [vmem:[%s339 + $0x8] sm:$0xff]
      %v397 = vld [vmem:[%s339 + $0x10] sm:$0xff]
      %v398 = vld [vmem:[%s339 + $0x18] sm:$0xff]
      %v399 = vld [vmem:[%s345] sm:$0xff]
      %v400 = vld [vmem:[%s345 + $0x8] sm:$0xff]
      %v401 = vld [vmem:[%s345 + $0x10] sm:$0xff]
      %v402 = vld [vmem:[%s345 + $0x18] sm:$0xff]
      %v403 = vld [vmem:[%s355] sm:$0xff]
      %v404 = vld [vmem:[%s355 + $0x8] sm:$0xff]
      %v405 = vld [vmem:[%s355 + $0x10] sm:$0xff]
      %v406 = vld [vmem:[%s355 + $0x18] sm:$0xff]
      %v407 = vld [vmem:[%s365] sm:$0xff]
      %v408 = vld [vmem:[%s365 + $0x8] sm:$0xff]
      %v409 = vld [vmem:[%s365 + $0x10] sm:$0xff]
      %v410 = vld [vmem:[%s365 + $0x18] sm:$0xff]
      %v411 = vmul.f32 %v395, %v403
      %v412 = vmul.f32 %v396, %v404
      %v413 = vmul.f32 %v397, %v405
      %v414 = vmul.f32 %v398, %v406
      %v415 = vmul.f32 %v399, %v407
      %v416 = vmul.f32 %v400, %v408
      %v417 = vmul.f32 %v401, %v409
      %v418 = vmul.f32 %v402, %v410
      %v419 = vsub.f32 %v411, %v415
      %v420 = vsub.f32 %v412, %v416
      %v421 = vsub.f32 %v413, %v417
      %v422 = vsub.f32 %v414, %v418
      %vm423 = vcmask 261120
      %424 = vst.msk [vmem:[%s379] sm:$0xff] %vm423, %v419
      %425 = vst.msk [vmem:[%s379 + $0x8] sm:$0xff] %vm423, %v420
      %426 = vst.msk [vmem:[%s379 + $0x10] sm:$0xff] %vm423, %v421
      %427 = vst.msk [vmem:[%s379 + $0x18] sm:$0xff] %vm423, %v422
      %v428 = vmul.f32 %v395, %v407
      %v429 = vmul.f32 %v396, %v408
      %v430 = vmul.f32 %v397, %v409
      %v431 = vmul.f32 %v398, %v410
      %v432 = vmul.f32 %v399, %v403
      %v433 = vmul.f32 %v400, %v404
      %v434 = vmul.f32 %v401, %v405
      %v435 = vmul.f32 %v402, %v406
      %v436 = vadd.f32 %v428, %v432
      %v437 = vadd.f32 %v429, %v433
      %v438 = vadd.f32 %v430, %v434
      %v439 = vadd.f32 %v431, %v435
      %440 = vst.msk [vmem:[%s393] sm:$0xff] %vm423, %v436
      %441 = vst.msk [vmem:[%s393 + $0x8] sm:$0xff] %vm423, %v437
      %442 = vst.msk [vmem:[%s393 + $0x10] sm:$0xff] %vm423, %v438
      %443 = vst.msk [vmem:[%s393 + $0x18] sm:$0xff] %vm423, %v439
      %s444 = smul.u32 4, %s24
      %p445 = scmp.lt.s32.totalorder %s22, 0
      %s446 = scalar_select %p445, %s22, 0
      %p447 = scmp.lt.s32.totalorder %s23, 1
      %s448 = scalar_select %p447, %s23, 1
      %p449 = scmp.lt.s32.totalorder %s444, 3
      %s450 = scalar_select %p449, %s444, 3
      %s451 = smul.addr %s448, 4
      %s452 = sadd.s32 %s450, %s451
      %s453 = smul.addr %s446, 8
      %s454 = sadd.s32 %s452, %s453
      %s455 = smul.addr %s454, 8
      %s456 = scalar_lea.vmem %s4, %s455
      %s457 = smul.u32 4, %s24
      %p458 = scmp.lt.s32.totalorder %s22, 0
      %s459 = scalar_select %p458, %s22, 0
      %p460 = scmp.lt.s32.totalorder %s23, 1
      %s461 = scalar_select %p460, %s23, 1
      %p462 = scmp.lt.s32.totalorder %s457, 3
      %s463 = scalar_select %p462, %s457, 3
      %s464 = smul.addr %s461, 4
      %s465 = sadd.s32 %s463, %s464
      %s466 = smul.addr %s459, 8
      %s467 = sadd.s32 %s465, %s466
      %s468 = smul.addr %s467, 8
      %s469 = scalar_lea.vmem %s5, %s468
      // Predicated region
      $region37: #{_lambda_.72} parent=35 // pred_check
        %p470 = pneg %p166
      $region38: #{_lambda_.72} parent=35 // pred_check_branch
        %472 = sbr.rel (%p470) target = $region40
      $region39: #{_lambda_.72} parent=35 // pred_region
        %s473 = smul.u32 4, %s24
      $region40: #{_lambda_.72} parent=35 // pred_fallthru
        _
      // Predicated region
      $region41: #{_lambda_.72} parent=35 // pred_check
        %p474 = pneg %p196
      $region42: #{_lambda_.72} parent=35 // pred_check_branch
        %476 = sbr.rel (%p474) target = $region44
      $region43: #{_lambda_.72} parent=35 // pred_region
        %s477 = smul.u32 4, %s24
      $region44: #{_lambda_.72} parent=35 // pred_fallthru
        _
    $region36: #{_lambda_.72} parent=5 // pred_fallthru
      _
    %p478 = scmp.le.s32.totalorder 2, %s12
    // Predicated region
    $region45: #{_lambda_.72} parent=5 // pred_check
      %p479 = pneg %p478
    $region46: #{_lambda_.72} parent=5 // pred_check_branch
      %481 = sbr.rel (%p479) target = $region48
    $region47: #{_lambda_.72} parent=5 // pred_region
      %s482 = ssub.s32 %s12, 2
      // Predicated region
      $region49: #{_lambda_.72} parent=47 // pred_check
        %p483 = pneg %p172
      $region50: #{_lambda_.72} parent=47 // pred_check_branch
        %485 = sbr.rel (%p483) target = $region52
      $region51: #{_lambda_.72} parent=47 // pred_region
        %s486 = smul.u32 4, %s27
        %p487 = scmp.lt.s32.totalorder %s25, 0
        %s488 = scalar_select %p487, %s25, 0
        %p489 = scmp.lt.s32.totalorder %s26, 1
        %s490 = scalar_select %p489, %s26, 1
        %p491 = scmp.lt.s32.totalorder %s486, 3
        %s492 = scalar_select %p491, %s486, 3
        %s493 = smul.addr %s490, 4
        %s494 = sadd.s32 %s492, %s493
        %s495 = smul.addr %s488, 8
        %s496 = sadd.s32 %s494, %s495
        %s497 = smul.addr %s496, 8
        %s498 = scalar_lea.vmem %s4, %s497
      $region52: #{_lambda_.72} parent=47 // pred_fallthru
        _
      // Predicated region
      $region53: #{_lambda_.72} parent=47 // pred_check
        %p499 = pneg %p202
      $region54: #{_lambda_.72} parent=47 // pred_check_branch
        %501 = sbr.rel (%p499) target = $region56
      $region55: #{_lambda_.72} parent=47 // pred_region
        %s502 = smul.u32 4, %s27
        %p503 = scmp.lt.s32.totalorder %s25, 0
        %s504 = scalar_select %p503, %s25, 0
        %p505 = scmp.lt.s32.totalorder %s26, 1
        %s506 = scalar_select %p505, %s26, 1
        %p507 = scmp.lt.s32.totalorder %s502, 3
        %s508 = scalar_select %p507, %s502, 3
        %s509 = smul.addr %s506, 4
        %s510 = sadd.s32 %s508, %s509
        %s511 = smul.addr %s504, 8
        %s512 = sadd.s32 %s510, %s511
        %s513 = smul.addr %s512, 8
        %s514 = scalar_lea.vmem %s5, %s513
      $region56: #{_lambda_.72} parent=47 // pred_fallthru
        _
    $region48: #{_lambda_.72} parent=5 // pred_fallthru
      _
  $region6: #{_lambda_.72} parent=0 // loop_footer
    %s16 = sadd.s32 1, %s12
  $region7: #{_lambda_.72} parent=0 // loop_footer_branch
    %11 = sbr.rel target = $region3
  $region8: #{_lambda_.72} parent=0 // loop_exit
    _

// kernel: _lambda_.73
$region0: #{_lambda_.73}
  #allocation0 [shape = 'u32[]', space=smem, size = 0x4, offset = 0x4, fixed_abs, tag = 'smem constant byte address 0x4 - core index']
  #allocation1 [shape = 'u32[144,128]{1,0:T(1,128)}', space=vmem, size = 0x12000, scoped, tag = 'internal scratch']
  %s0 = inlined_call_operand.vmem [shape: f32[2,16,16], index: 0, kind: input, shape index: {}]
  %s1 = inlined_call_operand.vmem [shape: f32[2,16,16], index: 1, kind: input, shape index: {}]
  %s2 = inlined_call_operand.vmem [shape: f32[2,16,16], index: 2, kind: output, shape index: {}]
  %s3 = sld [smem:[#allocation0]]
  $region41: #{_lambda_.73} parent=0
    _
  %s5 = ssub.s32 1, %s3
  %s6 = scalar_select 0, %s5, %s3
  loop: start=0, step=1, limit=4
  $region2: #{_lambda_.73} parent=0 // loop_pre_header
    _
  $region3: #{_lambda_.73} parent=0 // loop_header
    %s8 = sphi 0, %s12
    %p9 = scmp.ge.s32.totalorder %s8, 4
    %s15 = sphi 0, %s27
    %s16 = sphi 0, %s23
    %s17 = sphi 0, %s15
    %s18 = sphi 0, %s16
    %s19 = sphi 0, %s17
    %s20 = sphi 0, %s18
    %s32 = sphi 0, %s34
    %s35 = sphi 0, %s32
    %s36 = sphi 0, %s35
    %s52 = sphi 0, %s36
    %s60 = sphi 0, %s62
    %s63 = sphi 0, %s60
    %s64 = sphi 0, %s63
    %s80 = sphi 0, %s64
    %s88 = sphi 0, %s90
    %s91 = sphi 0, %s88
    %s92 = sphi 0, %s91
    %s108 = sphi 0, %s92
  $region4: #{_lambda_.73} parent=0 // loop_header_branch
    %11 = sbr.rel (%p9) target = $region8
  $region5: #{_lambda_.73} parent=0 // loop_body
    %s13 = ssub.s32 %s8, 1
    %s14 = ssub.s32 %s8, 2
    %s21 = sadd.s32 1, %s16
    %p22 = scmp.ge.s32.totalorder %s21, 1
    %s23 = scalar_select %p22, 0, %s21
    %s24 = sadd.s32 1, %s15
    %s25 = scalar_select %p22, %s24, %s15
    %p26 = scmp.ge.s32.totalorder %s25, 2
    %s27 = scalar_select %p26, 0, %s25
    %s28 = ssub.s32 %s15, %s27
    %s29 = ssub.s32 %s16, %s23
    %s30 = sor.u32 %s28, %s29
    %p31 = scmp.eq.s32.totalorder %s30, 0
    %s33 = sadd.s32 %s32, 1
    %s34 = scalar_select %p31, %s32, %s33
    %p37 = pneg %p31
    %p38 = scmp.eq.s32.totalorder %s8, 1
    %p39 = por %p37, %p38
    %p40 = scmp.ne.s32.totalorder %s32, %s35
    %p41 = scmp.eq.s32.totalorder %s8, 0
    %p42 = por %p40, %p41
    %p43 = scmp.ne.s32.totalorder %s32, %s35
    %p44 = scmp.eq.s32.totalorder %s13, 1
    %p45 = por %p43, %p44
    %p46 = scmp.ne.s32.totalorder %s35, %s36
    %p47 = scmp.eq.s32.totalorder %s13, 0
    %p48 = por %p46, %p47
    %p49 = scmp.ne.s32.totalorder %s35, %s36
    %p50 = scmp.eq.s32.totalorder %s14, 1
    %p51 = por %p49, %p50
    %p53 = scmp.ne.s32.totalorder %s36, %s52
    %p54 = scmp.eq.s32.totalorder %s14, 0
    %p55 = por %p53, %p54
    %s56 = ssub.s32 %s15, %s27
    %s57 = ssub.s32 %s16, %s23
    %s58 = sor.u32 %s56, %s57
    %p59 = scmp.eq.s32.totalorder %s58, 0
    %s61 = sadd.s32 %s60, 1
    %s62 = scalar_select %p59, %s60, %s61
    %p65 = pneg %p59
    %p66 = scmp.eq.s32.totalorder %s8, 1
    %p67 = por %p65, %p66
    %p68 = scmp.ne.s32.totalorder %s60, %s63
    %p69 = scmp.eq.s32.totalorder %s8, 0
    %p70 = por %p68, %p69
    %p71 = scmp.ne.s32.totalorder %s60, %s63
    %p72 = scmp.eq.s32.totalorder %s13, 1
    %p73 = por %p71, %p72
    %p74 = scmp.ne.s32.totalorder %s63, %s64
    %p75 = scmp.eq.s32.totalorder %s13, 0
    %p76 = por %p74, %p75
    %p77 = scmp.ne.s32.totalorder %s63, %s64
    %p78 = scmp.eq.s32.totalorder %s14, 1
    %p79 = por %p77, %p78
    %p81 = scmp.ne.s32.totalorder %s64, %s80
    %p82 = scmp.eq.s32.totalorder %s14, 0
    %p83 = por %p81, %p82
    %s84 = ssub.s32 %s15, %s27
    %s85 = ssub.s32 %s16, %s23
    %s86 = sor.u32 %s84, %s85
    %p87 = scmp.eq.s32.totalorder %s86, 0
    %s89 = sadd.s32 %s88, 1
    %s90 = scalar_select %p87, %s88, %s89
    %p93 = pneg %p87
    %p94 = scmp.eq.s32.totalorder %s8, 1
    %p95 = por %p93, %p94
    %p96 = scmp.ne.s32.totalorder %s88, %s91
    %p97 = scmp.eq.s32.totalorder %s8, 0
    %p98 = por %p96, %p97
    %p99 = scmp.ne.s32.totalorder %s88, %s91
    %p100 = scmp.eq.s32.totalorder %s13, 1
    %p101 = por %p99, %p100
    %p102 = scmp.ne.s32.totalorder %s91, %s92
    %p103 = scmp.eq.s32.totalorder %s13, 0
    %p104 = por %p102, %p103
    %p105 = scmp.ne.s32.totalorder %s91, %s92
    %p106 = scmp.eq.s32.totalorder %s14, 1
    %p107 = por %p105, %p106
    %p109 = scmp.ne.s32.totalorder %s92, %s108
    %p110 = scmp.eq.s32.totalorder %s14, 0
    %p111 = por %p109, %p110
    %p112 = scmp.le.s32.totalorder 1, %s8
    %p113 = scmp.lt.s32.totalorder %s8, 3
    %p114 = pnand %p112, %p113
    %p115 = pneg %p114
    // Predicated region
    $region9: #{_lambda_.73} parent=5 // pred_check
      _
    $region10: #{_lambda_.73} parent=5 // pred_check_branch
      %117 = sbr.rel (%p114) target = $region12
    $region11: #{_lambda_.73} parent=5 // pred_region
      %s118 = ssub.s32 %s8, 1
    $region12: #{_lambda_.73} parent=5 // pred_fallthru
      _
    %p119 = scmp.lt.s32.totalorder %s8, 2
    // Predicated region
    $region13: #{_lambda_.73} parent=5 // pred_check
      %p120 = pneg %p119
    $region14: #{_lambda_.73} parent=5 // pred_check_branch
      %122 = sbr.rel (%p120) target = $region16
    $region15: #{_lambda_.73} parent=5 // pred_region
      // Predicated region
      $region17: #{_lambda_.73} parent=15 // pred_check
        %p123 = pneg %p42
      $region18: #{_lambda_.73} parent=15 // pred_check_branch
        %125 = sbr.rel (%p123) target = $region20
      $region19: #{_lambda_.73} parent=15 // pred_region
        %s126 = smul.u32 2, %s16
        %p127 = scmp.lt.s32.totalorder %s15, 1
        %s128 = scalar_select %p127, %s15, 1
        %p129 = scmp.lt.s32.totalorder %s126, 1
        %s130 = scalar_select %p129, %s126, 1
        %s131 = smul.addr %s128, 2
        %s132 = sadd.s32 %s130, %s131
        %s133 = smul.addr %s132, 8
        %s134 = scalar_lea.vmem %s0, %s133
        %s135 = smul.u32 2, %s16
      $region20: #{_lambda_.73} parent=15 // pred_fallthru
        _
      // Predicated region
      $region21: #{_lambda_.73} parent=15 // pred_check
        %p136 = pneg %p70
      $region22: #{_lambda_.73} parent=15 // pred_check_branch
        %138 = sbr.rel (%p136) target = $region24
      $region23: #{_lambda_.73} parent=15 // pred_region
        %s139 = smul.u32 2, %s16
        %p140 = scmp.lt.s32.totalorder %s15, 1
        %s141 = scalar_select %p140, %s15, 1
        %p142 = scmp.lt.s32.totalorder %s139, 1
        %s143 = scalar_select %p142, %s139, 1
        %s144 = smul.addr %s141, 2
        %s145 = sadd.s32 %s143, %s144
        %s146 = smul.addr %s145, 8
        %s147 = scalar_lea.vmem %s1, %s146
        %s148 = smul.u32 2, %s16
      $region24: #{_lambda_.73} parent=15 // pred_fallthru
        _
    $region16: #{_lambda_.73} parent=5 // pred_fallthru
      _
    %p149 = scmp.le.s32.totalorder 1, %s8
    %p150 = scmp.lt.s32.totalorder %s8, 3
    %p151 = pnand %p149, %p150
    %p152 = pneg %p151
    // Predicated region
    $region25: #{_lambda_.73} parent=5 // pred_check
      _
    $region26: #{_lambda_.73} parent=5 // pred_check_branch
      %154 = sbr.rel (%p151) target = $region28
    $region27: #{_lambda_.73} parent=5 // pred_region
      %s155 = ssub.s32 %s8, 1
      %s156 = smul.u32 2, %s18
      %p157 = scmp.lt.s32.totalorder %s17, 1
      %s158 = scalar_select %p157, %s17, 1
      %p159 = scmp.lt.s32.totalorder %s156, 1
      %s160 = scalar_select %p159, %s156, 1
      %s161 = smul.addr %s158, 2
      %s162 = sadd.s32 %s160, %s161
      %s163 = smul.addr %s162, 8
      %s164 = scalar_lea.vmem %s0, %s163
      %p165 = pneg %p48
      %p166 = pneg %p45
      %s167 = smul.u32 2, %s18
      %p168 = scmp.lt.s32.totalorder %s17, 1
      %s169 = scalar_select %p168, %s17, 1
      %p170 = scmp.lt.s32.totalorder %s167, 1
      %s171 = scalar_select %p170, %s167, 1
      %s172 = smul.addr %s169, 2
      %s173 = sadd.s32 %s171, %s172
      %s174 = smul.addr %s173, 8
      %s175 = scalar_lea.vmem %s1, %s174
      %p176 = pneg %p76
      %p177 = pneg %p73
      %p178 = pneg %p104
      %p179 = pneg %p101
      %s180 = smul.u32 2, %s18
      %p181 = scmp.lt.s32.totalorder %s17, 1
      %s182 = scalar_select %p181, %s17, 1
      %p183 = scmp.lt.s32.totalorder %s180, 1
      %s184 = scalar_select %p183, %s180, 1
      %s185 = smul.addr %s182, 2
      %s186 = sadd.s32 %s184, %s185
      %s187 = smul.addr %s186, 8
      %s188 = scalar_lea.vmem %s2, %s187
      %s189 = smul.u32 2, %s18
      %p190 = scmp.lt.s32.totalorder %s17, 1
      %s191 = scalar_select %p190, %s17, 1
      %p192 = scmp.lt.s32.totalorder %s189, 1
      %s193 = scalar_select %p192, %s189, 1
      %s194 = smul.addr %s191, 2
      %s195 = sadd.s32 %s193, %s194
      %s196 = smul.addr %s195, 8
      %s197 = scalar_lea.vmem %s0, %s196
      %s198 = smul.u32 2, %s18
      %s199 = smul.u32 2, %s18
      %p200 = scmp.lt.s32.totalorder %s17, 1
      %s201 = scalar_select %p200, %s17, 1
      %p202 = scmp.lt.s32.totalorder %s199, 1
      %s203 = scalar_select %p202, %s199, 1
      %s204 = smul.addr %s201, 2
      %s205 = sadd.s32 %s203, %s204
      %s206 = smul.addr %s205, 8
      %s207 = scalar_lea.vmem %s1, %s206
      %s208 = smul.u32 2, %s18
      %s209 = smul.u32 2, %s18
      %p210 = scmp.lt.s32.totalorder %s17, 1
      %s211 = scalar_select %p210, %s17, 1
      %p212 = scmp.lt.s32.totalorder %s209, 1
      %s213 = scalar_select %p212, %s209, 1
      %s214 = smul.addr %s211, 2
      %s215 = sadd.s32 %s213, %s214
      %s216 = smul.addr %s215, 8
      %s217 = scalar_lea.vmem %s2, %s216
      %s218 = smul.u32 2, %s18
      %v219 = vld [vmem:[%s197] sm:$0xff]
      %v220 = vld [vmem:[%s197 + $0x8] sm:$0xff]
      %v221 = vld [vmem:[%s207] sm:$0xff]
      %v222 = vld [vmem:[%s207 + $0x8] sm:$0xff]
      %v223 = vmul.f32 %v219, %v219
      %v224 = vmul.f32 %v220, %v220
      %v225 = vmul.f32 %v221, %v221
      %v226 = vmul.f32 %v222, %v222
      %v227 = vadd.f32 %v223, %v225
      %v228 = vadd.f32 %v224, %v226
      %v229 = vrsqrt.pop %v227
      %v230 = vmul.f32 %v227, %v229
      %vm231 = vcmp.eq.f32.partialorder %v227, inf
      %v232 = vsel %vm231, %v227, %v230
      %vm233 = vcmp.eq.f32.partialorder %v227, 0.0
      %v234 = vand.u32 %v227, 2147483648
      %v235 = vsel %vm233, %v234, %v232
      %v236 = vrsqrt.pop %v228
      %v237 = vmul.f32 %v228, %v236
      %vm238 = vcmp.eq.f32.partialorder %v228, inf
      %v239 = vsel %vm238, %v228, %v237
      %vm240 = vcmp.eq.f32.partialorder %v228, 0.0
      %v241 = vand.u32 %v228, 2147483648
      %v242 = vsel %vm240, %v241, %v239
      %vm243 = vcmask 130048
      %244 = vst.msk [vmem:[%s217] sm:$0xff] %vm243, %v235
      %245 = vst.msk [vmem:[%s217 + $0x8] sm:$0xff] %vm243, %v242
      %s246 = smul.u32 2, %s18
      %p247 = scmp.lt.s32.totalorder %s17, 1
      %s248 = scalar_select %p247, %s17, 1
      %p249 = scmp.lt.s32.totalorder %s246, 1
      %s250 = scalar_select %p249, %s246, 1
      %s251 = smul.addr %s248, 2
      %s252 = sadd.s32 %s250, %s251
      %s253 = smul.addr %s252, 8
      %s254 = scalar_lea.vmem %s2, %s253
      // Predicated region
      $region29: #{_lambda_.73} parent=27 // pred_check
        %p255 = pneg %p101
      $region30: #{_lambda_.73} parent=27 // pred_check_branch
        %257 = sbr.rel (%p255) target = $region32
      $region31: #{_lambda_.73} parent=27 // pred_region
        %s258 = smul.u32 2, %s18
      $region32: #{_lambda_.73} parent=27 // pred_fallthru
        _
    $region28: #{_lambda_.73} parent=5 // pred_fallthru
      _
    %p259 = scmp.le.s32.totalorder 2, %s8
    // Predicated region
    $region33: #{_lambda_.73} parent=5 // pred_check
      %p260 = pneg %p259
    $region34: #{_lambda_.73} parent=5 // pred_check_branch
      %262 = sbr.rel (%p260) target = $region36
    $region35: #{_lambda_.73} parent=5 // pred_region
      %s263 = ssub.s32 %s8, 2
      // Predicated region
      $region37: #{_lambda_.73} parent=35 // pred_check
        %p264 = pneg %p107
      $region38: #{_lambda_.73} parent=35 // pred_check_branch
        %266 = sbr.rel (%p264) target = $region40
      $region39: #{_lambda_.73} parent=35 // pred_region
        %s267 = smul.u32 2, %s20
        %p268 = scmp.lt.s32.totalorder %s19, 1
        %s269 = scalar_select %p268, %s19, 1
        %p270 = scmp.lt.s32.totalorder %s267, 1
        %s271 = scalar_select %p270, %s267, 1
        %s272 = smul.addr %s269, 2
        %s273 = sadd.s32 %s271, %s272
        %s274 = smul.addr %s273, 8
        %s275 = scalar_lea.vmem %s2, %s274
      $region40: #{_lambda_.73} parent=35 // pred_fallthru
        _
    $region36: #{_lambda_.73} parent=5 // pred_fallthru
      _
  $region6: #{_lambda_.73} parent=0 // loop_footer
    %s12 = sadd.s32 1, %s8
  $region7: #{_lambda_.73} parent=0 // loop_footer_branch
    %7 = sbr.rel target = $region3
  $region8: #{_lambda_.73} parent=0 // loop_exit
    _

// kernel: _lambda_.76
$region0: #{_lambda_.76}
  #allocation0 [shape = 'u32[]', space=smem, size = 0x4, offset = 0x4, fixed_abs, tag = 'smem constant byte address 0x4 - core index']
  #allocation1 [shape = 'u32[144,128]{1,0:T(1,128)}', space=vmem, size = 0x12000, scoped, tag = 'internal scratch']
  #allocation2 [shape = 'f32[8,1]{1,0:T(8,128)}', space=vmem, size = 0x1000, scoped, tag = 'scratch operand']
  #allocation3 [shape = 'f32[8,1]{1,0:T(8,128)}', space=vmem, size = 0x1000, scoped, tag = 'scratch operand']
  %s0 = inlined_call_operand.vmem [shape: f32[32,128], index: 0, kind: input, shape index: {}]
  %s1 = inlined_call_operand.vmem [shape: f32[32,1], index: 1, kind: output, shape index: {0}]
  %s2 = inlined_call_operand.vmem [shape: f32[32,1], index: 2, kind: output, shape index: {1}]
  %3 = xla_tuple %s1, %s2
  %s4 = sld [smem:[#allocation0]]
  $region53: #{_lambda_.76} parent=0
    _
  %s6 = ssub.s32 1, %s4
  %s7 = scalar_select 0, %s6, %s4
  loop: start=0, step=1, limit=6
  $region2: #{_lambda_.76} parent=0 // loop_pre_header
    _
  $region3: #{_lambda_.76} parent=0 // loop_header
    %s9 = sphi 0, %s13
    %p10 = scmp.ge.s32.totalorder %s9, 6
    %s16 = sphi 0, %s28
    %s17 = sphi 0, %s24
    %s18 = sphi 0, %s16
    %s19 = sphi 0, %s17
    %s20 = sphi 0, %s18
    %s21 = sphi 0, %s19
    %s33 = sphi 0, %s35
    %s36 = sphi 0, %s33
    %s37 = sphi 0, %s36
    %s53 = sphi 0, %s37
    %s59 = sphi 0, %s61
    %s62 = sphi 0, %s59
    %s63 = sphi 0, %s62
    %s79 = sphi 0, %s63
    %s85 = sphi 0, %s87
    %s88 = sphi 0, %s85
    %s89 = sphi 0, %s88
    %s105 = sphi 0, %s89
  $region4: #{_lambda_.76} parent=0 // loop_header_branch
    %12 = sbr.rel (%p10) target = $region8
  $region5: #{_lambda_.76} parent=0 // loop_body
    %s14 = ssub.s32 %s9, 1
    %s15 = ssub.s32 %s9, 2
    %s22 = sadd.s32 1, %s17
    %p23 = scmp.ge.s32.totalorder %s22, 1
    %s24 = scalar_select %p23, 0, %s22
    %s25 = sadd.s32 1, %s16
    %s26 = scalar_select %p23, %s25, %s16
    %p27 = scmp.ge.s32.totalorder %s26, 4
    %s28 = scalar_select %p27, 0, %s26
    %s29 = ssub.s32 %s16, %s28
    %s30 = ssub.s32 %s17, %s24
    %s31 = sor.u32 %s29, %s30
    %p32 = scmp.eq.s32.totalorder %s31, 0
    %s34 = sadd.s32 %s33, 1
    %s35 = scalar_select %p32, %s33, %s34
    %p38 = pneg %p32
    %p39 = scmp.eq.s32.totalorder %s9, 3
    %p40 = por %p38, %p39
    %p41 = scmp.ne.s32.totalorder %s33, %s36
    %p42 = scmp.eq.s32.totalorder %s9, 0
    %p43 = por %p41, %p42
    %p44 = scmp.ne.s32.totalorder %s33, %s36
    %p45 = scmp.eq.s32.totalorder %s14, 3
    %p46 = por %p44, %p45
    %p47 = scmp.ne.s32.totalorder %s36, %s37
    %p48 = scmp.eq.s32.totalorder %s14, 0
    %p49 = por %p47, %p48
    %p50 = scmp.ne.s32.totalorder %s36, %s37
    %p51 = scmp.eq.s32.totalorder %s15, 3
    %p52 = por %p50, %p51
    %p54 = scmp.ne.s32.totalorder %s37, %s53
    %p55 = scmp.eq.s32.totalorder %s15, 0
    %p56 = por %p54, %p55
    %s57 = ssub.s32 %s16, %s28
    %p58 = scmp.eq.s32.totalorder %s57, 0
    %s60 = sadd.s32 %s59, 1
    %s61 = scalar_select %p58, %s59, %s60
    %p64 = pneg %p58
    %p65 = scmp.eq.s32.totalorder %s9, 3
    %p66 = por %p64, %p65
    %p67 = scmp.ne.s32.totalorder %s59, %s62
    %p68 = scmp.eq.s32.totalorder %s9, 0
    %p69 = por %p67, %p68
    %p70 = scmp.ne.s32.totalorder %s59, %s62
    %p71 = scmp.eq.s32.totalorder %s14, 3
    %p72 = por %p70, %p71
    %p73 = scmp.ne.s32.totalorder %s62, %s63
    %p74 = scmp.eq.s32.totalorder %s14, 0
    %p75 = por %p73, %p74
    %p76 = scmp.ne.s32.totalorder %s62, %s63
    %p77 = scmp.eq.s32.totalorder %s15, 3
    %p78 = por %p76, %p77
    %p80 = scmp.ne.s32.totalorder %s63, %s79
    %p81 = scmp.eq.s32.totalorder %s15, 0
    %p82 = por %p80, %p81
    %s83 = ssub.s32 %s16, %s28
    %p84 = scmp.eq.s32.totalorder %s83, 0
    %s86 = sadd.s32 %s85, 1
    %s87 = scalar_select %p84, %s85, %s86
    %p90 = pneg %p84
    %p91 = scmp.eq.s32.totalorder %s9, 3
    %p92 = por %p90, %p91
    %p93 = scmp.ne.s32.totalorder %s85, %s88
    %p94 = scmp.eq.s32.totalorder %s9, 0
    %p95 = por %p93, %p94
    %p96 = scmp.ne.s32.totalorder %s85, %s88
    %p97 = scmp.eq.s32.totalorder %s14, 3
    %p98 = por %p96, %p97
    %p99 = scmp.ne.s32.totalorder %s88, %s89
    %p100 = scmp.eq.s32.totalorder %s14, 0
    %p101 = por %p99, %p100
    %p102 = scmp.ne.s32.totalorder %s88, %s89
    %p103 = scmp.eq.s32.totalorder %s15, 3
    %p104 = por %p102, %p103
    %p106 = scmp.ne.s32.totalorder %s89, %s105
    %p107 = scmp.eq.s32.totalorder %s15, 0
    %p108 = por %p106, %p107
    %p109 = scmp.le.s32.totalorder 1, %s9
    %p110 = scmp.lt.s32.totalorder %s9, 5
    %p111 = pnand %p109, %p110
    %p112 = pneg %p111
    // Predicated region
    $region9: #{_lambda_.76} parent=5 // pred_check
      _
    $region10: #{_lambda_.76} parent=5 // pred_check_branch
      %114 = sbr.rel (%p111) target = $region12
    $region11: #{_lambda_.76} parent=5 // pred_region
      %s115 = ssub.s32 %s9, 1
    $region12: #{_lambda_.76} parent=5 // pred_fallthru
      _
    %p116 = scmp.lt.s32.totalorder %s9, 4
    // Predicated region
    $region13: #{_lambda_.76} parent=5 // pred_check
      %p117 = pneg %p116
    $region14: #{_lambda_.76} parent=5 // pred_check_branch
      %119 = sbr.rel (%p117) target = $region16
    $region15: #{_lambda_.76} parent=5 // pred_region
      // Predicated region
      $region17: #{_lambda_.76} parent=15 // pred_check
        %p120 = pneg %p43
      $region18: #{_lambda_.76} parent=15 // pred_check_branch
        %122 = sbr.rel (%p120) target = $region20
      $region19: #{_lambda_.76} parent=15 // pred_region
        %p123 = scmp.lt.s32.totalorder %s16, 3
        %s124 = scalar_select %p123, %s16, 3
        %p125 = scmp.lt.s32.totalorder %s17, 0
        %s126 = scalar_select %p125, %s17, 0
        %s127 = sadd.s32 %s126, %s124
        %s128 = smul.addr %s127, 8
        %s129 = scalar_lea.vmem %s0, %s128
      $region20: #{_lambda_.76} parent=15 // pred_fallthru
        _
    $region16: #{_lambda_.76} parent=5 // pred_fallthru
      _
    %p130 = scmp.le.s32.totalorder 1, %s9
    %p131 = scmp.lt.s32.totalorder %s9, 5
    %p132 = pnand %p130, %p131
    %p133 = pneg %p132
    // Predicated region
    $region21: #{_lambda_.76} parent=5 // pred_check
      _
    $region22: #{_lambda_.76} parent=5 // pred_check_branch
      %135 = sbr.rel (%p132) target = $region24
    $region23: #{_lambda_.76} parent=5 // pred_region
      %s136 = ssub.s32 %s9, 1
      %p137 = scmp.lt.s32.totalorder %s18, 3
      %s138 = scalar_select %p137, %s18, 3
      %p139 = scmp.lt.s32.totalorder %s19, 0
      %s140 = scalar_select %p139, %s19, 0
      %s141 = sadd.s32 %s140, %s138
      %s142 = smul.addr %s141, 8
      %s143 = scalar_lea.vmem %s0, %s142
      %p144 = pneg %p49
      %p145 = pneg %p46
      %p146 = pneg %p75
      %p147 = pneg %p72
      %p148 = scmp.lt.s32.totalorder %s18, 3
      %s149 = scalar_select %p148, %s18, 3
      %s150 = smul.addr %s149, 8
      %s151 = scalar_lea.vmem %s1, %s150
      %p152 = pneg %p101
      %p153 = pneg %p98
      %p154 = scmp.lt.s32.totalorder %s18, 3
      %s155 = scalar_select %p154, %s18, 3
      %s156 = smul.addr %s155, 8
      %s157 = scalar_lea.vmem %s2, %s156
      %p158 = scmp.lt.s32.totalorder %s18, 3
      %s159 = scalar_select %p158, %s18, 3
      %p160 = scmp.lt.s32.totalorder %s19, 0
      %s161 = scalar_select %p160, %s19, 0
      %s162 = sadd.s32 %s161, %s159
      %s163 = smul.addr %s162, 8
      %s164 = scalar_lea.vmem %s0, %s163
      %p165 = scmp.lt.s32.totalorder %s18, 3
      %s166 = scalar_select %p165, %s18, 3
      %s167 = smul.addr %s166, 8
      %s168 = scalar_lea.vmem %s1, %s167
      %p169 = scmp.lt.s32.totalorder %s18, 3
      %s170 = scalar_select %p169, %s18, 3
      %s171 = smul.addr %s170, 8
      %s172 = scalar_lea.vmem %s2, %s171
      %p173 = scmp.eq.s32.totalorder %s19, 0
      // Predicated region
      $region25: #{_lambda_.76} parent=23 // pred_check
        %p174 = pneg %p173
      $region26: #{_lambda_.76} parent=23 // pred_check_branch
        %176 = sbr.rel (%p174) target = $region28
      $region27: #{_lambda_.76} parent=23 // pred_region
        %vm177 = vcmask 7168
        %178 = vst.msk [vmem:[#allocation2] sm:$0xff] %vm177, 0.0
        %179 = vst.msk [vmem:[#allocation3] sm:$0xff] %vm177, 0.0
      $region28: #{_lambda_.76} parent=23 // pred_fallthru
        _
      %v180 = vld [vmem:[%s164] sm:$0xff]
      %v181 = vld [vmem:[#allocation2] sm:$0xff]
      %182 = vadd.xlane.f32.xlu0 %v180
      %v183 = vpop.xlane.xlu0 %182
      %v184 = vadd.f32 %v181, %v183
      %vm185 = vcmask 7168
      %186 = vst.msk [vmem:[#allocation2] sm:$0xff] %vm185, %v184
      %v187 = vld [vmem:[#allocation3] sm:$0xff]
      %v188 = vmul.f32 %v180, %v180
      %189 = vadd.xlane.f32.xlu0 %v188
      %v190 = vpop.xlane.xlu0 %189
      %v191 = vadd.f32 %v187, %v190
      %192 = vst.msk [vmem:[#allocation3] sm:$0xff] %vm185, %v191
      // Predicated region
      $region29: #{_lambda_.76} parent=23 // pred_check
        %p193 = pneg %p173
      $region30: #{_lambda_.76} parent=23 // pred_check_branch
        %195 = sbr.rel (%p193) target = $region32
      $region31: #{_lambda_.76} parent=23 // pred_region
        %v196 = vld [vmem:[#allocation2] sm:$0xff]
        %v197 = vrcp.pop 16.0
        %v198 = vmul.f32 %v196, %v197
        %v199 = vld [vmem:[#allocation3] sm:$0xff]
        %v200 = vmul.f32 %v199, %v197
        %v201 = vmul.f32 %v198, %v198
        %v202 = vsub.f32 %v200, %v201
        %203 = vst.msk [vmem:[%s168] sm:$0xff] %vm185, %v198
        %v204 = vmax.f32 %v202, 0.0
        %v205 = vadd.f32 %v204, 1e-05
        %v206 = vrsqrt.pop %v205
        %207 = vst.msk [vmem:[%s172] sm:$0xff] %vm185, %v206
      $region32: #{_lambda_.76} parent=23 // pred_fallthru
        _
      %p208 = scmp.lt.s32.totalorder %s18, 3
      %s209 = scalar_select %p208, %s18, 3
      %s210 = smul.addr %s209, 8
      %s211 = scalar_lea.vmem %s1, %s210
      %p212 = scmp.lt.s32.totalorder %s18, 3
      %s213 = scalar_select %p212, %s18, 3
      %s214 = smul.addr %s213, 8
      %s215 = scalar_lea.vmem %s2, %s214
      // Predicated region
      $region33: #{_lambda_.76} parent=23 // pred_check
        %p216 = pneg %p72
      $region34: #{_lambda_.76} parent=23 // pred_check_branch
        %218 = sbr.rel (%p216) target = $region36
      $region35: #{_lambda_.76} parent=23 // pred_region
        _
      $region36: #{_lambda_.76} parent=23 // pred_fallthru
        _
      // Predicated region
      $region37: #{_lambda_.76} parent=23 // pred_check
        %p219 = pneg %p98
      $region38: #{_lambda_.76} parent=23 // pred_check_branch
        %221 = sbr.rel (%p219) target = $region40
      $region39: #{_lambda_.76} parent=23 // pred_region
        _
      $region40: #{_lambda_.76} parent=23 // pred_fallthru
        _
    $region24: #{_lambda_.76} parent=5 // pred_fallthru
      _
    %p222 = scmp.le.s32.totalorder 2, %s9
    // Predicated region
    $region41: #{_lambda_.76} parent=5 // pred_check
      %p223 = pneg %p222
    $region42: #{_lambda_.76} parent=5 // pred_check_branch
      %225 = sbr.rel (%p223) target = $region44
    $region43: #{_lambda_.76} parent=5 // pred_region
      %s226 = ssub.s32 %s9, 2
      // Predicated region
      $region45: #{_lambda_.76} parent=43 // pred_check
        %p227 = pneg %p78
      $region46: #{_lambda_.76} parent=43 // pred_check_branch
        %229 = sbr.rel (%p227) target = $region48
      $region47: #{_lambda_.76} parent=43 // pred_region
        %p230 = scmp.lt.s32.totalorder %s20, 3
        %s231 = scalar_select %p230, %s20, 3
        %s232 = smul.addr %s231, 8
        %s233 = scalar_lea.vmem %s1, %s232
      $region48: #{_lambda_.76} parent=43 // pred_fallthru
        _
      // Predicated region
      $region49: #{_lambda_.76} parent=43 // pred_check
        %p234 = pneg %p104
      $region50: #{_lambda_.76} parent=43 // pred_check_branch
        %236 = sbr.rel (%p234) target = $region52
      $region51: #{_lambda_.76} parent=43 // pred_region
        %p237 = scmp.lt.s32.totalorder %s20, 3
        %s238 = scalar_select %p237, %s20, 3
        %s239 = smul.addr %s238, 8
        %s240 = scalar_lea.vmem %s2, %s239
      $region52: #{_lambda_.76} parent=43 // pred_fallthru
        _
    $region44: #{_lambda_.76} parent=5 // pred_fallthru
      _
  $region6: #{_lambda_.76} parent=0 // loop_footer
    %s13 = sadd.s32 1, %s9
  $region7: #{_lambda_.76} parent=0 // loop_footer_branch
    %8 = sbr.rel target = $region3
  $region8: #{_lambda_.76} parent=0 // loop_exit
    _

// kernel: _lambda_.77
$region0: #{_lambda_.77}
  #allocation0 [shape = 'u32[]', space=smem, size = 0x4, offset = 0x4, fixed_abs, tag = 'smem constant byte address 0x4 - core index']
  #allocation1 [shape = 'u32[144,128]{1,0:T(1,128)}', space=vmem, size = 0x12000, scoped, tag = 'internal scratch']
  %s0 = inlined_call_operand.vmem [shape: f32[32,128], index: 0, kind: input, shape index: {}]
  %s1 = inlined_call_operand.vmem [shape: f32[32,1], index: 1, kind: input, shape index: {}]
  %s2 = inlined_call_operand.vmem [shape: f32[32,1], index: 2, kind: input, shape index: {}]
  %s3 = inlined_call_operand.vmem [shape: f32[32,128], index: 3, kind: output, shape index: {}]
  %s4 = sld [smem:[#allocation0]]
  $region45: #{_lambda_.77} parent=0
    _
  %s6 = ssub.s32 1, %s4
  %s7 = scalar_select 0, %s6, %s4
  loop: start=0, step=1, limit=6
  $region2: #{_lambda_.77} parent=0 // loop_pre_header
    _
  $region3: #{_lambda_.77} parent=0 // loop_header
    %s9 = sphi 0, %s13
    %p10 = scmp.ge.s32.totalorder %s9, 6
    %s16 = sphi 0, %s28
    %s17 = sphi 0, %s24
    %s18 = sphi 0, %s16
    %s19 = sphi 0, %s17
    %s20 = sphi 0, %s18
    %s21 = sphi 0, %s19
    %s33 = sphi 0, %s35
    %s36 = sphi 0, %s33
    %s37 = sphi 0, %s36
    %s53 = sphi 0, %s37
    %s59 = sphi 0, %s61
    %s62 = sphi 0, %s59
    %s63 = sphi 0, %s62
    %s79 = sphi 0, %s63
    %s85 = sphi 0, %s87
    %s88 = sphi 0, %s85
    %s89 = sphi 0, %s88
    %s105 = sphi 0, %s89
    %s113 = sphi 0, %s115
    %s116 = sphi 0, %s113
    %s117 = sphi 0, %s116
    %s133 = sphi 0, %s117
  $region4: #{_lambda_.77} parent=0 // loop_header_branch
    %12 = sbr.rel (%p10) target = $region8
  $region5: #{_lambda_.77} parent=0 // loop_body
    %s14 = ssub.s32 %s9, 1
    %s15 = ssub.s32 %s9, 2
    %s22 = sadd.s32 1, %s17
    %p23 = scmp.ge.s32.totalorder %s22, 1
    %s24 = scalar_select %p23, 0, %s22
    %s25 = sadd.s32 1, %s16
    %s26 = scalar_select %p23, %s25, %s16
    %p27 = scmp.ge.s32.totalorder %s26, 4
    %s28 = scalar_select %p27, 0, %s26
    %s29 = ssub.s32 %s16, %s28
    %s30 = ssub.s32 %s17, %s24
    %s31 = sor.u32 %s29, %s30
    %p32 = scmp.eq.s32.totalorder %s31, 0
    %s34 = sadd.s32 %s33, 1
    %s35 = scalar_select %p32, %s33, %s34
    %p38 = pneg %p32
    %p39 = scmp.eq.s32.totalorder %s9, 3
    %p40 = por %p38, %p39
    %p41 = scmp.ne.s32.totalorder %s33, %s36
    %p42 = scmp.eq.s32.totalorder %s9, 0
    %p43 = por %p41, %p42
    %p44 = scmp.ne.s32.totalorder %s33, %s36
    %p45 = scmp.eq.s32.totalorder %s14, 3
    %p46 = por %p44, %p45
    %p47 = scmp.ne.s32.totalorder %s36, %s37
    %p48 = scmp.eq.s32.totalorder %s14, 0
    %p49 = por %p47, %p48
    %p50 = scmp.ne.s32.totalorder %s36, %s37
    %p51 = scmp.eq.s32.totalorder %s15, 3
    %p52 = por %p50, %p51
    %p54 = scmp.ne.s32.totalorder %s37, %s53
    %p55 = scmp.eq.s32.totalorder %s15, 0
    %p56 = por %p54, %p55
    %s57 = ssub.s32 %s16, %s28
    %p58 = scmp.eq.s32.totalorder %s57, 0
    %s60 = sadd.s32 %s59, 1
    %s61 = scalar_select %p58, %s59, %s60
    %p64 = pneg %p58
    %p65 = scmp.eq.s32.totalorder %s9, 3
    %p66 = por %p64, %p65
    %p67 = scmp.ne.s32.totalorder %s59, %s62
    %p68 = scmp.eq.s32.totalorder %s9, 0
    %p69 = por %p67, %p68
    %p70 = scmp.ne.s32.totalorder %s59, %s62
    %p71 = scmp.eq.s32.totalorder %s14, 3
    %p72 = por %p70, %p71
    %p73 = scmp.ne.s32.totalorder %s62, %s63
    %p74 = scmp.eq.s32.totalorder %s14, 0
    %p75 = por %p73, %p74
    %p76 = scmp.ne.s32.totalorder %s62, %s63
    %p77 = scmp.eq.s32.totalorder %s15, 3
    %p78 = por %p76, %p77
    %p80 = scmp.ne.s32.totalorder %s63, %s79
    %p81 = scmp.eq.s32.totalorder %s15, 0
    %p82 = por %p80, %p81
    %s83 = ssub.s32 %s16, %s28
    %p84 = scmp.eq.s32.totalorder %s83, 0
    %s86 = sadd.s32 %s85, 1
    %s87 = scalar_select %p84, %s85, %s86
    %p90 = pneg %p84
    %p91 = scmp.eq.s32.totalorder %s9, 3
    %p92 = por %p90, %p91
    %p93 = scmp.ne.s32.totalorder %s85, %s88
    %p94 = scmp.eq.s32.totalorder %s9, 0
    %p95 = por %p93, %p94
    %p96 = scmp.ne.s32.totalorder %s85, %s88
    %p97 = scmp.eq.s32.totalorder %s14, 3
    %p98 = por %p96, %p97
    %p99 = scmp.ne.s32.totalorder %s88, %s89
    %p100 = scmp.eq.s32.totalorder %s14, 0
    %p101 = por %p99, %p100
    %p102 = scmp.ne.s32.totalorder %s88, %s89
    %p103 = scmp.eq.s32.totalorder %s15, 3
    %p104 = por %p102, %p103
    %p106 = scmp.ne.s32.totalorder %s89, %s105
    %p107 = scmp.eq.s32.totalorder %s15, 0
    %p108 = por %p106, %p107
    %s109 = ssub.s32 %s16, %s28
    %s110 = ssub.s32 %s17, %s24
    %s111 = sor.u32 %s109, %s110
    %p112 = scmp.eq.s32.totalorder %s111, 0
    %s114 = sadd.s32 %s113, 1
    %s115 = scalar_select %p112, %s113, %s114
    %p118 = pneg %p112
    %p119 = scmp.eq.s32.totalorder %s9, 3
    %p120 = por %p118, %p119
    %p121 = scmp.ne.s32.totalorder %s113, %s116
    %p122 = scmp.eq.s32.totalorder %s9, 0
    %p123 = por %p121, %p122
    %p124 = scmp.ne.s32.totalorder %s113, %s116
    %p125 = scmp.eq.s32.totalorder %s14, 3
    %p126 = por %p124, %p125
    %p127 = scmp.ne.s32.totalorder %s116, %s117
    %p128 = scmp.eq.s32.totalorder %s14, 0
    %p129 = por %p127, %p128
    %p130 = scmp.ne.s32.totalorder %s116, %s117
    %p131 = scmp.eq.s32.totalorder %s15, 3
    %p132 = por %p130, %p131
    %p134 = scmp.ne.s32.totalorder %s117, %s133
    %p135 = scmp.eq.s32.totalorder %s15, 0
    %p136 = por %p134, %p135
    %p137 = scmp.le.s32.totalorder 1, %s9
    %p138 = scmp.lt.s32.totalorder %s9, 5
    %p139 = pnand %p137, %p138
    %p140 = pneg %p139
    // Predicated region
    $region9: #{_lambda_.77} parent=5 // pred_check
      _
    $region10: #{_lambda_.77} parent=5 // pred_check_branch
      %142 = sbr.rel (%p139) target = $region12
    $region11: #{_lambda_.77} parent=5 // pred_region
      %s143 = ssub.s32 %s9, 1
    $region12: #{_lambda_.77} parent=5 // pred_fallthru
      _
    %p144 = scmp.lt.s32.totalorder %s9, 4
    // Predicated region
    $region13: #{_lambda_.77} parent=5 // pred_check
      %p145 = pneg %p144
    $region14: #{_lambda_.77} parent=5 // pred_check_branch
      %147 = sbr.rel (%p145) target = $region16
    $region15: #{_lambda_.77} parent=5 // pred_region
      // Predicated region
      $region17: #{_lambda_.77} parent=15 // pred_check
        %p148 = pneg %p43
      $region18: #{_lambda_.77} parent=15 // pred_check_branch
        %150 = sbr.rel (%p148) target = $region20
      $region19: #{_lambda_.77} parent=15 // pred_region
        %p151 = scmp.lt.s32.totalorder %s16, 3
        %s152 = scalar_select %p151, %s16, 3
        %p153 = scmp.lt.s32.totalorder %s17, 0
        %s154 = scalar_select %p153, %s17, 0
        %s155 = sadd.s32 %s154, %s152
        %s156 = smul.addr %s155, 8
        %s157 = scalar_lea.vmem %s0, %s156
      $region20: #{_lambda_.77} parent=15 // pred_fallthru
        _
      // Predicated region
      $region21: #{_lambda_.77} parent=15 // pred_check
        %p158 = pneg %p69
      $region22: #{_lambda_.77} parent=15 // pred_check_branch
        %160 = sbr.rel (%p158) target = $region24
      $region23: #{_lambda_.77} parent=15 // pred_region
        %p161 = scmp.lt.s32.totalorder %s16, 3
        %s162 = scalar_select %p161, %s16, 3
        %s163 = smul.addr %s162, 8
        %s164 = scalar_lea.vmem %s1, %s163
      $region24: #{_lambda_.77} parent=15 // pred_fallthru
        _
      // Predicated region
      $region25: #{_lambda_.77} parent=15 // pred_check
        %p165 = pneg %p95
      $region26: #{_lambda_.77} parent=15 // pred_check_branch
        %167 = sbr.rel (%p165) target = $region28
      $region27: #{_lambda_.77} parent=15 // pred_region
        %p168 = scmp.lt.s32.totalorder %s16, 3
        %s169 = scalar_select %p168, %s16, 3
        %s170 = smul.addr %s169, 8
        %s171 = scalar_lea.vmem %s2, %s170
      $region28: #{_lambda_.77} parent=15 // pred_fallthru
        _
    $region16: #{_lambda_.77} parent=5 // pred_fallthru
      _
    %p172 = scmp.le.s32.totalorder 1, %s9
    %p173 = scmp.lt.s32.totalorder %s9, 5
    %p174 = pnand %p172, %p173
    %p175 = pneg %p174
    // Predicated region
    $region29: #{_lambda_.77} parent=5 // pred_check
      _
    $region30: #{_lambda_.77} parent=5 // pred_check_branch
      %177 = sbr.rel (%p174) target = $region32
    $region31: #{_lambda_.77} parent=5 // pred_region
      %s178 = ssub.s32 %s9, 1
      %p179 = scmp.lt.s32.totalorder %s18, 3
      %s180 = scalar_select %p179, %s18, 3
      %p181 = scmp.lt.s32.totalorder %s19, 0
      %s182 = scalar_select %p181, %s19, 0
      %s183 = sadd.s32 %s182, %s180
      %s184 = smul.addr %s183, 8
      %s185 = scalar_lea.vmem %s0, %s184
      %p186 = pneg %p49
      %p187 = pneg %p46
      %p188 = scmp.lt.s32.totalorder %s18, 3
      %s189 = scalar_select %p188, %s18, 3
      %s190 = smul.addr %s189, 8
      %s191 = scalar_lea.vmem %s1, %s190
      %p192 = pneg %p75
      %p193 = pneg %p72
      %p194 = scmp.lt.s32.totalorder %s18, 3
      %s195 = scalar_select %p194, %s18, 3
      %s196 = smul.addr %s195, 8
      %s197 = scalar_lea.vmem %s2, %s196
      %p198 = pneg %p101
      %p199 = pneg %p98
      %p200 = pneg %p129
      %p201 = pneg %p126
      %p202 = scmp.lt.s32.totalorder %s18, 3
      %s203 = scalar_select %p202, %s18, 3
      %p204 = scmp.lt.s32.totalorder %s19, 0
      %s205 = scalar_select %p204, %s19, 0
      %s206 = sadd.s32 %s205, %s203
      %s207 = smul.addr %s206, 8
      %s208 = scalar_lea.vmem %s3, %s207
      %p209 = scmp.lt.s32.totalorder %s18, 3
      %s210 = scalar_select %p209, %s18, 3
      %p211 = scmp.lt.s32.totalorder %s19, 0
      %s212 = scalar_select %p211, %s19, 0
      %s213 = sadd.s32 %s212, %s210
      %s214 = smul.addr %s213, 8
      %s215 = scalar_lea.vmem %s0, %s214
      %p216 = scmp.lt.s32.totalorder %s18, 3
      %s217 = scalar_select %p216, %s18, 3
      %s218 = smul.addr %s217, 8
      %s219 = scalar_lea.vmem %s1, %s218
      %p220 = scmp.lt.s32.totalorder %s18, 3
      %s221 = scalar_select %p220, %s18, 3
      %s222 = smul.addr %s221, 8
      %s223 = scalar_lea.vmem %s2, %s222
      %p224 = scmp.lt.s32.totalorder %s18, 3
      %s225 = scalar_select %p224, %s18, 3
      %p226 = scmp.lt.s32.totalorder %s19, 0
      %s227 = scalar_select %p226, %s19, 0
      %s228 = sadd.s32 %s227, %s225
      %s229 = smul.addr %s228, 8
      %s230 = scalar_lea.vmem %s3, %s229
      %v231 = vld [vmem:[%s215] sm:$0xff]
      %v232 = vld [vmem:[%s219] sm:$0xff]
      %234 = vset.pattern.permute.xlu0 0
      %235 = vperm.xlu0 %234, %v232
      %v236 = vpop.permute.xlu0 %235
      %v238 = vsub.f32 %v231, %v236
      %v239 = vld [vmem:[%s223] sm:$0xff]
      %241 = vset.pattern.permute.xlu0 0
      %242 = vperm.xlu0 %241, %v239
      %v243 = vpop.permute.xlu0 %242
      %v245 = vmul.f32 %v238, %v243
      %246 = vst [vmem:[%s230] sm:$0xff] %v245
      %p247 = scmp.lt.s32.totalorder %s18, 3
      %s248 = scalar_select %p247, %s18, 3
      %p249 = scmp.lt.s32.totalorder %s19, 0
      %s250 = scalar_select %p249, %s19, 0
      %s251 = sadd.s32 %s250, %s248
      %s252 = smul.addr %s251, 8
      %s253 = scalar_lea.vmem %s3, %s252
      // Predicated region
      $region33: #{_lambda_.77} parent=31 // pred_check
        %p254 = pneg %p126
      $region34: #{_lambda_.77} parent=31 // pred_check_branch
        %256 = sbr.rel (%p254) target = $region36
      $region35: #{_lambda_.77} parent=31 // pred_region
        _
      $region36: #{_lambda_.77} parent=31 // pred_fallthru
        _
    $region32: #{_lambda_.77} parent=5 // pred_fallthru
      _
    %p257 = scmp.le.s32.totalorder 2, %s9
    // Predicated region
    $region37: #{_lambda_.77} parent=5 // pred_check
      %p258 = pneg %p257
    $region38: #{_lambda_.77} parent=5 // pred_check_branch
      %260 = sbr.rel (%p258) target = $region40
    $region39: #{_lambda_.77} parent=5 // pred_region
      %s261 = ssub.s32 %s9, 2
      // Predicated region
      $region41: #{_lambda_.77} parent=39 // pred_check
        %p262 = pneg %p132
      $region42: #{_lambda_.77} parent=39 // pred_check_branch
        %264 = sbr.rel (%p262) target = $region44
      $region43: #{_lambda_.77} parent=39 // pred_region
        %p265 = scmp.lt.s32.totalorder %s20, 3
        %s266 = scalar_select %p265, %s20, 3
        %p267 = scmp.lt.s32.totalorder %s21, 0
        %s268 = scalar_select %p267, %s21, 0
        %s269 = sadd.s32 %s268, %s266
        %s270 = smul.addr %s269, 8
        %s271 = scalar_lea.vmem %s3, %s270
      $region44: #{_lambda_.77} parent=39 // pred_fallthru
        _
    $region40: #{_lambda_.77} parent=5 // pred_fallthru
      _
  $region6: #{_lambda_.77} parent=0 // loop_footer
    %s13 = sadd.s32 1, %s9
  $region7: #{_lambda_.77} parent=0 // loop_footer_branch
    %8 = sbr.rel target = $region3
  $region8: #{_lambda_.77} parent=0 // loop_exit
    _

// kernel: _lambda_.89
$region0: #{_lambda_.89}
  #allocation0 [shape = 'u32[]', space=smem, size = 0x4, offset = 0x4, fixed_abs, tag = 'smem constant byte address 0x4 - core index']
  #allocation1 [shape = 'u32[144,128]{1,0:T(1,128)}', space=vmem, size = 0x12000, scoped, tag = 'internal scratch']
  #allocation2 [shape = 'f32[8,1]{1,0:T(8,128)}', space=vmem, size = 0x1000, scoped, tag = 'scratch operand']
  #allocation3 [shape = 'f32[8,1]{1,0:T(8,128)}', space=vmem, size = 0x1000, scoped, tag = 'scratch operand']
  %s0 = inlined_call_operand.vmem [shape: f32[16,128], index: 0, kind: input, shape index: {}]
  %s1 = inlined_call_operand.vmem [shape: f32[16,1], index: 1, kind: output, shape index: {0}]
  %s2 = inlined_call_operand.vmem [shape: f32[16,1], index: 2, kind: output, shape index: {1}]
  %3 = xla_tuple %s1, %s2
  %s4 = sld [smem:[#allocation0]]
  $region53: #{_lambda_.89} parent=0
    _
  %s6 = ssub.s32 1, %s4
  %s7 = scalar_select 0, %s6, %s4
  loop: start=0, step=1, limit=4
  $region2: #{_lambda_.89} parent=0 // loop_pre_header
    _
  $region3: #{_lambda_.89} parent=0 // loop_header
    %s9 = sphi 0, %s13
    %p10 = scmp.ge.s32.totalorder %s9, 4
    %s16 = sphi 0, %s28
    %s17 = sphi 0, %s24
    %s18 = sphi 0, %s16
    %s19 = sphi 0, %s17
    %s20 = sphi 0, %s18
    %s21 = sphi 0, %s19
    %s33 = sphi 0, %s35
    %s36 = sphi 0, %s33
    %s37 = sphi 0, %s36
    %s53 = sphi 0, %s37
    %s59 = sphi 0, %s61
    %s62 = sphi 0, %s59
    %s63 = sphi 0, %s62
    %s79 = sphi 0, %s63
    %s85 = sphi 0, %s87
    %s88 = sphi 0, %s85
    %s89 = sphi 0, %s88
    %s105 = sphi 0, %s89
  $region4: #{_lambda_.89} parent=0 // loop_header_branch
    %12 = sbr.rel (%p10) target = $region8
  $region5: #{_lambda_.89} parent=0 // loop_body
    %s14 = ssub.s32 %s9, 1
    %s15 = ssub.s32 %s9, 2
    %s22 = sadd.s32 1, %s17
    %p23 = scmp.ge.s32.totalorder %s22, 1
    %s24 = scalar_select %p23, 0, %s22
    %s25 = sadd.s32 1, %s16
    %s26 = scalar_select %p23, %s25, %s16
    %p27 = scmp.ge.s32.totalorder %s26, 2
    %s28 = scalar_select %p27, 0, %s26
    %s29 = ssub.s32 %s16, %s28
    %s30 = ssub.s32 %s17, %s24
    %s31 = sor.u32 %s29, %s30
    %p32 = scmp.eq.s32.totalorder %s31, 0
    %s34 = sadd.s32 %s33, 1
    %s35 = scalar_select %p32, %s33, %s34
    %p38 = pneg %p32
    %p39 = scmp.eq.s32.totalorder %s9, 1
    %p40 = por %p38, %p39
    %p41 = scmp.ne.s32.totalorder %s33, %s36
    %p42 = scmp.eq.s32.totalorder %s9, 0
    %p43 = por %p41, %p42
    %p44 = scmp.ne.s32.totalorder %s33, %s36
    %p45 = scmp.eq.s32.totalorder %s14, 1
    %p46 = por %p44, %p45
    %p47 = scmp.ne.s32.totalorder %s36, %s37
    %p48 = scmp.eq.s32.totalorder %s14, 0
    %p49 = por %p47, %p48
    %p50 = scmp.ne.s32.totalorder %s36, %s37
    %p51 = scmp.eq.s32.totalorder %s15, 1
    %p52 = por %p50, %p51
    %p54 = scmp.ne.s32.totalorder %s37, %s53
    %p55 = scmp.eq.s32.totalorder %s15, 0
    %p56 = por %p54, %p55
    %s57 = ssub.s32 %s16, %s28
    %p58 = scmp.eq.s32.totalorder %s57, 0
    %s60 = sadd.s32 %s59, 1
    %s61 = scalar_select %p58, %s59, %s60
    %p64 = pneg %p58
    %p65 = scmp.eq.s32.totalorder %s9, 1
    %p66 = por %p64, %p65
    %p67 = scmp.ne.s32.totalorder %s59, %s62
    %p68 = scmp.eq.s32.totalorder %s9, 0
    %p69 = por %p67, %p68
    %p70 = scmp.ne.s32.totalorder %s59, %s62
    %p71 = scmp.eq.s32.totalorder %s14, 1
    %p72 = por %p70, %p71
    %p73 = scmp.ne.s32.totalorder %s62, %s63
    %p74 = scmp.eq.s32.totalorder %s14, 0
    %p75 = por %p73, %p74
    %p76 = scmp.ne.s32.totalorder %s62, %s63
    %p77 = scmp.eq.s32.totalorder %s15, 1
    %p78 = por %p76, %p77
    %p80 = scmp.ne.s32.totalorder %s63, %s79
    %p81 = scmp.eq.s32.totalorder %s15, 0
    %p82 = por %p80, %p81
    %s83 = ssub.s32 %s16, %s28
    %p84 = scmp.eq.s32.totalorder %s83, 0
    %s86 = sadd.s32 %s85, 1
    %s87 = scalar_select %p84, %s85, %s86
    %p90 = pneg %p84
    %p91 = scmp.eq.s32.totalorder %s9, 1
    %p92 = por %p90, %p91
    %p93 = scmp.ne.s32.totalorder %s85, %s88
    %p94 = scmp.eq.s32.totalorder %s9, 0
    %p95 = por %p93, %p94
    %p96 = scmp.ne.s32.totalorder %s85, %s88
    %p97 = scmp.eq.s32.totalorder %s14, 1
    %p98 = por %p96, %p97
    %p99 = scmp.ne.s32.totalorder %s88, %s89
    %p100 = scmp.eq.s32.totalorder %s14, 0
    %p101 = por %p99, %p100
    %p102 = scmp.ne.s32.totalorder %s88, %s89
    %p103 = scmp.eq.s32.totalorder %s15, 1
    %p104 = por %p102, %p103
    %p106 = scmp.ne.s32.totalorder %s89, %s105
    %p107 = scmp.eq.s32.totalorder %s15, 0
    %p108 = por %p106, %p107
    %p109 = scmp.le.s32.totalorder 1, %s9
    %p110 = scmp.lt.s32.totalorder %s9, 3
    %p111 = pnand %p109, %p110
    %p112 = pneg %p111
    // Predicated region
    $region9: #{_lambda_.89} parent=5 // pred_check
      _
    $region10: #{_lambda_.89} parent=5 // pred_check_branch
      %114 = sbr.rel (%p111) target = $region12
    $region11: #{_lambda_.89} parent=5 // pred_region
      %s115 = ssub.s32 %s9, 1
    $region12: #{_lambda_.89} parent=5 // pred_fallthru
      _
    %p116 = scmp.lt.s32.totalorder %s9, 2
    // Predicated region
    $region13: #{_lambda_.89} parent=5 // pred_check
      %p117 = pneg %p116
    $region14: #{_lambda_.89} parent=5 // pred_check_branch
      %119 = sbr.rel (%p117) target = $region16
    $region15: #{_lambda_.89} parent=5 // pred_region
      // Predicated region
      $region17: #{_lambda_.89} parent=15 // pred_check
        %p120 = pneg %p43
      $region18: #{_lambda_.89} parent=15 // pred_check_branch
        %122 = sbr.rel (%p120) target = $region20
      $region19: #{_lambda_.89} parent=15 // pred_region
        %p123 = scmp.lt.s32.totalorder %s16, 1
        %s124 = scalar_select %p123, %s16, 1
        %p125 = scmp.lt.s32.totalorder %s17, 0
        %s126 = scalar_select %p125, %s17, 0
        %s127 = sadd.s32 %s126, %s124
        %s128 = smul.addr %s127, 8
        %s129 = scalar_lea.vmem %s0, %s128
      $region20: #{_lambda_.89} parent=15 // pred_fallthru
        _
    $region16: #{_lambda_.89} parent=5 // pred_fallthru
      _
    %p130 = scmp.le.s32.totalorder 1, %s9
    %p131 = scmp.lt.s32.totalorder %s9, 3
    %p132 = pnand %p130, %p131
    %p133 = pneg %p132
    // Predicated region
    $region21: #{_lambda_.89} parent=5 // pred_check
      _
    $region22: #{_lambda_.89} parent=5 // pred_check_branch
      %135 = sbr.rel (%p132) target = $region24
    $region23: #{_lambda_.89} parent=5 // pred_region
      %s136 = ssub.s32 %s9, 1
      %p137 = scmp.lt.s32.totalorder %s18, 1
      %s138 = scalar_select %p137, %s18, 1
      %p139 = scmp.lt.s32.totalorder %s19, 0
      %s140 = scalar_select %p139, %s19, 0
      %s141 = sadd.s32 %s140, %s138
      %s142 = smul.addr %s141, 8
      %s143 = scalar_lea.vmem %s0, %s142
      %p144 = pneg %p49
      %p145 = pneg %p46
      %p146 = pneg %p75
      %p147 = pneg %p72
      %p148 = scmp.lt.s32.totalorder %s18, 1
      %s149 = scalar_select %p148, %s18, 1
      %s150 = smul.addr %s149, 8
      %s151 = scalar_lea.vmem %s1, %s150
      %p152 = pneg %p101
      %p153 = pneg %p98
      %p154 = scmp.lt.s32.totalorder %s18, 1
      %s155 = scalar_select %p154, %s18, 1
      %s156 = smul.addr %s155, 8
      %s157 = scalar_lea.vmem %s2, %s156
      %p158 = scmp.lt.s32.totalorder %s18, 1
      %s159 = scalar_select %p158, %s18, 1
      %p160 = scmp.lt.s32.totalorder %s19, 0
      %s161 = scalar_select %p160, %s19, 0
      %s162 = sadd.s32 %s161, %s159
      %s163 = smul.addr %s162, 8
      %s164 = scalar_lea.vmem %s0, %s163
      %p165 = scmp.lt.s32.totalorder %s18, 1
      %s166 = scalar_select %p165, %s18, 1
      %s167 = smul.addr %s166, 8
      %s168 = scalar_lea.vmem %s1, %s167
      %p169 = scmp.lt.s32.totalorder %s18, 1
      %s170 = scalar_select %p169, %s18, 1
      %s171 = smul.addr %s170, 8
      %s172 = scalar_lea.vmem %s2, %s171
      %p173 = scmp.eq.s32.totalorder %s19, 0
      // Predicated region
      $region25: #{_lambda_.89} parent=23 // pred_check
        %p174 = pneg %p173
      $region26: #{_lambda_.89} parent=23 // pred_check_branch
        %176 = sbr.rel (%p174) target = $region28
      $region27: #{_lambda_.89} parent=23 // pred_region
        %vm177 = vcmask 7168
        %178 = vst.msk [vmem:[#allocation2] sm:$0xff] %vm177, 0.0
        %179 = vst.msk [vmem:[#allocation3] sm:$0xff] %vm177, 0.0
      $region28: #{_lambda_.89} parent=23 // pred_fallthru
        _
      %v180 = vld [vmem:[%s164] sm:$0xff]
      %v181 = vld [vmem:[#allocation2] sm:$0xff]
      %182 = vadd.xlane.f32.xlu0 %v180
      %v183 = vpop.xlane.xlu0 %182
      %v184 = vadd.f32 %v181, %v183
      %vm185 = vcmask 7168
      %186 = vst.msk [vmem:[#allocation2] sm:$0xff] %vm185, %v184
      %v187 = vld [vmem:[#allocation3] sm:$0xff]
      %v188 = vmul.f32 %v180, %v180
      %189 = vadd.xlane.f32.xlu0 %v188
      %v190 = vpop.xlane.xlu0 %189
      %v191 = vadd.f32 %v187, %v190
      %192 = vst.msk [vmem:[#allocation3] sm:$0xff] %vm185, %v191
      // Predicated region
      $region29: #{_lambda_.89} parent=23 // pred_check
        %p193 = pneg %p173
      $region30: #{_lambda_.89} parent=23 // pred_check_branch
        %195 = sbr.rel (%p193) target = $region32
      $region31: #{_lambda_.89} parent=23 // pred_region
        %v196 = vld [vmem:[#allocation2] sm:$0xff]
        %v197 = vrcp.pop 64.0
        %v198 = vmul.f32 %v196, %v197
        %v199 = vld [vmem:[#allocation3] sm:$0xff]
        %v200 = vmul.f32 %v199, %v197
        %v201 = vmul.f32 %v198, %v198
        %v202 = vsub.f32 %v200, %v201
        %203 = vst.msk [vmem:[%s168] sm:$0xff] %vm185, %v198
        %v204 = vmax.f32 %v202, 0.0
        %v205 = vadd.f32 %v204, 1e-05
        %v206 = vrsqrt.pop %v205
        %207 = vst.msk [vmem:[%s172] sm:$0xff] %vm185, %v206
      $region32: #{_lambda_.89} parent=23 // pred_fallthru
        _
      %p208 = scmp.lt.s32.totalorder %s18, 1
      %s209 = scalar_select %p208, %s18, 1
      %s210 = smul.addr %s209, 8
      %s211 = scalar_lea.vmem %s1, %s210
      %p212 = scmp.lt.s32.totalorder %s18, 1
      %s213 = scalar_select %p212, %s18, 1
      %s214 = smul.addr %s213, 8
      %s215 = scalar_lea.vmem %s2, %s214
      // Predicated region
      $region33: #{_lambda_.89} parent=23 // pred_check
        %p216 = pneg %p72
      $region34: #{_lambda_.89} parent=23 // pred_check_branch
        %218 = sbr.rel (%p216) target = $region36
      $region35: #{_lambda_.89} parent=23 // pred_region
        _
      $region36: #{_lambda_.89} parent=23 // pred_fallthru
        _
      // Predicated region
      $region37: #{_lambda_.89} parent=23 // pred_check
        %p219 = pneg %p98
      $region38: #{_lambda_.89} parent=23 // pred_check_branch
        %221 = sbr.rel (%p219) target = $region40
      $region39: #{_lambda_.89} parent=23 // pred_region
        _
      $region40: #{_lambda_.89} parent=23 // pred_fallthru
        _
    $region24: #{_lambda_.89} parent=5 // pred_fallthru
      _
    %p222 = scmp.le.s32.totalorder 2, %s9
    // Predicated region
    $region41: #{_lambda_.89} parent=5 // pred_check
      %p223 = pneg %p222
    $region42: #{_lambda_.89} parent=5 // pred_check_branch
      %225 = sbr.rel (%p223) target = $region44
    $region43: #{_lambda_.89} parent=5 // pred_region
      %s226 = ssub.s32 %s9, 2
      // Predicated region
      $region45: #{_lambda_.89} parent=43 // pred_check
        %p227 = pneg %p78
      $region46: #{_lambda_.89} parent=43 // pred_check_branch
        %229 = sbr.rel (%p227) target = $region48
      $region47: #{_lambda_.89} parent=43 // pred_region
        %p230 = scmp.lt.s32.totalorder %s20, 1
        %s231 = scalar_select %p230, %s20, 1
        %s232 = smul.addr %s231, 8
        %s233 = scalar_lea.vmem %s1, %s232
      $region48: #{_lambda_.89} parent=43 // pred_fallthru
        _
      // Predicated region
      $region49: #{_lambda_.89} parent=43 // pred_check
        %p234 = pneg %p104
      $region50: #{_lambda_.89} parent=43 // pred_check_branch
        %236 = sbr.rel (%p234) target = $region52
      $region51: #{_lambda_.89} parent=43 // pred_region
        %p237 = scmp.lt.s32.totalorder %s20, 1
        %s238 = scalar_select %p237, %s20, 1
        %s239 = smul.addr %s238, 8
        %s240 = scalar_lea.vmem %s2, %s239
      $region52: #{_lambda_.89} parent=43 // pred_fallthru
        _
    $region44: #{_lambda_.89} parent=5 // pred_fallthru
      _
  $region6: #{_lambda_.89} parent=0 // loop_footer
    %s13 = sadd.s32 1, %s9
  $region7: #{_lambda_.89} parent=0 // loop_footer_branch
    %8 = sbr.rel target = $region3
  $region8: #{_lambda_.89} parent=0 // loop_exit
    _

// kernel: custom-call
$region0: #{custom-call}
  %s0 = inlined_call_operand.vmem [shape: f32[2,16,16], index: 0, kind: input, shape index: {}]
  %s1 = inlined_call_operand.vmem [shape: f32[2,16,16], index: 1, kind: input, shape index: {}]
  %s2 = inlined_call_operand.hbm [shape: c64[2,16,16], index: 2, kind: output, shape index: {}]
  %s3 = scalar_lea.hbm %s2, 512
  $region1: #{custom-call} parent=0
    #allocation0 [shape = 's32[1]{0}', space=sflag, size = 0x4, scoped, tag = 'scoped memory for custom-call']
    %4 = vsyncpa [#allocation0], 0
    %s5 = sshll.u32 %s0, 4
    %s6 = int_to_ptr.vmem [resolvable:$true] %s5
    %8 = dma.vmem_to_hbm [thread:$0]  %s6, 512, %s2, [#allocation0]
    %9 = dma.done [#allocation0], 512
    %10 = vsyncpa [#allocation0], 1
  $region2: #{custom-call} parent=0
    #allocation1 [shape = 's32[1]{0}', space=sflag, size = 0x4, scoped, tag = 'scoped memory for custom-call']
    %11 = vsyncpa [#allocation1], 0
    %s12 = sshll.u32 %s1, 4
    %s13 = int_to_ptr.vmem [resolvable:$true] %s12
    %15 = dma.vmem_to_hbm [thread:$0]  %s13, 512, %s3, [#allocation1]
    %16 = dma.done [#allocation1], 512
    %17 = vsyncpa [#allocation1], 1

// kernel: _lambda_.95
$region0: #{_lambda_.95}
  #allocation0 [shape = 'u32[]', space=smem, size = 0x4, offset = 0x4, fixed_abs, tag = 'smem constant byte address 0x4 - core index']
  #allocation1 [shape = 'u32[144,128]{1,0:T(1,128)}', space=vmem, size = 0x12000, scoped, tag = 'internal scratch']
  %s0 = inlined_call_operand.vmem [shape: f32[2,16,16], index: 0, kind: input, shape index: {}]
  %s1 = inlined_call_operand.vmem [shape: f32[2,16,16], index: 1, kind: input, shape index: {}]
  %s2 = inlined_call_operand.vmem [shape: f32[2,16,16], index: 2, kind: input, shape index: {}]
  %s3 = inlined_call_operand.vmem [shape: f32[2,16,16], index: 3, kind: input, shape index: {}]
  %s4 = inlined_call_operand.vmem [shape: f32[2,16,16], index: 4, kind: output, shape index: {0}]
  %s5 = inlined_call_operand.vmem [shape: f32[2,16,16], index: 5, kind: output, shape index: {1}]
  %6 = xla_tuple %s4, %s5
  %s7 = sld [smem:[#allocation0]]
  $region57: #{_lambda_.95} parent=0
    _
  %s9 = ssub.s32 1, %s7
  %s10 = scalar_select 0, %s9, %s7
  loop: start=0, step=1, limit=4
  $region2: #{_lambda_.95} parent=0 // loop_pre_header
    _
  $region3: #{_lambda_.95} parent=0 // loop_header
    %s12 = sphi 0, %s16
    %p13 = scmp.ge.s32.totalorder %s12, 4
    %s19 = sphi 0, %s31
    %s20 = sphi 0, %s27
    %s21 = sphi 0, %s19
    %s22 = sphi 0, %s20
    %s23 = sphi 0, %s21
    %s24 = sphi 0, %s22
    %s36 = sphi 0, %s38
    %s39 = sphi 0, %s36
    %s40 = sphi 0, %s39
    %s56 = sphi 0, %s40
    %s64 = sphi 0, %s66
    %s67 = sphi 0, %s64
    %s68 = sphi 0, %s67
    %s84 = sphi 0, %s68
    %s92 = sphi 0, %s94
    %s95 = sphi 0, %s92
    %s96 = sphi 0, %s95
    %s112 = sphi 0, %s96
    %s120 = sphi 0, %s122
    %s123 = sphi 0, %s120
    %s124 = sphi 0, %s123
    %s140 = sphi 0, %s124
    %s148 = sphi 0, %s150
    %s151 = sphi 0, %s148
    %s152 = sphi 0, %s151
    %s168 = sphi 0, %s152
    %s176 = sphi 0, %s178
    %s179 = sphi 0, %s176
    %s180 = sphi 0, %s179
    %s196 = sphi 0, %s180
  $region4: #{_lambda_.95} parent=0 // loop_header_branch
    %15 = sbr.rel (%p13) target = $region8
  $region5: #{_lambda_.95} parent=0 // loop_body
    %s17 = ssub.s32 %s12, 1
    %s18 = ssub.s32 %s12, 2
    %s25 = sadd.s32 1, %s20
    %p26 = scmp.ge.s32.totalorder %s25, 1
    %s27 = scalar_select %p26, 0, %s25
    %s28 = sadd.s32 1, %s19
    %s29 = scalar_select %p26, %s28, %s19
    %p30 = scmp.ge.s32.totalorder %s29, 2
    %s31 = scalar_select %p30, 0, %s29
    %s32 = ssub.s32 %s19, %s31
    %s33 = ssub.s32 %s20, %s27
    %s34 = sor.u32 %s32, %s33
    %p35 = scmp.eq.s32.totalorder %s34, 0
    %s37 = sadd.s32 %s36, 1
    %s38 = scalar_select %p35, %s36, %s37
    %p41 = pneg %p35
    %p42 = scmp.eq.s32.totalorder %s12, 1
    %p43 = por %p41, %p42
    %p44 = scmp.ne.s32.totalorder %s36, %s39
    %p45 = scmp.eq.s32.totalorder %s12, 0
    %p46 = por %p44, %p45
    %p47 = scmp.ne.s32.totalorder %s36, %s39
    %p48 = scmp.eq.s32.totalorder %s17, 1
    %p49 = por %p47, %p48
    %p50 = scmp.ne.s32.totalorder %s39, %s40
    %p51 = scmp.eq.s32.totalorder %s17, 0
    %p52 = por %p50, %p51
    %p53 = scmp.ne.s32.totalorder %s39, %s40
    %p54 = scmp.eq.s32.totalorder %s18, 1
    %p55 = por %p53, %p54
    %p57 = scmp.ne.s32.totalorder %s40, %s56
    %p58 = scmp.eq.s32.totalorder %s18, 0
    %p59 = por %p57, %p58
    %s60 = ssub.s32 %s19, %s31
    %s61 = ssub.s32 %s20, %s27
    %s62 = sor.u32 %s60, %s61
    %p63 = scmp.eq.s32.totalorder %s62, 0
    %s65 = sadd.s32 %s64, 1
    %s66 = scalar_select %p63, %s64, %s65
    %p69 = pneg %p63
    %p70 = scmp.eq.s32.totalorder %s12, 1
    %p71 = por %p69, %p70
    %p72 = scmp.ne.s32.totalorder %s64, %s67
    %p73 = scmp.eq.s32.totalorder %s12, 0
    %p74 = por %p72, %p73
    %p75 = scmp.ne.s32.totalorder %s64, %s67
    %p76 = scmp.eq.s32.totalorder %s17, 1
    %p77 = por %p75, %p76
    %p78 = scmp.ne.s32.totalorder %s67, %s68
    %p79 = scmp.eq.s32.totalorder %s17, 0
    %p80 = por %p78, %p79
    %p81 = scmp.ne.s32.totalorder %s67, %s68
    %p82 = scmp.eq.s32.totalorder %s18, 1
    %p83 = por %p81, %p82
    %p85 = scmp.ne.s32.totalorder %s68, %s84
    %p86 = scmp.eq.s32.totalorder %s18, 0
    %p87 = por %p85, %p86
    %s88 = ssub.s32 %s19, %s31
    %s89 = ssub.s32 %s20, %s27
    %s90 = sor.u32 %s88, %s89
    %p91 = scmp.eq.s32.totalorder %s90, 0
    %s93 = sadd.s32 %s92, 1
    %s94 = scalar_select %p91, %s92, %s93
    %p97 = pneg %p91
    %p98 = scmp.eq.s32.totalorder %s12, 1
    %p99 = por %p97, %p98
    %p100 = scmp.ne.s32.totalorder %s92, %s95
    %p101 = scmp.eq.s32.totalorder %s12, 0
    %p102 = por %p100, %p101
    %p103 = scmp.ne.s32.totalorder %s92, %s95
    %p104 = scmp.eq.s32.totalorder %s17, 1
    %p105 = por %p103, %p104
    %p106 = scmp.ne.s32.totalorder %s95, %s96
    %p107 = scmp.eq.s32.totalorder %s17, 0
    %p108 = por %p106, %p107
    %p109 = scmp.ne.s32.totalorder %s95, %s96
    %p110 = scmp.eq.s32.totalorder %s18, 1
    %p111 = por %p109, %p110
    %p113 = scmp.ne.s32.totalorder %s96, %s112
    %p114 = scmp.eq.s32.totalorder %s18, 0
    %p115 = por %p113, %p114
    %s116 = ssub.s32 %s19, %s31
    %s117 = ssub.s32 %s20, %s27
    %s118 = sor.u32 %s116, %s117
    %p119 = scmp.eq.s32.totalorder %s118, 0
    %s121 = sadd.s32 %s120, 1
    %s122 = scalar_select %p119, %s120, %s121
    %p125 = pneg %p119
    %p126 = scmp.eq.s32.totalorder %s12, 1
    %p127 = por %p125, %p126
    %p128 = scmp.ne.s32.totalorder %s120, %s123
    %p129 = scmp.eq.s32.totalorder %s12, 0
    %p130 = por %p128, %p129
    %p131 = scmp.ne.s32.totalorder %s120, %s123
    %p132 = scmp.eq.s32.totalorder %s17, 1
    %p133 = por %p131, %p132
    %p134 = scmp.ne.s32.totalorder %s123, %s124
    %p135 = scmp.eq.s32.totalorder %s17, 0
    %p136 = por %p134, %p135
    %p137 = scmp.ne.s32.totalorder %s123, %s124
    %p138 = scmp.eq.s32.totalorder %s18, 1
    %p139 = por %p137, %p138
    %p141 = scmp.ne.s32.totalorder %s124, %s140
    %p142 = scmp.eq.s32.totalorder %s18, 0
    %p143 = por %p141, %p142
    %s144 = ssub.s32 %s19, %s31
    %s145 = ssub.s32 %s20, %s27
    %s146 = sor.u32 %s144, %s145
    %p147 = scmp.eq.s32.totalorder %s146, 0
    %s149 = sadd.s32 %s148, 1
    %s150 = scalar_select %p147, %s148, %s149
    %p153 = pneg %p147
    %p154 = scmp.eq.s32.totalorder %s12, 1
    %p155 = por %p153, %p154
    %p156 = scmp.ne.s32.totalorder %s148, %s151
    %p157 = scmp.eq.s32.totalorder %s12, 0
    %p158 = por %p156, %p157
    %p159 = scmp.ne.s32.totalorder %s148, %s151
    %p160 = scmp.eq.s32.totalorder %s17, 1
    %p161 = por %p159, %p160
    %p162 = scmp.ne.s32.totalorder %s151, %s152
    %p163 = scmp.eq.s32.totalorder %s17, 0
    %p164 = por %p162, %p163
    %p165 = scmp.ne.s32.totalorder %s151, %s152
    %p166 = scmp.eq.s32.totalorder %s18, 1
    %p167 = por %p165, %p166
    %p169 = scmp.ne.s32.totalorder %s152, %s168
    %p170 = scmp.eq.s32.totalorder %s18, 0
    %p171 = por %p169, %p170
    %s172 = ssub.s32 %s19, %s31
    %s173 = ssub.s32 %s20, %s27
    %s174 = sor.u32 %s172, %s173
    %p175 = scmp.eq.s32.totalorder %s174, 0
    %s177 = sadd.s32 %s176, 1
    %s178 = scalar_select %p175, %s176, %s177
    %p181 = pneg %p175
    %p182 = scmp.eq.s32.totalorder %s12, 1
    %p183 = por %p181, %p182
    %p184 = scmp.ne.s32.totalorder %s176, %s179
    %p185 = scmp.eq.s32.totalorder %s12, 0
    %p186 = por %p184, %p185
    %p187 = scmp.ne.s32.totalorder %s176, %s179
    %p188 = scmp.eq.s32.totalorder %s17, 1
    %p189 = por %p187, %p188
    %p190 = scmp.ne.s32.totalorder %s179, %s180
    %p191 = scmp.eq.s32.totalorder %s17, 0
    %p192 = por %p190, %p191
    %p193 = scmp.ne.s32.totalorder %s179, %s180
    %p194 = scmp.eq.s32.totalorder %s18, 1
    %p195 = por %p193, %p194
    %p197 = scmp.ne.s32.totalorder %s180, %s196
    %p198 = scmp.eq.s32.totalorder %s18, 0
    %p199 = por %p197, %p198
    %p200 = scmp.le.s32.totalorder 1, %s12
    %p201 = scmp.lt.s32.totalorder %s12, 3
    %p202 = pnand %p200, %p201
    %p203 = pneg %p202
    // Predicated region
    $region9: #{_lambda_.95} parent=5 // pred_check
      _
    $region10: #{_lambda_.95} parent=5 // pred_check_branch
      %205 = sbr.rel (%p202) target = $region12
    $region11: #{_lambda_.95} parent=5 // pred_region
      %s206 = ssub.s32 %s12, 1
    $region12: #{_lambda_.95} parent=5 // pred_fallthru
      _
    %p207 = scmp.lt.s32.totalorder %s12, 2
    // Predicated region
    $region13: #{_lambda_.95} parent=5 // pred_check
      %p208 = pneg %p207
    $region14: #{_lambda_.95} parent=5 // pred_check_branch
      %210 = sbr.rel (%p208) target = $region16
    $region15: #{_lambda_.95} parent=5 // pred_region
      // Predicated region
      $region17: #{_lambda_.95} parent=15 // pred_check
        %p211 = pneg %p46
      $region18: #{_lambda_.95} parent=15 // pred_check_branch
        %213 = sbr.rel (%p211) target = $region20
      $region19: #{_lambda_.95} parent=15 // pred_region
        %s214 = smul.u32 2, %s20
        %p215 = scmp.lt.s32.totalorder %s19, 1
        %s216 = scalar_select %p215, %s19, 1
        %p217 = scmp.lt.s32.totalorder %s214, 1
        %s218 = scalar_select %p217, %s214, 1
        %s219 = smul.addr %s216, 2
        %s220 = sadd.s32 %s218, %s219
        %s221 = smul.addr %s220, 8
        %s222 = scalar_lea.vmem %s0, %s221
        %s223 = smul.u32 2, %s20
      $region20: #{_lambda_.95} parent=15 // pred_fallthru
        _
      // Predicated region
      $region21: #{_lambda_.95} parent=15 // pred_check
        %p224 = pneg %p74
      $region22: #{_lambda_.95} parent=15 // pred_check_branch
        %226 = sbr.rel (%p224) target = $region24
      $region23: #{_lambda_.95} parent=15 // pred_region
        %s227 = smul.u32 2, %s20
        %p228 = scmp.lt.s32.totalorder %s19, 1
        %s229 = scalar_select %p228, %s19, 1
        %p230 = scmp.lt.s32.totalorder %s227, 1
        %s231 = scalar_select %p230, %s227, 1
        %s232 = smul.addr %s229, 2
        %s233 = sadd.s32 %s231, %s232
        %s234 = smul.addr %s233, 8
        %s235 = scalar_lea.vmem %s1, %s234
        %s236 = smul.u32 2, %s20
      $region24: #{_lambda_.95} parent=15 // pred_fallthru
        _
      // Predicated region
      $region25: #{_lambda_.95} parent=15 // pred_check
        %p237 = pneg %p102
      $region26: #{_lambda_.95} parent=15 // pred_check_branch
        %239 = sbr.rel (%p237) target = $region28
      $region27: #{_lambda_.95} parent=15 // pred_region
        %s240 = smul.u32 2, %s20
        %p241 = scmp.lt.s32.totalorder %s19, 1
        %s242 = scalar_select %p241, %s19, 1
        %p243 = scmp.lt.s32.totalorder %s240, 1
        %s244 = scalar_select %p243, %s240, 1
        %s245 = smul.addr %s242, 2
        %s246 = sadd.s32 %s244, %s245
        %s247 = smul.addr %s246, 8
        %s248 = scalar_lea.vmem %s2, %s247
        %s249 = smul.u32 2, %s20
      $region28: #{_lambda_.95} parent=15 // pred_fallthru
        _
      // Predicated region
      $region29: #{_lambda_.95} parent=15 // pred_check
        %p250 = pneg %p130
      $region30: #{_lambda_.95} parent=15 // pred_check_branch
        %252 = sbr.rel (%p250) target = $region32
      $region31: #{_lambda_.95} parent=15 // pred_region
        %s253 = smul.u32 2, %s20
        %p254 = scmp.lt.s32.totalorder %s19, 1
        %s255 = scalar_select %p254, %s19, 1
        %p256 = scmp.lt.s32.totalorder %s253, 1
        %s257 = scalar_select %p256, %s253, 1
        %s258 = smul.addr %s255, 2
        %s259 = sadd.s32 %s257, %s258
        %s260 = smul.addr %s259, 8
        %s261 = scalar_lea.vmem %s3, %s260
        %s262 = smul.u32 2, %s20
      $region32: #{_lambda_.95} parent=15 // pred_fallthru
        _
    $region16: #{_lambda_.95} parent=5 // pred_fallthru
      _
    %p263 = scmp.le.s32.totalorder 1, %s12
    %p264 = scmp.lt.s32.totalorder %s12, 3
    %p265 = pnand %p263, %p264
    %p266 = pneg %p265
    // Predicated region
    $region33: #{_lambda_.95} parent=5 // pred_check
      _
    $region34: #{_lambda_.95} parent=5 // pred_check_branch
      %268 = sbr.rel (%p265) target = $region36
    $region35: #{_lambda_.95} parent=5 // pred_region
      %s269 = ssub.s32 %s12, 1
      %s270 = smul.u32 2, %s22
      %p271 = scmp.lt.s32.totalorder %s21, 1
      %s272 = scalar_select %p271, %s21, 1
      %p273 = scmp.lt.s32.totalorder %s270, 1
      %s274 = scalar_select %p273, %s270, 1
      %s275 = smul.addr %s272, 2
      %s276 = sadd.s32 %s274, %s275
      %s277 = smul.addr %s276, 8
      %s278 = scalar_lea.vmem %s0, %s277
      %p279 = pneg %p52
      %p280 = pneg %p49
      %s281 = smul.u32 2, %s22
      %p282 = scmp.lt.s32.totalorder %s21, 1
      %s283 = scalar_select %p282, %s21, 1
      %p284 = scmp.lt.s32.totalorder %s281, 1
      %s285 = scalar_select %p284, %s281, 1
      %s286 = smul.addr %s283, 2
      %s287 = sadd.s32 %s285, %s286
      %s288 = smul.addr %s287, 8
      %s289 = scalar_lea.vmem %s1, %s288
      %p290 = pneg %p80
      %p291 = pneg %p77
      %s292 = smul.u32 2, %s22
      %p293 = scmp.lt.s32.totalorder %s21, 1
      %s294 = scalar_select %p293, %s21, 1
      %p295 = scmp.lt.s32.totalorder %s292, 1
      %s296 = scalar_select %p295, %s292, 1
      %s297 = smul.addr %s294, 2
      %s298 = sadd.s32 %s296, %s297
      %s299 = smul.addr %s298, 8
      %s300 = scalar_lea.vmem %s2, %s299
      %p301 = pneg %p108
      %p302 = pneg %p105
      %s303 = smul.u32 2, %s22
      %p304 = scmp.lt.s32.totalorder %s21, 1
      %s305 = scalar_select %p304, %s21, 1
      %p306 = scmp.lt.s32.totalorder %s303, 1
      %s307 = scalar_select %p306, %s303, 1
      %s308 = smul.addr %s305, 2
      %s309 = sadd.s32 %s307, %s308
      %s310 = smul.addr %s309, 8
      %s311 = scalar_lea.vmem %s3, %s310
      %p312 = pneg %p136
      %p313 = pneg %p133
      %p314 = pneg %p164
      %p315 = pneg %p161
      %s316 = smul.u32 2, %s22
      %p317 = scmp.lt.s32.totalorder %s21, 1
      %s318 = scalar_select %p317, %s21, 1
      %p319 = scmp.lt.s32.totalorder %s316, 1
      %s320 = scalar_select %p319, %s316, 1
      %s321 = smul.addr %s318, 2
      %s322 = sadd.s32 %s320, %s321
      %s323 = smul.addr %s322, 8
      %s324 = scalar_lea.vmem %s4, %s323
      %p325 = pneg %p192
      %p326 = pneg %p189
      %s327 = smul.u32 2, %s22
      %p328 = scmp.lt.s32.totalorder %s21, 1
      %s329 = scalar_select %p328, %s21, 1
      %p330 = scmp.lt.s32.totalorder %s327, 1
      %s331 = scalar_select %p330, %s327, 1
      %s332 = smul.addr %s329, 2
      %s333 = sadd.s32 %s331, %s332
      %s334 = smul.addr %s333, 8
      %s335 = scalar_lea.vmem %s5, %s334
      %s336 = smul.u32 2, %s22
      %p337 = scmp.lt.s32.totalorder %s21, 1
      %s338 = scalar_select %p337, %s21, 1
      %p339 = scmp.lt.s32.totalorder %s336, 1
      %s340 = scalar_select %p339, %s336, 1
      %s341 = smul.addr %s338, 2
      %s342 = sadd.s32 %s340, %s341
      %s343 = smul.addr %s342, 8
      %s344 = scalar_lea.vmem %s0, %s343
      %s345 = smul.u32 2, %s22
      %s346 = smul.u32 2, %s22
      %p347 = scmp.lt.s32.totalorder %s21, 1
      %s348 = scalar_select %p347, %s21, 1
      %p349 = scmp.lt.s32.totalorder %s346, 1
      %s350 = scalar_select %p349, %s346, 1
      %s351 = smul.addr %s348, 2
      %s352 = sadd.s32 %s350, %s351
      %s353 = smul.addr %s352, 8
      %s354 = scalar_lea.vmem %s1, %s353
      %s355 = smul.u32 2, %s22
      %s356 = smul.u32 2, %s22
      %p357 = scmp.lt.s32.totalorder %s21, 1
      %s358 = scalar_select %p357, %s21, 1
      %p359 = scmp.lt.s32.totalorder %s356, 1
      %s360 = scalar_select %p359, %s356, 1
      %s361 = smul.addr %s358, 2
      %s362 = sadd.s32 %s360, %s361
      %s363 = smul.addr %s362, 8
      %s364 = scalar_lea.vmem %s2, %s363
      %s365 = smul.u32 2, %s22
      %s366 = smul.u32 2, %s22
      %p367 = scmp.lt.s32.totalorder %s21, 1
      %s368 = scalar_select %p367, %s21, 1
      %p369 = scmp.lt.s32.totalorder %s366, 1
      %s370 = scalar_select %p369, %s366, 1
      %s371 = smul.addr %s368, 2
      %s372 = sadd.s32 %s370, %s371
      %s373 = smul.addr %s372, 8
      %s374 = scalar_lea.vmem %s3, %s373
      %s375 = smul.u32 2, %s22
      %s376 = smul.u32 2, %s22
      %p377 = scmp.lt.s32.totalorder %s21, 1
      %s378 = scalar_select %p377, %s21, 1
      %p379 = scmp.lt.s32.totalorder %s376, 1
      %s380 = scalar_select %p379, %s376, 1
      %s381 = smul.addr %s378, 2
      %s382 = sadd.s32 %s380, %s381
      %s383 = smul.addr %s382, 8
      %s384 = scalar_lea.vmem %s4, %s383
      %s385 = smul.u32 2, %s22
      %s386 = smul.u32 2, %s22
      %p387 = scmp.lt.s32.totalorder %s21, 1
      %s388 = scalar_select %p387, %s21, 1
      %p389 = scmp.lt.s32.totalorder %s386, 1
      %s390 = scalar_select %p389, %s386, 1
      %s391 = smul.addr %s388, 2
      %s392 = sadd.s32 %s390, %s391
      %s393 = smul.addr %s392, 8
      %s394 = scalar_lea.vmem %s5, %s393
      %s395 = smul.u32 2, %s22
      %v396 = vld [vmem:[%s344] sm:$0xff]
      %v397 = vld [vmem:[%s344 + $0x8] sm:$0xff]
      %v398 = vld [vmem:[%s354] sm:$0xff]
      %v399 = vld [vmem:[%s354 + $0x8] sm:$0xff]
      %v400 = vld [vmem:[%s364] sm:$0xff]
      %v401 = vld [vmem:[%s364 + $0x8] sm:$0xff]
      %v402 = vld [vmem:[%s374] sm:$0xff]
      %v403 = vld [vmem:[%s374 + $0x8] sm:$0xff]
      %v404 = vmul.f32 %v396, %v396
      %v405 = vmul.f32 %v397, %v397
      %v406 = vmul.f32 %v398, %v398
      %v407 = vmul.f32 %v399, %v399
      %v408 = vadd.f32 %v404, %v406
      %v409 = vadd.f32 %v405, %v407
      %v410 = vrsqrt.pop %v408
      %v411 = vmul.f32 %v408, %v410
      %vm412 = vcmp.eq.f32.partialorder %v408, inf
      %v413 = vsel %vm412, %v408, %v411
      %vm414 = vcmp.eq.f32.partialorder %v408, 0.0
      %v415 = vand.u32 %v408, 2147483648
      %v416 = vsel %vm414, %v415, %v413
      %v417 = vrsqrt.pop %v409
      %v418 = vmul.f32 %v409, %v417
      %vm419 = vcmp.eq.f32.partialorder %v409, inf
      %v420 = vsel %vm419, %v409, %v418
      %vm421 = vcmp.eq.f32.partialorder %v409, 0.0
      %v422 = vand.u32 %v409, 2147483648
      %v423 = vsel %vm421, %v422, %v420
      %v424 = vmul.f32 %v400, %v400
      %v425 = vmul.f32 %v401, %v401
      %v426 = vmul.f32 %v402, %v402
      %v427 = vmul.f32 %v403, %v403
      %v428 = vadd.f32 %v424, %v426
      %v429 = vadd.f32 %v425, %v427
      %v430 = vrsqrt.pop %v428
      %v431 = vmul.f32 %v428, %v430
      %vm432 = vcmp.eq.f32.partialorder %v428, inf
      %v433 = vsel %vm432, %v428, %v431
      %vm434 = vcmp.eq.f32.partialorder %v428, 0.0
      %v435 = vand.u32 %v428, 2147483648
      %v436 = vsel %vm434, %v435, %v433
      %v437 = vrsqrt.pop %v429
      %v438 = vmul.f32 %v429, %v437
      %vm439 = vcmp.eq.f32.partialorder %v429, inf
      %v440 = vsel %vm439, %v429, %v438
      %vm441 = vcmp.eq.f32.partialorder %v429, 0.0
      %v442 = vand.u32 %v429, 2147483648
      %v443 = vsel %vm441, %v442, %v440
      %vm444 = vcmp.gt.f32.partialorder %v436, 0.0
      %vm445 = vcmp.gt.f32.partialorder %v443, 0.0
      %v446 = vrcp.pop %v436
      %v447 = vmul.f32 1.0, %v446
      %v448 = vrcp.pop %v443
      %v449 = vmul.f32 1.0, %v448
      %v450 = vsel %vm444, %v447, 0.0
      %v451 = vsel %vm445, %v449, 0.0
      %v452 = vmul.f32 %v400, %v450
      %v453 = vmul.f32 %v401, %v451
      %v454 = vsel %vm444, %v452, 1.0
      %v455 = vsel %vm445, %v453, 1.0
      %v456 = vmul.f32 %v402, %v450
      %v457 = vmul.f32 %v403, %v451
      %v458 = vmul.f32 %v416, %v454
      %v459 = vmul.f32 %v423, %v455
      %vm460 = vcmask 130048
      %461 = vst.msk [vmem:[%s384] sm:$0xff] %vm460, %v458
      %462 = vst.msk [vmem:[%s384 + $0x8] sm:$0xff] %vm460, %v459
      %v463 = vmul.f32 %v416, %v456
      %v464 = vmul.f32 %v423, %v457
      %465 = vst.msk [vmem:[%s394] sm:$0xff] %vm460, %v463
      %466 = vst.msk [vmem:[%s394 + $0x8] sm:$0xff] %vm460, %v464
      %s467 = smul.u32 2, %s22
      %p468 = scmp.lt.s32.totalorder %s21, 1
      %s469 = scalar_select %p468, %s21, 1
      %p470 = scmp.lt.s32.totalorder %s467, 1
      %s471 = scalar_select %p470, %s467, 1
      %s472 = smul.addr %s469, 2
      %s473 = sadd.s32 %s471, %s472
      %s474 = smul.addr %s473, 8
      %s475 = scalar_lea.vmem %s4, %s474
      %s476 = smul.u32 2, %s22
      %p477 = scmp.lt.s32.totalorder %s21, 1
      %s478 = scalar_select %p477, %s21, 1
      %p479 = scmp.lt.s32.totalorder %s476, 1
      %s480 = scalar_select %p479, %s476, 1
      %s481 = smul.addr %s478, 2
      %s482 = sadd.s32 %s480, %s481
      %s483 = smul.addr %s482, 8
      %s484 = scalar_lea.vmem %s5, %s483
      // Predicated region
      $region37: #{_lambda_.95} parent=35 // pred_check
        %p485 = pneg %p161
      $region38: #{_lambda_.95} parent=35 // pred_check_branch
        %487 = sbr.rel (%p485) target = $region40
      $region39: #{_lambda_.95} parent=35 // pred_region
        %s488 = smul.u32 2, %s22
      $region40: #{_lambda_.95} parent=35 // pred_fallthru
        _
      // Predicated region
      $region41: #{_lambda_.95} parent=35 // pred_check
        %p489 = pneg %p189
      $region42: #{_lambda_.95} parent=35 // pred_check_branch
        %491 = sbr.rel (%p489) target = $region44
      $region43: #{_lambda_.95} parent=35 // pred_region
        %s492 = smul.u32 2, %s22
      $region44: #{_lambda_.95} parent=35 // pred_fallthru
        _
    $region36: #{_lambda_.95} parent=5 // pred_fallthru
      _
    %p493 = scmp.le.s32.totalorder 2, %s12
    // Predicated region
    $region45: #{_lambda_.95} parent=5 // pred_check
      %p494 = pneg %p493
    $region46: #{_lambda_.95} parent=5 // pred_check_branch
      %496 = sbr.rel (%p494) target = $region48
    $region47: #{_lambda_.95} parent=5 // pred_region
      %s497 = ssub.s32 %s12, 2
      // Predicated region
      $region49: #{_lambda_.95} parent=47 // pred_check
        %p498 = pneg %p167
      $region50: #{_lambda_.95} parent=47 // pred_check_branch
        %500 = sbr.rel (%p498) target = $region52
      $region51: #{_lambda_.95} parent=47 // pred_region
        %s501 = smul.u32 2, %s24
        %p502 = scmp.lt.s32.totalorder %s23, 1
        %s503 = scalar_select %p502, %s23, 1
        %p504 = scmp.lt.s32.totalorder %s501, 1
        %s505 = scalar_select %p504, %s501, 1
        %s506 = smul.addr %s503, 2
        %s507 = sadd.s32 %s505, %s506
        %s508 = smul.addr %s507, 8
        %s509 = scalar_lea.vmem %s4, %s508
      $region52: #{_lambda_.95} parent=47 // pred_fallthru
        _
      // Predicated region
      $region53: #{_lambda_.95} parent=47 // pred_check
        %p510 = pneg %p195
      $region54: #{_lambda_.95} parent=47 // pred_check_branch
        %512 = sbr.rel (%p510) target = $region56
      $region55: #{_lambda_.95} parent=47 // pred_region
        %s513 = smul.u32 2, %s24
        %p514 = scmp.lt.s32.totalorder %s23, 1
        %s515 = scalar_select %p514, %s23, 1
        %p516 = scmp.lt.s32.totalorder %s513, 1
        %s517 = scalar_select %p516, %s513, 1
        %s518 = smul.addr %s515, 2
        %s519 = sadd.s32 %s517, %s518
        %s520 = smul.addr %s519, 8
        %s521 = scalar_lea.vmem %s5, %s520
      $region56: #{_lambda_.95} parent=47 // pred_fallthru
        _
    $region48: #{_lambda_.95} parent=5 // pred_fallthru
      _
  $region6: #{_lambda_.95} parent=0 // loop_footer
    %s16 = sadd.s32 1, %s12
  $region7: #{_lambda_.95} parent=0 // loop_footer_branch
    %11 = sbr.rel target = $region3
  $region8: #{_lambda_.95} parent=0 // loop_exit
    _

</llo_original>
